<compile_context>
chip_gen: v5e
topology: v5e:2x2
jax: 0.10.0
libtpu: 0.0.40
codegen_flags: <defaults>
</compile_context>

<pallas_src>
import jax
import jax.numpy as jnp
from jax import lax
from jax.experimental import pallas as pl
from jax.experimental.pallas import tpu as pltpu


# ----------------------------------------------------------------------------
# In-kernel building blocks (operate on per-head activation blocks)
# ----------------------------------------------------------------------------
def _project(acts, w_ref, hout, cout):
    """Projection x' = x @ W for one GATConv layer (all MXU work in bf16).

    Weight packings (chosen host-side in make_params, all bf16):
      * 3D [hout, cin, cout]      per-OUTPUT-head blocks (layer 1: cout=448 is
                                  not 128-aligned, so heads stay separate).
      * 3D [hin, cin, hout*cout]  per-INPUT-head blocks, output heads fused
                                  along cout (layer 2: cin=448 unaligned,
                                  cout=384 aligned).
      * 2D [hin*cin, hout*cout]   fully fused (layers 3/4: cin and cout are
                                  multiples of 128, so concat + slice are
                                  lane-aligned).
    Returns a list of hout per-output-head [N, cout] f32 activations.
    """
    if len(w_ref.shape) == 2:
        # Fully fused: one matmul for the whole layer.
        lhs = acts[0] if len(acts) == 1 else jnp.concatenate(acts, axis=1)
        xp_all = jnp.dot(lhs.astype(jnp.bfloat16), w_ref[...],
                         preferred_element_type=jnp.float32)
    elif w_ref.shape[-1] == hout * cout and hout * cout != cout:
        # Per-input-head LHS (unaligned cin), fused output heads in the RHS.
        acts_bf = [a.astype(jnp.bfloat16) for a in acts]        # cast hoisted
        xp_all = jnp.dot(acts_bf[0], w_ref[0], preferred_element_type=jnp.float32)
        for hi in range(1, len(acts)):
            xp_all = xp_all + jnp.dot(acts_bf[hi], w_ref[hi],
                                      preferred_element_type=jnp.float32)
    else:
        # Per-output-head weight blocks (layer 1; hin == 1 there).
        acts_bf = [a.astype(jnp.bfloat16) for a in acts]        # cast hoisted
        xps = []
        for ho in range(hout):
            xp = jnp.dot(acts_bf[0], w_ref[ho], preferred_element_type=jnp.float32)
            for hi in range(1, len(acts)):
                xp = xp + jnp.dot(acts_bf[hi], w_ref[hi * hout + ho],
                                  preferred_element_type=jnp.float32)
            xps.append(xp)
        return xps
    # 128-aligned static slices per output head.
    return [xp_all[:, ho * cout:(ho + 1) * cout] for ho in range(hout)]


def _gat_conv(acts, mb, w_ref, as_ref, ad_ref, b_ref):
    """One GATConv layer.

    acts  : list of hin per-input-head activations, each [N, Cin] f32
    mb    : [N, N] additive mask (0 on edges / self-loops, -1e9 elsewhere)
    w_ref : bf16 weights (packing documented in _project)
    as_ref, ad_ref, b_ref : [hout, 1, Cout] f32
    returns list of hout per-output-head activations, each [N, Cout] f32
    """
    hout, _, cout = as_ref.shape
    xps = _project(acts, w_ref, hout, cout)

    outs = []
    for ho in range(hout):
        xp = xps[ho]                                    # [N, C] f32
        xp_bf = xp.astype(jnp.bfloat16)                 # one cast, used twice

        # a_dst[i] = <x'_i, att_dst>  (f32 VPU reduce)
        a_dst = jnp.sum(xp * ad_ref[ho], axis=1, keepdims=True)          # [N, 1]
        # a_src[j] = <x'_j, att_src> as a [1, N] row: one tiny bf16 matvec
        # (replaces the old [N,C] broadcast + [N,C]x[C,N] f32 matmul).
        a_src = jnp.einsum("ic,jc->ij",
                           as_ref[ho].astype(jnp.bfloat16), xp_bf,
                           preferred_element_type=jnp.float32)           # [1, N]

        e = a_dst + a_src                      # [N, N]
        e = jnp.where(e > 0, e, 0.2 * e)       # LeakyReLU(0.2), BEFORE masking
        logits = e + mb                        # additive -1e9 mask (non-edges)

        m = jnp.max(logits, axis=-1, keepdims=True)
        p = jnp.exp(logits - m)
        alpha = p * pl.reciprocal(jnp.sum(p, axis=-1, keepdims=True), approx=True)

        out = jnp.dot(alpha.astype(jnp.bfloat16), xp_bf,
                      preferred_element_type=jnp.float32)                # [N, C]
        outs.append(out + b_ref[ho])
    return outs


def _relu_layernorm(acts, g_ref, bb_ref):
    """ReLU + LayerNorm over the concatenated (H*C) feature dim, per node,
    evaluated on per-head blocks (no concatenation is ever materialized)."""
    h, _, c = g_ref.shape
    d = float(h * c)
    ys = [jnp.maximum(a, 0.0) for a in acts]

    row_sum = jnp.sum(ys[0], axis=1, keepdims=True)
    for y in ys[1:]:
        row_sum = row_sum + jnp.sum(y, axis=1, keepdims=True)
    mean = row_sum * (1.0 / d)

    sq = jnp.sum((ys[0] - mean) ** 2, axis=1, keepdims=True)
    for y in ys[1:]:
        sq = sq + jnp.sum((y - mean) ** 2, axis=1, keepdims=True)
    inv = lax.rsqrt(sq * (1.0 / d) + 1e-5)

    return [(ys[i] - mean) * inv * g_ref[i] + bb_ref[i] for i in range(h)]


# ----------------------------------------------------------------------------
# Fused whole-network kernel
# ----------------------------------------------------------------------------
def _gatnet_kernel(x_ref, mb_ref, w1_ref,
                   as1_ref, ad1_ref, b1_ref, g1_ref, bb1_ref,
                   as2_ref, ad2_ref, b2_ref, g2_ref, bb2_ref,
                   as3_ref, ad3_ref, b3_ref, g3_ref, bb3_ref,
                   as4_ref, ad4_ref, b4_ref,
                   w2_hbm, w3_hbm, w4_hbm,
                   o_ref,
                   w2_vmem, w3_vmem, w4_vmem, dma_sem):
    # Kick off the layer-2/3/4 weight DMAs immediately: they overlap with the
    # layer-1..3 compute (the kernel is weight-bandwidth bound at small N).
    cp2 = pltpu.make_async_copy(w2_hbm, w2_vmem, dma_sem.at[0])
    cp3 = pltpu.make_async_copy(w3_hbm, w3_vmem, dma_sem.at[1])
    cp4 = pltpu.make_async_copy(w4_hbm, w4_vmem, dma_sem.at[2])
    cp2.start()
    cp3.start()
    cp4.start()

    mb = mb_ref[...]                       # [N, N] additive mask, reused 4x
    acts = [x_ref[...]]                    # input is one "head block" of 256

    acts = _gat_conv(acts, mb, w1_ref, as1_ref, ad1_ref, b1_ref)
    acts = _relu_layernorm(acts, g1_ref, bb1_ref)

    cp2.wait()
    acts = _gat_conv(acts, mb, w2_vmem, as2_ref, ad2_ref, b2_ref)
    acts = _relu_layernorm(acts, g2_ref, bb2_ref)

    cp3.wait()
    acts = _gat_conv(acts, mb, w3_vmem, as3_ref, ad3_ref, b3_ref)
    acts = _relu_layernorm(acts, g3_ref, bb3_ref)

    cp4.wait()
    acts = _gat_conv(acts, mb, w4_vmem, as4_ref, ad4_ref, b4_ref)  # heads=1

    o_ref[...] = acts[0]


def _full_block_spec(shape):
    zeros = (0,) * len(shape)
    return pl.BlockSpec(shape, lambda i, _z=zeros: _z)


def gatnet_forward(x, adj, params):
    """x: [N, 256] f32, adj: [N, N] (adj[i, j]=1 iff edge j->i; incl. self loops)."""
    n = x.shape[0]
    num_genes = params["nn4"]["att_src"].shape[-1]

    # Additive mask, computed once per forward and reused by all 4 layers.
    mask_bias = jnp.where(adj > 0.0, 0.0, -1e9).astype(jnp.float32)

    # Inputs that go through regular (prologue-DMA'd) BlockSpecs: the small
    # per-layer parameters plus the layer-1 weights (needed before any compute).
    vmem_inputs = [x.astype(jnp.float32), mask_bias, params["nn1"]["W"]]
    for conv, ln in (("nn1", "ln1"), ("nn2", "ln2"), ("nn3", "ln3"), ("nn4", None)):
        p = params[conv]
        vmem_inputs += [p["att_src"], p["att_dst"], p["bias"]]
        if ln is not None:
            vmem_inputs += [params[ln]["g"], params[ln]["b"]]

    # Layer-2/3/4 weights stay in HBM and are prefetched manually in-kernel.
    hbm_inputs = [params["nn2"]["W"], params["nn3"]["W"], params["nn4"]["W"]]

    in_specs = ([_full_block_spec(a.shape) for a in vmem_inputs]
                + [pl.BlockSpec(memory_space=pl.ANY)] * len(hbm_inputs))

    scratch_shapes = [
        pltpu.VMEM(params["nn2"]["W"].shape, jnp.bfloat16),
        pltpu.VMEM(params["nn3"]["W"].shape, jnp.bfloat16),
        pltpu.VMEM(params["nn4"]["W"].shape, jnp.bfloat16),
        pltpu.SemaphoreType.DMA((3,)),
    ]

    return pl.pallas_call(
        _gatnet_kernel,
        out_shape=jax.ShapeDtypeStruct((n, num_genes), jnp.float32),
        grid_spec=pltpu.PrefetchScalarGridSpec(
            num_scalar_prefetch=0,
            grid=(1,),
            in_specs=in_specs,
            out_specs=pl.BlockSpec((n, num_genes), lambda i: (0, 0)),
            scratch_shapes=scratch_shapes),
        compiler_params=pltpu.CompilerParams(
            dimension_semantics=("arbitrary",),
            vmem_limit_bytes=32 * 1024 * 1024),
    )(*vmem_inputs, *hbm_inputs)


# ----------------------------------------------------------------------------
# Deterministic parameter / input construction
# ----------------------------------------------------------------------------
def make_params(key, num_heads, num_genes, in_dim=256):
    d1, d2, d3 = 448, 384, 256
    h = num_heads
    cfg = [  # name, hin, cin, hout, cout, weight layout
        ("nn1", 1, in_dim, h, d1, "out_heads"),   # [hout, cin, cout]      (448 unaligned)
        ("nn2", h, d1, h, d2, "in_heads"),        # [hin, cin, hout*cout]  (cin 448 unaligned)
        ("nn3", h, d2, h, d3, "fused"),           # [hin*cin, hout*cout]   (all 128-aligned)
        ("nn4", h, d3, 1, num_genes, "fused"),    # [hin*cin, cout]
    ]
    params = {}
    for name, hin, cin, hout, cout, layout in cfg:
        key, k1, k2, k3, k4 = jax.random.split(key, 5)
        scale = (2.0 / (hin * cin + cout)) ** 0.5
        if layout == "out_heads":
            wshape = (hout, cin, cout)
        elif layout == "in_heads":
            wshape = (hin, cin, hout * cout)
        else:
            wshape = (hin * cin, hout * cout)
        w = jax.random.normal(k1, wshape, jnp.float32) * scale
        params[name] = {
            "W": w.astype(jnp.bfloat16),                                  # bf16 weights
            "att_src": jax.random.normal(k2, (hout, 1, cout), jnp.float32) * 0.1,
            "att_dst": jax.random.normal(k3, (hout, 1, cout), jnp.float32) * 0.1,
            "bias": jax.random.normal(k4, (hout, 1, cout), jnp.float32) * 0.01,
        }
    for name, hh, c in (("ln1", h, d1), ("ln2", h, d2), ("ln3", h, d3)):
        key, kg, kb = jax.random.split(key, 3)
        params[name] = {
            "g": 1.0 + 0.01 * jax.random.normal(kg, (hh, 1, c), jnp.float32),
            "b": 0.01 * jax.random.normal(kb, (hh, 1, c), jnp.float32),
        }
    return params


if __name__ == "__main__":
    N_NODES = 32       # graph nodes
    IN_DIM = 256       # fixed by GATConv(256, ...)
    NUM_HEADS = 2      # small head count for the demo (module default is 8)
    NUM_GENES = 128    # output dim (multiple of 128 -> lane-dense output)
    N_EDGES = 96

    root = jax.random.PRNGKey(0)
    kx, ks, kd, kp = jax.random.split(root, 4)

    x = jax.random.normal(kx, (N_NODES, IN_DIM), jnp.float32)

    # random edge_index (src, dst) -> dense adjacency (j -> i) + self loops
    src = jax.random.randint(ks, (N_EDGES,), 0, N_NODES)
    dst = jax.random.randint(kd, (N_EDGES,), 0, N_NODES)
    adj = jnp.zeros((N_NODES, N_NODES), jnp.float32).at[dst, src].set(1.0)
    adj = jnp.maximum(adj, jnp.eye(N_NODES, dtype=jnp.float32))   # add_self_loops

    params = make_params(kp, NUM_HEADS, NUM_GENES, IN_DIM)

    out = jax.jit(gatnet_forward)(x, adj, params)
    out = jax.block_until_ready(out)
    assert out.shape == (N_NODES, NUM_GENES)
    assert bool(jnp.all(jnp.isfinite(out)))
    print("KERNEL_OK")
</pallas_src>

<mosaic_0001>
module attributes {stable_mosaic.version = 11 : i64} {
  func.func @_gatnet_kernel(%arg0: i32, %arg1: memref<32x256xf32, #tpu.memory_space<vmem>>, %arg2: memref<32x32xf32, #tpu.memory_space<vmem>>, %arg3: memref<2x256x448xbf16, #tpu.memory_space<vmem>>, %arg4: memref<2x1x448xf32, #tpu.memory_space<vmem>>, %arg5: memref<2x1x448xf32, #tpu.memory_space<vmem>>, %arg6: memref<2x1x448xf32, #tpu.memory_space<vmem>>, %arg7: memref<2x1x448xf32, #tpu.memory_space<vmem>>, %arg8: memref<2x1x448xf32, #tpu.memory_space<vmem>>, %arg9: memref<2x1x384xf32, #tpu.memory_space<vmem>>, %arg10: memref<2x1x384xf32, #tpu.memory_space<vmem>>, %arg11: memref<2x1x384xf32, #tpu.memory_space<vmem>>, %arg12: memref<2x1x384xf32, #tpu.memory_space<vmem>>, %arg13: memref<2x1x384xf32, #tpu.memory_space<vmem>>, %arg14: memref<2x1x256xf32, #tpu.memory_space<vmem>>, %arg15: memref<2x1x256xf32, #tpu.memory_space<vmem>>, %arg16: memref<2x1x256xf32, #tpu.memory_space<vmem>>, %arg17: memref<2x1x256xf32, #tpu.memory_space<vmem>>, %arg18: memref<2x1x256xf32, #tpu.memory_space<vmem>>, %arg19: memref<1x1x128xf32, #tpu.memory_space<vmem>>, %arg20: memref<1x1x128xf32, #tpu.memory_space<vmem>>, %arg21: memref<1x1x128xf32, #tpu.memory_space<vmem>>, %arg22: memref<2x448x768xbf16, #tpu.memory_space<any>>, %arg23: memref<768x512xbf16, #tpu.memory_space<any>>, %arg24: memref<512x128xbf16, #tpu.memory_space<any>>, %arg25: memref<32x128xf32, #tpu.memory_space<vmem>>, %arg26: memref<2x448x768xbf16, #tpu.memory_space<vmem>>, %arg27: memref<768x512xbf16, #tpu.memory_space<vmem>>, %arg28: memref<512x128xbf16, #tpu.memory_space<vmem>>, %arg29: memref<3x!tpu.dma_semaphore, #tpu.memory_space<semaphore_mem>>) attributes {dimension_semantics = [#tpu.dimension_semantics<arbitrary>], iteration_bounds = array<i64: 1>, scalar_prefetch = 0 : i64, scratch_operands = 4 : i64, tpu.core_type = #tpu.core_type<tc>, window_params = [{pipeline_mode = #tpu.pipeline_mode<synchronous>, transform_indices = @transform_0, window_bounds = array<i64: 32, 256>}, {pipeline_mode = #tpu.pipeline_mode<synchronous>, transform_indices = @transform_1, window_bounds = array<i64: 32, 32>}, {pipeline_mode = #tpu.pipeline_mode<synchronous>, transform_indices = @transform_2, window_bounds = array<i64: 2, 256, 448>}, {pipeline_mode = #tpu.pipeline_mode<synchronous>, transform_indices = @transform_3, window_bounds = array<i64: 2, 1, 448>}, {pipeline_mode = #tpu.pipeline_mode<synchronous>, transform_indices = @transform_4, window_bounds = array<i64: 2, 1, 448>}, {pipeline_mode = #tpu.pipeline_mode<synchronous>, transform_indices = @transform_5, window_bounds = array<i64: 2, 1, 448>}, {pipeline_mode = #tpu.pipeline_mode<synchronous>, transform_indices = @transform_6, window_bounds = array<i64: 2, 1, 448>}, {pipeline_mode = #tpu.pipeline_mode<synchronous>, transform_indices = @transform_7, window_bounds = array<i64: 2, 1, 448>}, {pipeline_mode = #tpu.pipeline_mode<synchronous>, transform_indices = @transform_8, window_bounds = array<i64: 2, 1, 384>}, {pipeline_mode = #tpu.pipeline_mode<synchronous>, transform_indices = @transform_9, window_bounds = array<i64: 2, 1, 384>}, {pipeline_mode = #tpu.pipeline_mode<synchronous>, transform_indices = @transform_10, window_bounds = array<i64: 2, 1, 384>}, {pipeline_mode = #tpu.pipeline_mode<synchronous>, transform_indices = @transform_11, window_bounds = array<i64: 2, 1, 384>}, {pipeline_mode = #tpu.pipeline_mode<synchronous>, transform_indices = @transform_12, window_bounds = array<i64: 2, 1, 384>}, {pipeline_mode = #tpu.pipeline_mode<synchronous>, transform_indices = @transform_13, window_bounds = array<i64: 2, 1, 256>}, {pipeline_mode = #tpu.pipeline_mode<synchronous>, transform_indices = @transform_14, window_bounds = array<i64: 2, 1, 256>}, {pipeline_mode = #tpu.pipeline_mode<synchronous>, transform_indices = @transform_15, window_bounds = array<i64: 2, 1, 256>}, {pipeline_mode = #tpu.pipeline_mode<synchronous>, transform_indices = @transform_16, window_bounds = array<i64: 2, 1, 256>}, {pipeline_mode = #tpu.pipeline_mode<synchronous>, transform_indices = @transform_17, window_bounds = array<i64: 2, 1, 256>}, {pipeline_mode = #tpu.pipeline_mode<synchronous>, transform_indices = @transform_18, window_bounds = array<i64: 1, 1, 128>}, {pipeline_mode = #tpu.pipeline_mode<synchronous>, transform_indices = @transform_19, window_bounds = array<i64: 1, 1, 128>}, {pipeline_mode = #tpu.pipeline_mode<synchronous>, transform_indices = @transform_20, window_bounds = array<i64: 1, 1, 128>}, {}, {}, {}, {pipeline_mode = #tpu.pipeline_mode<synchronous>, transform_indices = @transform_24, window_bounds = array<i64: 32, 128>}]} {
    %c0_i32 = arith.constant 0 : i32
    %0 = tpu.memref_slice %arg29[%c0_i32] : memref<3x!tpu.dma_semaphore, #tpu.memory_space<semaphore_mem>> -> memref<1x!tpu.dma_semaphore, #tpu.memory_space<semaphore_mem>>
    %1 = tpu.memref_squeeze %0 : memref<1x!tpu.dma_semaphore, #tpu.memory_space<semaphore_mem>> -> memref<!tpu.dma_semaphore, #tpu.memory_space<semaphore_mem>>
    tpu.enqueue_dma source(%arg22 : memref<2x448x768xbf16, #tpu.memory_space<any>>) target(%arg26 : memref<2x448x768xbf16, #tpu.memory_space<vmem>>) target_semaphore(%1 : memref<!tpu.dma_semaphore, #tpu.memory_space<semaphore_mem>>)
    %c1_i32 = arith.constant 1 : i32
    %2 = tpu.memref_slice %arg29[%c1_i32] : memref<3x!tpu.dma_semaphore, #tpu.memory_space<semaphore_mem>> -> memref<1x!tpu.dma_semaphore, #tpu.memory_space<semaphore_mem>>
    %3 = tpu.memref_squeeze %2 : memref<1x!tpu.dma_semaphore, #tpu.memory_space<semaphore_mem>> -> memref<!tpu.dma_semaphore, #tpu.memory_space<semaphore_mem>>
    tpu.enqueue_dma source(%arg23 : memref<768x512xbf16, #tpu.memory_space<any>>) target(%arg27 : memref<768x512xbf16, #tpu.memory_space<vmem>>) target_semaphore(%3 : memref<!tpu.dma_semaphore, #tpu.memory_space<semaphore_mem>>)
    %c2_i32 = arith.constant 2 : i32
    %4 = tpu.memref_slice %arg29[%c2_i32] : memref<3x!tpu.dma_semaphore, #tpu.memory_space<semaphore_mem>> -> memref<1x!tpu.dma_semaphore, #tpu.memory_space<semaphore_mem>>
    %5 = tpu.memref_squeeze %4 : memref<1x!tpu.dma_semaphore, #tpu.memory_space<semaphore_mem>> -> memref<!tpu.dma_semaphore, #tpu.memory_space<semaphore_mem>>
    tpu.enqueue_dma source(%arg24 : memref<512x128xbf16, #tpu.memory_space<any>>) target(%arg28 : memref<512x128xbf16, #tpu.memory_space<vmem>>) target_semaphore(%5 : memref<!tpu.dma_semaphore, #tpu.memory_space<semaphore_mem>>)
    %c0 = arith.constant 0 : index
    %c0_0 = arith.constant 0 : index
    %6 = vector.load %arg2[%c0, %c0_0] : memref<32x32xf32, #tpu.memory_space<vmem>>, vector<32x32xf32>
    %c0_1 = arith.constant 0 : index
    %c0_2 = arith.constant 0 : index
    %7 = vector.load %arg1[%c0_1, %c0_2] : memref<32x256xf32, #tpu.memory_space<vmem>>, vector<32x256xf32>
    %8 = arith.truncf %7 : vector<32x256xf32> to vector<32x256xbf16>
    %c0_3 = arith.constant 0 : index
    %c0_4 = arith.constant 0 : index
    %c0_5 = arith.constant 0 : index
    %9 = vector.load %arg3[%c0_3, %c0_4, %c0_5] : memref<2x256x448xbf16, #tpu.memory_space<vmem>>, vector<1x256x448xbf16>
    %10 = vector.shape_cast %9 : vector<1x256x448xbf16> to vector<256x448xbf16>
    %cst = arith.constant dense<0.000000e+00> : vector<32x448xf32>
    %11 = tpu.matmul %8, %10, %cst {dimension_numbers = #tpu.dot_dimension_numbers<[1], [0], [0], [1], [0, 0, 1, 1], [], []>} : vector<32x256xbf16>, vector<256x448xbf16>, vector<32x448xf32> -> vector<32x448xf32>
    %c1 = arith.constant 1 : index
    %c0_6 = arith.constant 0 : index
    %c0_7 = arith.constant 0 : index
    %12 = vector.load %arg3[%c1, %c0_6, %c0_7] : memref<2x256x448xbf16, #tpu.memory_space<vmem>>, vector<1x256x448xbf16>
    %13 = vector.shape_cast %12 : vector<1x256x448xbf16> to vector<256x448xbf16>
    %cst_8 = arith.constant dense<0.000000e+00> : vector<32x448xf32>
    %14 = tpu.matmul %8, %13, %cst_8 {dimension_numbers = #tpu.dot_dimension_numbers<[1], [0], [0], [1], [0, 0, 1, 1], [], []>} : vector<32x256xbf16>, vector<256x448xbf16>, vector<32x448xf32> -> vector<32x448xf32>
    %15 = arith.truncf %11 : vector<32x448xf32> to vector<32x448xbf16>
    %c0_9 = arith.constant 0 : index
    %c0_10 = arith.constant 0 : index
    %c0_11 = arith.constant 0 : index
    %16 = vector.load %arg5[%c0_9, %c0_10, %c0_11] : memref<2x1x448xf32, #tpu.memory_space<vmem>>, vector<1x1x448xf32>
    %17 = vector.shape_cast %16 : vector<1x1x448xf32> to vector<1x448xf32>
    %18 = vector.broadcast %17 : vector<1x448xf32> to vector<32x448xf32>
    %19 = arith.mulf %11, %18 : vector<32x448xf32>
    %cst_12 = arith.constant dense<0.000000e+00> : vector<32xf32>
    %20 = vector.multi_reduction <add>, %19, %cst_12 [1] : vector<32x448xf32> to vector<32xf32>
    %21 = vector.shape_cast %20 : vector<32xf32> to vector<32x1xf32>
    %c0_13 = arith.constant 0 : index
    %c0_14 = arith.constant 0 : index
    %c0_15 = arith.constant 0 : index
    %22 = vector.load %arg4[%c0_13, %c0_14, %c0_15] : memref<2x1x448xf32, #tpu.memory_space<vmem>>, vector<1x1x448xf32>
    %23 = vector.shape_cast %22 : vector<1x1x448xf32> to vector<1x448xf32>
    %24 = arith.truncf %23 : vector<1x448xf32> to vector<1x448xbf16>
    "tpu.trace_start"() <{level = 10 : i32, message = "ic,jc->ij"}> : () -> ()
    %cst_16 = arith.constant dense<0.000000e+00> : vector<1x32xf32>
    %25 = tpu.matmul %24, %15, %cst_16 {dimension_numbers = #tpu.dot_dimension_numbers<[1], [1], [0], [0], [0, 0, 1, 0], [], []>} : vector<1x448xbf16>, vector<32x448xbf16>, vector<1x32xf32> -> vector<1x32xf32>
    "tpu.trace_stop"() : () -> ()
    %26 = vector.broadcast %21 : vector<32x1xf32> to vector<32x32xf32>
    %27 = vector.broadcast %25 : vector<1x32xf32> to vector<32x32xf32>
    %28 = arith.addf %26, %27 : vector<32x32xf32>
    %cst_17 = arith.constant 0.000000e+00 : f32
    %29 = vector.broadcast %cst_17 : f32 to vector<32x32xf32>
    %30 = arith.cmpf ogt, %28, %29 : vector<32x32xf32>
    %cst_18 = arith.constant 2.000000e-01 : f32
    %31 = vector.broadcast %cst_18 : f32 to vector<32x32xf32>
    %32 = arith.mulf %31, %28 : vector<32x32xf32>
    %33 = arith.select %30, %28, %32 : vector<32x32xi1>, vector<32x32xf32>
    %34 = arith.addf %33, %6 : vector<32x32xf32>
    %cst_19 = arith.constant dense<0xFF800000> : vector<32xf32>
    %35 = vector.multi_reduction <maximumf>, %34, %cst_19 [1] : vector<32x32xf32> to vector<32xf32>
    %36 = vector.shape_cast %35 : vector<32xf32> to vector<32x1xf32>
    %37 = vector.broadcast %36 : vector<32x1xf32> to vector<32x32xf32>
    %38 = arith.subf %34, %37 : vector<32x32xf32>
    %39 = math.exp %38 : vector<32x32xf32>
    %cst_20 = arith.constant dense<0.000000e+00> : vector<32xf32>
    %40 = vector.multi_reduction <add>, %39, %cst_20 [1] : vector<32x32xf32> to vector<32xf32>
    %41 = vector.shape_cast %40 : vector<32xf32> to vector<32x1xf32>
    %42 = tpu.reciprocal %41 {approx = true} : vector<32x1xf32> -> vector<32x1xf32>
    %43 = vector.broadcast %42 : vector<32x1xf32> to vector<32x32xf32>
    %44 = arith.mulf %39, %43 : vector<32x32xf32>
    %45 = arith.truncf %44 : vector<32x32xf32> to vector<32x32xbf16>
    %cst_21 = arith.constant dense<0.000000e+00> : vector<32x448xf32>
    %46 = tpu.matmul %45, %15, %cst_21 {dimension_numbers = #tpu.dot_dimension_numbers<[1], [0], [0], [1], [0, 0, 1, 1], [], []>} : vector<32x32xbf16>, vector<32x448xbf16>, vector<32x448xf32> -> vector<32x448xf32>
    %c0_22 = arith.constant 0 : index
    %c0_23 = arith.constant 0 : index
    %c0_24 = arith.constant 0 : index
    %47 = vector.load %arg6[%c0_22, %c0_23, %c0_24] : memref<2x1x448xf32, #tpu.memory_space<vmem>>, vector<1x1x448xf32>
    %48 = vector.shape_cast %47 : vector<1x1x448xf32> to vector<1x448xf32>
    %49 = vector.broadcast %48 : vector<1x448xf32> to vector<32x448xf32>
    %50 = arith.addf %46, %49 : vector<32x448xf32>
    %51 = arith.truncf %14 : vector<32x448xf32> to vector<32x448xbf16>
    %c1_25 = arith.constant 1 : index
    %c0_26 = arith.constant 0 : index
    %c0_27 = arith.constant 0 : index
    %52 = vector.load %arg5[%c1_25, %c0_26, %c0_27] : memref<2x1x448xf32, #tpu.memory_space<vmem>>, vector<1x1x448xf32>
    %53 = vector.shape_cast %52 : vector<1x1x448xf32> to vector<1x448xf32>
    %54 = vector.broadcast %53 : vector<1x448xf32> to vector<32x448xf32>
    %55 = arith.mulf %14, %54 : vector<32x448xf32>
    %cst_28 = arith.constant dense<0.000000e+00> : vector<32xf32>
    %56 = vector.multi_reduction <add>, %55, %cst_28 [1] : vector<32x448xf32> to vector<32xf32>
    %57 = vector.shape_cast %56 : vector<32xf32> to vector<32x1xf32>
    %c1_29 = arith.constant 1 : index
    %c0_30 = arith.constant 0 : index
    %c0_31 = arith.constant 0 : index
    %58 = vector.load %arg4[%c1_29, %c0_30, %c0_31] : memref<2x1x448xf32, #tpu.memory_space<vmem>>, vector<1x1x448xf32>
    %59 = vector.shape_cast %58 : vector<1x1x448xf32> to vector<1x448xf32>
    %60 = arith.truncf %59 : vector<1x448xf32> to vector<1x448xbf16>
    "tpu.trace_start"() <{level = 10 : i32, message = "ic,jc->ij"}> : () -> ()
    %cst_32 = arith.constant dense<0.000000e+00> : vector<1x32xf32>
    %61 = tpu.matmul %60, %51, %cst_32 {dimension_numbers = #tpu.dot_dimension_numbers<[1], [1], [0], [0], [0, 0, 1, 0], [], []>} : vector<1x448xbf16>, vector<32x448xbf16>, vector<1x32xf32> -> vector<1x32xf32>
    "tpu.trace_stop"() : () -> ()
    %62 = vector.broadcast %57 : vector<32x1xf32> to vector<32x32xf32>
    %63 = vector.broadcast %61 : vector<1x32xf32> to vector<32x32xf32>
    %64 = arith.addf %62, %63 : vector<32x32xf32>
    %cst_33 = arith.constant 0.000000e+00 : f32
    %65 = vector.broadcast %cst_33 : f32 to vector<32x32xf32>
    %66 = arith.cmpf ogt, %64, %65 : vector<32x32xf32>
    %cst_34 = arith.constant 2.000000e-01 : f32
    %67 = vector.broadcast %cst_34 : f32 to vector<32x32xf32>
    %68 = arith.mulf %67, %64 : vector<32x32xf32>
    %69 = arith.select %66, %64, %68 : vector<32x32xi1>, vector<32x32xf32>
    %70 = arith.addf %69, %6 : vector<32x32xf32>
    %cst_35 = arith.constant dense<0xFF800000> : vector<32xf32>
    %71 = vector.multi_reduction <maximumf>, %70, %cst_35 [1] : vector<32x32xf32> to vector<32xf32>
    %72 = vector.shape_cast %71 : vector<32xf32> to vector<32x1xf32>
    %73 = vector.broadcast %72 : vector<32x1xf32> to vector<32x32xf32>
    %74 = arith.subf %70, %73 : vector<32x32xf32>
    %75 = math.exp %74 : vector<32x32xf32>
    %cst_36 = arith.constant dense<0.000000e+00> : vector<32xf32>
    %76 = vector.multi_reduction <add>, %75, %cst_36 [1] : vector<32x32xf32> to vector<32xf32>
    %77 = vector.shape_cast %76 : vector<32xf32> to vector<32x1xf32>
    %78 = tpu.reciprocal %77 {approx = true} : vector<32x1xf32> -> vector<32x1xf32>
    %79 = vector.broadcast %78 : vector<32x1xf32> to vector<32x32xf32>
    %80 = arith.mulf %75, %79 : vector<32x32xf32>
    %81 = arith.truncf %80 : vector<32x32xf32> to vector<32x32xbf16>
    %cst_37 = arith.constant dense<0.000000e+00> : vector<32x448xf32>
    %82 = tpu.matmul %81, %51, %cst_37 {dimension_numbers = #tpu.dot_dimension_numbers<[1], [0], [0], [1], [0, 0, 1, 1], [], []>} : vector<32x32xbf16>, vector<32x448xbf16>, vector<32x448xf32> -> vector<32x448xf32>
    %c1_38 = arith.constant 1 : index
    %c0_39 = arith.constant 0 : index
    %c0_40 = arith.constant 0 : index
    %83 = vector.load %arg6[%c1_38, %c0_39, %c0_40] : memref<2x1x448xf32, #tpu.memory_space<vmem>>, vector<1x1x448xf32>
    %84 = vector.shape_cast %83 : vector<1x1x448xf32> to vector<1x448xf32>
    %85 = vector.broadcast %84 : vector<1x448xf32> to vector<32x448xf32>
    %86 = arith.addf %82, %85 : vector<32x448xf32>
    %cst_41 = arith.constant 0.000000e+00 : f32
    %87 = vector.broadcast %cst_41 : f32 to vector<32x448xf32>
    %88 = arith.maximumf %50, %87 : vector<32x448xf32>
    %cst_42 = arith.constant 0.000000e+00 : f32
    %89 = vector.broadcast %cst_42 : f32 to vector<32x448xf32>
    %90 = arith.maximumf %86, %89 : vector<32x448xf32>
    %cst_43 = arith.constant dense<0.000000e+00> : vector<32xf32>
    %91 = vector.multi_reduction <add>, %88, %cst_43 [1] : vector<32x448xf32> to vector<32xf32>
    %92 = vector.shape_cast %91 : vector<32xf32> to vector<32x1xf32>
    %cst_44 = arith.constant dense<0.000000e+00> : vector<32xf32>
    %93 = vector.multi_reduction <add>, %90, %cst_44 [1] : vector<32x448xf32> to vector<32xf32>
    %94 = vector.shape_cast %93 : vector<32xf32> to vector<32x1xf32>
    %95 = arith.addf %92, %94 : vector<32x1xf32>
    %cst_45 = arith.constant 0.00111607148 : f32
    %96 = vector.broadcast %cst_45 : f32 to vector<32x1xf32>
    %97 = arith.mulf %95, %96 : vector<32x1xf32>
    %98 = vector.broadcast %97 : vector<32x1xf32> to vector<32x448xf32>
    %99 = arith.subf %88, %98 : vector<32x448xf32>
    %100 = arith.mulf %99, %99 : vector<32x448xf32>
    %cst_46 = arith.constant dense<0.000000e+00> : vector<32xf32>
    %101 = vector.multi_reduction <add>, %100, %cst_46 [1] : vector<32x448xf32> to vector<32xf32>
    %102 = vector.shape_cast %101 : vector<32xf32> to vector<32x1xf32>
    %103 = vector.broadcast %97 : vector<32x1xf32> to vector<32x448xf32>
    %104 = arith.subf %90, %103 : vector<32x448xf32>
    %105 = arith.mulf %104, %104 : vector<32x448xf32>
    %cst_47 = arith.constant dense<0.000000e+00> : vector<32xf32>
    %106 = vector.multi_reduction <add>, %105, %cst_47 [1] : vector<32x448xf32> to vector<32xf32>
    %107 = vector.shape_cast %106 : vector<32xf32> to vector<32x1xf32>
    %108 = arith.addf %102, %107 : vector<32x1xf32>
    %cst_48 = arith.constant 0.00111607148 : f32
    %109 = vector.broadcast %cst_48 : f32 to vector<32x1xf32>
    %110 = arith.mulf %108, %109 : vector<32x1xf32>
    %cst_49 = arith.constant 9.99999974E-6 : f32
    %111 = vector.broadcast %cst_49 : f32 to vector<32x1xf32>
    %112 = arith.addf %110, %111 : vector<32x1xf32>
    %113 = math.rsqrt %112 : vector<32x1xf32>
    %114 = vector.broadcast %97 : vector<32x1xf32> to vector<32x448xf32>
    %115 = arith.subf %88, %114 : vector<32x448xf32>
    %116 = vector.broadcast %113 : vector<32x1xf32> to vector<32x448xf32>
    %117 = arith.mulf %115, %116 : vector<32x448xf32>
    %c0_50 = arith.constant 0 : index
    %c0_51 = arith.constant 0 : index
    %c0_52 = arith.constant 0 : index
    %118 = vector.load %arg7[%c0_50, %c0_51, %c0_52] : memref<2x1x448xf32, #tpu.memory_space<vmem>>, vector<1x1x448xf32>
    %119 = vector.shape_cast %118 : vector<1x1x448xf32> to vector<1x448xf32>
    %120 = vector.broadcast %119 : vector<1x448xf32> to vector<32x448xf32>
    %121 = arith.mulf %117, %120 : vector<32x448xf32>
    %c0_53 = arith.constant 0 : index
    %c0_54 = arith.constant 0 : index
    %c0_55 = arith.constant 0 : index
    %122 = vector.load %arg8[%c0_53, %c0_54, %c0_55] : memref<2x1x448xf32, #tpu.memory_space<vmem>>, vector<1x1x448xf32>
    %123 = vector.shape_cast %122 : vector<1x1x448xf32> to vector<1x448xf32>
    %124 = vector.broadcast %123 : vector<1x448xf32> to vector<32x448xf32>
    %125 = arith.addf %121, %124 : vector<32x448xf32>
    %126 = vector.broadcast %97 : vector<32x1xf32> to vector<32x448xf32>
    %127 = arith.subf %90, %126 : vector<32x448xf32>
    %128 = vector.broadcast %113 : vector<32x1xf32> to vector<32x448xf32>
    %129 = arith.mulf %127, %128 : vector<32x448xf32>
    %c1_56 = arith.constant 1 : index
    %c0_57 = arith.constant 0 : index
    %c0_58 = arith.constant 0 : index
    %130 = vector.load %arg7[%c1_56, %c0_57, %c0_58] : memref<2x1x448xf32, #tpu.memory_space<vmem>>, vector<1x1x448xf32>
    %131 = vector.shape_cast %130 : vector<1x1x448xf32> to vector<1x448xf32>
    %132 = vector.broadcast %131 : vector<1x448xf32> to vector<32x448xf32>
    %133 = arith.mulf %129, %132 : vector<32x448xf32>
    %c1_59 = arith.constant 1 : index
    %c0_60 = arith.constant 0 : index
    %c0_61 = arith.constant 0 : index
    %134 = vector.load %arg8[%c1_59, %c0_60, %c0_61] : memref<2x1x448xf32, #tpu.memory_space<vmem>>, vector<1x1x448xf32>
    %135 = vector.shape_cast %134 : vector<1x1x448xf32> to vector<1x448xf32>
    %136 = vector.broadcast %135 : vector<1x448xf32> to vector<32x448xf32>
    %137 = arith.addf %133, %136 : vector<32x448xf32>
    %c0_i32_62 = arith.constant 0 : i32
    %138 = tpu.memref_slice %arg29[%c0_i32_62] : memref<3x!tpu.dma_semaphore, #tpu.memory_space<semaphore_mem>> -> memref<1x!tpu.dma_semaphore, #tpu.memory_space<semaphore_mem>>
    %139 = tpu.memref_squeeze %138 : memref<1x!tpu.dma_semaphore, #tpu.memory_space<semaphore_mem>> -> memref<!tpu.dma_semaphore, #tpu.memory_space<semaphore_mem>>
    tpu.wait_dma2 semaphore(%139 : memref<!tpu.dma_semaphore, #tpu.memory_space<semaphore_mem>>) src(%arg22 : memref<2x448x768xbf16, #tpu.memory_space<any>>) dst(%arg26 : memref<2x448x768xbf16, #tpu.memory_space<vmem>>)
    %140 = arith.truncf %125 : vector<32x448xf32> to vector<32x448xbf16>
    %141 = arith.truncf %137 : vector<32x448xf32> to vector<32x448xbf16>
    %c0_63 = arith.constant 0 : index
    %c0_64 = arith.constant 0 : index
    %c0_65 = arith.constant 0 : index
    %142 = vector.load %arg26[%c0_63, %c0_64, %c0_65] : memref<2x448x768xbf16, #tpu.memory_space<vmem>>, vector<1x448x768xbf16>
    %143 = vector.shape_cast %142 : vector<1x448x768xbf16> to vector<448x768xbf16>
    %cst_66 = arith.constant dense<0.000000e+00> : vector<32x768xf32>
    %144 = tpu.matmul %140, %143, %cst_66 {dimension_numbers = #tpu.dot_dimension_numbers<[1], [0], [0], [1], [0, 0, 1, 1], [], []>} : vector<32x448xbf16>, vector<448x768xbf16>, vector<32x768xf32> -> vector<32x768xf32>
    %c1_67 = arith.constant 1 : index
    %c0_68 = arith.constant 0 : index
    %c0_69 = arith.constant 0 : index
    %145 = vector.load %arg26[%c1_67, %c0_68, %c0_69] : memref<2x448x768xbf16, #tpu.memory_space<vmem>>, vector<1x448x768xbf16>
    %146 = vector.shape_cast %145 : vector<1x448x768xbf16> to vector<448x768xbf16>
    %cst_70 = arith.constant dense<0.000000e+00> : vector<32x768xf32>
    %147 = tpu.matmul %141, %146, %cst_70 {dimension_numbers = #tpu.dot_dimension_numbers<[1], [0], [0], [1], [0, 0, 1, 1], [], []>} : vector<32x448xbf16>, vector<448x768xbf16>, vector<32x768xf32> -> vector<32x768xf32>
    %148 = arith.addf %144, %147 : vector<32x768xf32>
    %149 = vector.extract_strided_slice %148 {offsets = [0, 0], sizes = [32, 384], strides = [1, 1]} : vector<32x768xf32> to vector<32x384xf32>
    %150 = vector.extract_strided_slice %148 {offsets = [0, 384], sizes = [32, 384], strides = [1, 1]} : vector<32x768xf32> to vector<32x384xf32>
    %151 = arith.truncf %149 : vector<32x384xf32> to vector<32x384xbf16>
    %c0_71 = arith.constant 0 : index
    %c0_72 = arith.constant 0 : index
    %c0_73 = arith.constant 0 : index
    %152 = vector.load %arg10[%c0_71, %c0_72, %c0_73] : memref<2x1x384xf32, #tpu.memory_space<vmem>>, vector<1x1x384xf32>
    %153 = vector.shape_cast %152 : vector<1x1x384xf32> to vector<1x384xf32>
    %154 = vector.broadcast %153 : vector<1x384xf32> to vector<32x384xf32>
    %155 = arith.mulf %149, %154 : vector<32x384xf32>
    %cst_74 = arith.constant dense<0.000000e+00> : vector<32xf32>
    %156 = vector.multi_reduction <add>, %155, %cst_74 [1] : vector<32x384xf32> to vector<32xf32>
    %157 = vector.shape_cast %156 : vector<32xf32> to vector<32x1xf32>
    %c0_75 = arith.constant 0 : index
    %c0_76 = arith.constant 0 : index
    %c0_77 = arith.constant 0 : index
    %158 = vector.load %arg9[%c0_75, %c0_76, %c0_77] : memref<2x1x384xf32, #tpu.memory_space<vmem>>, vector<1x1x384xf32>
    %159 = vector.shape_cast %158 : vector<1x1x384xf32> to vector<1x384xf32>
    %160 = arith.truncf %159 : vector<1x384xf32> to vector<1x384xbf16>
    "tpu.trace_start"() <{level = 10 : i32, message = "ic,jc->ij"}> : () -> ()
    %cst_78 = arith.constant dense<0.000000e+00> : vector<1x32xf32>
    %161 = tpu.matmul %160, %151, %cst_78 {dimension_numbers = #tpu.dot_dimension_numbers<[1], [1], [0], [0], [0, 0, 1, 0], [], []>} : vector<1x384xbf16>, vector<32x384xbf16>, vector<1x32xf32> -> vector<1x32xf32>
    "tpu.trace_stop"() : () -> ()
    %162 = vector.broadcast %157 : vector<32x1xf32> to vector<32x32xf32>
    %163 = vector.broadcast %161 : vector<1x32xf32> to vector<32x32xf32>
    %164 = arith.addf %162, %163 : vector<32x32xf32>
    %cst_79 = arith.constant 0.000000e+00 : f32
    %165 = vector.broadcast %cst_79 : f32 to vector<32x32xf32>
    %166 = arith.cmpf ogt, %164, %165 : vector<32x32xf32>
    %cst_80 = arith.constant 2.000000e-01 : f32
    %167 = vector.broadcast %cst_80 : f32 to vector<32x32xf32>
    %168 = arith.mulf %167, %164 : vector<32x32xf32>
    %169 = arith.select %166, %164, %168 : vector<32x32xi1>, vector<32x32xf32>
    %170 = arith.addf %169, %6 : vector<32x32xf32>
    %cst_81 = arith.constant dense<0xFF800000> : vector<32xf32>
    %171 = vector.multi_reduction <maximumf>, %170, %cst_81 [1] : vector<32x32xf32> to vector<32xf32>
    %172 = vector.shape_cast %171 : vector<32xf32> to vector<32x1xf32>
    %173 = vector.broadcast %172 : vector<32x1xf32> to vector<32x32xf32>
    %174 = arith.subf %170, %173 : vector<32x32xf32>
    %175 = math.exp %174 : vector<32x32xf32>
    %cst_82 = arith.constant dense<0.000000e+00> : vector<32xf32>
    %176 = vector.multi_reduction <add>, %175, %cst_82 [1] : vector<32x32xf32> to vector<32xf32>
    %177 = vector.shape_cast %176 : vector<32xf32> to vector<32x1xf32>
    %178 = tpu.reciprocal %177 {approx = true} : vector<32x1xf32> -> vector<32x1xf32>
    %179 = vector.broadcast %178 : vector<32x1xf32> to vector<32x32xf32>
    %180 = arith.mulf %175, %179 : vector<32x32xf32>
    %181 = arith.truncf %180 : vector<32x32xf32> to vector<32x32xbf16>
    %cst_83 = arith.constant dense<0.000000e+00> : vector<32x384xf32>
    %182 = tpu.matmul %181, %151, %cst_83 {dimension_numbers = #tpu.dot_dimension_numbers<[1], [0], [0], [1], [0, 0, 1, 1], [], []>} : vector<32x32xbf16>, vector<32x384xbf16>, vector<32x384xf32> -> vector<32x384xf32>
    %c0_84 = arith.constant 0 : index
    %c0_85 = arith.constant 0 : index
    %c0_86 = arith.constant 0 : index
    %183 = vector.load %arg11[%c0_84, %c0_85, %c0_86] : memref<2x1x384xf32, #tpu.memory_space<vmem>>, vector<1x1x384xf32>
    %184 = vector.shape_cast %183 : vector<1x1x384xf32> to vector<1x384xf32>
    %185 = vector.broadcast %184 : vector<1x384xf32> to vector<32x384xf32>
    %186 = arith.addf %182, %185 : vector<32x384xf32>
    %187 = arith.truncf %150 : vector<32x384xf32> to vector<32x384xbf16>
    %c1_87 = arith.constant 1 : index
    %c0_88 = arith.constant 0 : index
    %c0_89 = arith.constant 0 : index
    %188 = vector.load %arg10[%c1_87, %c0_88, %c0_89] : memref<2x1x384xf32, #tpu.memory_space<vmem>>, vector<1x1x384xf32>
    %189 = vector.shape_cast %188 : vector<1x1x384xf32> to vector<1x384xf32>
    %190 = vector.broadcast %189 : vector<1x384xf32> to vector<32x384xf32>
    %191 = arith.mulf %150, %190 : vector<32x384xf32>
    %cst_90 = arith.constant dense<0.000000e+00> : vector<32xf32>
    %192 = vector.multi_reduction <add>, %191, %cst_90 [1] : vector<32x384xf32> to vector<32xf32>
    %193 = vector.shape_cast %192 : vector<32xf32> to vector<32x1xf32>
    %c1_91 = arith.constant 1 : index
    %c0_92 = arith.constant 0 : index
    %c0_93 = arith.constant 0 : index
    %194 = vector.load %arg9[%c1_91, %c0_92, %c0_93] : memref<2x1x384xf32, #tpu.memory_space<vmem>>, vector<1x1x384xf32>
    %195 = vector.shape_cast %194 : vector<1x1x384xf32> to vector<1x384xf32>
    %196 = arith.truncf %195 : vector<1x384xf32> to vector<1x384xbf16>
    "tpu.trace_start"() <{level = 10 : i32, message = "ic,jc->ij"}> : () -> ()
    %cst_94 = arith.constant dense<0.000000e+00> : vector<1x32xf32>
    %197 = tpu.matmul %196, %187, %cst_94 {dimension_numbers = #tpu.dot_dimension_numbers<[1], [1], [0], [0], [0, 0, 1, 0], [], []>} : vector<1x384xbf16>, vector<32x384xbf16>, vector<1x32xf32> -> vector<1x32xf32>
    "tpu.trace_stop"() : () -> ()
    %198 = vector.broadcast %193 : vector<32x1xf32> to vector<32x32xf32>
    %199 = vector.broadcast %197 : vector<1x32xf32> to vector<32x32xf32>
    %200 = arith.addf %198, %199 : vector<32x32xf32>
    %cst_95 = arith.constant 0.000000e+00 : f32
    %201 = vector.broadcast %cst_95 : f32 to vector<32x32xf32>
    %202 = arith.cmpf ogt, %200, %201 : vector<32x32xf32>
    %cst_96 = arith.constant 2.000000e-01 : f32
    %203 = vector.broadcast %cst_96 : f32 to vector<32x32xf32>
    %204 = arith.mulf %203, %200 : vector<32x32xf32>
    %205 = arith.select %202, %200, %204 : vector<32x32xi1>, vector<32x32xf32>
    %206 = arith.addf %205, %6 : vector<32x32xf32>
    %cst_97 = arith.constant dense<0xFF800000> : vector<32xf32>
    %207 = vector.multi_reduction <maximumf>, %206, %cst_97 [1] : vector<32x32xf32> to vector<32xf32>
    %208 = vector.shape_cast %207 : vector<32xf32> to vector<32x1xf32>
    %209 = vector.broadcast %208 : vector<32x1xf32> to vector<32x32xf32>
    %210 = arith.subf %206, %209 : vector<32x32xf32>
    %211 = math.exp %210 : vector<32x32xf32>
    %cst_98 = arith.constant dense<0.000000e+00> : vector<32xf32>
    %212 = vector.multi_reduction <add>, %211, %cst_98 [1] : vector<32x32xf32> to vector<32xf32>
    %213 = vector.shape_cast %212 : vector<32xf32> to vector<32x1xf32>
    %214 = tpu.reciprocal %213 {approx = true} : vector<32x1xf32> -> vector<32x1xf32>
    %215 = vector.broadcast %214 : vector<32x1xf32> to vector<32x32xf32>
    %216 = arith.mulf %211, %215 : vector<32x32xf32>
    %217 = arith.truncf %216 : vector<32x32xf32> to vector<32x32xbf16>
    %cst_99 = arith.constant dense<0.000000e+00> : vector<32x384xf32>
    %218 = tpu.matmul %217, %187, %cst_99 {dimension_numbers = #tpu.dot_dimension_numbers<[1], [0], [0], [1], [0, 0, 1, 1], [], []>} : vector<32x32xbf16>, vector<32x384xbf16>, vector<32x384xf32> -> vector<32x384xf32>
    %c1_100 = arith.constant 1 : index
    %c0_101 = arith.constant 0 : index
    %c0_102 = arith.constant 0 : index
    %219 = vector.load %arg11[%c1_100, %c0_101, %c0_102] : memref<2x1x384xf32, #tpu.memory_space<vmem>>, vector<1x1x384xf32>
    %220 = vector.shape_cast %219 : vector<1x1x384xf32> to vector<1x384xf32>
    %221 = vector.broadcast %220 : vector<1x384xf32> to vector<32x384xf32>
    %222 = arith.addf %218, %221 : vector<32x384xf32>
    %cst_103 = arith.constant 0.000000e+00 : f32
    %223 = vector.broadcast %cst_103 : f32 to vector<32x384xf32>
    %224 = arith.maximumf %186, %223 : vector<32x384xf32>
    %cst_104 = arith.constant 0.000000e+00 : f32
    %225 = vector.broadcast %cst_104 : f32 to vector<32x384xf32>
    %226 = arith.maximumf %222, %225 : vector<32x384xf32>
    %cst_105 = arith.constant dense<0.000000e+00> : vector<32xf32>
    %227 = vector.multi_reduction <add>, %224, %cst_105 [1] : vector<32x384xf32> to vector<32xf32>
    %228 = vector.shape_cast %227 : vector<32xf32> to vector<32x1xf32>
    %cst_106 = arith.constant dense<0.000000e+00> : vector<32xf32>
    %229 = vector.multi_reduction <add>, %226, %cst_106 [1] : vector<32x384xf32> to vector<32xf32>
    %230 = vector.shape_cast %229 : vector<32xf32> to vector<32x1xf32>
    %231 = arith.addf %228, %230 : vector<32x1xf32>
    %cst_107 = arith.constant 0.00130208337 : f32
    %232 = vector.broadcast %cst_107 : f32 to vector<32x1xf32>
    %233 = arith.mulf %231, %232 : vector<32x1xf32>
    %234 = vector.broadcast %233 : vector<32x1xf32> to vector<32x384xf32>
    %235 = arith.subf %224, %234 : vector<32x384xf32>
    %236 = arith.mulf %235, %235 : vector<32x384xf32>
    %cst_108 = arith.constant dense<0.000000e+00> : vector<32xf32>
    %237 = vector.multi_reduction <add>, %236, %cst_108 [1] : vector<32x384xf32> to vector<32xf32>
    %238 = vector.shape_cast %237 : vector<32xf32> to vector<32x1xf32>
    %239 = vector.broadcast %233 : vector<32x1xf32> to vector<32x384xf32>
    %240 = arith.subf %226, %239 : vector<32x384xf32>
    %241 = arith.mulf %240, %240 : vector<32x384xf32>
    %cst_109 = arith.constant dense<0.000000e+00> : vector<32xf32>
    %242 = vector.multi_reduction <add>, %241, %cst_109 [1] : vector<32x384xf32> to vector<32xf32>
    %243 = vector.shape_cast %242 : vector<32xf32> to vector<32x1xf32>
    %244 = arith.addf %238, %243 : vector<32x1xf32>
    %cst_110 = arith.constant 0.00130208337 : f32
    %245 = vector.broadcast %cst_110 : f32 to vector<32x1xf32>
    %246 = arith.mulf %244, %245 : vector<32x1xf32>
    %cst_111 = arith.constant 9.99999974E-6 : f32
    %247 = vector.broadcast %cst_111 : f32 to vector<32x1xf32>
    %248 = arith.addf %246, %247 : vector<32x1xf32>
    %249 = math.rsqrt %248 : vector<32x1xf32>
    %250 = vector.broadcast %233 : vector<32x1xf32> to vector<32x384xf32>
    %251 = arith.subf %224, %250 : vector<32x384xf32>
    %252 = vector.broadcast %249 : vector<32x1xf32> to vector<32x384xf32>
    %253 = arith.mulf %251, %252 : vector<32x384xf32>
    %c0_112 = arith.constant 0 : index
    %c0_113 = arith.constant 0 : index
    %c0_114 = arith.constant 0 : index
    %254 = vector.load %arg12[%c0_112, %c0_113, %c0_114] : memref<2x1x384xf32, #tpu.memory_space<vmem>>, vector<1x1x384xf32>
    %255 = vector.shape_cast %254 : vector<1x1x384xf32> to vector<1x384xf32>
    %256 = vector.broadcast %255 : vector<1x384xf32> to vector<32x384xf32>
    %257 = arith.mulf %253, %256 : vector<32x384xf32>
    %c0_115 = arith.constant 0 : index
    %c0_116 = arith.constant 0 : index
    %c0_117 = arith.constant 0 : index
    %258 = vector.load %arg13[%c0_115, %c0_116, %c0_117] : memref<2x1x384xf32, #tpu.memory_space<vmem>>, vector<1x1x384xf32>
    %259 = vector.shape_cast %258 : vector<1x1x384xf32> to vector<1x384xf32>
    %260 = vector.broadcast %259 : vector<1x384xf32> to vector<32x384xf32>
    %261 = arith.addf %257, %260 : vector<32x384xf32>
    %262 = vector.broadcast %233 : vector<32x1xf32> to vector<32x384xf32>
    %263 = arith.subf %226, %262 : vector<32x384xf32>
    %264 = vector.broadcast %249 : vector<32x1xf32> to vector<32x384xf32>
    %265 = arith.mulf %263, %264 : vector<32x384xf32>
    %c1_118 = arith.constant 1 : index
    %c0_119 = arith.constant 0 : index
    %c0_120 = arith.constant 0 : index
    %266 = vector.load %arg12[%c1_118, %c0_119, %c0_120] : memref<2x1x384xf32, #tpu.memory_space<vmem>>, vector<1x1x384xf32>
    %267 = vector.shape_cast %266 : vector<1x1x384xf32> to vector<1x384xf32>
    %268 = vector.broadcast %267 : vector<1x384xf32> to vector<32x384xf32>
    %269 = arith.mulf %265, %268 : vector<32x384xf32>
    %c1_121 = arith.constant 1 : index
    %c0_122 = arith.constant 0 : index
    %c0_123 = arith.constant 0 : index
    %270 = vector.load %arg13[%c1_121, %c0_122, %c0_123] : memref<2x1x384xf32, #tpu.memory_space<vmem>>, vector<1x1x384xf32>
    %271 = vector.shape_cast %270 : vector<1x1x384xf32> to vector<1x384xf32>
    %272 = vector.broadcast %271 : vector<1x384xf32> to vector<32x384xf32>
    %273 = arith.addf %269, %272 : vector<32x384xf32>
    %c1_i32_124 = arith.constant 1 : i32
    %274 = tpu.memref_slice %arg29[%c1_i32_124] : memref<3x!tpu.dma_semaphore, #tpu.memory_space<semaphore_mem>> -> memref<1x!tpu.dma_semaphore, #tpu.memory_space<semaphore_mem>>
    %275 = tpu.memref_squeeze %274 : memref<1x!tpu.dma_semaphore, #tpu.memory_space<semaphore_mem>> -> memref<!tpu.dma_semaphore, #tpu.memory_space<semaphore_mem>>
    tpu.wait_dma2 semaphore(%275 : memref<!tpu.dma_semaphore, #tpu.memory_space<semaphore_mem>>) src(%arg23 : memref<768x512xbf16, #tpu.memory_space<any>>) dst(%arg27 : memref<768x512xbf16, #tpu.memory_space<vmem>>)
    %276 = tpu.concatenate %261, %273 in 1 : vector<32x384xf32>, vector<32x384xf32> -> vector<32x768xf32>
    %277 = arith.truncf %276 : vector<32x768xf32> to vector<32x768xbf16>
    %c0_125 = arith.constant 0 : index
    %c0_126 = arith.constant 0 : index
    %278 = vector.load %arg27[%c0_125, %c0_126] : memref<768x512xbf16, #tpu.memory_space<vmem>>, vector<768x512xbf16>
    %cst_127 = arith.constant dense<0.000000e+00> : vector<32x512xf32>
    %279 = tpu.matmul %277, %278, %cst_127 {dimension_numbers = #tpu.dot_dimension_numbers<[1], [0], [0], [1], [0, 0, 1, 1], [], []>} : vector<32x768xbf16>, vector<768x512xbf16>, vector<32x512xf32> -> vector<32x512xf32>
    %280 = vector.extract_strided_slice %279 {offsets = [0, 0], sizes = [32, 256], strides = [1, 1]} : vector<32x512xf32> to vector<32x256xf32>
    %281 = vector.extract_strided_slice %279 {offsets = [0, 256], sizes = [32, 256], strides = [1, 1]} : vector<32x512xf32> to vector<32x256xf32>
    %282 = arith.truncf %280 : vector<32x256xf32> to vector<32x256xbf16>
    %c0_128 = arith.constant 0 : index
    %c0_129 = arith.constant 0 : index
    %c0_130 = arith.constant 0 : index
    %283 = vector.load %arg15[%c0_128, %c0_129, %c0_130] : memref<2x1x256xf32, #tpu.memory_space<vmem>>, vector<1x1x256xf32>
    %284 = vector.shape_cast %283 : vector<1x1x256xf32> to vector<1x256xf32>
    %285 = vector.broadcast %284 : vector<1x256xf32> to vector<32x256xf32>
    %286 = arith.mulf %280, %285 : vector<32x256xf32>
    %cst_131 = arith.constant dense<0.000000e+00> : vector<32xf32>
    %287 = vector.multi_reduction <add>, %286, %cst_131 [1] : vector<32x256xf32> to vector<32xf32>
    %288 = vector.shape_cast %287 : vector<32xf32> to vector<32x1xf32>
    %c0_132 = arith.constant 0 : index
    %c0_133 = arith.constant 0 : index
    %c0_134 = arith.constant 0 : index
    %289 = vector.load %arg14[%c0_132, %c0_133, %c0_134] : memref<2x1x256xf32, #tpu.memory_space<vmem>>, vector<1x1x256xf32>
    %290 = vector.shape_cast %289 : vector<1x1x256xf32> to vector<1x256xf32>
    %291 = arith.truncf %290 : vector<1x256xf32> to vector<1x256xbf16>
    "tpu.trace_start"() <{level = 10 : i32, message = "ic,jc->ij"}> : () -> ()
    %cst_135 = arith.constant dense<0.000000e+00> : vector<1x32xf32>
    %292 = tpu.matmul %291, %282, %cst_135 {dimension_numbers = #tpu.dot_dimension_numbers<[1], [1], [0], [0], [0, 0, 1, 0], [], []>} : vector<1x256xbf16>, vector<32x256xbf16>, vector<1x32xf32> -> vector<1x32xf32>
    "tpu.trace_stop"() : () -> ()
    %293 = vector.broadcast %288 : vector<32x1xf32> to vector<32x32xf32>
    %294 = vector.broadcast %292 : vector<1x32xf32> to vector<32x32xf32>
    %295 = arith.addf %293, %294 : vector<32x32xf32>
    %cst_136 = arith.constant 0.000000e+00 : f32
    %296 = vector.broadcast %cst_136 : f32 to vector<32x32xf32>
    %297 = arith.cmpf ogt, %295, %296 : vector<32x32xf32>
    %cst_137 = arith.constant 2.000000e-01 : f32
    %298 = vector.broadcast %cst_137 : f32 to vector<32x32xf32>
    %299 = arith.mulf %298, %295 : vector<32x32xf32>
    %300 = arith.select %297, %295, %299 : vector<32x32xi1>, vector<32x32xf32>
    %301 = arith.addf %300, %6 : vector<32x32xf32>
    %cst_138 = arith.constant dense<0xFF800000> : vector<32xf32>
    %302 = vector.multi_reduction <maximumf>, %301, %cst_138 [1] : vector<32x32xf32> to vector<32xf32>
    %303 = vector.shape_cast %302 : vector<32xf32> to vector<32x1xf32>
    %304 = vector.broadcast %303 : vector<32x1xf32> to vector<32x32xf32>
    %305 = arith.subf %301, %304 : vector<32x32xf32>
    %306 = math.exp %305 : vector<32x32xf32>
    %cst_139 = arith.constant dense<0.000000e+00> : vector<32xf32>
    %307 = vector.multi_reduction <add>, %306, %cst_139 [1] : vector<32x32xf32> to vector<32xf32>
    %308 = vector.shape_cast %307 : vector<32xf32> to vector<32x1xf32>
    %309 = tpu.reciprocal %308 {approx = true} : vector<32x1xf32> -> vector<32x1xf32>
    %310 = vector.broadcast %309 : vector<32x1xf32> to vector<32x32xf32>
    %311 = arith.mulf %306, %310 : vector<32x32xf32>
    %312 = arith.truncf %311 : vector<32x32xf32> to vector<32x32xbf16>
    %cst_140 = arith.constant dense<0.000000e+00> : vector<32x256xf32>
    %313 = tpu.matmul %312, %282, %cst_140 {dimension_numbers = #tpu.dot_dimension_numbers<[1], [0], [0], [1], [0, 0, 1, 1], [], []>} : vector<32x32xbf16>, vector<32x256xbf16>, vector<32x256xf32> -> vector<32x256xf32>
    %c0_141 = arith.constant 0 : index
    %c0_142 = arith.constant 0 : index
    %c0_143 = arith.constant 0 : index
    %314 = vector.load %arg16[%c0_141, %c0_142, %c0_143] : memref<2x1x256xf32, #tpu.memory_space<vmem>>, vector<1x1x256xf32>
    %315 = vector.shape_cast %314 : vector<1x1x256xf32> to vector<1x256xf32>
    %316 = vector.broadcast %315 : vector<1x256xf32> to vector<32x256xf32>
    %317 = arith.addf %313, %316 : vector<32x256xf32>
    %318 = arith.truncf %281 : vector<32x256xf32> to vector<32x256xbf16>
    %c1_144 = arith.constant 1 : index
    %c0_145 = arith.constant 0 : index
    %c0_146 = arith.constant 0 : index
    %319 = vector.load %arg15[%c1_144, %c0_145, %c0_146] : memref<2x1x256xf32, #tpu.memory_space<vmem>>, vector<1x1x256xf32>
    %320 = vector.shape_cast %319 : vector<1x1x256xf32> to vector<1x256xf32>
    %321 = vector.broadcast %320 : vector<1x256xf32> to vector<32x256xf32>
    %322 = arith.mulf %281, %321 : vector<32x256xf32>
    %cst_147 = arith.constant dense<0.000000e+00> : vector<32xf32>
    %323 = vector.multi_reduction <add>, %322, %cst_147 [1] : vector<32x256xf32> to vector<32xf32>
    %324 = vector.shape_cast %323 : vector<32xf32> to vector<32x1xf32>
    %c1_148 = arith.constant 1 : index
    %c0_149 = arith.constant 0 : index
    %c0_150 = arith.constant 0 : index
    %325 = vector.load %arg14[%c1_148, %c0_149, %c0_150] : memref<2x1x256xf32, #tpu.memory_space<vmem>>, vector<1x1x256xf32>
    %326 = vector.shape_cast %325 : vector<1x1x256xf32> to vector<1x256xf32>
    %327 = arith.truncf %326 : vector<1x256xf32> to vector<1x256xbf16>
    "tpu.trace_start"() <{level = 10 : i32, message = "ic,jc->ij"}> : () -> ()
    %cst_151 = arith.constant dense<0.000000e+00> : vector<1x32xf32>
    %328 = tpu.matmul %327, %318, %cst_151 {dimension_numbers = #tpu.dot_dimension_numbers<[1], [1], [0], [0], [0, 0, 1, 0], [], []>} : vector<1x256xbf16>, vector<32x256xbf16>, vector<1x32xf32> -> vector<1x32xf32>
    "tpu.trace_stop"() : () -> ()
    %329 = vector.broadcast %324 : vector<32x1xf32> to vector<32x32xf32>
    %330 = vector.broadcast %328 : vector<1x32xf32> to vector<32x32xf32>
    %331 = arith.addf %329, %330 : vector<32x32xf32>
    %cst_152 = arith.constant 0.000000e+00 : f32
    %332 = vector.broadcast %cst_152 : f32 to vector<32x32xf32>
    %333 = arith.cmpf ogt, %331, %332 : vector<32x32xf32>
    %cst_153 = arith.constant 2.000000e-01 : f32
    %334 = vector.broadcast %cst_153 : f32 to vector<32x32xf32>
    %335 = arith.mulf %334, %331 : vector<32x32xf32>
    %336 = arith.select %333, %331, %335 : vector<32x32xi1>, vector<32x32xf32>
    %337 = arith.addf %336, %6 : vector<32x32xf32>
    %cst_154 = arith.constant dense<0xFF800000> : vector<32xf32>
    %338 = vector.multi_reduction <maximumf>, %337, %cst_154 [1] : vector<32x32xf32> to vector<32xf32>
    %339 = vector.shape_cast %338 : vector<32xf32> to vector<32x1xf32>
    %340 = vector.broadcast %339 : vector<32x1xf32> to vector<32x32xf32>
    %341 = arith.subf %337, %340 : vector<32x32xf32>
    %342 = math.exp %341 : vector<32x32xf32>
    %cst_155 = arith.constant dense<0.000000e+00> : vector<32xf32>
    %343 = vector.multi_reduction <add>, %342, %cst_155 [1] : vector<32x32xf32> to vector<32xf32>
    %344 = vector.shape_cast %343 : vector<32xf32> to vector<32x1xf32>
    %345 = tpu.reciprocal %344 {approx = true} : vector<32x1xf32> -> vector<32x1xf32>
    %346 = vector.broadcast %345 : vector<32x1xf32> to vector<32x32xf32>
    %347 = arith.mulf %342, %346 : vector<32x32xf32>
    %348 = arith.truncf %347 : vector<32x32xf32> to vector<32x32xbf16>
    %cst_156 = arith.constant dense<0.000000e+00> : vector<32x256xf32>
    %349 = tpu.matmul %348, %318, %cst_156 {dimension_numbers = #tpu.dot_dimension_numbers<[1], [0], [0], [1], [0, 0, 1, 1], [], []>} : vector<32x32xbf16>, vector<32x256xbf16>, vector<32x256xf32> -> vector<32x256xf32>
    %c1_157 = arith.constant 1 : index
    %c0_158 = arith.constant 0 : index
    %c0_159 = arith.constant 0 : index
    %350 = vector.load %arg16[%c1_157, %c0_158, %c0_159] : memref<2x1x256xf32, #tpu.memory_space<vmem>>, vector<1x1x256xf32>
    %351 = vector.shape_cast %350 : vector<1x1x256xf32> to vector<1x256xf32>
    %352 = vector.broadcast %351 : vector<1x256xf32> to vector<32x256xf32>
    %353 = arith.addf %349, %352 : vector<32x256xf32>
    %cst_160 = arith.constant 0.000000e+00 : f32
    %354 = vector.broadcast %cst_160 : f32 to vector<32x256xf32>
    %355 = arith.maximumf %317, %354 : vector<32x256xf32>
    %cst_161 = arith.constant 0.000000e+00 : f32
    %356 = vector.broadcast %cst_161 : f32 to vector<32x256xf32>
    %357 = arith.maximumf %353, %356 : vector<32x256xf32>
    %cst_162 = arith.constant dense<0.000000e+00> : vector<32xf32>
    %358 = vector.multi_reduction <add>, %355, %cst_162 [1] : vector<32x256xf32> to vector<32xf32>
    %359 = vector.shape_cast %358 : vector<32xf32> to vector<32x1xf32>
    %cst_163 = arith.constant dense<0.000000e+00> : vector<32xf32>
    %360 = vector.multi_reduction <add>, %357, %cst_163 [1] : vector<32x256xf32> to vector<32xf32>
    %361 = vector.shape_cast %360 : vector<32xf32> to vector<32x1xf32>
    %362 = arith.addf %359, %361 : vector<32x1xf32>
    %cst_164 = arith.constant 0.001953125 : f32
    %363 = vector.broadcast %cst_164 : f32 to vector<32x1xf32>
    %364 = arith.mulf %362, %363 : vector<32x1xf32>
    %365 = vector.broadcast %364 : vector<32x1xf32> to vector<32x256xf32>
    %366 = arith.subf %355, %365 : vector<32x256xf32>
    %367 = arith.mulf %366, %366 : vector<32x256xf32>
    %cst_165 = arith.constant dense<0.000000e+00> : vector<32xf32>
    %368 = vector.multi_reduction <add>, %367, %cst_165 [1] : vector<32x256xf32> to vector<32xf32>
    %369 = vector.shape_cast %368 : vector<32xf32> to vector<32x1xf32>
    %370 = vector.broadcast %364 : vector<32x1xf32> to vector<32x256xf32>
    %371 = arith.subf %357, %370 : vector<32x256xf32>
    %372 = arith.mulf %371, %371 : vector<32x256xf32>
    %cst_166 = arith.constant dense<0.000000e+00> : vector<32xf32>
    %373 = vector.multi_reduction <add>, %372, %cst_166 [1] : vector<32x256xf32> to vector<32xf32>
    %374 = vector.shape_cast %373 : vector<32xf32> to vector<32x1xf32>
    %375 = arith.addf %369, %374 : vector<32x1xf32>
    %cst_167 = arith.constant 0.001953125 : f32
    %376 = vector.broadcast %cst_167 : f32 to vector<32x1xf32>
    %377 = arith.mulf %375, %376 : vector<32x1xf32>
    %cst_168 = arith.constant 9.99999974E-6 : f32
    %378 = vector.broadcast %cst_168 : f32 to vector<32x1xf32>
    %379 = arith.addf %377, %378 : vector<32x1xf32>
    %380 = math.rsqrt %379 : vector<32x1xf32>
    %381 = vector.broadcast %364 : vector<32x1xf32> to vector<32x256xf32>
    %382 = arith.subf %355, %381 : vector<32x256xf32>
    %383 = vector.broadcast %380 : vector<32x1xf32> to vector<32x256xf32>
    %384 = arith.mulf %382, %383 : vector<32x256xf32>
    %c0_169 = arith.constant 0 : index
    %c0_170 = arith.constant 0 : index
    %c0_171 = arith.constant 0 : index
    %385 = vector.load %arg17[%c0_169, %c0_170, %c0_171] : memref<2x1x256xf32, #tpu.memory_space<vmem>>, vector<1x1x256xf32>
    %386 = vector.shape_cast %385 : vector<1x1x256xf32> to vector<1x256xf32>
    %387 = vector.broadcast %386 : vector<1x256xf32> to vector<32x256xf32>
    %388 = arith.mulf %384, %387 : vector<32x256xf32>
    %c0_172 = arith.constant 0 : index
    %c0_173 = arith.constant 0 : index
    %c0_174 = arith.constant 0 : index
    %389 = vector.load %arg18[%c0_172, %c0_173, %c0_174] : memref<2x1x256xf32, #tpu.memory_space<vmem>>, vector<1x1x256xf32>
    %390 = vector.shape_cast %389 : vector<1x1x256xf32> to vector<1x256xf32>
    %391 = vector.broadcast %390 : vector<1x256xf32> to vector<32x256xf32>
    %392 = arith.addf %388, %391 : vector<32x256xf32>
    %393 = vector.broadcast %364 : vector<32x1xf32> to vector<32x256xf32>
    %394 = arith.subf %357, %393 : vector<32x256xf32>
    %395 = vector.broadcast %380 : vector<32x1xf32> to vector<32x256xf32>
    %396 = arith.mulf %394, %395 : vector<32x256xf32>
    %c1_175 = arith.constant 1 : index
    %c0_176 = arith.constant 0 : index
    %c0_177 = arith.constant 0 : index
    %397 = vector.load %arg17[%c1_175, %c0_176, %c0_177] : memref<2x1x256xf32, #tpu.memory_space<vmem>>, vector<1x1x256xf32>
    %398 = vector.shape_cast %397 : vector<1x1x256xf32> to vector<1x256xf32>
    %399 = vector.broadcast %398 : vector<1x256xf32> to vector<32x256xf32>
    %400 = arith.mulf %396, %399 : vector<32x256xf32>
    %c1_178 = arith.constant 1 : index
    %c0_179 = arith.constant 0 : index
    %c0_180 = arith.constant 0 : index
    %401 = vector.load %arg18[%c1_178, %c0_179, %c0_180] : memref<2x1x256xf32, #tpu.memory_space<vmem>>, vector<1x1x256xf32>
    %402 = vector.shape_cast %401 : vector<1x1x256xf32> to vector<1x256xf32>
    %403 = vector.broadcast %402 : vector<1x256xf32> to vector<32x256xf32>
    %404 = arith.addf %400, %403 : vector<32x256xf32>
    %c2_i32_181 = arith.constant 2 : i32
    %405 = tpu.memref_slice %arg29[%c2_i32_181] : memref<3x!tpu.dma_semaphore, #tpu.memory_space<semaphore_mem>> -> memref<1x!tpu.dma_semaphore, #tpu.memory_space<semaphore_mem>>
    %406 = tpu.memref_squeeze %405 : memref<1x!tpu.dma_semaphore, #tpu.memory_space<semaphore_mem>> -> memref<!tpu.dma_semaphore, #tpu.memory_space<semaphore_mem>>
    tpu.wait_dma2 semaphore(%406 : memref<!tpu.dma_semaphore, #tpu.memory_space<semaphore_mem>>) src(%arg24 : memref<512x128xbf16, #tpu.memory_space<any>>) dst(%arg28 : memref<512x128xbf16, #tpu.memory_space<vmem>>)
    %407 = tpu.concatenate %392, %404 in 1 : vector<32x256xf32>, vector<32x256xf32> -> vector<32x512xf32>
    %408 = arith.truncf %407 : vector<32x512xf32> to vector<32x512xbf16>
    %c0_182 = arith.constant 0 : index
    %c0_183 = arith.constant 0 : index
    %409 = vector.load %arg28[%c0_182, %c0_183] : memref<512x128xbf16, #tpu.memory_space<vmem>>, vector<512x128xbf16>
    %cst_184 = arith.constant dense<0.000000e+00> : vector<32x128xf32>
    %410 = tpu.matmul %408, %409, %cst_184 {dimension_numbers = #tpu.dot_dimension_numbers<[1], [0], [0], [1], [0, 0, 1, 1], [], []>} : vector<32x512xbf16>, vector<512x128xbf16>, vector<32x128xf32> -> vector<32x128xf32>
    %411 = arith.truncf %410 : vector<32x128xf32> to vector<32x128xbf16>
    %c0_185 = arith.constant 0 : index
    %c0_186 = arith.constant 0 : index
    %c0_187 = arith.constant 0 : index
    %412 = vector.load %arg20[%c0_185, %c0_186, %c0_187] : memref<1x1x128xf32, #tpu.memory_space<vmem>>, vector<1x1x128xf32>
    %413 = vector.shape_cast %412 : vector<1x1x128xf32> to vector<1x128xf32>
    %414 = vector.broadcast %413 : vector<1x128xf32> to vector<32x128xf32>
    %415 = arith.mulf %410, %414 : vector<32x128xf32>
    %cst_188 = arith.constant dense<0.000000e+00> : vector<32xf32>
    %416 = vector.multi_reduction <add>, %415, %cst_188 [1] : vector<32x128xf32> to vector<32xf32>
    %417 = vector.shape_cast %416 : vector<32xf32> to vector<32x1xf32>
    %c0_189 = arith.constant 0 : index
    %c0_190 = arith.constant 0 : index
    %c0_191 = arith.constant 0 : index
    %418 = vector.load %arg19[%c0_189, %c0_190, %c0_191] : memref<1x1x128xf32, #tpu.memory_space<vmem>>, vector<1x1x128xf32>
    %419 = vector.shape_cast %418 : vector<1x1x128xf32> to vector<1x128xf32>
    %420 = arith.truncf %419 : vector<1x128xf32> to vector<1x128xbf16>
    "tpu.trace_start"() <{level = 10 : i32, message = "ic,jc->ij"}> : () -> ()
    %cst_192 = arith.constant dense<0.000000e+00> : vector<1x32xf32>
    %421 = tpu.matmul %420, %411, %cst_192 {dimension_numbers = #tpu.dot_dimension_numbers<[1], [1], [0], [0], [0, 0, 1, 0], [], []>} : vector<1x128xbf16>, vector<32x128xbf16>, vector<1x32xf32> -> vector<1x32xf32>
    "tpu.trace_stop"() : () -> ()
    %422 = vector.broadcast %417 : vector<32x1xf32> to vector<32x32xf32>
    %423 = vector.broadcast %421 : vector<1x32xf32> to vector<32x32xf32>
    %424 = arith.addf %422, %423 : vector<32x32xf32>
    %cst_193 = arith.constant 0.000000e+00 : f32
    %425 = vector.broadcast %cst_193 : f32 to vector<32x32xf32>
    %426 = arith.cmpf ogt, %424, %425 : vector<32x32xf32>
    %cst_194 = arith.constant 2.000000e-01 : f32
    %427 = vector.broadcast %cst_194 : f32 to vector<32x32xf32>
    %428 = arith.mulf %427, %424 : vector<32x32xf32>
    %429 = arith.select %426, %424, %428 : vector<32x32xi1>, vector<32x32xf32>
    %430 = arith.addf %429, %6 : vector<32x32xf32>
    %cst_195 = arith.constant dense<0xFF800000> : vector<32xf32>
    %431 = vector.multi_reduction <maximumf>, %430, %cst_195 [1] : vector<32x32xf32> to vector<32xf32>
    %432 = vector.shape_cast %431 : vector<32xf32> to vector<32x1xf32>
    %433 = vector.broadcast %432 : vector<32x1xf32> to vector<32x32xf32>
    %434 = arith.subf %430, %433 : vector<32x32xf32>
    %435 = math.exp %434 : vector<32x32xf32>
    %cst_196 = arith.constant dense<0.000000e+00> : vector<32xf32>
    %436 = vector.multi_reduction <add>, %435, %cst_196 [1] : vector<32x32xf32> to vector<32xf32>
    %437 = vector.shape_cast %436 : vector<32xf32> to vector<32x1xf32>
    %438 = tpu.reciprocal %437 {approx = true} : vector<32x1xf32> -> vector<32x1xf32>
    %439 = vector.broadcast %438 : vector<32x1xf32> to vector<32x32xf32>
    %440 = arith.mulf %435, %439 : vector<32x32xf32>
    %441 = arith.truncf %440 : vector<32x32xf32> to vector<32x32xbf16>
    %cst_197 = arith.constant dense<0.000000e+00> : vector<32x128xf32>
    %442 = tpu.matmul %441, %411, %cst_197 {dimension_numbers = #tpu.dot_dimension_numbers<[1], [0], [0], [1], [0, 0, 1, 1], [], []>} : vector<32x32xbf16>, vector<32x128xbf16>, vector<32x128xf32> -> vector<32x128xf32>
    %c0_198 = arith.constant 0 : index
    %c0_199 = arith.constant 0 : index
    %c0_200 = arith.constant 0 : index
    %443 = vector.load %arg21[%c0_198, %c0_199, %c0_200] : memref<1x1x128xf32, #tpu.memory_space<vmem>>, vector<1x1x128xf32>
    %444 = vector.shape_cast %443 : vector<1x1x128xf32> to vector<1x128xf32>
    %445 = vector.broadcast %444 : vector<1x128xf32> to vector<32x128xf32>
    %446 = arith.addf %442, %445 : vector<32x128xf32>
    %c0_201 = arith.constant 0 : index
    %c0_202 = arith.constant 0 : index
    %447 = vector.load %arg25[%c0_201, %c0_202] : memref<32x128xf32, #tpu.memory_space<vmem>>, vector<32x128xf32>
    tpu.vector_store %arg25[%c0_201, %c0_202], %446 {strides = array<i32>} : memref<32x128xf32, #tpu.memory_space<vmem>>, vector<32x128xf32>,
    return
  }
  func.func @transform_0(%arg0: i32) -> (i32, i32) {
    %c0_i32 = arith.constant 0 : i32
    %c0_i32_0 = arith.constant 0 : i32
    %c0_i32_1 = arith.constant 0 : i32
    return %c0_i32, %c0_i32_0 : i32, i32
  }
  func.func @transform_1(%arg0: i32) -> (i32, i32) {
    %c0_i32 = arith.constant 0 : i32
    %c0_i32_0 = arith.constant 0 : i32
    %c0_i32_1 = arith.constant 0 : i32
    return %c0_i32, %c0_i32_0 : i32, i32
  }
  func.func @transform_2(%arg0: i32) -> (i32, i32, i32) {
    %c0_i32 = arith.constant 0 : i32
    %c0_i32_0 = arith.constant 0 : i32
    %c0_i32_1 = arith.constant 0 : i32
    %c0_i32_2 = arith.constant 0 : i32
    return %c0_i32, %c0_i32_0, %c0_i32_1 : i32, i32, i32
  }
  func.func @transform_3(%arg0: i32) -> (i32, i32, i32) {
    %c0_i32 = arith.constant 0 : i32
    %c0_i32_0 = arith.constant 0 : i32
    %c0_i32_1 = arith.constant 0 : i32
    %c0_i32_2 = arith.constant 0 : i32
    return %c0_i32, %c0_i32_0, %c0_i32_1 : i32, i32, i32
  }
  func.func @transform_4(%arg0: i32) -> (i32, i32, i32) {
    %c0_i32 = arith.constant 0 : i32
    %c0_i32_0 = arith.constant 0 : i32
    %c0_i32_1 = arith.constant 0 : i32
    %c0_i32_2 = arith.constant 0 : i32
    return %c0_i32, %c0_i32_0, %c0_i32_1 : i32, i32, i32
  }
  func.func @transform_5(%arg0: i32) -> (i32, i32, i32) {
    %c0_i32 = arith.constant 0 : i32
    %c0_i32_0 = arith.constant 0 : i32
    %c0_i32_1 = arith.constant 0 : i32
    %c0_i32_2 = arith.constant 0 : i32
    return %c0_i32, %c0_i32_0, %c0_i32_1 : i32, i32, i32
  }
  func.func @transform_6(%arg0: i32) -> (i32, i32, i32) {
    %c0_i32 = arith.constant 0 : i32
    %c0_i32_0 = arith.constant 0 : i32
    %c0_i32_1 = arith.constant 0 : i32
    %c0_i32_2 = arith.constant 0 : i32
    return %c0_i32, %c0_i32_0, %c0_i32_1 : i32, i32, i32
  }
  func.func @transform_7(%arg0: i32) -> (i32, i32, i32) {
    %c0_i32 = arith.constant 0 : i32
    %c0_i32_0 = arith.constant 0 : i32
    %c0_i32_1 = arith.constant 0 : i32
    %c0_i32_2 = arith.constant 0 : i32
    return %c0_i32, %c0_i32_0, %c0_i32_1 : i32, i32, i32
  }
  func.func @transform_8(%arg0: i32) -> (i32, i32, i32) {
    %c0_i32 = arith.constant 0 : i32
    %c0_i32_0 = arith.constant 0 : i32
    %c0_i32_1 = arith.constant 0 : i32
    %c0_i32_2 = arith.constant 0 : i32
    return %c0_i32, %c0_i32_0, %c0_i32_1 : i32, i32, i32
  }
  func.func @transform_9(%arg0: i32) -> (i32, i32, i32) {
    %c0_i32 = arith.constant 0 : i32
    %c0_i32_0 = arith.constant 0 : i32
    %c0_i32_1 = arith.constant 0 : i32
    %c0_i32_2 = arith.constant 0 : i32
    return %c0_i32, %c0_i32_0, %c0_i32_1 : i32, i32, i32
  }
  func.func @transform_10(%arg0: i32) -> (i32, i32, i32) {
    %c0_i32 = arith.constant 0 : i32
    %c0_i32_0 = arith.constant 0 : i32
    %c0_i32_1 = arith.constant 0 : i32
    %c0_i32_2 = arith.constant 0 : i32
    return %c0_i32, %c0_i32_0, %c0_i32_1 : i32, i32, i32
  }
  func.func @transform_11(%arg0: i32) -> (i32, i32, i32) {
    %c0_i32 = arith.constant 0 : i32
    %c0_i32_0 = arith.constant 0 : i32
    %c0_i32_1 = arith.constant 0 : i32
    %c0_i32_2 = arith.constant 0 : i32
    return %c0_i32, %c0_i32_0, %c0_i32_1 : i32, i32, i32
  }
  func.func @transform_12(%arg0: i32) -> (i32, i32, i32) {
    %c0_i32 = arith.constant 0 : i32
    %c0_i32_0 = arith.constant 0 : i32
    %c0_i32_1 = arith.constant 0 : i32
    %c0_i32_2 = arith.constant 0 : i32
    return %c0_i32, %c0_i32_0, %c0_i32_1 : i32, i32, i32
  }
  func.func @transform_13(%arg0: i32) -> (i32, i32, i32) {
    %c0_i32 = arith.constant 0 : i32
    %c0_i32_0 = arith.constant 0 : i32
    %c0_i32_1 = arith.constant 0 : i32
    %c0_i32_2 = arith.constant 0 : i32
    return %c0_i32, %c0_i32_0, %c0_i32_1 : i32, i32, i32
  }
  func.func @transform_14(%arg0: i32) -> (i32, i32, i32) {
    %c0_i32 = arith.constant 0 : i32
    %c0_i32_0 = arith.constant 0 : i32
    %c0_i32_1 = arith.constant 0 : i32
    %c0_i32_2 = arith.constant 0 : i32
    return %c0_i32, %c0_i32_0, %c0_i32_1 : i32, i32, i32
  }
  func.func @transform_15(%arg0: i32) -> (i32, i32, i32) {
    %c0_i32 = arith.constant 0 : i32
    %c0_i32_0 = arith.constant 0 : i32
    %c0_i32_1 = arith.constant 0 : i32
    %c0_i32_2 = arith.constant 0 : i32
    return %c0_i32, %c0_i32_0, %c0_i32_1 : i32, i32, i32
  }
  func.func @transform_16(%arg0: i32) -> (i32, i32, i32) {
    %c0_i32 = arith.constant 0 : i32
    %c0_i32_0 = arith.constant 0 : i32
    %c0_i32_1 = arith.constant 0 : i32
    %c0_i32_2 = arith.constant 0 : i32
    return %c0_i32, %c0_i32_0, %c0_i32_1 : i32, i32, i32
  }
  func.func @transform_17(%arg0: i32) -> (i32, i32, i32) {
    %c0_i32 = arith.constant 0 : i32
    %c0_i32_0 = arith.constant 0 : i32
    %c0_i32_1 = arith.constant 0 : i32
    %c0_i32_2 = arith.constant 0 : i32
    return %c0_i32, %c0_i32_0, %c0_i32_1 : i32, i32, i32
  }
  func.func @transform_18(%arg0: i32) -> (i32, i32, i32) {
    %c0_i32 = arith.constant 0 : i32
    %c0_i32_0 = arith.constant 0 : i32
    %c0_i32_1 = arith.constant 0 : i32
    %c0_i32_2 = arith.constant 0 : i32
    return %c0_i32, %c0_i32_0, %c0_i32_1 : i32, i32, i32
  }
  func.func @transform_19(%arg0: i32) -> (i32, i32, i32) {
    %c0_i32 = arith.constant 0 : i32
    %c0_i32_0 = arith.constant 0 : i32
    %c0_i32_1 = arith.constant 0 : i32
    %c0_i32_2 = arith.constant 0 : i32
    return %c0_i32, %c0_i32_0, %c0_i32_1 : i32, i32, i32
  }
  func.func @transform_20(%arg0: i32) -> (i32, i32, i32) {
    %c0_i32 = arith.constant 0 : i32
    %c0_i32_0 = arith.constant 0 : i32
    %c0_i32_1 = arith.constant 0 : i32
    %c0_i32_2 = arith.constant 0 : i32
    return %c0_i32, %c0_i32_0, %c0_i32_1 : i32, i32, i32
  }
  func.func @transform_24(%arg0: i32) -> (i32, i32) {
    %c0_i32 = arith.constant 0 : i32
    %c0_i32_0 = arith.constant 0 : i32
    %c0_i32_1 = arith.constant 0 : i32
    return %c0_i32, %c0_i32_0 : i32, i32
  }
}

</mosaic_0001>

<llo_original>
// kernel: gatnet_forward.1
$region0: #{gatnet_forward.1}
  #allocation0 [shape = 'u32[]', space=smem, size = 0x4, offset = 0x4, fixed_abs, tag = 'smem constant byte address 0x4 - core index']
  #allocation1 [shape = 'u32[72,128]{1,0:T(1,128)}', space=vmem, size = 0x9000, scoped, tag = 'internal scratch']
  #allocation2 [shape = 'bf16[2,448,768]{2,1,0:T(8,128)(2,1)}', space=vmem, size = 0x150000, scoped, tag = 'scratch operand']
  #allocation3 [shape = 'bf16[768,512]{1,0:T(8,128)(2,1)}', space=vmem, size = 0xc0000, scoped, tag = 'scratch operand']
  #allocation4 [shape = 'bf16[512,128]{1,0:T(8,128)(2,1)}', space=vmem, size = 0x20000, scoped, tag = 'scratch operand']
  #allocation5 [shape = 's32[3]{0}', space=sflag, size = 0xc, scoped, tag = 'scratch operand']
  #allocation37 [shape = 's32[]', space=sflag, size = 0x4, offset = 0, fixed_abs, tag = 'sflag constant byte address 0x0 - dummy sync flag']
  #allocation38 [shape = 's32[]', space=sflag, size = 0x4, offset = 0, fixed_abs, tag = 'sflag constant byte address 0x0 - dummy sync flag']
  #allocation39 [shape = 'u32[]', space=smem, size = 0x4, offset = 0x44, fixed_abs, tag = 'smem constant byte address 0x44 - assertion arg 0']
  #allocation40 [shape = 'u32[]', space=smem, size = 0x4, offset = 0x48, fixed_abs, tag = 'smem constant byte address 0x48 - assertion arg 1']
  #allocation41 [shape = 's32[]', space=sflag, size = 0x4, offset = 0, fixed_abs, tag = 'sflag constant byte address 0x0 - dummy sync flag']
  #allocation42 [shape = 's32[]', space=sflag, size = 0x4, offset = 0, fixed_abs, tag = 'sflag constant byte address 0x0 - dummy sync flag']
  #allocation43 [shape = 's32[]', space=sflag, size = 0x4, offset = 0, fixed_abs, tag = 'sflag constant byte address 0x0 - dummy sync flag']
  #allocation44 [shape = 's32[]', space=sflag, size = 0x4, offset = 0, fixed_abs, tag = 'sflag constant byte address 0x0 - dummy sync flag']
  %s0 = inlined_call_operand.hbm [shape: f32[32,256], index: 0, kind: input, shape index: {}]
  %s1 = inlined_call_operand.vmem [shape: f32[32,32], index: 1, kind: input, shape index: {}]
  %s2 = inlined_call_operand.vmem [shape: bf16[2,256,448], index: 2, kind: input, shape index: {}]
  %s3 = inlined_call_operand.hbm [shape: f32[2,1,448], index: 3, kind: input, shape index: {}]
  %s4 = inlined_call_operand.hbm [shape: f32[2,1,448], index: 4, kind: input, shape index: {}]
  %s5 = inlined_call_operand.hbm [shape: f32[2,1,448], index: 5, kind: input, shape index: {}]
  %s6 = inlined_call_operand.hbm [shape: f32[2,1,448], index: 6, kind: input, shape index: {}]
  %s7 = inlined_call_operand.hbm [shape: f32[2,1,448], index: 7, kind: input, shape index: {}]
  %s8 = inlined_call_operand.hbm [shape: f32[2,1,384], index: 8, kind: input, shape index: {}]
  %s9 = inlined_call_operand.hbm [shape: f32[2,1,384], index: 9, kind: input, shape index: {}]
  %s10 = inlined_call_operand.hbm [shape: f32[2,1,384], index: 10, kind: input, shape index: {}]
  %s11 = inlined_call_operand.hbm [shape: f32[2,1,384], index: 11, kind: input, shape index: {}]
  %s12 = inlined_call_operand.hbm [shape: f32[2,1,384], index: 12, kind: input, shape index: {}]
  %s13 = inlined_call_operand.hbm [shape: f32[2,1,256], index: 13, kind: input, shape index: {}]
  %s14 = inlined_call_operand.hbm [shape: f32[2,1,256], index: 14, kind: input, shape index: {}]
  %s15 = inlined_call_operand.hbm [shape: f32[2,1,256], index: 15, kind: input, shape index: {}]
  %s16 = inlined_call_operand.hbm [shape: f32[2,1,256], index: 16, kind: input, shape index: {}]
  %s17 = inlined_call_operand.hbm [shape: f32[2,1,256], index: 17, kind: input, shape index: {}]
  %s18 = inlined_call_operand.hbm [shape: f32[1,1,128], index: 18, kind: input, shape index: {}]
  %s19 = inlined_call_operand.hbm [shape: f32[1,1,128], index: 19, kind: input, shape index: {}]
  %s20 = inlined_call_operand.hbm [shape: f32[1,1,128], index: 20, kind: input, shape index: {}]
  %s21 = inlined_call_operand.hbm [shape: bf16[2,448,768], index: 21, kind: input, shape index: {}]
  %s22 = inlined_call_operand.hbm [shape: bf16[768,512], index: 22, kind: input, shape index: {}]
  %s23 = inlined_call_operand.hbm [shape: bf16[512,128], index: 23, kind: input, shape index: {}]
  %s24 = inlined_call_operand.hbm [shape: f32[32,128], index: 24, kind: output, shape index: {}]
  %s25 = sld [smem:[#allocation0]]
  $region182: #{gatnet_forward.1} parent=0
    _
  %s27 = ssub.s32 1, %s25
  %s28 = scalar_select 0, %s27, %s25
  $region1: #{gatnet_forward.1} parent=0
    #allocation6 [shape = 'u8[32768]{0}', space=vmem, size = 0x8000, scoped, tag = 'input window, operand 0, single buffered']
    #allocation7 [shape = 's32[1]{0}', space=sflag, size = 0x4, scoped, tag = 'scoped memory for gatnet_forward.1']
    #allocation8 [shape = 's32[1]{0}', space=sflag, size = 0x4, scoped, tag = 'scoped memory for gatnet_forward.1']
    #allocation9 [shape = 'u8[4096]{0}', space=vmem, size = 0x1000, scoped, tag = 'input window, operand 3, single buffered']
    #allocation10 [shape = 's32[1]{0}', space=sflag, size = 0x4, scoped, tag = 'scoped memory for gatnet_forward.1']
    #allocation11 [shape = 'u8[4096]{0}', space=vmem, size = 0x1000, scoped, tag = 'input window, operand 4, single buffered']
    #allocation12 [shape = 'u8[4096]{0}', space=vmem, size = 0x1000, scoped, tag = 'input window, operand 5, single buffered']
    #allocation13 [shape = 's32[1]{0}', space=sflag, size = 0x4, scoped, tag = 'scoped memory for gatnet_forward.1']
    #allocation14 [shape = 'u8[4096]{0}', space=vmem, size = 0x1000, scoped, tag = 'input window, operand 6, single buffered']
    #allocation15 [shape = 'u8[4096]{0}', space=vmem, size = 0x1000, scoped, tag = 'input window, operand 7, single buffered']
    #allocation16 [shape = 's32[1]{0}', space=sflag, size = 0x4, scoped, tag = 'scoped memory for gatnet_forward.1']
    #allocation17 [shape = 'u8[3072]{0}', space=vmem, size = 0xc00, scoped, tag = 'input window, operand 8, single buffered']
    #allocation18 [shape = 'u8[3072]{0}', space=vmem, size = 0xc00, scoped, tag = 'input window, operand 9, single buffered']
    #allocation19 [shape = 's32[1]{0}', space=sflag, size = 0x4, scoped, tag = 'scoped memory for gatnet_forward.1']
    #allocation20 [shape = 'u8[3072]{0}', space=vmem, size = 0xc00, scoped, tag = 'input window, operand 10, single buffered']
    #allocation21 [shape = 'u8[3072]{0}', space=vmem, size = 0xc00, scoped, tag = 'input window, operand 11, single buffered']
    #allocation22 [shape = 's32[1]{0}', space=sflag, size = 0x4, scoped, tag = 'scoped memory for gatnet_forward.1']
    #allocation23 [shape = 'u8[3072]{0}', space=vmem, size = 0xc00, scoped, tag = 'input window, operand 12, single buffered']
    #allocation24 [shape = 'u8[2048]{0}', space=vmem, size = 0x800, scoped, tag = 'input window, operand 13, single buffered']
    #allocation25 [shape = 's32[1]{0}', space=sflag, size = 0x4, scoped, tag = 'scoped memory for gatnet_forward.1']
    #allocation26 [shape = 'u8[2048]{0}', space=vmem, size = 0x800, scoped, tag = 'input window, operand 14, single buffered']
    #allocation27 [shape = 'u8[2048]{0}', space=vmem, size = 0x800, scoped, tag = 'input window, operand 15, single buffered']
    #allocation28 [shape = 's32[1]{0}', space=sflag, size = 0x4, scoped, tag = 'scoped memory for gatnet_forward.1']
    #allocation29 [shape = 'u8[2048]{0}', space=vmem, size = 0x800, scoped, tag = 'input window, operand 16, single buffered']
    #allocation30 [shape = 'u8[2048]{0}', space=vmem, size = 0x800, scoped, tag = 'input window, operand 17, single buffered']
    #allocation31 [shape = 's32[1]{0}', space=sflag, size = 0x4, scoped, tag = 'scoped memory for gatnet_forward.1']
    #allocation32 [shape = 'u8[512]{0}', space=vmem, size = 0x400, scoped, tag = 'input window, operand 18, single buffered']
    #allocation33 [shape = 'u8[512]{0}', space=vmem, size = 0x400, scoped, tag = 'input window, operand 19, single buffered']
    #allocation34 [shape = 's32[1]{0}', space=sflag, size = 0x4, scoped, tag = 'scoped memory for gatnet_forward.1']
    #allocation35 [shape = 'u8[512]{0}', space=vmem, size = 0x400, scoped, tag = 'input window, operand 20, single buffered']
    #allocation36 [shape = 'u8[16384]{0}', space=vmem, size = 0x4000, scoped, tag = 'output window, operand 0, single buffered']
    %29 = vsyncpa [#allocation7], 0
    %30 = vsyncpa [#allocation10], 0
    %31 = vsyncpa [#allocation13], 0
    %32 = vsyncpa [#allocation16], 0
    %33 = vsyncpa [#allocation19], 0
    %34 = vsyncpa [#allocation22], 0
    %35 = vsyncpa [#allocation25], 0
    %36 = vsyncpa [#allocation28], 0
    %37 = vsyncpa [#allocation31], 0
    %38 = vsyncpa [#allocation34], 0
    %39 = vsyncpa [#allocation8], 0
    // Predicated region
    $region2: #{gatnet_forward.1} parent=1 // pred_check
      _
    $region3: #{gatnet_forward.1} parent=1 // pred_check_branch
      %41 = sbr.rel (0) target = $region5
    $region4: #{gatnet_forward.1} parent=1 // pred_region
      %43 = vsyncadd [#allocation7], 0
      %s44 = sshll.u32 %s0, 4
      %s45 = int_to_ptr.hbm [resolvable:$true] %s44
      %s46 = sshll.u32 [#allocation6], 4
      %s47 = int_to_ptr.vmem [resolvable:$true] %s46
      %52 = dma.hbm_to_vmem [thread:$0]  %s45, 1024, %s47, [#allocation7], 256, 256, 16
    $region5: #{gatnet_forward.1} parent=1 // pred_fallthru
      _
    // Predicated region
    $region6: #{gatnet_forward.1} parent=1 // pred_check
      _
    $region7: #{gatnet_forward.1} parent=1 // pred_check_branch
      %54 = sbr.rel (0) target = $region9
    $region8: #{gatnet_forward.1} parent=1 // pred_region
      _
    $region9: #{gatnet_forward.1} parent=1 // pred_fallthru
      _
    // Predicated region
    $region10: #{gatnet_forward.1} parent=1 // pred_check
      _
    $region11: #{gatnet_forward.1} parent=1 // pred_check_branch
      %56 = sbr.rel (0) target = $region13
    $region12: #{gatnet_forward.1} parent=1 // pred_region
      _
    $region13: #{gatnet_forward.1} parent=1 // pred_fallthru
      _
    // Predicated region
    $region14: #{gatnet_forward.1} parent=1 // pred_check
      _
    $region15: #{gatnet_forward.1} parent=1 // pred_check_branch
      %58 = sbr.rel (0) target = $region17
    $region16: #{gatnet_forward.1} parent=1 // pred_region
      %60 = vsyncadd [#allocation10], 0
      %s61 = sshll.u32 %s3, 4
      %s62 = int_to_ptr.hbm [resolvable:$true] %s61
      %s63 = sshll.u32 [#allocation9], 4
      %s64 = int_to_ptr.vmem [resolvable:$true] %s63
      %69 = dma.hbm_to_vmem [thread:$0]  %s62, 128, %s64, [#allocation10], 64, 64, 4
    $region17: #{gatnet_forward.1} parent=1 // pred_fallthru
      _
    // Predicated region
    $region18: #{gatnet_forward.1} parent=1 // pred_check
      _
    $region19: #{gatnet_forward.1} parent=1 // pred_check_branch
      %71 = sbr.rel (0) target = $region21
    $region20: #{gatnet_forward.1} parent=1 // pred_region
      %73 = vsyncadd [#allocation10], 0
      %s74 = sshll.u32 %s4, 4
      %s75 = int_to_ptr.hbm [resolvable:$true] %s74
      %s76 = sshll.u32 [#allocation11], 4
      %s77 = int_to_ptr.vmem [resolvable:$true] %s76
      %82 = dma.hbm_to_vmem [thread:$0]  %s75, 128, %s77, [#allocation10], 64, 64, 4
    $region21: #{gatnet_forward.1} parent=1 // pred_fallthru
      _
    // Predicated region
    $region22: #{gatnet_forward.1} parent=1 // pred_check
      _
    $region23: #{gatnet_forward.1} parent=1 // pred_check_branch
      %84 = sbr.rel (0) target = $region25
    $region24: #{gatnet_forward.1} parent=1 // pred_region
      %86 = vsyncadd [#allocation13], 0
      %s87 = sshll.u32 %s5, 4
      %s88 = int_to_ptr.hbm [resolvable:$true] %s87
      %s89 = sshll.u32 [#allocation12], 4
      %s90 = int_to_ptr.vmem [resolvable:$true] %s89
      %95 = dma.hbm_to_vmem [thread:$0]  %s88, 128, %s90, [#allocation13], 64, 64, 4
    $region25: #{gatnet_forward.1} parent=1 // pred_fallthru
      _
    // Predicated region
    $region26: #{gatnet_forward.1} parent=1 // pred_check
      _
    $region27: #{gatnet_forward.1} parent=1 // pred_check_branch
      %97 = sbr.rel (0) target = $region29
    $region28: #{gatnet_forward.1} parent=1 // pred_region
      %99 = vsyncadd [#allocation13], 0
      %s100 = sshll.u32 %s6, 4
      %s101 = int_to_ptr.hbm [resolvable:$true] %s100
      %s102 = sshll.u32 [#allocation14], 4
      %s103 = int_to_ptr.vmem [resolvable:$true] %s102
      %108 = dma.hbm_to_vmem [thread:$0]  %s101, 128, %s103, [#allocation13], 64, 64, 4
    $region29: #{gatnet_forward.1} parent=1 // pred_fallthru
      _
    // Predicated region
    $region30: #{gatnet_forward.1} parent=1 // pred_check
      _
    $region31: #{gatnet_forward.1} parent=1 // pred_check_branch
      %110 = sbr.rel (0) target = $region33
    $region32: #{gatnet_forward.1} parent=1 // pred_region
      %112 = vsyncadd [#allocation16], 0
      %s113 = sshll.u32 %s7, 4
      %s114 = int_to_ptr.hbm [resolvable:$true] %s113
      %s115 = sshll.u32 [#allocation15], 4
      %s116 = int_to_ptr.vmem [resolvable:$true] %s115
      %121 = dma.hbm_to_vmem [thread:$0]  %s114, 128, %s116, [#allocation16], 64, 64, 4
    $region33: #{gatnet_forward.1} parent=1 // pred_fallthru
      _
    // Predicated region
    $region34: #{gatnet_forward.1} parent=1 // pred_check
      _
    $region35: #{gatnet_forward.1} parent=1 // pred_check_branch
      %123 = sbr.rel (0) target = $region37
    $region36: #{gatnet_forward.1} parent=1 // pred_region
      %125 = vsyncadd [#allocation16], 0
      %s126 = sshll.u32 %s8, 4
      %s127 = int_to_ptr.hbm [resolvable:$true] %s126
      %s128 = sshll.u32 [#allocation17], 4
      %s129 = int_to_ptr.vmem [resolvable:$true] %s128
      %134 = dma.hbm_to_vmem [thread:$0]  %s127, 96, %s129, [#allocation16], 48, 48, 3
    $region37: #{gatnet_forward.1} parent=1 // pred_fallthru
      _
    // Predicated region
    $region38: #{gatnet_forward.1} parent=1 // pred_check
      _
    $region39: #{gatnet_forward.1} parent=1 // pred_check_branch
      %136 = sbr.rel (0) target = $region41
    $region40: #{gatnet_forward.1} parent=1 // pred_region
      %138 = vsyncadd [#allocation19], 0
      %s139 = sshll.u32 %s9, 4
      %s140 = int_to_ptr.hbm [resolvable:$true] %s139
      %s141 = sshll.u32 [#allocation18], 4
      %s142 = int_to_ptr.vmem [resolvable:$true] %s141
      %147 = dma.hbm_to_vmem [thread:$0]  %s140, 96, %s142, [#allocation19], 48, 48, 3
    $region41: #{gatnet_forward.1} parent=1 // pred_fallthru
      _
    // Predicated region
    $region42: #{gatnet_forward.1} parent=1 // pred_check
      _
    $region43: #{gatnet_forward.1} parent=1 // pred_check_branch
      %149 = sbr.rel (0) target = $region45
    $region44: #{gatnet_forward.1} parent=1 // pred_region
      %151 = vsyncadd [#allocation19], 0
      %s152 = sshll.u32 %s10, 4
      %s153 = int_to_ptr.hbm [resolvable:$true] %s152
      %s154 = sshll.u32 [#allocation20], 4
      %s155 = int_to_ptr.vmem [resolvable:$true] %s154
      %160 = dma.hbm_to_vmem [thread:$0]  %s153, 96, %s155, [#allocation19], 48, 48, 3
    $region45: #{gatnet_forward.1} parent=1 // pred_fallthru
      _
    // Predicated region
    $region46: #{gatnet_forward.1} parent=1 // pred_check
      _
    $region47: #{gatnet_forward.1} parent=1 // pred_check_branch
      %162 = sbr.rel (0) target = $region49
    $region48: #{gatnet_forward.1} parent=1 // pred_region
      %164 = vsyncadd [#allocation22], 0
      %s165 = sshll.u32 %s11, 4
      %s166 = int_to_ptr.hbm [resolvable:$true] %s165
      %s167 = sshll.u32 [#allocation21], 4
      %s168 = int_to_ptr.vmem [resolvable:$true] %s167
      %173 = dma.hbm_to_vmem [thread:$0]  %s166, 96, %s168, [#allocation22], 48, 48, 3
    $region49: #{gatnet_forward.1} parent=1 // pred_fallthru
      _
    // Predicated region
    $region50: #{gatnet_forward.1} parent=1 // pred_check
      _
    $region51: #{gatnet_forward.1} parent=1 // pred_check_branch
      %175 = sbr.rel (0) target = $region53
    $region52: #{gatnet_forward.1} parent=1 // pred_region
      %177 = vsyncadd [#allocation22], 0
      %s178 = sshll.u32 %s12, 4
      %s179 = int_to_ptr.hbm [resolvable:$true] %s178
      %s180 = sshll.u32 [#allocation23], 4
      %s181 = int_to_ptr.vmem [resolvable:$true] %s180
      %186 = dma.hbm_to_vmem [thread:$0]  %s179, 96, %s181, [#allocation22], 48, 48, 3
    $region53: #{gatnet_forward.1} parent=1 // pred_fallthru
      _
    // Predicated region
    $region54: #{gatnet_forward.1} parent=1 // pred_check
      _
    $region55: #{gatnet_forward.1} parent=1 // pred_check_branch
      %188 = sbr.rel (0) target = $region57
    $region56: #{gatnet_forward.1} parent=1 // pred_region
      %190 = vsyncadd [#allocation25], 0
      %s191 = sshll.u32 %s13, 4
      %s192 = int_to_ptr.hbm [resolvable:$true] %s191
      %s193 = sshll.u32 [#allocation24], 4
      %s194 = int_to_ptr.vmem [resolvable:$true] %s193
      %199 = dma.hbm_to_vmem [thread:$0]  %s192, 64, %s194, [#allocation25], 32, 32, 2
    $region57: #{gatnet_forward.1} parent=1 // pred_fallthru
      _
    // Predicated region
    $region58: #{gatnet_forward.1} parent=1 // pred_check
      _
    $region59: #{gatnet_forward.1} parent=1 // pred_check_branch
      %201 = sbr.rel (0) target = $region61
    $region60: #{gatnet_forward.1} parent=1 // pred_region
      %203 = vsyncadd [#allocation25], 0
      %s204 = sshll.u32 %s14, 4
      %s205 = int_to_ptr.hbm [resolvable:$true] %s204
      %s206 = sshll.u32 [#allocation26], 4
      %s207 = int_to_ptr.vmem [resolvable:$true] %s206
      %212 = dma.hbm_to_vmem [thread:$0]  %s205, 64, %s207, [#allocation25], 32, 32, 2
    $region61: #{gatnet_forward.1} parent=1 // pred_fallthru
      _
    // Predicated region
    $region62: #{gatnet_forward.1} parent=1 // pred_check
      _
    $region63: #{gatnet_forward.1} parent=1 // pred_check_branch
      %214 = sbr.rel (0) target = $region65
    $region64: #{gatnet_forward.1} parent=1 // pred_region
      %216 = vsyncadd [#allocation28], 0
      %s217 = sshll.u32 %s15, 4
      %s218 = int_to_ptr.hbm [resolvable:$true] %s217
      %s219 = sshll.u32 [#allocation27], 4
      %s220 = int_to_ptr.vmem [resolvable:$true] %s219
      %225 = dma.hbm_to_vmem [thread:$0]  %s218, 64, %s220, [#allocation28], 32, 32, 2
    $region65: #{gatnet_forward.1} parent=1 // pred_fallthru
      _
    // Predicated region
    $region66: #{gatnet_forward.1} parent=1 // pred_check
      _
    $region67: #{gatnet_forward.1} parent=1 // pred_check_branch
      %227 = sbr.rel (0) target = $region69
    $region68: #{gatnet_forward.1} parent=1 // pred_region
      %229 = vsyncadd [#allocation28], 0
      %s230 = sshll.u32 %s16, 4
      %s231 = int_to_ptr.hbm [resolvable:$true] %s230
      %s232 = sshll.u32 [#allocation29], 4
      %s233 = int_to_ptr.vmem [resolvable:$true] %s232
      %238 = dma.hbm_to_vmem [thread:$0]  %s231, 64, %s233, [#allocation28], 32, 32, 2
    $region69: #{gatnet_forward.1} parent=1 // pred_fallthru
      _
    // Predicated region
    $region70: #{gatnet_forward.1} parent=1 // pred_check
      _
    $region71: #{gatnet_forward.1} parent=1 // pred_check_branch
      %240 = sbr.rel (0) target = $region73
    $region72: #{gatnet_forward.1} parent=1 // pred_region
      %242 = vsyncadd [#allocation31], 0
      %s243 = sshll.u32 %s17, 4
      %s244 = int_to_ptr.hbm [resolvable:$true] %s243
      %s245 = sshll.u32 [#allocation30], 4
      %s246 = int_to_ptr.vmem [resolvable:$true] %s245
      %251 = dma.hbm_to_vmem [thread:$0]  %s244, 64, %s246, [#allocation31], 32, 32, 2
    $region73: #{gatnet_forward.1} parent=1 // pred_fallthru
      _
    // Predicated region
    $region74: #{gatnet_forward.1} parent=1 // pred_check
      _
    $region75: #{gatnet_forward.1} parent=1 // pred_check_branch
      %253 = sbr.rel (0) target = $region77
    $region76: #{gatnet_forward.1} parent=1 // pred_region
      %255 = vsyncadd [#allocation31], 0
      %s257 = sshll.u32 %s18, 4
      %s258 = int_to_ptr.hbm [resolvable:$true] %s257
      %s259 = sshll.u32 [#allocation32], 4
      %s260 = int_to_ptr.vmem [resolvable:$true] %s259
      %262 = dma.hbm_to_vmem [thread:$0]  %s258, 16, %s260, [#allocation31]
    $region77: #{gatnet_forward.1} parent=1 // pred_fallthru
      _
    // Predicated region
    $region78: #{gatnet_forward.1} parent=1 // pred_check
      _
    $region79: #{gatnet_forward.1} parent=1 // pred_check_branch
      %264 = sbr.rel (0) target = $region81
    $region80: #{gatnet_forward.1} parent=1 // pred_region
      %266 = vsyncadd [#allocation34], 0
      %s268 = sshll.u32 %s19, 4
      %s269 = int_to_ptr.hbm [resolvable:$true] %s268
      %s270 = sshll.u32 [#allocation33], 4
      %s271 = int_to_ptr.vmem [resolvable:$true] %s270
      %273 = dma.hbm_to_vmem [thread:$0]  %s269, 16, %s271, [#allocation34]
    $region81: #{gatnet_forward.1} parent=1 // pred_fallthru
      _
    // Predicated region
    $region82: #{gatnet_forward.1} parent=1 // pred_check
      _
    $region83: #{gatnet_forward.1} parent=1 // pred_check_branch
      %275 = sbr.rel (0) target = $region85
    $region84: #{gatnet_forward.1} parent=1 // pred_region
      %277 = vsyncadd [#allocation34], 0
      %s279 = sshll.u32 %s20, 4
      %s280 = int_to_ptr.hbm [resolvable:$true] %s279
      %s281 = sshll.u32 [#allocation35], 4
      %s282 = int_to_ptr.vmem [resolvable:$true] %s281
      %284 = dma.hbm_to_vmem [thread:$0]  %s280, 16, %s282, [#allocation34]
    $region85: #{gatnet_forward.1} parent=1 // pred_fallthru
      _
    // Predicated region
    $region86: #{gatnet_forward.1} parent=1 // pred_check
      _
    $region87: #{gatnet_forward.1} parent=1 // pred_check_branch
      %286 = sbr.rel (0) target = $region89
    $region88: #{gatnet_forward.1} parent=1 // pred_region
      %288 = dma.done [#allocation7], 1024
    $region89: #{gatnet_forward.1} parent=1 // pred_fallthru
      _
    // Predicated region
    $region90: #{gatnet_forward.1} parent=1 // pred_check
      _
    $region91: #{gatnet_forward.1} parent=1 // pred_check_branch
      %290 = sbr.rel (0) target = $region93
    $region92: #{gatnet_forward.1} parent=1 // pred_region
      %292 = dma.done [#allocation10], 128
    $region93: #{gatnet_forward.1} parent=1 // pred_fallthru
      _
    // Predicated region
    $region94: #{gatnet_forward.1} parent=1 // pred_check
      _
    $region95: #{gatnet_forward.1} parent=1 // pred_check_branch
      %294 = sbr.rel (0) target = $region97
    $region96: #{gatnet_forward.1} parent=1 // pred_region
      %296 = dma.done [#allocation10], 128
    $region97: #{gatnet_forward.1} parent=1 // pred_fallthru
      _
    // Predicated region
    $region98: #{gatnet_forward.1} parent=1 // pred_check
      _
    $region99: #{gatnet_forward.1} parent=1 // pred_check_branch
      %298 = sbr.rel (0) target = $region101
    $region100: #{gatnet_forward.1} parent=1 // pred_region
      %300 = dma.done [#allocation13], 128
    $region101: #{gatnet_forward.1} parent=1 // pred_fallthru
      _
    // Predicated region
    $region102: #{gatnet_forward.1} parent=1 // pred_check
      _
    $region103: #{gatnet_forward.1} parent=1 // pred_check_branch
      %302 = sbr.rel (0) target = $region105
    $region104: #{gatnet_forward.1} parent=1 // pred_region
      %304 = dma.done [#allocation13], 128
    $region105: #{gatnet_forward.1} parent=1 // pred_fallthru
      _
    // Predicated region
    $region106: #{gatnet_forward.1} parent=1 // pred_check
      _
    $region107: #{gatnet_forward.1} parent=1 // pred_check_branch
      %306 = sbr.rel (0) target = $region109
    $region108: #{gatnet_forward.1} parent=1 // pred_region
      %308 = dma.done [#allocation16], 128
    $region109: #{gatnet_forward.1} parent=1 // pred_fallthru
      _
    // Predicated region
    $region110: #{gatnet_forward.1} parent=1 // pred_check
      _
    $region111: #{gatnet_forward.1} parent=1 // pred_check_branch
      %310 = sbr.rel (0) target = $region113
    $region112: #{gatnet_forward.1} parent=1 // pred_region
      %312 = dma.done [#allocation16], 96
    $region113: #{gatnet_forward.1} parent=1 // pred_fallthru
      _
    // Predicated region
    $region114: #{gatnet_forward.1} parent=1 // pred_check
      _
    $region115: #{gatnet_forward.1} parent=1 // pred_check_branch
      %314 = sbr.rel (0) target = $region117
    $region116: #{gatnet_forward.1} parent=1 // pred_region
      %316 = dma.done [#allocation19], 96
    $region117: #{gatnet_forward.1} parent=1 // pred_fallthru
      _
    // Predicated region
    $region118: #{gatnet_forward.1} parent=1 // pred_check
      _
    $region119: #{gatnet_forward.1} parent=1 // pred_check_branch
      %318 = sbr.rel (0) target = $region121
    $region120: #{gatnet_forward.1} parent=1 // pred_region
      %320 = dma.done [#allocation19], 96
    $region121: #{gatnet_forward.1} parent=1 // pred_fallthru
      _
    // Predicated region
    $region122: #{gatnet_forward.1} parent=1 // pred_check
      _
    $region123: #{gatnet_forward.1} parent=1 // pred_check_branch
      %322 = sbr.rel (0) target = $region125
    $region124: #{gatnet_forward.1} parent=1 // pred_region
      %324 = dma.done [#allocation22], 96
    $region125: #{gatnet_forward.1} parent=1 // pred_fallthru
      _
    // Predicated region
    $region126: #{gatnet_forward.1} parent=1 // pred_check
      _
    $region127: #{gatnet_forward.1} parent=1 // pred_check_branch
      %326 = sbr.rel (0) target = $region129
    $region128: #{gatnet_forward.1} parent=1 // pred_region
      %328 = dma.done [#allocation22], 96
    $region129: #{gatnet_forward.1} parent=1 // pred_fallthru
      _
    // Predicated region
    $region130: #{gatnet_forward.1} parent=1 // pred_check
      _
    $region131: #{gatnet_forward.1} parent=1 // pred_check_branch
      %330 = sbr.rel (0) target = $region133
    $region132: #{gatnet_forward.1} parent=1 // pred_region
      %332 = dma.done [#allocation25], 64
    $region133: #{gatnet_forward.1} parent=1 // pred_fallthru
      _
    // Predicated region
    $region134: #{gatnet_forward.1} parent=1 // pred_check
      _
    $region135: #{gatnet_forward.1} parent=1 // pred_check_branch
      %334 = sbr.rel (0) target = $region137
    $region136: #{gatnet_forward.1} parent=1 // pred_region
      %336 = dma.done [#allocation25], 64
    $region137: #{gatnet_forward.1} parent=1 // pred_fallthru
      _
    // Predicated region
    $region138: #{gatnet_forward.1} parent=1 // pred_check
      _
    $region139: #{gatnet_forward.1} parent=1 // pred_check_branch
      %338 = sbr.rel (0) target = $region141
    $region140: #{gatnet_forward.1} parent=1 // pred_region
      %340 = dma.done [#allocation28], 64
    $region141: #{gatnet_forward.1} parent=1 // pred_fallthru
      _
    // Predicated region
    $region142: #{gatnet_forward.1} parent=1 // pred_check
      _
    $region143: #{gatnet_forward.1} parent=1 // pred_check_branch
      %342 = sbr.rel (0) target = $region145
    $region144: #{gatnet_forward.1} parent=1 // pred_region
      %344 = dma.done [#allocation28], 64
    $region145: #{gatnet_forward.1} parent=1 // pred_fallthru
      _
    // Predicated region
    $region146: #{gatnet_forward.1} parent=1 // pred_check
      _
    $region147: #{gatnet_forward.1} parent=1 // pred_check_branch
      %346 = sbr.rel (0) target = $region149
    $region148: #{gatnet_forward.1} parent=1 // pred_region
      %348 = dma.done [#allocation31], 64
    $region149: #{gatnet_forward.1} parent=1 // pred_fallthru
      _
    // Predicated region
    $region150: #{gatnet_forward.1} parent=1 // pred_check
      _
    $region151: #{gatnet_forward.1} parent=1 // pred_check_branch
      %350 = sbr.rel (0) target = $region153
    $region152: #{gatnet_forward.1} parent=1 // pred_region
      %352 = dma.done [#allocation31], 16
    $region153: #{gatnet_forward.1} parent=1 // pred_fallthru
      _
    // Predicated region
    $region154: #{gatnet_forward.1} parent=1 // pred_check
      _
    $region155: #{gatnet_forward.1} parent=1 // pred_check_branch
      %354 = sbr.rel (0) target = $region157
    $region156: #{gatnet_forward.1} parent=1 // pred_region
      %356 = dma.done [#allocation34], 16
    $region157: #{gatnet_forward.1} parent=1 // pred_fallthru
      _
    // Predicated region
    $region158: #{gatnet_forward.1} parent=1 // pred_check
      _
    $region159: #{gatnet_forward.1} parent=1 // pred_check_branch
      %358 = sbr.rel (0) target = $region161
    $region160: #{gatnet_forward.1} parent=1 // pred_region
      %360 = dma.done [#allocation34], 16
    $region161: #{gatnet_forward.1} parent=1 // pred_fallthru
      _
    // Predicated region
    $region162: #{gatnet_forward.1} parent=1 // pred_check
      _
    $region163: #{gatnet_forward.1} parent=1 // pred_check_branch
      %363 = sbr.rel target = $region165
    $region164: #{gatnet_forward.1} parent=1 // pred_region
      %364 = sst [smem:[#allocation39]] [#allocation38]
      %365 = sst [smem:[#allocation40]] [#allocation37]
    $region165: #{gatnet_forward.1} parent=1 // pred_fallthru
      _
    %367 = shalt.err (0)
    %s369 = sshll.u32 %s21, 4
    %s370 = int_to_ptr.hbm [resolvable:$true] %s369
    %s371 = sshll.u32 [#allocation2], 4
    %s372 = int_to_ptr.vmem [resolvable:$true] %s371
    %374 = dma.hbm_to_vmem [thread:$0]  %s370, 43008, %s372, [#allocation5]
    %s375 = scalar_lea.sflag [#allocation5], 1
    // Predicated region
    $region166: #{gatnet_forward.1} parent=1 // pred_check
      _
    $region167: #{gatnet_forward.1} parent=1 // pred_check_branch
      %377 = sbr.rel target = $region169
    $region168: #{gatnet_forward.1} parent=1 // pred_region
      %378 = sst [smem:[#allocation39]] [#allocation42]
      %379 = sst [smem:[#allocation40]] [#allocation41]
    $region169: #{gatnet_forward.1} parent=1 // pred_fallthru
      _
    %381 = shalt.err (0)
    %s383 = sshll.u32 %s22, 4
    %s384 = int_to_ptr.hbm [resolvable:$true] %s383
    %s385 = sshll.u32 [#allocation3], 4
    %s386 = int_to_ptr.vmem [resolvable:$true] %s385
    %388 = dma.hbm_to_vmem [thread:$0]  %s384, 24576, %s386, %s375
    %s389 = scalar_lea.sflag [#allocation5], 2
    // Predicated region
    $region170: #{gatnet_forward.1} parent=1 // pred_check
      _
    $region171: #{gatnet_forward.1} parent=1 // pred_check_branch
      %391 = sbr.rel target = $region173
    $region172: #{gatnet_forward.1} parent=1 // pred_region
      %392 = sst [smem:[#allocation39]] [#allocation44]
      %393 = sst [smem:[#allocation40]] [#allocation43]
    $region173: #{gatnet_forward.1} parent=1 // pred_fallthru
      _
    %395 = shalt.err (0)
    %s397 = sshll.u32 %s23, 4
    %s398 = int_to_ptr.hbm [resolvable:$true] %s397
    %s399 = sshll.u32 [#allocation4], 4
    %s400 = int_to_ptr.vmem [resolvable:$true] %s399
    %402 = dma.hbm_to_vmem [thread:$0]  %s398, 4096, %s400, %s389
    %v403 = vld [vmem:[%s1] sm:$0xff]
    %v404 = vld [vmem:[%s1 + $0x8] sm:$0xff]
    %v405 = vld [vmem:[%s1 + $0x10] sm:$0xff]
    %v406 = vld [vmem:[%s1 + $0x18] sm:$0xff]
    %v407 = vld [vmem:[#allocation6] sm:$0xff]
    %v408 = vld [vmem:[#allocation6 + $0x8] sm:$0xff]
    %v409 = vld [vmem:[#allocation6 + $0x10] sm:$0xff]
    %v410 = vld [vmem:[#allocation6 + $0x18] sm:$0xff]
    %v411 = vld [vmem:[#allocation6 + $0x20] sm:$0xff]
    %v412 = vld [vmem:[#allocation6 + $0x28] sm:$0xff]
    %v413 = vld [vmem:[#allocation6 + $0x30] sm:$0xff]
    %v414 = vld [vmem:[#allocation6 + $0x38] sm:$0xff]
    %v415 = vpack.c.bf16 %v409, %v407
    %v416 = vpack.c.bf16 %v410, %v408
    %v417 = vpack.c.bf16 %v413, %v411
    %v418 = vpack.c.bf16 %v414, %v412
    %v419 = vld [vmem:[%s2] sm:$0xff]
    %v420 = vld [vmem:[%s2 + $0x8] sm:$0xff]
    %v421 = vld [vmem:[%s2 + $0x10] sm:$0xff]
    %v422 = vld [vmem:[%s2 + $0x18] sm:$0xff]
    %v423 = vld [vmem:[%s2 + $0x20] sm:$0xff]
    %v424 = vld [vmem:[%s2 + $0x28] sm:$0xff]
    %v425 = vld [vmem:[%s2 + $0x30] sm:$0xff]
    %v426 = vld [vmem:[%s2 + $0x38] sm:$0xff]
    %v427 = vld [vmem:[%s2 + $0x40] sm:$0xff]
    %v428 = vld [vmem:[%s2 + $0x48] sm:$0xff]
    %v429 = vld [vmem:[%s2 + $0x50] sm:$0xff]
    %v430 = vld [vmem:[%s2 + $0x58] sm:$0xff]
    %v431 = vld [vmem:[%s2 + $0x60] sm:$0xff]
    %v432 = vld [vmem:[%s2 + $0x68] sm:$0xff]
    %v433 = vld [vmem:[%s2 + $0x70] sm:$0xff]
    %v434 = vld [vmem:[%s2 + $0x78] sm:$0xff]
    %v435 = vld [vmem:[%s2 + $0x80] sm:$0xff]
    %v436 = vld [vmem:[%s2 + $0x88] sm:$0xff]
    %v437 = vld [vmem:[%s2 + $0x90] sm:$0xff]
    %v438 = vld [vmem:[%s2 + $0x98] sm:$0xff]
    %v439 = vld [vmem:[%s2 + $0xa0] sm:$0xff]
    %v440 = vld [vmem:[%s2 + $0xa8] sm:$0xff]
    %v441 = vld [vmem:[%s2 + $0xb0] sm:$0xff]
    %v442 = vld [vmem:[%s2 + $0xb8] sm:$0xff]
    %v443 = vld [vmem:[%s2 + $0xc0] sm:$0xff]
    %v444 = vld [vmem:[%s2 + $0xc8] sm:$0xff]
    %v445 = vld [vmem:[%s2 + $0xd0] sm:$0xff]
    %v446 = vld [vmem:[%s2 + $0xd8] sm:$0xff]
    %v447 = vld [vmem:[%s2 + $0xe0] sm:$0xff]
    %v448 = vld [vmem:[%s2 + $0xe8] sm:$0xff]
    %v449 = vld [vmem:[%s2 + $0xf0] sm:$0xff]
    %v450 = vld [vmem:[%s2 + $0xf8] sm:$0xff]
    %v451 = vld [vmem:[%s2 + $0x100] sm:$0xff]
    %v452 = vld [vmem:[%s2 + $0x108] sm:$0xff]
    %v453 = vld [vmem:[%s2 + $0x110] sm:$0xff]
    %v454 = vld [vmem:[%s2 + $0x118] sm:$0xff]
    %v455 = vld [vmem:[%s2 + $0x120] sm:$0xff]
    %v456 = vld [vmem:[%s2 + $0x128] sm:$0xff]
    %v457 = vld [vmem:[%s2 + $0x130] sm:$0xff]
    %v458 = vld [vmem:[%s2 + $0x138] sm:$0xff]
    %v459 = vld [vmem:[%s2 + $0x140] sm:$0xff]
    %v460 = vld [vmem:[%s2 + $0x148] sm:$0xff]
    %v461 = vld [vmem:[%s2 + $0x150] sm:$0xff]
    %v462 = vld [vmem:[%s2 + $0x158] sm:$0xff]
    %v463 = vld [vmem:[%s2 + $0x160] sm:$0xff]
    %v464 = vld [vmem:[%s2 + $0x168] sm:$0xff]
    %v465 = vld [vmem:[%s2 + $0x170] sm:$0xff]
    %v466 = vld [vmem:[%s2 + $0x178] sm:$0xff]
    %v467 = vld [vmem:[%s2 + $0x180] sm:$0xff]
    %v468 = vld [vmem:[%s2 + $0x188] sm:$0xff]
    %v469 = vld [vmem:[%s2 + $0x190] sm:$0xff]
    %v470 = vld [vmem:[%s2 + $0x198] sm:$0xff]
    %v471 = vld [vmem:[%s2 + $0x1a0] sm:$0xff]
    %v472 = vld [vmem:[%s2 + $0x1a8] sm:$0xff]
    %v473 = vld [vmem:[%s2 + $0x1b0] sm:$0xff]
    %v474 = vld [vmem:[%s2 + $0x1b8] sm:$0xff]
    %v475 = vld [vmem:[%s2 + $0x1c0] sm:$0xff]
    %v476 = vld [vmem:[%s2 + $0x1c8] sm:$0xff]
    %v477 = vld [vmem:[%s2 + $0x1d0] sm:$0xff]
    %v478 = vld [vmem:[%s2 + $0x1d8] sm:$0xff]
    %v479 = vld [vmem:[%s2 + $0x1e0] sm:$0xff]
    %v480 = vld [vmem:[%s2 + $0x1e8] sm:$0xff]
    %v481 = vld [vmem:[%s2 + $0x1f0] sm:$0xff]
    %v482 = vld [vmem:[%s2 + $0x1f8] sm:$0xff]
    %v547 = vunpack.c.l.b16 %v419
    %v548 = vunpack.c.h.b16 %v419
    %v549 = vunpack.c.l.b16 %v420
    %v550 = vunpack.c.h.b16 %v420
    %v551 = vunpack.c.l.b16 %v421
    %v552 = vunpack.c.h.b16 %v421
    %v553 = vunpack.c.l.b16 %v422
    %v554 = vunpack.c.h.b16 %v422
    %v555 = vunpack.c.l.b16 %v423
    %v556 = vunpack.c.h.b16 %v423
    %v557 = vunpack.c.l.b16 %v424
    %v558 = vunpack.c.h.b16 %v424
    %v559 = vunpack.c.l.b16 %v425
    %v560 = vunpack.c.h.b16 %v425
    %v561 = vunpack.c.l.b16 %v426
    %v562 = vunpack.c.h.b16 %v426
    %v563 = vunpack.c.l.b16 %v427
    %v564 = vunpack.c.h.b16 %v427
    %v565 = vunpack.c.l.b16 %v428
    %v566 = vunpack.c.h.b16 %v428
    %v567 = vunpack.c.l.b16 %v429
    %v568 = vunpack.c.h.b16 %v429
    %v569 = vunpack.c.l.b16 %v430
    %v570 = vunpack.c.h.b16 %v430
    %v571 = vunpack.c.l.b16 %v431
    %v572 = vunpack.c.h.b16 %v431
    %v573 = vunpack.c.l.b16 %v432
    %v574 = vunpack.c.h.b16 %v432
    %v575 = vunpack.c.l.b16 %v433
    %v576 = vunpack.c.h.b16 %v433
    %v577 = vunpack.c.l.b16 %v434
    %v578 = vunpack.c.h.b16 %v434
    %v579 = vunpack.c.l.b16 %v435
    %v580 = vunpack.c.h.b16 %v435
    %v581 = vunpack.c.l.b16 %v436
    %v582 = vunpack.c.h.b16 %v436
    %v583 = vunpack.c.l.b16 %v437
    %v584 = vunpack.c.h.b16 %v437
    %v585 = vunpack.c.l.b16 %v438
    %v586 = vunpack.c.h.b16 %v438
    %v587 = vunpack.c.l.b16 %v439
    %v588 = vunpack.c.h.b16 %v439
    %v589 = vunpack.c.l.b16 %v440
    %v590 = vunpack.c.h.b16 %v440
    %v591 = vunpack.c.l.b16 %v441
    %v592 = vunpack.c.h.b16 %v441
    %v593 = vunpack.c.l.b16 %v442
    %v594 = vunpack.c.h.b16 %v442
    %v595 = vunpack.c.l.b16 %v443
    %v596 = vunpack.c.h.b16 %v443
    %v597 = vunpack.c.l.b16 %v444
    %v598 = vunpack.c.h.b16 %v444
    %v599 = vunpack.c.l.b16 %v445
    %v600 = vunpack.c.h.b16 %v445
    %v601 = vunpack.c.l.b16 %v446
    %v602 = vunpack.c.h.b16 %v446
    %v603 = vunpack.c.l.b16 %v447
    %v604 = vunpack.c.h.b16 %v447
    %v605 = vunpack.c.l.b16 %v448
    %v606 = vunpack.c.h.b16 %v448
    %v607 = vunpack.c.l.b16 %v449
    %v608 = vunpack.c.h.b16 %v449
    %v609 = vunpack.c.l.b16 %v450
    %v610 = vunpack.c.h.b16 %v450
    %v611 = vunpack.c.l.b16 %v451
    %v612 = vunpack.c.h.b16 %v451
    %v613 = vunpack.c.l.b16 %v452
    %v614 = vunpack.c.h.b16 %v452
    %v615 = vunpack.c.l.b16 %v453
    %v616 = vunpack.c.h.b16 %v453
    %v617 = vunpack.c.l.b16 %v454
    %v618 = vunpack.c.h.b16 %v454
    %v619 = vunpack.c.l.b16 %v455
    %v620 = vunpack.c.h.b16 %v455
    %v621 = vunpack.c.l.b16 %v456
    %v622 = vunpack.c.h.b16 %v456
    %v623 = vunpack.c.l.b16 %v457
    %v624 = vunpack.c.h.b16 %v457
    %v625 = vunpack.c.l.b16 %v458
    %v626 = vunpack.c.h.b16 %v458
    %v627 = vunpack.c.l.b16 %v459
    %v628 = vunpack.c.h.b16 %v459
    %v629 = vunpack.c.l.b16 %v460
    %v630 = vunpack.c.h.b16 %v460
    %v631 = vunpack.c.l.b16 %v461
    %v632 = vunpack.c.h.b16 %v461
    %v633 = vunpack.c.l.b16 %v462
    %v634 = vunpack.c.h.b16 %v462
    %v635 = vunpack.c.l.b16 %v463
    %v636 = vunpack.c.h.b16 %v463
    %v637 = vunpack.c.l.b16 %v464
    %v638 = vunpack.c.h.b16 %v464
    %v639 = vunpack.c.l.b16 %v465
    %v640 = vunpack.c.h.b16 %v465
    %v641 = vunpack.c.l.b16 %v466
    %v642 = vunpack.c.h.b16 %v466
    %v643 = vunpack.c.l.b16 %v467
    %v644 = vunpack.c.h.b16 %v467
    %v645 = vunpack.c.l.b16 %v468
    %v646 = vunpack.c.h.b16 %v468
    %v647 = vunpack.c.l.b16 %v469
    %v648 = vunpack.c.h.b16 %v469
    %v649 = vunpack.c.l.b16 %v470
    %v650 = vunpack.c.h.b16 %v470
    %v651 = vunpack.c.l.b16 %v471
    %v652 = vunpack.c.h.b16 %v471
    %v653 = vunpack.c.l.b16 %v472
    %v654 = vunpack.c.h.b16 %v472
    %v655 = vunpack.c.l.b16 %v473
    %v656 = vunpack.c.h.b16 %v473
    %v657 = vunpack.c.l.b16 %v474
    %v658 = vunpack.c.h.b16 %v474
    %v659 = vunpack.c.l.b16 %v475
    %v660 = vunpack.c.h.b16 %v475
    %v661 = vunpack.c.l.b16 %v476
    %v662 = vunpack.c.h.b16 %v476
    %v663 = vunpack.c.l.b16 %v477
    %v664 = vunpack.c.h.b16 %v477
    %v665 = vunpack.c.l.b16 %v478
    %v666 = vunpack.c.h.b16 %v478
    %v667 = vunpack.c.l.b16 %v479
    %v668 = vunpack.c.h.b16 %v479
    %v669 = vunpack.c.l.b16 %v480
    %v670 = vunpack.c.h.b16 %v480
    %v671 = vunpack.c.l.b16 %v481
    %v672 = vunpack.c.h.b16 %v481
    %v673 = vunpack.c.l.b16 %v482
    %v674 = vunpack.c.h.b16 %v482
    %v675 = vpack.c.b16 %v551, %v547
    %v676 = vpack.c.b16 %v552, %v548
    %v677 = vpack.c.b16 %v553, %v549
    %v678 = vpack.c.b16 %v554, %v550
    %v679 = vpack.c.b16 %v559, %v555
    %v680 = vpack.c.b16 %v560, %v556
    %v681 = vpack.c.b16 %v561, %v557
    %v682 = vpack.c.b16 %v562, %v558
    %v683 = vpack.c.b16 %v567, %v563
    %v684 = vpack.c.b16 %v568, %v564
    %v685 = vpack.c.b16 %v569, %v565
    %v686 = vpack.c.b16 %v570, %v566
    %v687 = vpack.c.b16 %v575, %v571
    %v688 = vpack.c.b16 %v576, %v572
    %v689 = vpack.c.b16 %v577, %v573
    %v690 = vpack.c.b16 %v578, %v574
    %v691 = vpack.c.b16 %v583, %v579
    %v692 = vpack.c.b16 %v584, %v580
    %v693 = vpack.c.b16 %v585, %v581
    %v694 = vpack.c.b16 %v586, %v582
    %v695 = vpack.c.b16 %v591, %v587
    %v696 = vpack.c.b16 %v592, %v588
    %v697 = vpack.c.b16 %v593, %v589
    %v698 = vpack.c.b16 %v594, %v590
    %v699 = vpack.c.b16 %v599, %v595
    %v700 = vpack.c.b16 %v600, %v596
    %v701 = vpack.c.b16 %v601, %v597
    %v702 = vpack.c.b16 %v602, %v598
    %v703 = vpack.c.b16 %v607, %v603
    %v704 = vpack.c.b16 %v608, %v604
    %v705 = vpack.c.b16 %v609, %v605
    %v706 = vpack.c.b16 %v610, %v606
    %v707 = vpack.c.b16 %v615, %v611
    %v708 = vpack.c.b16 %v616, %v612
    %v709 = vpack.c.b16 %v617, %v613
    %v710 = vpack.c.b16 %v618, %v614
    %v711 = vpack.c.b16 %v623, %v619
    %v712 = vpack.c.b16 %v624, %v620
    %v713 = vpack.c.b16 %v625, %v621
    %v714 = vpack.c.b16 %v626, %v622
    %v715 = vpack.c.b16 %v631, %v627
    %v716 = vpack.c.b16 %v632, %v628
    %v717 = vpack.c.b16 %v633, %v629
    %v718 = vpack.c.b16 %v634, %v630
    %v719 = vpack.c.b16 %v639, %v635
    %v720 = vpack.c.b16 %v640, %v636
    %v721 = vpack.c.b16 %v641, %v637
    %v722 = vpack.c.b16 %v642, %v638
    %v723 = vpack.c.b16 %v647, %v643
    %v724 = vpack.c.b16 %v648, %v644
    %v725 = vpack.c.b16 %v649, %v645
    %v726 = vpack.c.b16 %v650, %v646
    %v727 = vpack.c.b16 %v655, %v651
    %v728 = vpack.c.b16 %v656, %v652
    %v729 = vpack.c.b16 %v657, %v653
    %v730 = vpack.c.b16 %v658, %v654
    %v731 = vpack.c.b16 %v663, %v659
    %v732 = vpack.c.b16 %v664, %v660
    %v733 = vpack.c.b16 %v665, %v661
    %v734 = vpack.c.b16 %v666, %v662
    %v735 = vpack.c.b16 %v671, %v667
    %v736 = vpack.c.b16 %v672, %v668
    %v737 = vpack.c.b16 %v673, %v669
    %v738 = vpack.c.b16 %v674, %v670
    %803 = vmatpush.bf16.msra.mxu0 %v703
    %804 = vmatpush.bf16.msra.mxu0 %v699
    %805 = vmatpush.bf16.msra.mxu0 %v695
    %806 = vmatpush.bf16.msra.mxu0 %v691
    %807 = vmatpush.bf16.msra.mxu0 %v687
    %808 = vmatpush.bf16.msra.mxu0 %v683
    %809 = vmatpush.bf16.msra.mxu0 %v679
    %810 = vmatpush.bf16.msra.mxu0 %v675
    %811 = vmatmul.bf16.gmra.mxu0 %v415
    %v812 = vpop.f32.mrf.mxu0
    %v813 = vadd.f32 0.0, %v812
    %v814 = vpop.f32.mrf.mxu0
    %v815 = vadd.f32 0.0, %v814
    %816 = vmatmul.bf16.gmra.mxu0 %v417
    %v817 = vpop.f32.mrf.mxu0
    %v818 = vadd.f32 0.0, %v817
    %v819 = vpop.f32.mrf.mxu0
    %v820 = vadd.f32 0.0, %v819
    %821 = vdwg.mxu0
    %822 = vmatpush.bf16.msra.mxu0 %v735
    %823 = vmatpush.bf16.msra.mxu0 %v731
    %824 = vmatpush.bf16.msra.mxu0 %v727
    %825 = vmatpush.bf16.msra.mxu0 %v723
    %826 = vmatpush.bf16.msra.mxu0 %v719
    %827 = vmatpush.bf16.msra.mxu0 %v715
    %828 = vmatpush.bf16.msra.mxu0 %v711
    %829 = vmatpush.bf16.msra.mxu0 %v707
    %830 = vmatmul.bf16.gmra.mxu0 %v416
    %v831 = vpop.f32.mrf.mxu0
    %v832 = vadd.f32 %v813, %v831
    %v833 = vpop.f32.mrf.mxu0
    %v834 = vadd.f32 %v815, %v833
    %835 = vmatmul.bf16.gmra.mxu0 %v418
    %v836 = vpop.f32.mrf.mxu0
    %v837 = vadd.f32 %v818, %v836
    %v838 = vpop.f32.mrf.mxu0
    %v839 = vadd.f32 %v820, %v838
    %840 = vdwg.mxu0
    %841 = vmatpush.bf16.msra.mxu0 %v704
    %842 = vmatpush.bf16.msra.mxu0 %v700
    %843 = vmatpush.bf16.msra.mxu0 %v696
    %844 = vmatpush.bf16.msra.mxu0 %v692
    %845 = vmatpush.bf16.msra.mxu0 %v688
    %846 = vmatpush.bf16.msra.mxu0 %v684
    %847 = vmatpush.bf16.msra.mxu0 %v680
    %848 = vmatpush.bf16.msra.mxu0 %v676
    %849 = vmatmul.bf16.gmra.mxu0 %v415
    %v850 = vpop.f32.mrf.mxu0
    %v851 = vadd.f32 0.0, %v850
    %v852 = vpop.f32.mrf.mxu0
    %v853 = vadd.f32 0.0, %v852
    %854 = vmatmul.bf16.gmra.mxu0 %v417
    %v855 = vpop.f32.mrf.mxu0
    %v856 = vadd.f32 0.0, %v855
    %v857 = vpop.f32.mrf.mxu0
    %v858 = vadd.f32 0.0, %v857
    %859 = vdwg.mxu0
    %860 = vmatpush.bf16.msra.mxu0 %v736
    %861 = vmatpush.bf16.msra.mxu0 %v732
    %862 = vmatpush.bf16.msra.mxu0 %v728
    %863 = vmatpush.bf16.msra.mxu0 %v724
    %864 = vmatpush.bf16.msra.mxu0 %v720
    %865 = vmatpush.bf16.msra.mxu0 %v716
    %866 = vmatpush.bf16.msra.mxu0 %v712
    %867 = vmatpush.bf16.msra.mxu0 %v708
    %868 = vmatmul.bf16.gmra.mxu0 %v416
    %v869 = vpop.f32.mrf.mxu0
    %v870 = vadd.f32 %v851, %v869
    %v871 = vpop.f32.mrf.mxu0
    %v872 = vadd.f32 %v853, %v871
    %873 = vmatmul.bf16.gmra.mxu0 %v418
    %v874 = vpop.f32.mrf.mxu0
    %v875 = vadd.f32 %v856, %v874
    %v876 = vpop.f32.mrf.mxu0
    %v877 = vadd.f32 %v858, %v876
    %878 = vdwg.mxu0
    %879 = vmatpush.bf16.msra.mxu0 %v705
    %880 = vmatpush.bf16.msra.mxu0 %v701
    %881 = vmatpush.bf16.msra.mxu0 %v697
    %882 = vmatpush.bf16.msra.mxu0 %v693
    %883 = vmatpush.bf16.msra.mxu0 %v689
    %884 = vmatpush.bf16.msra.mxu0 %v685
    %885 = vmatpush.bf16.msra.mxu0 %v681
    %886 = vmatpush.bf16.msra.mxu0 %v677
    %887 = vmatmul.bf16.gmra.mxu0 %v415
    %v888 = vpop.f32.mrf.mxu0
    %v889 = vadd.f32 0.0, %v888
    %v890 = vpop.f32.mrf.mxu0
    %v891 = vadd.f32 0.0, %v890
    %892 = vmatmul.bf16.gmra.mxu0 %v417
    %v893 = vpop.f32.mrf.mxu0
    %v894 = vadd.f32 0.0, %v893
    %v895 = vpop.f32.mrf.mxu0
    %v896 = vadd.f32 0.0, %v895
    %897 = vdwg.mxu0
    %898 = vmatpush.bf16.msra.mxu0 %v737
    %899 = vmatpush.bf16.msra.mxu0 %v733
    %900 = vmatpush.bf16.msra.mxu0 %v729
    %901 = vmatpush.bf16.msra.mxu0 %v725
    %902 = vmatpush.bf16.msra.mxu0 %v721
    %903 = vmatpush.bf16.msra.mxu0 %v717
    %904 = vmatpush.bf16.msra.mxu0 %v713
    %905 = vmatpush.bf16.msra.mxu0 %v709
    %906 = vmatmul.bf16.gmra.mxu0 %v416
    %v907 = vpop.f32.mrf.mxu0
    %v908 = vadd.f32 %v889, %v907
    %v909 = vpop.f32.mrf.mxu0
    %v910 = vadd.f32 %v891, %v909
    %911 = vmatmul.bf16.gmra.mxu0 %v418
    %v912 = vpop.f32.mrf.mxu0
    %v913 = vadd.f32 %v894, %v912
    %v914 = vpop.f32.mrf.mxu0
    %v915 = vadd.f32 %v896, %v914
    %916 = vdwg.mxu0
    %917 = vmatpush.bf16.msra.mxu0 %v706
    %918 = vmatpush.bf16.msra.mxu0 %v702
    %919 = vmatpush.bf16.msra.mxu0 %v698
    %920 = vmatpush.bf16.msra.mxu0 %v694
    %921 = vmatpush.bf16.msra.mxu0 %v690
    %922 = vmatpush.bf16.msra.mxu0 %v686
    %923 = vmatpush.bf16.msra.mxu0 %v682
    %924 = vmatpush.bf16.msra.mxu0 %v678
    %925 = vmatmul.bf16.gmra.mxu0 %v415
    %v926 = vpop.f32.mrf.mxu0
    %v927 = vadd.f32 0.0, %v926
    %v928 = vpop.f32.mrf.mxu0
    %v929 = vadd.f32 0.0, %v928
    %930 = vmatmul.bf16.gmra.mxu0 %v417
    %v931 = vpop.f32.mrf.mxu0
    %v932 = vadd.f32 0.0, %v931
    %v933 = vpop.f32.mrf.mxu0
    %v934 = vadd.f32 0.0, %v933
    %935 = vdwg.mxu0
    %936 = vmatpush.bf16.msra.mxu0 %v738
    %937 = vmatpush.bf16.msra.mxu0 %v734
    %938 = vmatpush.bf16.msra.mxu0 %v730
    %939 = vmatpush.bf16.msra.mxu0 %v726
    %940 = vmatpush.bf16.msra.mxu0 %v722
    %941 = vmatpush.bf16.msra.mxu0 %v718
    %942 = vmatpush.bf16.msra.mxu0 %v714
    %943 = vmatpush.bf16.msra.mxu0 %v710
    %944 = vmatmul.bf16.gmra.mxu0 %v416
    %v945 = vpop.f32.mrf.mxu0
    %v946 = vadd.f32 %v927, %v945
    %v947 = vpop.f32.mrf.mxu0
    %v948 = vadd.f32 %v929, %v947
    %949 = vmatmul.bf16.gmra.mxu0 %v418
    %v950 = vpop.f32.mrf.mxu0
    %v951 = vadd.f32 %v932, %v950
    %v952 = vpop.f32.mrf.mxu0
    %v953 = vadd.f32 %v934, %v952
    %954 = vdwg.mxu0
    %s955 = scalar_lea.vmem %s2, 512
    %v956 = vld [vmem:[%s955] sm:$0xff]
    %v957 = vld [vmem:[%s955 + $0x8] sm:$0xff]
    %v958 = vld [vmem:[%s955 + $0x10] sm:$0xff]
    %v959 = vld [vmem:[%s955 + $0x18] sm:$0xff]
    %v960 = vld [vmem:[%s955 + $0x20] sm:$0xff]
    %v961 = vld [vmem:[%s955 + $0x28] sm:$0xff]
    %v962 = vld [vmem:[%s955 + $0x30] sm:$0xff]
    %v963 = vld [vmem:[%s955 + $0x38] sm:$0xff]
    %v964 = vld [vmem:[%s955 + $0x40] sm:$0xff]
    %v965 = vld [vmem:[%s955 + $0x48] sm:$0xff]
    %v966 = vld [vmem:[%s955 + $0x50] sm:$0xff]
    %v967 = vld [vmem:[%s955 + $0x58] sm:$0xff]
    %v968 = vld [vmem:[%s955 + $0x60] sm:$0xff]
    %v969 = vld [vmem:[%s955 + $0x68] sm:$0xff]
    %v970 = vld [vmem:[%s955 + $0x70] sm:$0xff]
    %v971 = vld [vmem:[%s955 + $0x78] sm:$0xff]
    %v972 = vld [vmem:[%s955 + $0x80] sm:$0xff]
    %v973 = vld [vmem:[%s955 + $0x88] sm:$0xff]
    %v974 = vld [vmem:[%s955 + $0x90] sm:$0xff]
    %v975 = vld [vmem:[%s955 + $0x98] sm:$0xff]
    %v976 = vld [vmem:[%s955 + $0xa0] sm:$0xff]
    %v977 = vld [vmem:[%s955 + $0xa8] sm:$0xff]
    %v978 = vld [vmem:[%s955 + $0xb0] sm:$0xff]
    %v979 = vld [vmem:[%s955 + $0xb8] sm:$0xff]
    %v980 = vld [vmem:[%s955 + $0xc0] sm:$0xff]
    %v981 = vld [vmem:[%s955 + $0xc8] sm:$0xff]
    %v982 = vld [vmem:[%s955 + $0xd0] sm:$0xff]
    %v983 = vld [vmem:[%s955 + $0xd8] sm:$0xff]
    %v984 = vld [vmem:[%s955 + $0xe0] sm:$0xff]
    %v985 = vld [vmem:[%s955 + $0xe8] sm:$0xff]
    %v986 = vld [vmem:[%s955 + $0xf0] sm:$0xff]
    %v987 = vld [vmem:[%s955 + $0xf8] sm:$0xff]
    %v988 = vld [vmem:[%s955 + $0x100] sm:$0xff]
    %v989 = vld [vmem:[%s955 + $0x108] sm:$0xff]
    %v990 = vld [vmem:[%s955 + $0x110] sm:$0xff]
    %v991 = vld [vmem:[%s955 + $0x118] sm:$0xff]
    %v992 = vld [vmem:[%s955 + $0x120] sm:$0xff]
    %v993 = vld [vmem:[%s955 + $0x128] sm:$0xff]
    %v994 = vld [vmem:[%s955 + $0x130] sm:$0xff]
    %v995 = vld [vmem:[%s955 + $0x138] sm:$0xff]
    %v996 = vld [vmem:[%s955 + $0x140] sm:$0xff]
    %v997 = vld [vmem:[%s955 + $0x148] sm:$0xff]
    %v998 = vld [vmem:[%s955 + $0x150] sm:$0xff]
    %v999 = vld [vmem:[%s955 + $0x158] sm:$0xff]
    %v1000 = vld [vmem:[%s955 + $0x160] sm:$0xff]
    %v1001 = vld [vmem:[%s955 + $0x168] sm:$0xff]
    %v1002 = vld [vmem:[%s955 + $0x170] sm:$0xff]
    %v1003 = vld [vmem:[%s955 + $0x178] sm:$0xff]
    %v1004 = vld [vmem:[%s955 + $0x180] sm:$0xff]
    %v1005 = vld [vmem:[%s955 + $0x188] sm:$0xff]
    %v1006 = vld [vmem:[%s955 + $0x190] sm:$0xff]
    %v1007 = vld [vmem:[%s955 + $0x198] sm:$0xff]
    %v1008 = vld [vmem:[%s955 + $0x1a0] sm:$0xff]
    %v1009 = vld [vmem:[%s955 + $0x1a8] sm:$0xff]
    %v1010 = vld [vmem:[%s955 + $0x1b0] sm:$0xff]
    %v1011 = vld [vmem:[%s955 + $0x1b8] sm:$0xff]
    %v1012 = vld [vmem:[%s955 + $0x1c0] sm:$0xff]
    %v1013 = vld [vmem:[%s955 + $0x1c8] sm:$0xff]
    %v1014 = vld [vmem:[%s955 + $0x1d0] sm:$0xff]
    %v1015 = vld [vmem:[%s955 + $0x1d8] sm:$0xff]
    %v1016 = vld [vmem:[%s955 + $0x1e0] sm:$0xff]
    %v1017 = vld [vmem:[%s955 + $0x1e8] sm:$0xff]
    %v1018 = vld [vmem:[%s955 + $0x1f0] sm:$0xff]
    %v1019 = vld [vmem:[%s955 + $0x1f8] sm:$0xff]
    %v1084 = vunpack.c.l.b16 %v956
    %v1085 = vunpack.c.h.b16 %v956
    %v1086 = vunpack.c.l.b16 %v957
    %v1087 = vunpack.c.h.b16 %v957
    %v1088 = vunpack.c.l.b16 %v958
    %v1089 = vunpack.c.h.b16 %v958
    %v1090 = vunpack.c.l.b16 %v959
    %v1091 = vunpack.c.h.b16 %v959
    %v1092 = vunpack.c.l.b16 %v960
    %v1093 = vunpack.c.h.b16 %v960
    %v1094 = vunpack.c.l.b16 %v961
    %v1095 = vunpack.c.h.b16 %v961
    %v1096 = vunpack.c.l.b16 %v962
    %v1097 = vunpack.c.h.b16 %v962
    %v1098 = vunpack.c.l.b16 %v963
    %v1099 = vunpack.c.h.b16 %v963
    %v1100 = vunpack.c.l.b16 %v964
    %v1101 = vunpack.c.h.b16 %v964
    %v1102 = vunpack.c.l.b16 %v965
    %v1103 = vunpack.c.h.b16 %v965
    %v1104 = vunpack.c.l.b16 %v966
    %v1105 = vunpack.c.h.b16 %v966
    %v1106 = vunpack.c.l.b16 %v967
    %v1107 = vunpack.c.h.b16 %v967
    %v1108 = vunpack.c.l.b16 %v968
    %v1109 = vunpack.c.h.b16 %v968
    %v1110 = vunpack.c.l.b16 %v969
    %v1111 = vunpack.c.h.b16 %v969
    %v1112 = vunpack.c.l.b16 %v970
    %v1113 = vunpack.c.h.b16 %v970
    %v1114 = vunpack.c.l.b16 %v971
    %v1115 = vunpack.c.h.b16 %v971
    %v1116 = vunpack.c.l.b16 %v972
    %v1117 = vunpack.c.h.b16 %v972
    %v1118 = vunpack.c.l.b16 %v973
    %v1119 = vunpack.c.h.b16 %v973
    %v1120 = vunpack.c.l.b16 %v974
    %v1121 = vunpack.c.h.b16 %v974
    %v1122 = vunpack.c.l.b16 %v975
    %v1123 = vunpack.c.h.b16 %v975
    %v1124 = vunpack.c.l.b16 %v976
    %v1125 = vunpack.c.h.b16 %v976
    %v1126 = vunpack.c.l.b16 %v977
    %v1127 = vunpack.c.h.b16 %v977
    %v1128 = vunpack.c.l.b16 %v978
    %v1129 = vunpack.c.h.b16 %v978
    %v1130 = vunpack.c.l.b16 %v979
    %v1131 = vunpack.c.h.b16 %v979
    %v1132 = vunpack.c.l.b16 %v980
    %v1133 = vunpack.c.h.b16 %v980
    %v1134 = vunpack.c.l.b16 %v981
    %v1135 = vunpack.c.h.b16 %v981
    %v1136 = vunpack.c.l.b16 %v982
    %v1137 = vunpack.c.h.b16 %v982
    %v1138 = vunpack.c.l.b16 %v983
    %v1139 = vunpack.c.h.b16 %v983
    %v1140 = vunpack.c.l.b16 %v984
    %v1141 = vunpack.c.h.b16 %v984
    %v1142 = vunpack.c.l.b16 %v985
    %v1143 = vunpack.c.h.b16 %v985
    %v1144 = vunpack.c.l.b16 %v986
    %v1145 = vunpack.c.h.b16 %v986
    %v1146 = vunpack.c.l.b16 %v987
    %v1147 = vunpack.c.h.b16 %v987
    %v1148 = vunpack.c.l.b16 %v988
    %v1149 = vunpack.c.h.b16 %v988
    %v1150 = vunpack.c.l.b16 %v989
    %v1151 = vunpack.c.h.b16 %v989
    %v1152 = vunpack.c.l.b16 %v990
    %v1153 = vunpack.c.h.b16 %v990
    %v1154 = vunpack.c.l.b16 %v991
    %v1155 = vunpack.c.h.b16 %v991
    %v1156 = vunpack.c.l.b16 %v992
    %v1157 = vunpack.c.h.b16 %v992
    %v1158 = vunpack.c.l.b16 %v993
    %v1159 = vunpack.c.h.b16 %v993
    %v1160 = vunpack.c.l.b16 %v994
    %v1161 = vunpack.c.h.b16 %v994
    %v1162 = vunpack.c.l.b16 %v995
    %v1163 = vunpack.c.h.b16 %v995
    %v1164 = vunpack.c.l.b16 %v996
    %v1165 = vunpack.c.h.b16 %v996
    %v1166 = vunpack.c.l.b16 %v997
    %v1167 = vunpack.c.h.b16 %v997
    %v1168 = vunpack.c.l.b16 %v998
    %v1169 = vunpack.c.h.b16 %v998
    %v1170 = vunpack.c.l.b16 %v999
    %v1171 = vunpack.c.h.b16 %v999
    %v1172 = vunpack.c.l.b16 %v1000
    %v1173 = vunpack.c.h.b16 %v1000
    %v1174 = vunpack.c.l.b16 %v1001
    %v1175 = vunpack.c.h.b16 %v1001
    %v1176 = vunpack.c.l.b16 %v1002
    %v1177 = vunpack.c.h.b16 %v1002
    %v1178 = vunpack.c.l.b16 %v1003
    %v1179 = vunpack.c.h.b16 %v1003
    %v1180 = vunpack.c.l.b16 %v1004
    %v1181 = vunpack.c.h.b16 %v1004
    %v1182 = vunpack.c.l.b16 %v1005
    %v1183 = vunpack.c.h.b16 %v1005
    %v1184 = vunpack.c.l.b16 %v1006
    %v1185 = vunpack.c.h.b16 %v1006
    %v1186 = vunpack.c.l.b16 %v1007
    %v1187 = vunpack.c.h.b16 %v1007
    %v1188 = vunpack.c.l.b16 %v1008
    %v1189 = vunpack.c.h.b16 %v1008
    %v1190 = vunpack.c.l.b16 %v1009
    %v1191 = vunpack.c.h.b16 %v1009
    %v1192 = vunpack.c.l.b16 %v1010
    %v1193 = vunpack.c.h.b16 %v1010
    %v1194 = vunpack.c.l.b16 %v1011
    %v1195 = vunpack.c.h.b16 %v1011
    %v1196 = vunpack.c.l.b16 %v1012
    %v1197 = vunpack.c.h.b16 %v1012
    %v1198 = vunpack.c.l.b16 %v1013
    %v1199 = vunpack.c.h.b16 %v1013
    %v1200 = vunpack.c.l.b16 %v1014
    %v1201 = vunpack.c.h.b16 %v1014
    %v1202 = vunpack.c.l.b16 %v1015
    %v1203 = vunpack.c.h.b16 %v1015
    %v1204 = vunpack.c.l.b16 %v1016
    %v1205 = vunpack.c.h.b16 %v1016
    %v1206 = vunpack.c.l.b16 %v1017
    %v1207 = vunpack.c.h.b16 %v1017
    %v1208 = vunpack.c.l.b16 %v1018
    %v1209 = vunpack.c.h.b16 %v1018
    %v1210 = vunpack.c.l.b16 %v1019
    %v1211 = vunpack.c.h.b16 %v1019
    %v1212 = vpack.c.b16 %v1088, %v1084
    %v1213 = vpack.c.b16 %v1089, %v1085
    %v1214 = vpack.c.b16 %v1090, %v1086
    %v1215 = vpack.c.b16 %v1091, %v1087
    %v1216 = vpack.c.b16 %v1096, %v1092
    %v1217 = vpack.c.b16 %v1097, %v1093
    %v1218 = vpack.c.b16 %v1098, %v1094
    %v1219 = vpack.c.b16 %v1099, %v1095
    %v1220 = vpack.c.b16 %v1104, %v1100
    %v1221 = vpack.c.b16 %v1105, %v1101
    %v1222 = vpack.c.b16 %v1106, %v1102
    %v1223 = vpack.c.b16 %v1107, %v1103
    %v1224 = vpack.c.b16 %v1112, %v1108
    %v1225 = vpack.c.b16 %v1113, %v1109
    %v1226 = vpack.c.b16 %v1114, %v1110
    %v1227 = vpack.c.b16 %v1115, %v1111
    %v1228 = vpack.c.b16 %v1120, %v1116
    %v1229 = vpack.c.b16 %v1121, %v1117
    %v1230 = vpack.c.b16 %v1122, %v1118
    %v1231 = vpack.c.b16 %v1123, %v1119
    %v1232 = vpack.c.b16 %v1128, %v1124
    %v1233 = vpack.c.b16 %v1129, %v1125
    %v1234 = vpack.c.b16 %v1130, %v1126
    %v1235 = vpack.c.b16 %v1131, %v1127
    %v1236 = vpack.c.b16 %v1136, %v1132
    %v1237 = vpack.c.b16 %v1137, %v1133
    %v1238 = vpack.c.b16 %v1138, %v1134
    %v1239 = vpack.c.b16 %v1139, %v1135
    %v1240 = vpack.c.b16 %v1144, %v1140
    %v1241 = vpack.c.b16 %v1145, %v1141
    %v1242 = vpack.c.b16 %v1146, %v1142
    %v1243 = vpack.c.b16 %v1147, %v1143
    %v1244 = vpack.c.b16 %v1152, %v1148
    %v1245 = vpack.c.b16 %v1153, %v1149
    %v1246 = vpack.c.b16 %v1154, %v1150
    %v1247 = vpack.c.b16 %v1155, %v1151
    %v1248 = vpack.c.b16 %v1160, %v1156
    %v1249 = vpack.c.b16 %v1161, %v1157
    %v1250 = vpack.c.b16 %v1162, %v1158
    %v1251 = vpack.c.b16 %v1163, %v1159
    %v1252 = vpack.c.b16 %v1168, %v1164
    %v1253 = vpack.c.b16 %v1169, %v1165
    %v1254 = vpack.c.b16 %v1170, %v1166
    %v1255 = vpack.c.b16 %v1171, %v1167
    %v1256 = vpack.c.b16 %v1176, %v1172
    %v1257 = vpack.c.b16 %v1177, %v1173
    %v1258 = vpack.c.b16 %v1178, %v1174
    %v1259 = vpack.c.b16 %v1179, %v1175
    %v1260 = vpack.c.b16 %v1184, %v1180
    %v1261 = vpack.c.b16 %v1185, %v1181
    %v1262 = vpack.c.b16 %v1186, %v1182
    %v1263 = vpack.c.b16 %v1187, %v1183
    %v1264 = vpack.c.b16 %v1192, %v1188
    %v1265 = vpack.c.b16 %v1193, %v1189
    %v1266 = vpack.c.b16 %v1194, %v1190
    %v1267 = vpack.c.b16 %v1195, %v1191
    %v1268 = vpack.c.b16 %v1200, %v1196
    %v1269 = vpack.c.b16 %v1201, %v1197
    %v1270 = vpack.c.b16 %v1202, %v1198
    %v1271 = vpack.c.b16 %v1203, %v1199
    %v1272 = vpack.c.b16 %v1208, %v1204
    %v1273 = vpack.c.b16 %v1209, %v1205
    %v1274 = vpack.c.b16 %v1210, %v1206
    %v1275 = vpack.c.b16 %v1211, %v1207
    %1340 = vmatpush.bf16.msra.mxu0 %v1240
    %1341 = vmatpush.bf16.msra.mxu0 %v1236
    %1342 = vmatpush.bf16.msra.mxu0 %v1232
    %1343 = vmatpush.bf16.msra.mxu0 %v1228
    %1344 = vmatpush.bf16.msra.mxu0 %v1224
    %1345 = vmatpush.bf16.msra.mxu0 %v1220
    %1346 = vmatpush.bf16.msra.mxu0 %v1216
    %1347 = vmatpush.bf16.msra.mxu0 %v1212
    %1348 = vmatmul.bf16.gmra.mxu0 %v415
    %v1349 = vpop.f32.mrf.mxu0
    %v1350 = vadd.f32 0.0, %v1349
    %v1351 = vpop.f32.mrf.mxu0
    %v1352 = vadd.f32 0.0, %v1351
    %1353 = vmatmul.bf16.gmra.mxu0 %v417
    %v1354 = vpop.f32.mrf.mxu0
    %v1355 = vadd.f32 0.0, %v1354
    %v1356 = vpop.f32.mrf.mxu0
    %v1357 = vadd.f32 0.0, %v1356
    %1358 = vdwg.mxu0
    %1359 = vmatpush.bf16.msra.mxu0 %v1272
    %1360 = vmatpush.bf16.msra.mxu0 %v1268
    %1361 = vmatpush.bf16.msra.mxu0 %v1264
    %1362 = vmatpush.bf16.msra.mxu0 %v1260
    %1363 = vmatpush.bf16.msra.mxu0 %v1256
    %1364 = vmatpush.bf16.msra.mxu0 %v1252
    %1365 = vmatpush.bf16.msra.mxu0 %v1248
    %1366 = vmatpush.bf16.msra.mxu0 %v1244
    %1367 = vmatmul.bf16.gmra.mxu0 %v416
    %v1368 = vpop.f32.mrf.mxu0
    %v1369 = vadd.f32 %v1350, %v1368
    %v1370 = vpop.f32.mrf.mxu0
    %v1371 = vadd.f32 %v1352, %v1370
    %1372 = vmatmul.bf16.gmra.mxu0 %v418
    %v1373 = vpop.f32.mrf.mxu0
    %v1374 = vadd.f32 %v1355, %v1373
    %v1375 = vpop.f32.mrf.mxu0
    %v1376 = vadd.f32 %v1357, %v1375
    %1377 = vdwg.mxu0
    %1378 = vmatpush.bf16.msra.mxu0 %v1241
    %1379 = vmatpush.bf16.msra.mxu0 %v1237
    %1380 = vmatpush.bf16.msra.mxu0 %v1233
    %1381 = vmatpush.bf16.msra.mxu0 %v1229
    %1382 = vmatpush.bf16.msra.mxu0 %v1225
    %1383 = vmatpush.bf16.msra.mxu0 %v1221
    %1384 = vmatpush.bf16.msra.mxu0 %v1217
    %1385 = vmatpush.bf16.msra.mxu0 %v1213
    %1386 = vmatmul.bf16.gmra.mxu0 %v415
    %v1387 = vpop.f32.mrf.mxu0
    %v1388 = vadd.f32 0.0, %v1387
    %v1389 = vpop.f32.mrf.mxu0
    %v1390 = vadd.f32 0.0, %v1389
    %1391 = vmatmul.bf16.gmra.mxu0 %v417
    %v1392 = vpop.f32.mrf.mxu0
    %v1393 = vadd.f32 0.0, %v1392
    %v1394 = vpop.f32.mrf.mxu0
    %v1395 = vadd.f32 0.0, %v1394
    %1396 = vdwg.mxu0
    %1397 = vmatpush.bf16.msra.mxu0 %v1273
    %1398 = vmatpush.bf16.msra.mxu0 %v1269
    %1399 = vmatpush.bf16.msra.mxu0 %v1265
    %1400 = vmatpush.bf16.msra.mxu0 %v1261
    %1401 = vmatpush.bf16.msra.mxu0 %v1257
    %1402 = vmatpush.bf16.msra.mxu0 %v1253
    %1403 = vmatpush.bf16.msra.mxu0 %v1249
    %1404 = vmatpush.bf16.msra.mxu0 %v1245
    %1405 = vmatmul.bf16.gmra.mxu0 %v416
    %v1406 = vpop.f32.mrf.mxu0
    %v1407 = vadd.f32 %v1388, %v1406
    %v1408 = vpop.f32.mrf.mxu0
    %v1409 = vadd.f32 %v1390, %v1408
    %1410 = vmatmul.bf16.gmra.mxu0 %v418
    %v1411 = vpop.f32.mrf.mxu0
    %v1412 = vadd.f32 %v1393, %v1411
    %v1413 = vpop.f32.mrf.mxu0
    %v1414 = vadd.f32 %v1395, %v1413
    %1415 = vdwg.mxu0
    %1416 = vmatpush.bf16.msra.mxu0 %v1242
    %1417 = vmatpush.bf16.msra.mxu0 %v1238
    %1418 = vmatpush.bf16.msra.mxu0 %v1234
    %1419 = vmatpush.bf16.msra.mxu0 %v1230
    %1420 = vmatpush.bf16.msra.mxu0 %v1226
    %1421 = vmatpush.bf16.msra.mxu0 %v1222
    %1422 = vmatpush.bf16.msra.mxu0 %v1218
    %1423 = vmatpush.bf16.msra.mxu0 %v1214
    %1424 = vmatmul.bf16.gmra.mxu0 %v415
    %v1425 = vpop.f32.mrf.mxu0
    %v1426 = vadd.f32 0.0, %v1425
    %v1427 = vpop.f32.mrf.mxu0
    %v1428 = vadd.f32 0.0, %v1427
    %1429 = vmatmul.bf16.gmra.mxu0 %v417
    %v1430 = vpop.f32.mrf.mxu0
    %v1431 = vadd.f32 0.0, %v1430
    %v1432 = vpop.f32.mrf.mxu0
    %v1433 = vadd.f32 0.0, %v1432
    %1434 = vdwg.mxu0
    %1435 = vmatpush.bf16.msra.mxu0 %v1274
    %1436 = vmatpush.bf16.msra.mxu0 %v1270
    %1437 = vmatpush.bf16.msra.mxu0 %v1266
    %1438 = vmatpush.bf16.msra.mxu0 %v1262
    %1439 = vmatpush.bf16.msra.mxu0 %v1258
    %1440 = vmatpush.bf16.msra.mxu0 %v1254
    %1441 = vmatpush.bf16.msra.mxu0 %v1250
    %1442 = vmatpush.bf16.msra.mxu0 %v1246
    %1443 = vmatmul.bf16.gmra.mxu0 %v416
    %v1444 = vpop.f32.mrf.mxu0
    %v1445 = vadd.f32 %v1426, %v1444
    %v1446 = vpop.f32.mrf.mxu0
    %v1447 = vadd.f32 %v1428, %v1446
    %1448 = vmatmul.bf16.gmra.mxu0 %v418
    %v1449 = vpop.f32.mrf.mxu0
    %v1450 = vadd.f32 %v1431, %v1449
    %v1451 = vpop.f32.mrf.mxu0
    %v1452 = vadd.f32 %v1433, %v1451
    %1453 = vdwg.mxu0
    %1454 = vmatpush.bf16.msra.mxu0 %v1243
    %1455 = vmatpush.bf16.msra.mxu0 %v1239
    %1456 = vmatpush.bf16.msra.mxu0 %v1235
    %1457 = vmatpush.bf16.msra.mxu0 %v1231
    %1458 = vmatpush.bf16.msra.mxu0 %v1227
    %1459 = vmatpush.bf16.msra.mxu0 %v1223
    %1460 = vmatpush.bf16.msra.mxu0 %v1219
    %1461 = vmatpush.bf16.msra.mxu0 %v1215
    %1462 = vmatmul.bf16.gmra.mxu0 %v415
    %v1463 = vpop.f32.mrf.mxu0
    %v1464 = vadd.f32 0.0, %v1463
    %v1465 = vpop.f32.mrf.mxu0
    %v1466 = vadd.f32 0.0, %v1465
    %1467 = vmatmul.bf16.gmra.mxu0 %v417
    %v1468 = vpop.f32.mrf.mxu0
    %v1469 = vadd.f32 0.0, %v1468
    %v1470 = vpop.f32.mrf.mxu0
    %v1471 = vadd.f32 0.0, %v1470
    %1472 = vdwg.mxu0
    %1473 = vmatpush.bf16.msra.mxu0 %v1275
    %1474 = vmatpush.bf16.msra.mxu0 %v1271
    %1475 = vmatpush.bf16.msra.mxu0 %v1267
    %1476 = vmatpush.bf16.msra.mxu0 %v1263
    %1477 = vmatpush.bf16.msra.mxu0 %v1259
    %1478 = vmatpush.bf16.msra.mxu0 %v1255
    %1479 = vmatpush.bf16.msra.mxu0 %v1251
    %1480 = vmatpush.bf16.msra.mxu0 %v1247
    %1481 = vmatmul.bf16.gmra.mxu0 %v416
    %v1482 = vpop.f32.mrf.mxu0
    %v1483 = vadd.f32 %v1464, %v1482
    %v1484 = vpop.f32.mrf.mxu0
    %v1485 = vadd.f32 %v1466, %v1484
    %1486 = vmatmul.bf16.gmra.mxu0 %v418
    %v1487 = vpop.f32.mrf.mxu0
    %v1488 = vadd.f32 %v1469, %v1487
    %v1489 = vpop.f32.mrf.mxu0
    %v1490 = vadd.f32 %v1471, %v1489
    %1491 = vdwg.mxu0
    %v1492 = vpack.c.bf16 %v834, %v832
    %v1493 = vpack.c.bf16 %v872, %v870
    %v1494 = vpack.c.bf16 %v910, %v908
    %v1495 = vpack.c.bf16 %v948, %v946
    %v1496 = vpack.c.bf16 %v839, %v837
    %v1497 = vpack.c.bf16 %v877, %v875
    %v1498 = vpack.c.bf16 %v915, %v913
    %v1499 = vpack.c.bf16 %v953, %v951
    %v1500 = vld [vmem:[#allocation11] sm:$0xf]
    %v1502 = vperm.slane %v1500, 0
    %v1503 = vperm.slane %v1500, 1
    %v1504 = vperm.slane %v1500, 2
    %v1505 = vperm.slane %v1500, 3
    %v1510 = vmul.f32 %v832, %v1502
    %v1511 = vmul.f32 %v870, %v1503
    %v1512 = vmul.f32 %v908, %v1504
    %v1513 = vmul.f32 %v946, %v1505
    %v1514 = vmul.f32 %v834, %v1502
    %v1515 = vmul.f32 %v872, %v1503
    %v1516 = vmul.f32 %v910, %v1504
    %v1517 = vmul.f32 %v948, %v1505
    %v1518 = vmul.f32 %v837, %v1502
    %v1519 = vmul.f32 %v875, %v1503
    %v1520 = vmul.f32 %v913, %v1504
    %v1521 = vmul.f32 %v951, %v1505
    %v1522 = vmul.f32 %v839, %v1502
    %v1523 = vmul.f32 %v877, %v1503
    %v1524 = vmul.f32 %v915, %v1504
    %v1525 = vmul.f32 %v953, %v1505
    %v1526 = vadd.f32 %v1510, %v1511
    %v1527 = vadd.f32 %v1526, %v1512
    %vm1528 = vcmask 523264
    %v1529 = vsel %vm1528, %v1513, 0.0
    %v1530 = vadd.f32 %v1527, %v1529
    %1531 = vadd.xlane.f32.xlu0 %v1530
    %v1532 = vpop.xlane.xlu0 %1531
    %v1533 = vadd.f32 %v1514, %v1515
    %v1534 = vadd.f32 %v1533, %v1516
    %v1535 = vsel %vm1528, %v1517, 0.0
    %v1536 = vadd.f32 %v1534, %v1535
    %1537 = vadd.xlane.f32.xlu0 %v1536
    %v1538 = vpop.xlane.xlu0 %1537
    %v1539 = vadd.f32 %v1518, %v1519
    %v1540 = vadd.f32 %v1539, %v1520
    %v1541 = vsel %vm1528, %v1521, 0.0
    %v1542 = vadd.f32 %v1540, %v1541
    %1543 = vadd.xlane.f32.xlu0 %v1542
    %v1544 = vpop.xlane.xlu0 %1543
    %v1545 = vadd.f32 %v1522, %v1523
    %v1546 = vadd.f32 %v1545, %v1524
    %v1547 = vsel %vm1528, %v1525, 0.0
    %v1548 = vadd.f32 %v1546, %v1547
    %1549 = vadd.xlane.f32.xlu0 %v1548
    %v1550 = vpop.xlane.xlu0 %1549
    %v1551 = vld [vmem:[#allocation9] sm:$0xf]
    %v1553 = vperm.slane %v1551, 0
    %v1554 = vperm.slane %v1551, 1
    %v1555 = vperm.slane %v1551, 2
    %v1556 = vperm.slane %v1551, 3
    %v1561 = vpack.c.bf16 %v1553, %v1553
    %v1562 = vpack.c.bf16 %v1554, %v1554
    %v1563 = vpack.c.bf16 %v1555, %v1555
    %v1564 = vpack.c.bf16 %v1556, %v1556
    %v1566 = vsel %vm1528, %v1564, 0
    %v1569 = vsel %vm1528, %v1495, 0
    %v1572 = vsel %vm1528, %v1499, 0
    %1574 = vmatpush.bf16.xpose.msra.mxu0 0
    %1575 = vmatpush.bf16.xpose.msra.mxu0 0
    %1576 = vmatpush.bf16.xpose.msra.mxu0 0
    %1577 = vmatpush.bf16.xpose.msra.mxu0 0
    %1578 = vmatpush.bf16.xpose.msra.mxu0 0
    %1579 = vmatpush.bf16.xpose.msra.mxu0 0
    %1580 = vmatpush.bf16.xpose.msra.mxu0 %v1496
    %1581 = vmatpush.bf16.xpose.msra.mxu0 %v1492
    %1582 = vmatmul.bf16.gmra.mxu0 %v1561
    %v1583 = vpop.f32.mrf.mxu0
    %v1584 = vadd.f32 0.0, %v1583
    %v1585 = vpop.f32.mrf.mxu0
    %1586 = vdwg.mxu0
    %1587 = vmatpush.bf16.xpose.msra.mxu0 0
    %1588 = vmatpush.bf16.xpose.msra.mxu0 0
    %1589 = vmatpush.bf16.xpose.msra.mxu0 0
    %1590 = vmatpush.bf16.xpose.msra.mxu0 0
    %1591 = vmatpush.bf16.xpose.msra.mxu0 0
    %1592 = vmatpush.bf16.xpose.msra.mxu0 0
    %1593 = vmatpush.bf16.xpose.msra.mxu0 %v1497
    %1594 = vmatpush.bf16.xpose.msra.mxu0 %v1493
    %1595 = vmatmul.bf16.gmra.mxu0 %v1562
    %v1596 = vpop.f32.mrf.mxu0
    %v1597 = vadd.f32 %v1584, %v1596
    %v1598 = vpop.f32.mrf.mxu0
    %1599 = vdwg.mxu0
    %1600 = vmatpush.bf16.xpose.msra.mxu0 0
    %1601 = vmatpush.bf16.xpose.msra.mxu0 0
    %1602 = vmatpush.bf16.xpose.msra.mxu0 0
    %1603 = vmatpush.bf16.xpose.msra.mxu0 0
    %1604 = vmatpush.bf16.xpose.msra.mxu0 0
    %1605 = vmatpush.bf16.xpose.msra.mxu0 0
    %1606 = vmatpush.bf16.xpose.msra.mxu0 %v1498
    %1607 = vmatpush.bf16.xpose.msra.mxu0 %v1494
    %1608 = vmatmul.bf16.gmra.mxu0 %v1563
    %v1609 = vpop.f32.mrf.mxu0
    %v1610 = vadd.f32 %v1597, %v1609
    %v1611 = vpop.f32.mrf.mxu0
    %1612 = vdwg.mxu0
    %1613 = vmatpush.bf16.xpose.msra.mxu0 0
    %1614 = vmatpush.bf16.xpose.msra.mxu0 0
    %1615 = vmatpush.bf16.xpose.msra.mxu0 0
    %1616 = vmatpush.bf16.xpose.msra.mxu0 0
    %1617 = vmatpush.bf16.xpose.msra.mxu0 0
    %1618 = vmatpush.bf16.xpose.msra.mxu0 0
    %1619 = vmatpush.bf16.xpose.msra.mxu0 %v1572
    %1620 = vmatpush.bf16.xpose.msra.mxu0 %v1569
    %1621 = vmatmul.bf16.gmra.mxu0 %v1566
    %v1622 = vpop.f32.mrf.mxu0
    %v1623 = vadd.f32 %v1610, %v1622
    %v1624 = vpop.f32.mrf.mxu0
    %1625 = vdwg.mxu0
    %v1626 = vperm.slane %v1623, 0
    %v1627 = vadd.f32 %v1532, %v1626
    %v1628 = vadd.f32 %v1538, %v1626
    %v1629 = vadd.f32 %v1544, %v1626
    %v1630 = vadd.f32 %v1550, %v1626
    %vm1631 = vcmp.gt.f32.partialorder %v1627, 0.0
    %vm1632 = vcmp.gt.f32.partialorder %v1628, 0.0
    %vm1633 = vcmp.gt.f32.partialorder %v1629, 0.0
    %vm1634 = vcmp.gt.f32.partialorder %v1630, 0.0
    %v1635 = vmul.f32 %v1627, 0.2
    %v1636 = vmul.f32 %v1628, 0.2
    %v1637 = vmul.f32 %v1629, 0.2
    %v1638 = vmul.f32 %v1630, 0.2
    %v1639 = vsel %vm1631, %v1627, %v1635
    %v1640 = vsel %vm1632, %v1628, %v1636
    %v1641 = vsel %vm1633, %v1629, %v1637
    %v1642 = vsel %vm1634, %v1630, %v1638
    %v1643 = vadd.f32 %v1639, %v403
    %v1644 = vadd.f32 %v1640, %v404
    %v1645 = vadd.f32 %v1641, %v405
    %v1646 = vadd.f32 %v1642, %v406
    %vm1647 = vcmask 261120
    %v1648 = vsel %vm1647, %v1643, -inf
    %1649 = vmax.xlane.f32.xlu0 %v1648
    %v1650 = vpop.xlane.xlu0 %1649
    %v1651 = vsel %vm1647, %v1644, -inf
    %1652 = vmax.xlane.f32.xlu0 %v1651
    %v1653 = vpop.xlane.xlu0 %1652
    %v1654 = vsel %vm1647, %v1645, -inf
    %1655 = vmax.xlane.f32.xlu0 %v1654
    %v1656 = vpop.xlane.xlu0 %1655
    %v1657 = vsel %vm1647, %v1646, -inf
    %1658 = vmax.xlane.f32.xlu0 %v1657
    %v1659 = vpop.xlane.xlu0 %1658
    %v1660 = vsub.f32 %v1643, %v1650
    %v1661 = vsub.f32 %v1644, %v1653
    %v1662 = vsub.f32 %v1645, %v1656
    %v1663 = vsub.f32 %v1646, %v1659
    %v1664 = vmul.f32 %v1660, 1.442695
    %v1665 = vpow.pop %v1664
    %v1666 = vmul.f32 %v1661, 1.442695
    %v1667 = vpow.pop %v1666
    %v1668 = vmul.f32 %v1662, 1.442695
    %v1669 = vpow.pop %v1668
    %v1670 = vmul.f32 %v1663, 1.442695
    %v1671 = vpow.pop %v1670
    %v1672 = vsel %vm1647, %v1665, 0.0
    %1673 = vadd.xlane.f32.xlu0 %v1672
    %v1674 = vpop.xlane.xlu0 %1673
    %v1675 = vsel %vm1647, %v1667, 0.0
    %1676 = vadd.xlane.f32.xlu0 %v1675
    %v1677 = vpop.xlane.xlu0 %1676
    %v1678 = vsel %vm1647, %v1669, 0.0
    %1679 = vadd.xlane.f32.xlu0 %v1678
    %v1680 = vpop.xlane.xlu0 %1679
    %v1681 = vsel %vm1647, %v1671, 0.0
    %1682 = vadd.xlane.f32.xlu0 %v1681
    %v1683 = vpop.xlane.xlu0 %1682
    %v1684 = vrcp.pop %v1674
    %v1685 = vrcp.pop %v1677
    %v1686 = vrcp.pop %v1680
    %v1687 = vrcp.pop %v1683
    %v1688 = vmul.f32 %v1665, %v1684
    %v1689 = vmul.f32 %v1667, %v1685
    %v1690 = vmul.f32 %v1669, %v1686
    %v1691 = vmul.f32 %v1671, %v1687
    %v1692 = vpack.c.bf16 %v1689, %v1688
    %v1693 = vpack.c.bf16 %v1691, %v1690
    %v1694 = vld [vmem:[#allocation12] sm:$0xf]
    %v1696 = vperm.slane %v1694, 0
    %v1697 = vperm.slane %v1694, 1
    %v1698 = vperm.slane %v1694, 2
    %v1699 = vperm.slane %v1694, 3
    %v1705 = vsel %vm1647, %v1692, 0
    %v1708 = vsel %vm1647, %v1693, 0
    %1710 = vmatpush.bf16.msra.mxu0 0
    %1711 = vmatpush.bf16.msra.mxu0 0
    %1712 = vmatpush.bf16.msra.mxu0 0
    %1713 = vmatpush.bf16.msra.mxu0 0
    %1714 = vmatpush.bf16.msra.mxu0 0
    %1715 = vmatpush.bf16.msra.mxu0 0
    %1716 = vmatpush.bf16.msra.mxu0 %v1496
    %1717 = vmatpush.bf16.msra.mxu0 %v1492
    %1718 = vmatmul.bf16.gmra.mxu0 %v1705
    %v1719 = vpop.f32.mrf.mxu0
    %v1720 = vadd.f32 %v1696, %v1719
    %v1721 = vpop.f32.mrf.mxu0
    %v1722 = vadd.f32 %v1696, %v1721
    %1723 = vmatmul.bf16.gmra.mxu0 %v1708
    %v1724 = vpop.f32.mrf.mxu0
    %v1725 = vadd.f32 %v1696, %v1724
    %v1726 = vpop.f32.mrf.mxu0
    %v1727 = vadd.f32 %v1696, %v1726
    %1728 = vdwg.mxu0
    %1729 = vmatpush.bf16.msra.mxu0 0
    %1730 = vmatpush.bf16.msra.mxu0 0
    %1731 = vmatpush.bf16.msra.mxu0 0
    %1732 = vmatpush.bf16.msra.mxu0 0
    %1733 = vmatpush.bf16.msra.mxu0 0
    %1734 = vmatpush.bf16.msra.mxu0 0
    %1735 = vmatpush.bf16.msra.mxu0 %v1497
    %1736 = vmatpush.bf16.msra.mxu0 %v1493
    %1737 = vmatmul.bf16.gmra.mxu0 %v1705
    %v1738 = vpop.f32.mrf.mxu0
    %v1739 = vadd.f32 %v1697, %v1738
    %v1740 = vpop.f32.mrf.mxu0
    %v1741 = vadd.f32 %v1697, %v1740
    %1742 = vmatmul.bf16.gmra.mxu0 %v1708
    %v1743 = vpop.f32.mrf.mxu0
    %v1744 = vadd.f32 %v1697, %v1743
    %v1745 = vpop.f32.mrf.mxu0
    %v1746 = vadd.f32 %v1697, %v1745
    %1747 = vdwg.mxu0
    %1748 = vmatpush.bf16.msra.mxu0 0
    %1749 = vmatpush.bf16.msra.mxu0 0
    %1750 = vmatpush.bf16.msra.mxu0 0
    %1751 = vmatpush.bf16.msra.mxu0 0
    %1752 = vmatpush.bf16.msra.mxu0 0
    %1753 = vmatpush.bf16.msra.mxu0 0
    %1754 = vmatpush.bf16.msra.mxu0 %v1498
    %1755 = vmatpush.bf16.msra.mxu0 %v1494
    %1756 = vmatmul.bf16.gmra.mxu0 %v1705
    %v1757 = vpop.f32.mrf.mxu0
    %v1758 = vadd.f32 %v1698, %v1757
    %v1759 = vpop.f32.mrf.mxu0
    %v1760 = vadd.f32 %v1698, %v1759
    %1761 = vmatmul.bf16.gmra.mxu0 %v1708
    %v1762 = vpop.f32.mrf.mxu0
    %v1763 = vadd.f32 %v1698, %v1762
    %v1764 = vpop.f32.mrf.mxu0
    %v1765 = vadd.f32 %v1698, %v1764
    %1766 = vdwg.mxu0
    %1767 = vmatpush.bf16.msra.mxu0 0
    %1768 = vmatpush.bf16.msra.mxu0 0
    %1769 = vmatpush.bf16.msra.mxu0 0
    %1770 = vmatpush.bf16.msra.mxu0 0
    %1771 = vmatpush.bf16.msra.mxu0 0
    %1772 = vmatpush.bf16.msra.mxu0 0
    %1773 = vmatpush.bf16.msra.mxu0 %v1499
    %1774 = vmatpush.bf16.msra.mxu0 %v1495
    %1775 = vmatmul.bf16.gmra.mxu0 %v1705
    %v1776 = vpop.f32.mrf.mxu0
    %v1777 = vadd.f32 %v1699, %v1776
    %v1778 = vpop.f32.mrf.mxu0
    %v1779 = vadd.f32 %v1699, %v1778
    %1780 = vmatmul.bf16.gmra.mxu0 %v1708
    %v1781 = vpop.f32.mrf.mxu0
    %v1782 = vadd.f32 %v1699, %v1781
    %v1783 = vpop.f32.mrf.mxu0
    %v1784 = vadd.f32 %v1699, %v1783
    %1785 = vdwg.mxu0
    %v1786 = vpack.c.bf16 %v1371, %v1369
    %v1787 = vpack.c.bf16 %v1409, %v1407
    %v1788 = vpack.c.bf16 %v1447, %v1445
    %v1789 = vpack.c.bf16 %v1485, %v1483
    %v1790 = vpack.c.bf16 %v1376, %v1374
    %v1791 = vpack.c.bf16 %v1414, %v1412
    %v1792 = vpack.c.bf16 %v1452, %v1450
    %v1793 = vpack.c.bf16 %v1490, %v1488
    %s1794 = scalar_lea.vmem [#allocation11], 4
    %v1795 = vld [vmem:[%s1794] sm:$0xf]
    %v1797 = vperm.slane %v1795, 0
    %v1798 = vperm.slane %v1795, 1
    %v1799 = vperm.slane %v1795, 2
    %v1800 = vperm.slane %v1795, 3
    %v1805 = vmul.f32 %v1369, %v1797
    %v1806 = vmul.f32 %v1407, %v1798
    %v1807 = vmul.f32 %v1445, %v1799
    %v1808 = vmul.f32 %v1483, %v1800
    %v1809 = vmul.f32 %v1371, %v1797
    %v1810 = vmul.f32 %v1409, %v1798
    %v1811 = vmul.f32 %v1447, %v1799
    %v1812 = vmul.f32 %v1485, %v1800
    %v1813 = vmul.f32 %v1374, %v1797
    %v1814 = vmul.f32 %v1412, %v1798
    %v1815 = vmul.f32 %v1450, %v1799
    %v1816 = vmul.f32 %v1488, %v1800
    %v1817 = vmul.f32 %v1376, %v1797
    %v1818 = vmul.f32 %v1414, %v1798
    %v1819 = vmul.f32 %v1452, %v1799
    %v1820 = vmul.f32 %v1490, %v1800
    %v1821 = vadd.f32 %v1805, %v1806
    %v1822 = vadd.f32 %v1821, %v1807
    %v1823 = vsel %vm1528, %v1808, 0.0
    %v1824 = vadd.f32 %v1822, %v1823
    %1825 = vadd.xlane.f32.xlu0 %v1824
    %v1826 = vpop.xlane.xlu0 %1825
    %v1827 = vadd.f32 %v1809, %v1810
    %v1828 = vadd.f32 %v1827, %v1811
    %v1829 = vsel %vm1528, %v1812, 0.0
    %v1830 = vadd.f32 %v1828, %v1829
    %1831 = vadd.xlane.f32.xlu0 %v1830
    %v1832 = vpop.xlane.xlu0 %1831
    %v1833 = vadd.f32 %v1813, %v1814
    %v1834 = vadd.f32 %v1833, %v1815
    %v1835 = vsel %vm1528, %v1816, 0.0
    %v1836 = vadd.f32 %v1834, %v1835
    %1837 = vadd.xlane.f32.xlu0 %v1836
    %v1838 = vpop.xlane.xlu0 %1837
    %v1839 = vadd.f32 %v1817, %v1818
    %v1840 = vadd.f32 %v1839, %v1819
    %v1841 = vsel %vm1528, %v1820, 0.0
    %v1842 = vadd.f32 %v1840, %v1841
    %1843 = vadd.xlane.f32.xlu0 %v1842
    %v1844 = vpop.xlane.xlu0 %1843
    %s1845 = scalar_lea.vmem [#allocation9], 4
    %v1846 = vld [vmem:[%s1845] sm:$0xf]
    %v1848 = vperm.slane %v1846, 0
    %v1849 = vperm.slane %v1846, 1
    %v1850 = vperm.slane %v1846, 2
    %v1851 = vperm.slane %v1846, 3
    %v1856 = vpack.c.bf16 %v1848, %v1848
    %v1857 = vpack.c.bf16 %v1849, %v1849
    %v1858 = vpack.c.bf16 %v1850, %v1850
    %v1859 = vpack.c.bf16 %v1851, %v1851
    %v1861 = vsel %vm1528, %v1859, 0
    %v1864 = vsel %vm1528, %v1789, 0
    %v1867 = vsel %vm1528, %v1793, 0
    %1869 = vmatpush.bf16.xpose.msra.mxu0 0
    %1870 = vmatpush.bf16.xpose.msra.mxu0 0
    %1871 = vmatpush.bf16.xpose.msra.mxu0 0
    %1872 = vmatpush.bf16.xpose.msra.mxu0 0
    %1873 = vmatpush.bf16.xpose.msra.mxu0 0
    %1874 = vmatpush.bf16.xpose.msra.mxu0 0
    %1875 = vmatpush.bf16.xpose.msra.mxu0 %v1790
    %1876 = vmatpush.bf16.xpose.msra.mxu0 %v1786
    %1877 = vmatmul.bf16.gmra.mxu0 %v1856
    %v1878 = vpop.f32.mrf.mxu0
    %v1879 = vadd.f32 0.0, %v1878
    %v1880 = vpop.f32.mrf.mxu0
    %1881 = vdwg.mxu0
    %1882 = vmatpush.bf16.xpose.msra.mxu0 0
    %1883 = vmatpush.bf16.xpose.msra.mxu0 0
    %1884 = vmatpush.bf16.xpose.msra.mxu0 0
    %1885 = vmatpush.bf16.xpose.msra.mxu0 0
    %1886 = vmatpush.bf16.xpose.msra.mxu0 0
    %1887 = vmatpush.bf16.xpose.msra.mxu0 0
    %1888 = vmatpush.bf16.xpose.msra.mxu0 %v1791
    %1889 = vmatpush.bf16.xpose.msra.mxu0 %v1787
    %1890 = vmatmul.bf16.gmra.mxu0 %v1857
    %v1891 = vpop.f32.mrf.mxu0
    %v1892 = vadd.f32 %v1879, %v1891
    %v1893 = vpop.f32.mrf.mxu0
    %1894 = vdwg.mxu0
    %1895 = vmatpush.bf16.xpose.msra.mxu0 0
    %1896 = vmatpush.bf16.xpose.msra.mxu0 0
    %1897 = vmatpush.bf16.xpose.msra.mxu0 0
    %1898 = vmatpush.bf16.xpose.msra.mxu0 0
    %1899 = vmatpush.bf16.xpose.msra.mxu0 0
    %1900 = vmatpush.bf16.xpose.msra.mxu0 0
    %1901 = vmatpush.bf16.xpose.msra.mxu0 %v1792
    %1902 = vmatpush.bf16.xpose.msra.mxu0 %v1788
    %1903 = vmatmul.bf16.gmra.mxu0 %v1858
    %v1904 = vpop.f32.mrf.mxu0
    %v1905 = vadd.f32 %v1892, %v1904
    %v1906 = vpop.f32.mrf.mxu0
    %1907 = vdwg.mxu0
    %1908 = vmatpush.bf16.xpose.msra.mxu0 0
    %1909 = vmatpush.bf16.xpose.msra.mxu0 0
    %1910 = vmatpush.bf16.xpose.msra.mxu0 0
    %1911 = vmatpush.bf16.xpose.msra.mxu0 0
    %1912 = vmatpush.bf16.xpose.msra.mxu0 0
    %1913 = vmatpush.bf16.xpose.msra.mxu0 0
    %1914 = vmatpush.bf16.xpose.msra.mxu0 %v1867
    %1915 = vmatpush.bf16.xpose.msra.mxu0 %v1864
    %1916 = vmatmul.bf16.gmra.mxu0 %v1861
    %v1917 = vpop.f32.mrf.mxu0
    %v1918 = vadd.f32 %v1905, %v1917
    %v1919 = vpop.f32.mrf.mxu0
    %1920 = vdwg.mxu0
    %v1921 = vperm.slane %v1918, 0
    %v1922 = vadd.f32 %v1826, %v1921
    %v1923 = vadd.f32 %v1832, %v1921
    %v1924 = vadd.f32 %v1838, %v1921
    %v1925 = vadd.f32 %v1844, %v1921
    %vm1926 = vcmp.gt.f32.partialorder %v1922, 0.0
    %vm1927 = vcmp.gt.f32.partialorder %v1923, 0.0
    %vm1928 = vcmp.gt.f32.partialorder %v1924, 0.0
    %vm1929 = vcmp.gt.f32.partialorder %v1925, 0.0
    %v1930 = vmul.f32 %v1922, 0.2
    %v1931 = vmul.f32 %v1923, 0.2
    %v1932 = vmul.f32 %v1924, 0.2
    %v1933 = vmul.f32 %v1925, 0.2
    %v1934 = vsel %vm1926, %v1922, %v1930
    %v1935 = vsel %vm1927, %v1923, %v1931
    %v1936 = vsel %vm1928, %v1924, %v1932
    %v1937 = vsel %vm1929, %v1925, %v1933
    %v1938 = vadd.f32 %v1934, %v403
    %v1939 = vadd.f32 %v1935, %v404
    %v1940 = vadd.f32 %v1936, %v405
    %v1941 = vadd.f32 %v1937, %v406
    %v1942 = vsel %vm1647, %v1938, -inf
    %1943 = vmax.xlane.f32.xlu0 %v1942
    %v1944 = vpop.xlane.xlu0 %1943
    %v1945 = vsel %vm1647, %v1939, -inf
    %1946 = vmax.xlane.f32.xlu0 %v1945
    %v1947 = vpop.xlane.xlu0 %1946
    %v1948 = vsel %vm1647, %v1940, -inf
    %1949 = vmax.xlane.f32.xlu0 %v1948
    %v1950 = vpop.xlane.xlu0 %1949
    %v1951 = vsel %vm1647, %v1941, -inf
    %1952 = vmax.xlane.f32.xlu0 %v1951
    %v1953 = vpop.xlane.xlu0 %1952
    %v1954 = vsub.f32 %v1938, %v1944
    %v1955 = vsub.f32 %v1939, %v1947
    %v1956 = vsub.f32 %v1940, %v1950
    %v1957 = vsub.f32 %v1941, %v1953
    %v1958 = vmul.f32 %v1954, 1.442695
    %v1959 = vpow.pop %v1958
    %v1960 = vmul.f32 %v1955, 1.442695
    %v1961 = vpow.pop %v1960
    %v1962 = vmul.f32 %v1956, 1.442695
    %v1963 = vpow.pop %v1962
    %v1964 = vmul.f32 %v1957, 1.442695
    %v1965 = vpow.pop %v1964
    %v1966 = vsel %vm1647, %v1959, 0.0
    %1967 = vadd.xlane.f32.xlu0 %v1966
    %v1968 = vpop.xlane.xlu0 %1967
    %v1969 = vsel %vm1647, %v1961, 0.0
    %1970 = vadd.xlane.f32.xlu0 %v1969
    %v1971 = vpop.xlane.xlu0 %1970
    %v1972 = vsel %vm1647, %v1963, 0.0
    %1973 = vadd.xlane.f32.xlu0 %v1972
    %v1974 = vpop.xlane.xlu0 %1973
    %v1975 = vsel %vm1647, %v1965, 0.0
    %1976 = vadd.xlane.f32.xlu0 %v1975
    %v1977 = vpop.xlane.xlu0 %1976
    %v1978 = vrcp.pop %v1968
    %v1979 = vrcp.pop %v1971
    %v1980 = vrcp.pop %v1974
    %v1981 = vrcp.pop %v1977
    %v1982 = vmul.f32 %v1959, %v1978
    %v1983 = vmul.f32 %v1961, %v1979
    %v1984 = vmul.f32 %v1963, %v1980
    %v1985 = vmul.f32 %v1965, %v1981
    %v1986 = vpack.c.bf16 %v1983, %v1982
    %v1987 = vpack.c.bf16 %v1985, %v1984
    %s1988 = scalar_lea.vmem [#allocation12], 4
    %v1989 = vld [vmem:[%s1988] sm:$0xf]
    %v1991 = vperm.slane %v1989, 0
    %v1992 = vperm.slane %v1989, 1
    %v1993 = vperm.slane %v1989, 2
    %v1994 = vperm.slane %v1989, 3
    %v2000 = vsel %vm1647, %v1986, 0
    %v2003 = vsel %vm1647, %v1987, 0
    %2005 = vmatpush.bf16.msra.mxu0 0
    %2006 = vmatpush.bf16.msra.mxu0 0
    %2007 = vmatpush.bf16.msra.mxu0 0
    %2008 = vmatpush.bf16.msra.mxu0 0
    %2009 = vmatpush.bf16.msra.mxu0 0
    %2010 = vmatpush.bf16.msra.mxu0 0
    %2011 = vmatpush.bf16.msra.mxu0 %v1790
    %2012 = vmatpush.bf16.msra.mxu0 %v1786
    %2013 = vmatmul.bf16.gmra.mxu0 %v2000
    %v2014 = vpop.f32.mrf.mxu0
    %v2015 = vadd.f32 %v1991, %v2014
    %v2016 = vpop.f32.mrf.mxu0
    %v2017 = vadd.f32 %v1991, %v2016
    %2018 = vmatmul.bf16.gmra.mxu0 %v2003
    %v2019 = vpop.f32.mrf.mxu0
    %v2020 = vadd.f32 %v1991, %v2019
    %v2021 = vpop.f32.mrf.mxu0
    %v2022 = vadd.f32 %v1991, %v2021
    %2023 = vdwg.mxu0
    %2024 = vmatpush.bf16.msra.mxu0 0
    %2025 = vmatpush.bf16.msra.mxu0 0
    %2026 = vmatpush.bf16.msra.mxu0 0
    %2027 = vmatpush.bf16.msra.mxu0 0
    %2028 = vmatpush.bf16.msra.mxu0 0
    %2029 = vmatpush.bf16.msra.mxu0 0
    %2030 = vmatpush.bf16.msra.mxu0 %v1791
    %2031 = vmatpush.bf16.msra.mxu0 %v1787
    %2032 = vmatmul.bf16.gmra.mxu0 %v2000
    %v2033 = vpop.f32.mrf.mxu0
    %v2034 = vadd.f32 %v1992, %v2033
    %v2035 = vpop.f32.mrf.mxu0
    %v2036 = vadd.f32 %v1992, %v2035
    %2037 = vmatmul.bf16.gmra.mxu0 %v2003
    %v2038 = vpop.f32.mrf.mxu0
    %v2039 = vadd.f32 %v1992, %v2038
    %v2040 = vpop.f32.mrf.mxu0
    %v2041 = vadd.f32 %v1992, %v2040
    %2042 = vdwg.mxu0
    %2043 = vmatpush.bf16.msra.mxu0 0
    %2044 = vmatpush.bf16.msra.mxu0 0
    %2045 = vmatpush.bf16.msra.mxu0 0
    %2046 = vmatpush.bf16.msra.mxu0 0
    %2047 = vmatpush.bf16.msra.mxu0 0
    %2048 = vmatpush.bf16.msra.mxu0 0
    %2049 = vmatpush.bf16.msra.mxu0 %v1792
    %2050 = vmatpush.bf16.msra.mxu0 %v1788
    %2051 = vmatmul.bf16.gmra.mxu0 %v2000
    %v2052 = vpop.f32.mrf.mxu0
    %v2053 = vadd.f32 %v1993, %v2052
    %v2054 = vpop.f32.mrf.mxu0
    %v2055 = vadd.f32 %v1993, %v2054
    %2056 = vmatmul.bf16.gmra.mxu0 %v2003
    %v2057 = vpop.f32.mrf.mxu0
    %v2058 = vadd.f32 %v1993, %v2057
    %v2059 = vpop.f32.mrf.mxu0
    %v2060 = vadd.f32 %v1993, %v2059
    %2061 = vdwg.mxu0
    %2062 = vmatpush.bf16.msra.mxu0 0
    %2063 = vmatpush.bf16.msra.mxu0 0
    %2064 = vmatpush.bf16.msra.mxu0 0
    %2065 = vmatpush.bf16.msra.mxu0 0
    %2066 = vmatpush.bf16.msra.mxu0 0
    %2067 = vmatpush.bf16.msra.mxu0 0
    %2068 = vmatpush.bf16.msra.mxu0 %v1793
    %2069 = vmatpush.bf16.msra.mxu0 %v1789
    %2070 = vmatmul.bf16.gmra.mxu0 %v2000
    %v2071 = vpop.f32.mrf.mxu0
    %v2072 = vadd.f32 %v1994, %v2071
    %v2073 = vpop.f32.mrf.mxu0
    %v2074 = vadd.f32 %v1994, %v2073
    %2075 = vmatmul.bf16.gmra.mxu0 %v2003
    %v2076 = vpop.f32.mrf.mxu0
    %v2077 = vadd.f32 %v1994, %v2076
    %v2078 = vpop.f32.mrf.mxu0
    %v2079 = vadd.f32 %v1994, %v2078
    %2080 = vdwg.mxu0
    %v2081 = vmax.f32 %v1720, 0.0
    %v2082 = vmax.f32 %v1739, 0.0
    %v2083 = vmax.f32 %v1758, 0.0
    %v2084 = vmax.f32 %v1777, 0.0
    %v2085 = vmax.f32 %v1722, 0.0
    %v2086 = vmax.f32 %v1741, 0.0
    %v2087 = vmax.f32 %v1760, 0.0
    %v2088 = vmax.f32 %v1779, 0.0
    %v2089 = vmax.f32 %v1725, 0.0
    %v2090 = vmax.f32 %v1744, 0.0
    %v2091 = vmax.f32 %v1763, 0.0
    %v2092 = vmax.f32 %v1782, 0.0
    %v2093 = vmax.f32 %v1727, 0.0
    %v2094 = vmax.f32 %v1746, 0.0
    %v2095 = vmax.f32 %v1765, 0.0
    %v2096 = vmax.f32 %v1784, 0.0
    %v2097 = vmax.f32 %v2015, 0.0
    %v2098 = vmax.f32 %v2034, 0.0
    %v2099 = vmax.f32 %v2053, 0.0
    %v2100 = vmax.f32 %v2072, 0.0
    %v2101 = vmax.f32 %v2017, 0.0
    %v2102 = vmax.f32 %v2036, 0.0
    %v2103 = vmax.f32 %v2055, 0.0
    %v2104 = vmax.f32 %v2074, 0.0
    %v2105 = vmax.f32 %v2020, 0.0
    %v2106 = vmax.f32 %v2039, 0.0
    %v2107 = vmax.f32 %v2058, 0.0
    %v2108 = vmax.f32 %v2077, 0.0
    %v2109 = vmax.f32 %v2022, 0.0
    %v2110 = vmax.f32 %v2041, 0.0
    %v2111 = vmax.f32 %v2060, 0.0
    %v2112 = vmax.f32 %v2079, 0.0
    %v2113 = vadd.f32 %v2081, %v2082
    %v2114 = vadd.f32 %v2113, %v2083
    %v2115 = vsel %vm1528, %v2084, 0.0
    %v2116 = vadd.f32 %v2114, %v2115
    %2117 = vadd.xlane.f32.xlu0 %v2116
    %v2118 = vpop.xlane.xlu0 %2117
    %v2119 = vadd.f32 %v2085, %v2086
    %v2120 = vadd.f32 %v2119, %v2087
    %v2121 = vsel %vm1528, %v2088, 0.0
    %v2122 = vadd.f32 %v2120, %v2121
    %2123 = vadd.xlane.f32.xlu0 %v2122
    %v2124 = vpop.xlane.xlu0 %2123
    %v2125 = vadd.f32 %v2089, %v2090
    %v2126 = vadd.f32 %v2125, %v2091
    %v2127 = vsel %vm1528, %v2092, 0.0
    %v2128 = vadd.f32 %v2126, %v2127
    %2129 = vadd.xlane.f32.xlu0 %v2128
    %v2130 = vpop.xlane.xlu0 %2129
    %v2131 = vadd.f32 %v2093, %v2094
    %v2132 = vadd.f32 %v2131, %v2095
    %v2133 = vsel %vm1528, %v2096, 0.0
    %v2134 = vadd.f32 %v2132, %v2133
    %2135 = vadd.xlane.f32.xlu0 %v2134
    %v2136 = vpop.xlane.xlu0 %2135
    %v2137 = vadd.f32 %v2097, %v2098
    %v2138 = vadd.f32 %v2137, %v2099
    %v2139 = vsel %vm1528, %v2100, 0.0
    %v2140 = vadd.f32 %v2138, %v2139
    %2141 = vadd.xlane.f32.xlu0 %v2140
    %v2142 = vpop.xlane.xlu0 %2141
    %v2143 = vadd.f32 %v2101, %v2102
    %v2144 = vadd.f32 %v2143, %v2103
    %v2145 = vsel %vm1528, %v2104, 0.0
    %v2146 = vadd.f32 %v2144, %v2145
    %2147 = vadd.xlane.f32.xlu0 %v2146
    %v2148 = vpop.xlane.xlu0 %2147
    %v2149 = vadd.f32 %v2105, %v2106
    %v2150 = vadd.f32 %v2149, %v2107
    %v2151 = vsel %vm1528, %v2108, 0.0
    %v2152 = vadd.f32 %v2150, %v2151
    %2153 = vadd.xlane.f32.xlu0 %v2152
    %v2154 = vpop.xlane.xlu0 %2153
    %v2155 = vadd.f32 %v2109, %v2110
    %v2156 = vadd.f32 %v2155, %v2111
    %v2157 = vsel %vm1528, %v2112, 0.0
    %v2158 = vadd.f32 %v2156, %v2157
    %2159 = vadd.xlane.f32.xlu0 %v2158
    %v2160 = vpop.xlane.xlu0 %2159
    %v2161 = vadd.f32 %v2118, %v2142
    %v2162 = vadd.f32 %v2124, %v2148
    %v2163 = vadd.f32 %v2130, %v2154
    %v2164 = vadd.f32 %v2136, %v2160
    %v2165 = vmul.f32 %v2161, 0.0011160715
    %v2166 = vmul.f32 %v2162, 0.0011160715
    %v2167 = vmul.f32 %v2163, 0.0011160715
    %v2168 = vmul.f32 %v2164, 0.0011160715
    %v2169 = vsub.f32 %v2081, %v2165
    %v2170 = vsub.f32 %v2082, %v2165
    %v2171 = vsub.f32 %v2083, %v2165
    %v2172 = vsub.f32 %v2084, %v2165
    %v2173 = vsub.f32 %v2085, %v2166
    %v2174 = vsub.f32 %v2086, %v2166
    %v2175 = vsub.f32 %v2087, %v2166
    %v2176 = vsub.f32 %v2088, %v2166
    %v2177 = vsub.f32 %v2089, %v2167
    %v2178 = vsub.f32 %v2090, %v2167
    %v2179 = vsub.f32 %v2091, %v2167
    %v2180 = vsub.f32 %v2092, %v2167
    %v2181 = vsub.f32 %v2093, %v2168
    %v2182 = vsub.f32 %v2094, %v2168
    %v2183 = vsub.f32 %v2095, %v2168
    %v2184 = vsub.f32 %v2096, %v2168
    %v2185 = vmul.f32 %v2169, %v2169
    %v2186 = vmul.f32 %v2170, %v2170
    %v2187 = vmul.f32 %v2171, %v2171
    %v2188 = vmul.f32 %v2172, %v2172
    %v2189 = vmul.f32 %v2173, %v2173
    %v2190 = vmul.f32 %v2174, %v2174
    %v2191 = vmul.f32 %v2175, %v2175
    %v2192 = vmul.f32 %v2176, %v2176
    %v2193 = vmul.f32 %v2177, %v2177
    %v2194 = vmul.f32 %v2178, %v2178
    %v2195 = vmul.f32 %v2179, %v2179
    %v2196 = vmul.f32 %v2180, %v2180
    %v2197 = vmul.f32 %v2181, %v2181
    %v2198 = vmul.f32 %v2182, %v2182
    %v2199 = vmul.f32 %v2183, %v2183
    %v2200 = vmul.f32 %v2184, %v2184
    %v2201 = vadd.f32 %v2185, %v2186
    %v2202 = vadd.f32 %v2201, %v2187
    %v2203 = vsel %vm1528, %v2188, 0.0
    %v2204 = vadd.f32 %v2202, %v2203
    %2205 = vadd.xlane.f32.xlu0 %v2204
    %v2206 = vpop.xlane.xlu0 %2205
    %v2207 = vadd.f32 %v2189, %v2190
    %v2208 = vadd.f32 %v2207, %v2191
    %v2209 = vsel %vm1528, %v2192, 0.0
    %v2210 = vadd.f32 %v2208, %v2209
    %2211 = vadd.xlane.f32.xlu0 %v2210
    %v2212 = vpop.xlane.xlu0 %2211
    %v2213 = vadd.f32 %v2193, %v2194
    %v2214 = vadd.f32 %v2213, %v2195
    %v2215 = vsel %vm1528, %v2196, 0.0
    %v2216 = vadd.f32 %v2214, %v2215
    %2217 = vadd.xlane.f32.xlu0 %v2216
    %v2218 = vpop.xlane.xlu0 %2217
    %v2219 = vadd.f32 %v2197, %v2198
    %v2220 = vadd.f32 %v2219, %v2199
    %v2221 = vsel %vm1528, %v2200, 0.0
    %v2222 = vadd.f32 %v2220, %v2221
    %2223 = vadd.xlane.f32.xlu0 %v2222
    %v2224 = vpop.xlane.xlu0 %2223
    %v2225 = vsub.f32 %v2097, %v2165
    %v2226 = vsub.f32 %v2098, %v2165
    %v2227 = vsub.f32 %v2099, %v2165
    %v2228 = vsub.f32 %v2100, %v2165
    %v2229 = vsub.f32 %v2101, %v2166
    %v2230 = vsub.f32 %v2102, %v2166
    %v2231 = vsub.f32 %v2103, %v2166
    %v2232 = vsub.f32 %v2104, %v2166
    %v2233 = vsub.f32 %v2105, %v2167
    %v2234 = vsub.f32 %v2106, %v2167
    %v2235 = vsub.f32 %v2107, %v2167
    %v2236 = vsub.f32 %v2108, %v2167
    %v2237 = vsub.f32 %v2109, %v2168
    %v2238 = vsub.f32 %v2110, %v2168
    %v2239 = vsub.f32 %v2111, %v2168
    %v2240 = vsub.f32 %v2112, %v2168
    %v2241 = vmul.f32 %v2225, %v2225
    %v2242 = vmul.f32 %v2226, %v2226
    %v2243 = vmul.f32 %v2227, %v2227
    %v2244 = vmul.f32 %v2228, %v2228
    %v2245 = vmul.f32 %v2229, %v2229
    %v2246 = vmul.f32 %v2230, %v2230
    %v2247 = vmul.f32 %v2231, %v2231
    %v2248 = vmul.f32 %v2232, %v2232
    %v2249 = vmul.f32 %v2233, %v2233
    %v2250 = vmul.f32 %v2234, %v2234
    %v2251 = vmul.f32 %v2235, %v2235
    %v2252 = vmul.f32 %v2236, %v2236
    %v2253 = vmul.f32 %v2237, %v2237
    %v2254 = vmul.f32 %v2238, %v2238
    %v2255 = vmul.f32 %v2239, %v2239
    %v2256 = vmul.f32 %v2240, %v2240
    %v2257 = vadd.f32 %v2241, %v2242
    %v2258 = vadd.f32 %v2257, %v2243
    %v2259 = vsel %vm1528, %v2244, 0.0
    %v2260 = vadd.f32 %v2258, %v2259
    %2261 = vadd.xlane.f32.xlu0 %v2260
    %v2262 = vpop.xlane.xlu0 %2261
    %v2263 = vadd.f32 %v2245, %v2246
    %v2264 = vadd.f32 %v2263, %v2247
    %v2265 = vsel %vm1528, %v2248, 0.0
    %v2266 = vadd.f32 %v2264, %v2265
    %2267 = vadd.xlane.f32.xlu0 %v2266
    %v2268 = vpop.xlane.xlu0 %2267
    %v2269 = vadd.f32 %v2249, %v2250
    %v2270 = vadd.f32 %v2269, %v2251
    %v2271 = vsel %vm1528, %v2252, 0.0
    %v2272 = vadd.f32 %v2270, %v2271
    %2273 = vadd.xlane.f32.xlu0 %v2272
    %v2274 = vpop.xlane.xlu0 %2273
    %v2275 = vadd.f32 %v2253, %v2254
    %v2276 = vadd.f32 %v2275, %v2255
    %v2277 = vsel %vm1528, %v2256, 0.0
    %v2278 = vadd.f32 %v2276, %v2277
    %2279 = vadd.xlane.f32.xlu0 %v2278
    %v2280 = vpop.xlane.xlu0 %2279
    %v2281 = vadd.f32 %v2206, %v2262
    %v2282 = vadd.f32 %v2212, %v2268
    %v2283 = vadd.f32 %v2218, %v2274
    %v2284 = vadd.f32 %v2224, %v2280
    %v2285 = vmul.f32 %v2281, 0.0011160715
    %v2286 = vmul.f32 %v2282, 0.0011160715
    %v2287 = vmul.f32 %v2283, 0.0011160715
    %v2288 = vmul.f32 %v2284, 0.0011160715
    %v2289 = vadd.f32 %v2285, 1e-05
    %v2290 = vadd.f32 %v2286, 1e-05
    %v2291 = vadd.f32 %v2287, 1e-05
    %v2292 = vadd.f32 %v2288, 1e-05
    %v2293 = vrsqrt.pop %v2289
    %v2294 = vmul.f32 %v2293, %v2289
    %v2295 = vmul.f32 %v2294, %v2293
    %v2296 = vmul.f32 0.5, %v2295
    %v2297 = vsub.f32 1.5, %v2296
    %v2298 = vmul.f32 %v2293, %v2297
    %vm2299 = vweird.f32 %v2289
    %vm2300 = vweird.f32 %v2293
    %vm2301 = vmor %vm2299, %vm2300
    %v2302 = vsel %vm2301, %v2293, %v2298
    %v2303 = vrsqrt.pop %v2290
    %v2304 = vmul.f32 %v2303, %v2290
    %v2305 = vmul.f32 %v2304, %v2303
    %v2306 = vmul.f32 0.5, %v2305
    %v2307 = vsub.f32 1.5, %v2306
    %v2308 = vmul.f32 %v2303, %v2307
    %vm2309 = vweird.f32 %v2290
    %vm2310 = vweird.f32 %v2303
    %vm2311 = vmor %vm2309, %vm2310
    %v2312 = vsel %vm2311, %v2303, %v2308
    %v2313 = vrsqrt.pop %v2291
    %v2314 = vmul.f32 %v2313, %v2291
    %v2315 = vmul.f32 %v2314, %v2313
    %v2316 = vmul.f32 0.5, %v2315
    %v2317 = vsub.f32 1.5, %v2316
    %v2318 = vmul.f32 %v2313, %v2317
    %vm2319 = vweird.f32 %v2291
    %vm2320 = vweird.f32 %v2313
    %vm2321 = vmor %vm2319, %vm2320
    %v2322 = vsel %vm2321, %v2313, %v2318
    %v2323 = vrsqrt.pop %v2292
    %v2324 = vmul.f32 %v2323, %v2292
    %v2325 = vmul.f32 %v2324, %v2323
    %v2326 = vmul.f32 0.5, %v2325
    %v2327 = vsub.f32 1.5, %v2326
    %v2328 = vmul.f32 %v2323, %v2327
    %vm2329 = vweird.f32 %v2292
    %vm2330 = vweird.f32 %v2323
    %vm2331 = vmor %vm2329, %vm2330
    %v2332 = vsel %vm2331, %v2323, %v2328
    %v2333 = vmul.f32 %v2169, %v2302
    %v2334 = vmul.f32 %v2170, %v2302
    %v2335 = vmul.f32 %v2171, %v2302
    %v2336 = vmul.f32 %v2172, %v2302
    %v2337 = vmul.f32 %v2173, %v2312
    %v2338 = vmul.f32 %v2174, %v2312
    %v2339 = vmul.f32 %v2175, %v2312
    %v2340 = vmul.f32 %v2176, %v2312
    %v2341 = vmul.f32 %v2177, %v2322
    %v2342 = vmul.f32 %v2178, %v2322
    %v2343 = vmul.f32 %v2179, %v2322
    %v2344 = vmul.f32 %v2180, %v2322
    %v2345 = vmul.f32 %v2181, %v2332
    %v2346 = vmul.f32 %v2182, %v2332
    %v2347 = vmul.f32 %v2183, %v2332
    %v2348 = vmul.f32 %v2184, %v2332
    %v2349 = vld [vmem:[#allocation14] sm:$0xf]
    %v2351 = vperm.slane %v2349, 0
    %v2352 = vperm.slane %v2349, 1
    %v2353 = vperm.slane %v2349, 2
    %v2354 = vperm.slane %v2349, 3
    %v2359 = vmul.f32 %v2333, %v2351
    %v2360 = vmul.f32 %v2334, %v2352
    %v2361 = vmul.f32 %v2335, %v2353
    %v2362 = vmul.f32 %v2336, %v2354
    %v2363 = vmul.f32 %v2337, %v2351
    %v2364 = vmul.f32 %v2338, %v2352
    %v2365 = vmul.f32 %v2339, %v2353
    %v2366 = vmul.f32 %v2340, %v2354
    %v2367 = vmul.f32 %v2341, %v2351
    %v2368 = vmul.f32 %v2342, %v2352
    %v2369 = vmul.f32 %v2343, %v2353
    %v2370 = vmul.f32 %v2344, %v2354
    %v2371 = vmul.f32 %v2345, %v2351
    %v2372 = vmul.f32 %v2346, %v2352
    %v2373 = vmul.f32 %v2347, %v2353
    %v2374 = vmul.f32 %v2348, %v2354
    %v2375 = vld [vmem:[#allocation15] sm:$0xf]
    %v2377 = vperm.slane %v2375, 0
    %v2378 = vperm.slane %v2375, 1
    %v2379 = vperm.slane %v2375, 2
    %v2380 = vperm.slane %v2375, 3
    %v2385 = vadd.f32 %v2359, %v2377
    %v2386 = vadd.f32 %v2360, %v2378
    %v2387 = vadd.f32 %v2361, %v2379
    %v2388 = vadd.f32 %v2362, %v2380
    %v2389 = vadd.f32 %v2363, %v2377
    %v2390 = vadd.f32 %v2364, %v2378
    %v2391 = vadd.f32 %v2365, %v2379
    %v2392 = vadd.f32 %v2366, %v2380
    %v2393 = vadd.f32 %v2367, %v2377
    %v2394 = vadd.f32 %v2368, %v2378
    %v2395 = vadd.f32 %v2369, %v2379
    %v2396 = vadd.f32 %v2370, %v2380
    %v2397 = vadd.f32 %v2371, %v2377
    %v2398 = vadd.f32 %v2372, %v2378
    %v2399 = vadd.f32 %v2373, %v2379
    %v2400 = vadd.f32 %v2374, %v2380
    %v2401 = vmul.f32 %v2225, %v2302
    %v2402 = vmul.f32 %v2226, %v2302
    %v2403 = vmul.f32 %v2227, %v2302
    %v2404 = vmul.f32 %v2228, %v2302
    %v2405 = vmul.f32 %v2229, %v2312
    %v2406 = vmul.f32 %v2230, %v2312
    %v2407 = vmul.f32 %v2231, %v2312
    %v2408 = vmul.f32 %v2232, %v2312
    %v2409 = vmul.f32 %v2233, %v2322
    %v2410 = vmul.f32 %v2234, %v2322
    %v2411 = vmul.f32 %v2235, %v2322
    %v2412 = vmul.f32 %v2236, %v2322
    %v2413 = vmul.f32 %v2237, %v2332
    %v2414 = vmul.f32 %v2238, %v2332
    %v2415 = vmul.f32 %v2239, %v2332
    %v2416 = vmul.f32 %v2240, %v2332
    %s2417 = scalar_lea.vmem [#allocation14], 4
    %v2418 = vld [vmem:[%s2417] sm:$0xf]
    %v2420 = vperm.slane %v2418, 0
    %v2421 = vperm.slane %v2418, 1
    %v2422 = vperm.slane %v2418, 2
    %v2423 = vperm.slane %v2418, 3
    %v2428 = vmul.f32 %v2401, %v2420
    %v2429 = vmul.f32 %v2402, %v2421
    %v2430 = vmul.f32 %v2403, %v2422
    %v2431 = vmul.f32 %v2404, %v2423
    %v2432 = vmul.f32 %v2405, %v2420
    %v2433 = vmul.f32 %v2406, %v2421
    %v2434 = vmul.f32 %v2407, %v2422
    %v2435 = vmul.f32 %v2408, %v2423
    %v2436 = vmul.f32 %v2409, %v2420
    %v2437 = vmul.f32 %v2410, %v2421
    %v2438 = vmul.f32 %v2411, %v2422
    %v2439 = vmul.f32 %v2412, %v2423
    %v2440 = vmul.f32 %v2413, %v2420
    %v2441 = vmul.f32 %v2414, %v2421
    %v2442 = vmul.f32 %v2415, %v2422
    %v2443 = vmul.f32 %v2416, %v2423
    %s2444 = scalar_lea.vmem [#allocation15], 4
    %v2445 = vld [vmem:[%s2444] sm:$0xf]
    %v2447 = vperm.slane %v2445, 0
    %v2448 = vperm.slane %v2445, 1
    %v2449 = vperm.slane %v2445, 2
    %v2450 = vperm.slane %v2445, 3
    %v2455 = vadd.f32 %v2428, %v2447
    %v2456 = vadd.f32 %v2429, %v2448
    %v2457 = vadd.f32 %v2430, %v2449
    %v2458 = vadd.f32 %v2431, %v2450
    %v2459 = vadd.f32 %v2432, %v2447
    %v2460 = vadd.f32 %v2433, %v2448
    %v2461 = vadd.f32 %v2434, %v2449
    %v2462 = vadd.f32 %v2435, %v2450
    %v2463 = vadd.f32 %v2436, %v2447
    %v2464 = vadd.f32 %v2437, %v2448
    %v2465 = vadd.f32 %v2438, %v2449
    %v2466 = vadd.f32 %v2439, %v2450
    %v2467 = vadd.f32 %v2440, %v2447
    %v2468 = vadd.f32 %v2441, %v2448
    %v2469 = vadd.f32 %v2442, %v2449
    %v2470 = vadd.f32 %v2443, %v2450
    %s2471 = smul.u32 4, 2
    %s2472 = smul.u32 %s2471, 56
    %s2473 = smul.u32 %s2472, 6
    %s2474 = sshll.u32 %s2473, 4
    %2475 = dma.done [#allocation5], %s2474
    %v2476 = vpack.c.bf16 %v2389, %v2385
    %v2477 = vpack.c.bf16 %v2390, %v2386
    %v2478 = vpack.c.bf16 %v2391, %v2387
    %v2479 = vpack.c.bf16 %v2392, %v2388
    %v2480 = vpack.c.bf16 %v2397, %v2393
    %v2481 = vpack.c.bf16 %v2398, %v2394
    %v2482 = vpack.c.bf16 %v2399, %v2395
    %v2483 = vpack.c.bf16 %v2400, %v2396
    %v2484 = vpack.c.bf16 %v2459, %v2455
    %v2485 = vpack.c.bf16 %v2460, %v2456
    %v2486 = vpack.c.bf16 %v2461, %v2457
    %v2487 = vpack.c.bf16 %v2462, %v2458
    %v2488 = vpack.c.bf16 %v2467, %v2463
    %v2489 = vpack.c.bf16 %v2468, %v2464
    %v2490 = vpack.c.bf16 %v2469, %v2465
    %v2491 = vpack.c.bf16 %v2470, %v2466
    %v2492 = vld [vmem:[#allocation2] sm:$0xff]
    %v2493 = vld [vmem:[#allocation2 + $0x8] sm:$0xff]
    %v2494 = vld [vmem:[#allocation2 + $0x10] sm:$0xff]
    %v2495 = vld [vmem:[#allocation2 + $0x18] sm:$0xff]
    %v2496 = vld [vmem:[#allocation2 + $0x20] sm:$0xff]
    %v2497 = vld [vmem:[#allocation2 + $0x28] sm:$0xff]
    %v2498 = vld [vmem:[#allocation2 + $0x30] sm:$0xff]
    %v2499 = vld [vmem:[#allocation2 + $0x38] sm:$0xff]
    %v2500 = vld [vmem:[#allocation2 + $0x40] sm:$0xff]
    %v2501 = vld [vmem:[#allocation2 + $0x48] sm:$0xff]
    %v2502 = vld [vmem:[#allocation2 + $0x50] sm:$0xff]
    %v2503 = vld [vmem:[#allocation2 + $0x58] sm:$0xff]
    %v2504 = vld [vmem:[#allocation2 + $0x60] sm:$0xff]
    %v2505 = vld [vmem:[#allocation2 + $0x68] sm:$0xff]
    %v2506 = vld [vmem:[#allocation2 + $0x70] sm:$0xff]
    %v2507 = vld [vmem:[#allocation2 + $0x78] sm:$0xff]
    %v2508 = vld [vmem:[#allocation2 + $0x80] sm:$0xff]
    %v2509 = vld [vmem:[#allocation2 + $0x88] sm:$0xff]
    %v2510 = vld [vmem:[#allocation2 + $0x90] sm:$0xff]
    %v2511 = vld [vmem:[#allocation2 + $0x98] sm:$0xff]
    %v2512 = vld [vmem:[#allocation2 + $0xa0] sm:$0xff]
    %v2513 = vld [vmem:[#allocation2 + $0xa8] sm:$0xff]
    %v2514 = vld [vmem:[#allocation2 + $0xb0] sm:$0xff]
    %v2515 = vld [vmem:[#allocation2 + $0xb8] sm:$0xff]
    %v2516 = vld [vmem:[#allocation2 + $0xc0] sm:$0xff]
    %v2517 = vld [vmem:[#allocation2 + $0xc8] sm:$0xff]
    %v2518 = vld [vmem:[#allocation2 + $0xd0] sm:$0xff]
    %v2519 = vld [vmem:[#allocation2 + $0xd8] sm:$0xff]
    %v2520 = vld [vmem:[#allocation2 + $0xe0] sm:$0xff]
    %v2521 = vld [vmem:[#allocation2 + $0xe8] sm:$0xff]
    %v2522 = vld [vmem:[#allocation2 + $0xf0] sm:$0xff]
    %v2523 = vld [vmem:[#allocation2 + $0xf8] sm:$0xff]
    %v2524 = vld [vmem:[#allocation2 + $0x100] sm:$0xff]
    %v2525 = vld [vmem:[#allocation2 + $0x108] sm:$0xff]
    %v2526 = vld [vmem:[#allocation2 + $0x110] sm:$0xff]
    %v2527 = vld [vmem:[#allocation2 + $0x118] sm:$0xff]
    %v2528 = vld [vmem:[#allocation2 + $0x120] sm:$0xff]
    %v2529 = vld [vmem:[#allocation2 + $0x128] sm:$0xff]
    %v2530 = vld [vmem:[#allocation2 + $0x130] sm:$0xff]
    %v2531 = vld [vmem:[#allocation2 + $0x138] sm:$0xff]
    %v2532 = vld [vmem:[#allocation2 + $0x140] sm:$0xff]
    %v2533 = vld [vmem:[#allocation2 + $0x148] sm:$0xff]
    %v2534 = vld [vmem:[#allocation2 + $0x150] sm:$0xff]
    %v2535 = vld [vmem:[#allocation2 + $0x158] sm:$0xff]
    %v2536 = vld [vmem:[#allocation2 + $0x160] sm:$0xff]
    %v2537 = vld [vmem:[#allocation2 + $0x168] sm:$0xff]
    %v2538 = vld [vmem:[#allocation2 + $0x170] sm:$0xff]
    %v2539 = vld [vmem:[#allocation2 + $0x178] sm:$0xff]
    %v2540 = vld [vmem:[#allocation2 + $0x180] sm:$0xff]
    %v2541 = vld [vmem:[#allocation2 + $0x188] sm:$0xff]
    %v2542 = vld [vmem:[#allocation2 + $0x190] sm:$0xff]
    %v2543 = vld [vmem:[#allocation2 + $0x198] sm:$0xff]
    %v2544 = vld [vmem:[#allocation2 + $0x1a0] sm:$0xff]
    %v2545 = vld [vmem:[#allocation2 + $0x1a8] sm:$0xff]
    %v2546 = vld [vmem:[#allocation2 + $0x1b0] sm:$0xff]
    %v2547 = vld [vmem:[#allocation2 + $0x1b8] sm:$0xff]
    %v2548 = vld [vmem:[#allocation2 + $0x1c0] sm:$0xff]
    %v2549 = vld [vmem:[#allocation2 + $0x1c8] sm:$0xff]
    %v2550 = vld [vmem:[#allocation2 + $0x1d0] sm:$0xff]
    %v2551 = vld [vmem:[#allocation2 + $0x1d8] sm:$0xff]
    %v2552 = vld [vmem:[#allocation2 + $0x1e0] sm:$0xff]
    %v2553 = vld [vmem:[#allocation2 + $0x1e8] sm:$0xff]
    %v2554 = vld [vmem:[#allocation2 + $0x1f0] sm:$0xff]
    %v2555 = vld [vmem:[#allocation2 + $0x1f8] sm:$0xff]
    %v2556 = vld [vmem:[#allocation2 + $0x200] sm:$0xff]
    %v2557 = vld [vmem:[#allocation2 + $0x208] sm:$0xff]
    %v2558 = vld [vmem:[#allocation2 + $0x210] sm:$0xff]
    %v2559 = vld [vmem:[#allocation2 + $0x218] sm:$0xff]
    %v2560 = vld [vmem:[#allocation2 + $0x220] sm:$0xff]
    %v2561 = vld [vmem:[#allocation2 + $0x228] sm:$0xff]
    %v2562 = vld [vmem:[#allocation2 + $0x230] sm:$0xff]
    %v2563 = vld [vmem:[#allocation2 + $0x238] sm:$0xff]
    %v2564 = vld [vmem:[#allocation2 + $0x240] sm:$0xff]
    %v2565 = vld [vmem:[#allocation2 + $0x248] sm:$0xff]
    %v2566 = vld [vmem:[#allocation2 + $0x250] sm:$0xff]
    %v2567 = vld [vmem:[#allocation2 + $0x258] sm:$0xff]
    %v2568 = vld [vmem:[#allocation2 + $0x260] sm:$0xff]
    %v2569 = vld [vmem:[#allocation2 + $0x268] sm:$0xff]
    %v2570 = vld [vmem:[#allocation2 + $0x270] sm:$0xff]
    %v2571 = vld [vmem:[#allocation2 + $0x278] sm:$0xff]
    %v2572 = vld [vmem:[#allocation2 + $0x280] sm:$0xff]
    %v2573 = vld [vmem:[#allocation2 + $0x288] sm:$0xff]
    %v2574 = vld [vmem:[#allocation2 + $0x290] sm:$0xff]
    %v2575 = vld [vmem:[#allocation2 + $0x298] sm:$0xff]
    %v2576 = vld [vmem:[#allocation2 + $0x2a0] sm:$0xff]
    %v2577 = vld [vmem:[#allocation2 + $0x2a8] sm:$0xff]
    %v2578 = vld [vmem:[#allocation2 + $0x2b0] sm:$0xff]
    %v2579 = vld [vmem:[#allocation2 + $0x2b8] sm:$0xff]
    %v2580 = vld [vmem:[#allocation2 + $0x2c0] sm:$0xff]
    %v2581 = vld [vmem:[#allocation2 + $0x2c8] sm:$0xff]
    %v2582 = vld [vmem:[#allocation2 + $0x2d0] sm:$0xff]
    %v2583 = vld [vmem:[#allocation2 + $0x2d8] sm:$0xff]
    %v2584 = vld [vmem:[#allocation2 + $0x2e0] sm:$0xff]
    %v2585 = vld [vmem:[#allocation2 + $0x2e8] sm:$0xff]
    %v2586 = vld [vmem:[#allocation2 + $0x2f0] sm:$0xff]
    %v2587 = vld [vmem:[#allocation2 + $0x2f8] sm:$0xff]
    %v2588 = vld [vmem:[#allocation2 + $0x300] sm:$0xff]
    %v2589 = vld [vmem:[#allocation2 + $0x308] sm:$0xff]
    %v2590 = vld [vmem:[#allocation2 + $0x310] sm:$0xff]
    %v2591 = vld [vmem:[#allocation2 + $0x318] sm:$0xff]
    %v2592 = vld [vmem:[#allocation2 + $0x320] sm:$0xff]
    %v2593 = vld [vmem:[#allocation2 + $0x328] sm:$0xff]
    %v2594 = vld [vmem:[#allocation2 + $0x330] sm:$0xff]
    %v2595 = vld [vmem:[#allocation2 + $0x338] sm:$0xff]
    %v2596 = vld [vmem:[#allocation2 + $0x340] sm:$0xff]
    %v2597 = vld [vmem:[#allocation2 + $0x348] sm:$0xff]
    %v2598 = vld [vmem:[#allocation2 + $0x350] sm:$0xff]
    %v2599 = vld [vmem:[#allocation2 + $0x358] sm:$0xff]
    %v2600 = vld [vmem:[#allocation2 + $0x360] sm:$0xff]
    %v2601 = vld [vmem:[#allocation2 + $0x368] sm:$0xff]
    %v2602 = vld [vmem:[#allocation2 + $0x370] sm:$0xff]
    %v2603 = vld [vmem:[#allocation2 + $0x378] sm:$0xff]
    %v2604 = vld [vmem:[#allocation2 + $0x380] sm:$0xff]
    %v2605 = vld [vmem:[#allocation2 + $0x388] sm:$0xff]
    %v2606 = vld [vmem:[#allocation2 + $0x390] sm:$0xff]
    %v2607 = vld [vmem:[#allocation2 + $0x398] sm:$0xff]
    %v2608 = vld [vmem:[#allocation2 + $0x3a0] sm:$0xff]
    %v2609 = vld [vmem:[#allocation2 + $0x3a8] sm:$0xff]
    %v2610 = vld [vmem:[#allocation2 + $0x3b0] sm:$0xff]
    %v2611 = vld [vmem:[#allocation2 + $0x3b8] sm:$0xff]
    %v2612 = vld [vmem:[#allocation2 + $0x3c0] sm:$0xff]
    %v2613 = vld [vmem:[#allocation2 + $0x3c8] sm:$0xff]
    %v2614 = vld [vmem:[#allocation2 + $0x3d0] sm:$0xff]
    %v2615 = vld [vmem:[#allocation2 + $0x3d8] sm:$0xff]
    %v2616 = vld [vmem:[#allocation2 + $0x3e0] sm:$0xff]
    %v2617 = vld [vmem:[#allocation2 + $0x3e8] sm:$0xff]
    %v2618 = vld [vmem:[#allocation2 + $0x3f0] sm:$0xff]
    %v2619 = vld [vmem:[#allocation2 + $0x3f8] sm:$0xff]
    %v2620 = vld [vmem:[#allocation2 + $0x400] sm:$0xff]
    %v2621 = vld [vmem:[#allocation2 + $0x408] sm:$0xff]
    %v2622 = vld [vmem:[#allocation2 + $0x410] sm:$0xff]
    %v2623 = vld [vmem:[#allocation2 + $0x418] sm:$0xff]
    %v2624 = vld [vmem:[#allocation2 + $0x420] sm:$0xff]
    %v2625 = vld [vmem:[#allocation2 + $0x428] sm:$0xff]
    %v2626 = vld [vmem:[#allocation2 + $0x430] sm:$0xff]
    %v2627 = vld [vmem:[#allocation2 + $0x438] sm:$0xff]
    %v2628 = vld [vmem:[#allocation2 + $0x440] sm:$0xff]
    %v2629 = vld [vmem:[#allocation2 + $0x448] sm:$0xff]
    %v2630 = vld [vmem:[#allocation2 + $0x450] sm:$0xff]
    %v2631 = vld [vmem:[#allocation2 + $0x458] sm:$0xff]
    %v2632 = vld [vmem:[#allocation2 + $0x460] sm:$0xff]
    %v2633 = vld [vmem:[#allocation2 + $0x468] sm:$0xff]
    %v2634 = vld [vmem:[#allocation2 + $0x470] sm:$0xff]
    %v2635 = vld [vmem:[#allocation2 + $0x478] sm:$0xff]
    %v2636 = vld [vmem:[#allocation2 + $0x480] sm:$0xff]
    %v2637 = vld [vmem:[#allocation2 + $0x488] sm:$0xff]
    %v2638 = vld [vmem:[#allocation2 + $0x490] sm:$0xff]
    %v2639 = vld [vmem:[#allocation2 + $0x498] sm:$0xff]
    %v2640 = vld [vmem:[#allocation2 + $0x4a0] sm:$0xff]
    %v2641 = vld [vmem:[#allocation2 + $0x4a8] sm:$0xff]
    %v2642 = vld [vmem:[#allocation2 + $0x4b0] sm:$0xff]
    %v2643 = vld [vmem:[#allocation2 + $0x4b8] sm:$0xff]
    %v2644 = vld [vmem:[#allocation2 + $0x4c0] sm:$0xff]
    %v2645 = vld [vmem:[#allocation2 + $0x4c8] sm:$0xff]
    %v2646 = vld [vmem:[#allocation2 + $0x4d0] sm:$0xff]
    %v2647 = vld [vmem:[#allocation2 + $0x4d8] sm:$0xff]
    %v2648 = vld [vmem:[#allocation2 + $0x4e0] sm:$0xff]
    %v2649 = vld [vmem:[#allocation2 + $0x4e8] sm:$0xff]
    %v2650 = vld [vmem:[#allocation2 + $0x4f0] sm:$0xff]
    %v2651 = vld [vmem:[#allocation2 + $0x4f8] sm:$0xff]
    %v2652 = vld [vmem:[#allocation2 + $0x500] sm:$0xff]
    %v2653 = vld [vmem:[#allocation2 + $0x508] sm:$0xff]
    %v2654 = vld [vmem:[#allocation2 + $0x510] sm:$0xff]
    %v2655 = vld [vmem:[#allocation2 + $0x518] sm:$0xff]
    %v2656 = vld [vmem:[#allocation2 + $0x520] sm:$0xff]
    %v2657 = vld [vmem:[#allocation2 + $0x528] sm:$0xff]
    %v2658 = vld [vmem:[#allocation2 + $0x530] sm:$0xff]
    %v2659 = vld [vmem:[#allocation2 + $0x538] sm:$0xff]
    %s2660 = scalar_lea.vmem [#allocation2], 1344
    %v2661 = vld [vmem:[%s2660] sm:$0xff]
    %v2662 = vld [vmem:[%s2660 + $0x8] sm:$0xff]
    %v2663 = vld [vmem:[%s2660 + $0x10] sm:$0xff]
    %v2664 = vld [vmem:[%s2660 + $0x18] sm:$0xff]
    %v2665 = vld [vmem:[%s2660 + $0x20] sm:$0xff]
    %v2666 = vld [vmem:[%s2660 + $0x28] sm:$0xff]
    %v2667 = vld [vmem:[%s2660 + $0x30] sm:$0xff]
    %v2668 = vld [vmem:[%s2660 + $0x38] sm:$0xff]
    %v2669 = vld [vmem:[%s2660 + $0x40] sm:$0xff]
    %v2670 = vld [vmem:[%s2660 + $0x48] sm:$0xff]
    %v2671 = vld [vmem:[%s2660 + $0x50] sm:$0xff]
    %v2672 = vld [vmem:[%s2660 + $0x58] sm:$0xff]
    %v2673 = vld [vmem:[%s2660 + $0x60] sm:$0xff]
    %v2674 = vld [vmem:[%s2660 + $0x68] sm:$0xff]
    %v2675 = vld [vmem:[%s2660 + $0x70] sm:$0xff]
    %v2676 = vld [vmem:[%s2660 + $0x78] sm:$0xff]
    %v2677 = vld [vmem:[%s2660 + $0x80] sm:$0xff]
    %v2678 = vld [vmem:[%s2660 + $0x88] sm:$0xff]
    %v2679 = vld [vmem:[%s2660 + $0x90] sm:$0xff]
    %v2680 = vld [vmem:[%s2660 + $0x98] sm:$0xff]
    %v2681 = vld [vmem:[%s2660 + $0xa0] sm:$0xff]
    %v2682 = vld [vmem:[%s2660 + $0xa8] sm:$0xff]
    %v2683 = vld [vmem:[%s2660 + $0xb0] sm:$0xff]
    %v2684 = vld [vmem:[%s2660 + $0xb8] sm:$0xff]
    %v2685 = vld [vmem:[%s2660 + $0xc0] sm:$0xff]
    %v2686 = vld [vmem:[%s2660 + $0xc8] sm:$0xff]
    %v2687 = vld [vmem:[%s2660 + $0xd0] sm:$0xff]
    %v2688 = vld [vmem:[%s2660 + $0xd8] sm:$0xff]
    %v2689 = vld [vmem:[%s2660 + $0xe0] sm:$0xff]
    %v2690 = vld [vmem:[%s2660 + $0xe8] sm:$0xff]
    %v2691 = vld [vmem:[%s2660 + $0xf0] sm:$0xff]
    %v2692 = vld [vmem:[%s2660 + $0xf8] sm:$0xff]
    %v2693 = vld [vmem:[%s2660 + $0x100] sm:$0xff]
    %v2694 = vld [vmem:[%s2660 + $0x108] sm:$0xff]
    %v2695 = vld [vmem:[%s2660 + $0x110] sm:$0xff]
    %v2696 = vld [vmem:[%s2660 + $0x118] sm:$0xff]
    %v2697 = vld [vmem:[%s2660 + $0x120] sm:$0xff]
    %v2698 = vld [vmem:[%s2660 + $0x128] sm:$0xff]
    %v2699 = vld [vmem:[%s2660 + $0x130] sm:$0xff]
    %v2700 = vld [vmem:[%s2660 + $0x138] sm:$0xff]
    %v2701 = vld [vmem:[%s2660 + $0x140] sm:$0xff]
    %v2702 = vld [vmem:[%s2660 + $0x148] sm:$0xff]
    %v2703 = vld [vmem:[%s2660 + $0x150] sm:$0xff]
    %v2704 = vld [vmem:[%s2660 + $0x158] sm:$0xff]
    %v2705 = vld [vmem:[%s2660 + $0x160] sm:$0xff]
    %v2706 = vld [vmem:[%s2660 + $0x168] sm:$0xff]
    %v2707 = vld [vmem:[%s2660 + $0x170] sm:$0xff]
    %v2708 = vld [vmem:[%s2660 + $0x178] sm:$0xff]
    %v2709 = vld [vmem:[%s2660 + $0x180] sm:$0xff]
    %v2710 = vld [vmem:[%s2660 + $0x188] sm:$0xff]
    %v2711 = vld [vmem:[%s2660 + $0x190] sm:$0xff]
    %v2712 = vld [vmem:[%s2660 + $0x198] sm:$0xff]
    %v2713 = vld [vmem:[%s2660 + $0x1a0] sm:$0xff]
    %v2714 = vld [vmem:[%s2660 + $0x1a8] sm:$0xff]
    %v2715 = vld [vmem:[%s2660 + $0x1b0] sm:$0xff]
    %v2716 = vld [vmem:[%s2660 + $0x1b8] sm:$0xff]
    %v2717 = vld [vmem:[%s2660 + $0x1c0] sm:$0xff]
    %v2718 = vld [vmem:[%s2660 + $0x1c8] sm:$0xff]
    %v2719 = vld [vmem:[%s2660 + $0x1d0] sm:$0xff]
    %v2720 = vld [vmem:[%s2660 + $0x1d8] sm:$0xff]
    %v2721 = vld [vmem:[%s2660 + $0x1e0] sm:$0xff]
    %v2722 = vld [vmem:[%s2660 + $0x1e8] sm:$0xff]
    %v2723 = vld [vmem:[%s2660 + $0x1f0] sm:$0xff]
    %v2724 = vld [vmem:[%s2660 + $0x1f8] sm:$0xff]
    %v2725 = vld [vmem:[%s2660 + $0x200] sm:$0xff]
    %v2726 = vld [vmem:[%s2660 + $0x208] sm:$0xff]
    %v2727 = vld [vmem:[%s2660 + $0x210] sm:$0xff]
    %v2728 = vld [vmem:[%s2660 + $0x218] sm:$0xff]
    %v2729 = vld [vmem:[%s2660 + $0x220] sm:$0xff]
    %v2730 = vld [vmem:[%s2660 + $0x228] sm:$0xff]
    %v2731 = vld [vmem:[%s2660 + $0x230] sm:$0xff]
    %v2732 = vld [vmem:[%s2660 + $0x238] sm:$0xff]
    %v2733 = vld [vmem:[%s2660 + $0x240] sm:$0xff]
    %v2734 = vld [vmem:[%s2660 + $0x248] sm:$0xff]
    %v2735 = vld [vmem:[%s2660 + $0x250] sm:$0xff]
    %v2736 = vld [vmem:[%s2660 + $0x258] sm:$0xff]
    %v2737 = vld [vmem:[%s2660 + $0x260] sm:$0xff]
    %v2738 = vld [vmem:[%s2660 + $0x268] sm:$0xff]
    %v2739 = vld [vmem:[%s2660 + $0x270] sm:$0xff]
    %v2740 = vld [vmem:[%s2660 + $0x278] sm:$0xff]
    %v2741 = vld [vmem:[%s2660 + $0x280] sm:$0xff]
    %v2742 = vld [vmem:[%s2660 + $0x288] sm:$0xff]
    %v2743 = vld [vmem:[%s2660 + $0x290] sm:$0xff]
    %v2744 = vld [vmem:[%s2660 + $0x298] sm:$0xff]
    %v2745 = vld [vmem:[%s2660 + $0x2a0] sm:$0xff]
    %v2746 = vld [vmem:[%s2660 + $0x2a8] sm:$0xff]
    %v2747 = vld [vmem:[%s2660 + $0x2b0] sm:$0xff]
    %v2748 = vld [vmem:[%s2660 + $0x2b8] sm:$0xff]
    %v2749 = vld [vmem:[%s2660 + $0x2c0] sm:$0xff]
    %v2750 = vld [vmem:[%s2660 + $0x2c8] sm:$0xff]
    %v2751 = vld [vmem:[%s2660 + $0x2d0] sm:$0xff]
    %v2752 = vld [vmem:[%s2660 + $0x2d8] sm:$0xff]
    %v2753 = vld [vmem:[%s2660 + $0x2e0] sm:$0xff]
    %v2754 = vld [vmem:[%s2660 + $0x2e8] sm:$0xff]
    %v2755 = vld [vmem:[%s2660 + $0x2f0] sm:$0xff]
    %v2756 = vld [vmem:[%s2660 + $0x2f8] sm:$0xff]
    %v2757 = vld [vmem:[%s2660 + $0x300] sm:$0xff]
    %v2758 = vld [vmem:[%s2660 + $0x308] sm:$0xff]
    %v2759 = vld [vmem:[%s2660 + $0x310] sm:$0xff]
    %v2760 = vld [vmem:[%s2660 + $0x318] sm:$0xff]
    %v2761 = vld [vmem:[%s2660 + $0x320] sm:$0xff]
    %v2762 = vld [vmem:[%s2660 + $0x328] sm:$0xff]
    %v2763 = vld [vmem:[%s2660 + $0x330] sm:$0xff]
    %v2764 = vld [vmem:[%s2660 + $0x338] sm:$0xff]
    %v2765 = vld [vmem:[%s2660 + $0x340] sm:$0xff]
    %v2766 = vld [vmem:[%s2660 + $0x348] sm:$0xff]
    %v2767 = vld [vmem:[%s2660 + $0x350] sm:$0xff]
    %v2768 = vld [vmem:[%s2660 + $0x358] sm:$0xff]
    %v2769 = vld [vmem:[%s2660 + $0x360] sm:$0xff]
    %v2770 = vld [vmem:[%s2660 + $0x368] sm:$0xff]
    %v2771 = vld [vmem:[%s2660 + $0x370] sm:$0xff]
    %v2772 = vld [vmem:[%s2660 + $0x378] sm:$0xff]
    %v2773 = vld [vmem:[%s2660 + $0x380] sm:$0xff]
    %v2774 = vld [vmem:[%s2660 + $0x388] sm:$0xff]
    %v2775 = vld [vmem:[%s2660 + $0x390] sm:$0xff]
    %v2776 = vld [vmem:[%s2660 + $0x398] sm:$0xff]
    %v2777 = vld [vmem:[%s2660 + $0x3a0] sm:$0xff]
    %v2778 = vld [vmem:[%s2660 + $0x3a8] sm:$0xff]
    %v2779 = vld [vmem:[%s2660 + $0x3b0] sm:$0xff]
    %v2780 = vld [vmem:[%s2660 + $0x3b8] sm:$0xff]
    %v2781 = vld [vmem:[%s2660 + $0x3c0] sm:$0xff]
    %v2782 = vld [vmem:[%s2660 + $0x3c8] sm:$0xff]
    %v2783 = vld [vmem:[%s2660 + $0x3d0] sm:$0xff]
    %v2784 = vld [vmem:[%s2660 + $0x3d8] sm:$0xff]
    %v2785 = vld [vmem:[%s2660 + $0x3e0] sm:$0xff]
    %v2786 = vld [vmem:[%s2660 + $0x3e8] sm:$0xff]
    %v2787 = vld [vmem:[%s2660 + $0x3f0] sm:$0xff]
    %v2788 = vld [vmem:[%s2660 + $0x3f8] sm:$0xff]
    %v2789 = vld [vmem:[%s2660 + $0x400] sm:$0xff]
    %v2790 = vld [vmem:[%s2660 + $0x408] sm:$0xff]
    %v2791 = vld [vmem:[%s2660 + $0x410] sm:$0xff]
    %v2792 = vld [vmem:[%s2660 + $0x418] sm:$0xff]
    %v2793 = vld [vmem:[%s2660 + $0x420] sm:$0xff]
    %v2794 = vld [vmem:[%s2660 + $0x428] sm:$0xff]
    %v2795 = vld [vmem:[%s2660 + $0x430] sm:$0xff]
    %v2796 = vld [vmem:[%s2660 + $0x438] sm:$0xff]
    %v2797 = vld [vmem:[%s2660 + $0x440] sm:$0xff]
    %v2798 = vld [vmem:[%s2660 + $0x448] sm:$0xff]
    %v2799 = vld [vmem:[%s2660 + $0x450] sm:$0xff]
    %v2800 = vld [vmem:[%s2660 + $0x458] sm:$0xff]
    %v2801 = vld [vmem:[%s2660 + $0x460] sm:$0xff]
    %v2802 = vld [vmem:[%s2660 + $0x468] sm:$0xff]
    %v2803 = vld [vmem:[%s2660 + $0x470] sm:$0xff]
    %v2804 = vld [vmem:[%s2660 + $0x478] sm:$0xff]
    %v2805 = vld [vmem:[%s2660 + $0x480] sm:$0xff]
    %v2806 = vld [vmem:[%s2660 + $0x488] sm:$0xff]
    %v2807 = vld [vmem:[%s2660 + $0x490] sm:$0xff]
    %v2808 = vld [vmem:[%s2660 + $0x498] sm:$0xff]
    %v2809 = vld [vmem:[%s2660 + $0x4a0] sm:$0xff]
    %v2810 = vld [vmem:[%s2660 + $0x4a8] sm:$0xff]
    %v2811 = vld [vmem:[%s2660 + $0x4b0] sm:$0xff]
    %v2812 = vld [vmem:[%s2660 + $0x4b8] sm:$0xff]
    %v2813 = vld [vmem:[%s2660 + $0x4c0] sm:$0xff]
    %v2814 = vld [vmem:[%s2660 + $0x4c8] sm:$0xff]
    %v2815 = vld [vmem:[%s2660 + $0x4d0] sm:$0xff]
    %v2816 = vld [vmem:[%s2660 + $0x4d8] sm:$0xff]
    %v2817 = vld [vmem:[%s2660 + $0x4e0] sm:$0xff]
    %v2818 = vld [vmem:[%s2660 + $0x4e8] sm:$0xff]
    %v2819 = vld [vmem:[%s2660 + $0x4f0] sm:$0xff]
    %v2820 = vld [vmem:[%s2660 + $0x4f8] sm:$0xff]
    %v2821 = vld [vmem:[%s2660 + $0x500] sm:$0xff]
    %v2822 = vld [vmem:[%s2660 + $0x508] sm:$0xff]
    %v2823 = vld [vmem:[%s2660 + $0x510] sm:$0xff]
    %v2824 = vld [vmem:[%s2660 + $0x518] sm:$0xff]
    %v2825 = vld [vmem:[%s2660 + $0x520] sm:$0xff]
    %v2826 = vld [vmem:[%s2660 + $0x528] sm:$0xff]
    %v2827 = vld [vmem:[%s2660 + $0x530] sm:$0xff]
    %v2828 = vld [vmem:[%s2660 + $0x538] sm:$0xff]
    %v2997 = vunpack.c.l.b16 %v2661
    %v2998 = vunpack.c.h.b16 %v2661
    %v2999 = vunpack.c.l.b16 %v2662
    %v3000 = vunpack.c.h.b16 %v2662
    %v3001 = vunpack.c.l.b16 %v2663
    %v3002 = vunpack.c.h.b16 %v2663
    %v3003 = vunpack.c.l.b16 %v2664
    %v3004 = vunpack.c.h.b16 %v2664
    %v3005 = vunpack.c.l.b16 %v2665
    %v3006 = vunpack.c.h.b16 %v2665
    %v3007 = vunpack.c.l.b16 %v2666
    %v3008 = vunpack.c.h.b16 %v2666
    %v3009 = vunpack.c.l.b16 %v2667
    %v3010 = vunpack.c.h.b16 %v2667
    %v3011 = vunpack.c.l.b16 %v2668
    %v3012 = vunpack.c.h.b16 %v2668
    %v3013 = vunpack.c.l.b16 %v2669
    %v3014 = vunpack.c.h.b16 %v2669
    %v3015 = vunpack.c.l.b16 %v2670
    %v3016 = vunpack.c.h.b16 %v2670
    %v3017 = vunpack.c.l.b16 %v2671
    %v3018 = vunpack.c.h.b16 %v2671
    %v3019 = vunpack.c.l.b16 %v2672
    %v3020 = vunpack.c.h.b16 %v2672
    %v3021 = vunpack.c.l.b16 %v2673
    %v3022 = vunpack.c.h.b16 %v2673
    %v3023 = vunpack.c.l.b16 %v2674
    %v3024 = vunpack.c.h.b16 %v2674
    %v3025 = vunpack.c.l.b16 %v2675
    %v3026 = vunpack.c.h.b16 %v2675
    %v3027 = vunpack.c.l.b16 %v2676
    %v3028 = vunpack.c.h.b16 %v2676
    %v3029 = vunpack.c.l.b16 %v2677
    %v3030 = vunpack.c.h.b16 %v2677
    %v3031 = vunpack.c.l.b16 %v2678
    %v3032 = vunpack.c.h.b16 %v2678
    %v3033 = vunpack.c.l.b16 %v2679
    %v3034 = vunpack.c.h.b16 %v2679
    %v3035 = vunpack.c.l.b16 %v2680
    %v3036 = vunpack.c.h.b16 %v2680
    %v3037 = vunpack.c.l.b16 %v2681
    %v3038 = vunpack.c.h.b16 %v2681
    %v3039 = vunpack.c.l.b16 %v2682
    %v3040 = vunpack.c.h.b16 %v2682
    %v3041 = vunpack.c.l.b16 %v2683
    %v3042 = vunpack.c.h.b16 %v2683
    %v3043 = vunpack.c.l.b16 %v2684
    %v3044 = vunpack.c.h.b16 %v2684
    %v3045 = vunpack.c.l.b16 %v2685
    %v3046 = vunpack.c.h.b16 %v2685
    %v3047 = vunpack.c.l.b16 %v2686
    %v3048 = vunpack.c.h.b16 %v2686
    %v3049 = vunpack.c.l.b16 %v2687
    %v3050 = vunpack.c.h.b16 %v2687
    %v3051 = vunpack.c.l.b16 %v2688
    %v3052 = vunpack.c.h.b16 %v2688
    %v3053 = vunpack.c.l.b16 %v2689
    %v3054 = vunpack.c.h.b16 %v2689
    %v3055 = vunpack.c.l.b16 %v2690
    %v3056 = vunpack.c.h.b16 %v2690
    %v3057 = vunpack.c.l.b16 %v2691
    %v3058 = vunpack.c.h.b16 %v2691
    %v3059 = vunpack.c.l.b16 %v2692
    %v3060 = vunpack.c.h.b16 %v2692
    %v3061 = vunpack.c.l.b16 %v2693
    %v3062 = vunpack.c.h.b16 %v2693
    %v3063 = vunpack.c.l.b16 %v2694
    %v3064 = vunpack.c.h.b16 %v2694
    %v3065 = vunpack.c.l.b16 %v2695
    %v3066 = vunpack.c.h.b16 %v2695
    %v3067 = vunpack.c.l.b16 %v2696
    %v3068 = vunpack.c.h.b16 %v2696
    %v3069 = vunpack.c.l.b16 %v2697
    %v3070 = vunpack.c.h.b16 %v2697
    %v3071 = vunpack.c.l.b16 %v2698
    %v3072 = vunpack.c.h.b16 %v2698
    %v3073 = vunpack.c.l.b16 %v2699
    %v3074 = vunpack.c.h.b16 %v2699
    %v3075 = vunpack.c.l.b16 %v2700
    %v3076 = vunpack.c.h.b16 %v2700
    %v3077 = vunpack.c.l.b16 %v2701
    %v3078 = vunpack.c.h.b16 %v2701
    %v3079 = vunpack.c.l.b16 %v2702
    %v3080 = vunpack.c.h.b16 %v2702
    %v3081 = vunpack.c.l.b16 %v2703
    %v3082 = vunpack.c.h.b16 %v2703
    %v3083 = vunpack.c.l.b16 %v2704
    %v3084 = vunpack.c.h.b16 %v2704
    %v3085 = vunpack.c.l.b16 %v2705
    %v3086 = vunpack.c.h.b16 %v2705
    %v3087 = vunpack.c.l.b16 %v2706
    %v3088 = vunpack.c.h.b16 %v2706
    %v3089 = vunpack.c.l.b16 %v2707
    %v3090 = vunpack.c.h.b16 %v2707
    %v3091 = vunpack.c.l.b16 %v2708
    %v3092 = vunpack.c.h.b16 %v2708
    %v3093 = vunpack.c.l.b16 %v2709
    %v3094 = vunpack.c.h.b16 %v2709
    %v3095 = vunpack.c.l.b16 %v2710
    %v3096 = vunpack.c.h.b16 %v2710
    %v3097 = vunpack.c.l.b16 %v2711
    %v3098 = vunpack.c.h.b16 %v2711
    %v3099 = vunpack.c.l.b16 %v2712
    %v3100 = vunpack.c.h.b16 %v2712
    %v3101 = vunpack.c.l.b16 %v2713
    %v3102 = vunpack.c.h.b16 %v2713
    %v3103 = vunpack.c.l.b16 %v2714
    %v3104 = vunpack.c.h.b16 %v2714
    %v3105 = vunpack.c.l.b16 %v2715
    %v3106 = vunpack.c.h.b16 %v2715
    %v3107 = vunpack.c.l.b16 %v2716
    %v3108 = vunpack.c.h.b16 %v2716
    %v3109 = vunpack.c.l.b16 %v2717
    %v3110 = vunpack.c.h.b16 %v2717
    %v3111 = vunpack.c.l.b16 %v2718
    %v3112 = vunpack.c.h.b16 %v2718
    %v3113 = vunpack.c.l.b16 %v2719
    %v3114 = vunpack.c.h.b16 %v2719
    %v3115 = vunpack.c.l.b16 %v2720
    %v3116 = vunpack.c.h.b16 %v2720
    %v3117 = vunpack.c.l.b16 %v2721
    %v3118 = vunpack.c.h.b16 %v2721
    %v3119 = vunpack.c.l.b16 %v2722
    %v3120 = vunpack.c.h.b16 %v2722
    %v3121 = vunpack.c.l.b16 %v2723
    %v3122 = vunpack.c.h.b16 %v2723
    %v3123 = vunpack.c.l.b16 %v2724
    %v3124 = vunpack.c.h.b16 %v2724
    %v3125 = vunpack.c.l.b16 %v2725
    %v3126 = vunpack.c.h.b16 %v2725
    %v3127 = vunpack.c.l.b16 %v2726
    %v3128 = vunpack.c.h.b16 %v2726
    %v3129 = vunpack.c.l.b16 %v2727
    %v3130 = vunpack.c.h.b16 %v2727
    %v3131 = vunpack.c.l.b16 %v2728
    %v3132 = vunpack.c.h.b16 %v2728
    %v3133 = vunpack.c.l.b16 %v2729
    %v3134 = vunpack.c.h.b16 %v2729
    %v3135 = vunpack.c.l.b16 %v2730
    %v3136 = vunpack.c.h.b16 %v2730
    %v3137 = vunpack.c.l.b16 %v2731
    %v3138 = vunpack.c.h.b16 %v2731
    %v3139 = vunpack.c.l.b16 %v2732
    %v3140 = vunpack.c.h.b16 %v2732
    %v3141 = vunpack.c.l.b16 %v2733
    %v3142 = vunpack.c.h.b16 %v2733
    %v3143 = vunpack.c.l.b16 %v2734
    %v3144 = vunpack.c.h.b16 %v2734
    %v3145 = vunpack.c.l.b16 %v2735
    %v3146 = vunpack.c.h.b16 %v2735
    %v3147 = vunpack.c.l.b16 %v2736
    %v3148 = vunpack.c.h.b16 %v2736
    %v3149 = vunpack.c.l.b16 %v2737
    %v3150 = vunpack.c.h.b16 %v2737
    %v3151 = vunpack.c.l.b16 %v2738
    %v3152 = vunpack.c.h.b16 %v2738
    %v3153 = vunpack.c.l.b16 %v2739
    %v3154 = vunpack.c.h.b16 %v2739
    %v3155 = vunpack.c.l.b16 %v2740
    %v3156 = vunpack.c.h.b16 %v2740
    %v3157 = vunpack.c.l.b16 %v2741
    %v3158 = vunpack.c.h.b16 %v2741
    %v3159 = vunpack.c.l.b16 %v2742
    %v3160 = vunpack.c.h.b16 %v2742
    %v3161 = vunpack.c.l.b16 %v2743
    %v3162 = vunpack.c.h.b16 %v2743
    %v3163 = vunpack.c.l.b16 %v2744
    %v3164 = vunpack.c.h.b16 %v2744
    %v3165 = vunpack.c.l.b16 %v2745
    %v3166 = vunpack.c.h.b16 %v2745
    %v3167 = vunpack.c.l.b16 %v2746
    %v3168 = vunpack.c.h.b16 %v2746
    %v3169 = vunpack.c.l.b16 %v2747
    %v3170 = vunpack.c.h.b16 %v2747
    %v3171 = vunpack.c.l.b16 %v2748
    %v3172 = vunpack.c.h.b16 %v2748
    %v3173 = vunpack.c.l.b16 %v2749
    %v3174 = vunpack.c.h.b16 %v2749
    %v3175 = vunpack.c.l.b16 %v2750
    %v3176 = vunpack.c.h.b16 %v2750
    %v3177 = vunpack.c.l.b16 %v2751
    %v3178 = vunpack.c.h.b16 %v2751
    %v3179 = vunpack.c.l.b16 %v2752
    %v3180 = vunpack.c.h.b16 %v2752
    %v3181 = vunpack.c.l.b16 %v2753
    %v3182 = vunpack.c.h.b16 %v2753
    %v3183 = vunpack.c.l.b16 %v2754
    %v3184 = vunpack.c.h.b16 %v2754
    %v3185 = vunpack.c.l.b16 %v2755
    %v3186 = vunpack.c.h.b16 %v2755
    %v3187 = vunpack.c.l.b16 %v2756
    %v3188 = vunpack.c.h.b16 %v2756
    %v3189 = vunpack.c.l.b16 %v2757
    %v3190 = vunpack.c.h.b16 %v2757
    %v3191 = vunpack.c.l.b16 %v2758
    %v3192 = vunpack.c.h.b16 %v2758
    %v3193 = vunpack.c.l.b16 %v2759
    %v3194 = vunpack.c.h.b16 %v2759
    %v3195 = vunpack.c.l.b16 %v2760
    %v3196 = vunpack.c.h.b16 %v2760
    %v3197 = vunpack.c.l.b16 %v2761
    %v3198 = vunpack.c.h.b16 %v2761
    %v3199 = vunpack.c.l.b16 %v2762
    %v3200 = vunpack.c.h.b16 %v2762
    %v3201 = vunpack.c.l.b16 %v2763
    %v3202 = vunpack.c.h.b16 %v2763
    %v3203 = vunpack.c.l.b16 %v2764
    %v3204 = vunpack.c.h.b16 %v2764
    %v3205 = vunpack.c.l.b16 %v2765
    %v3206 = vunpack.c.h.b16 %v2765
    %v3207 = vunpack.c.l.b16 %v2766
    %v3208 = vunpack.c.h.b16 %v2766
    %v3209 = vunpack.c.l.b16 %v2767
    %v3210 = vunpack.c.h.b16 %v2767
    %v3211 = vunpack.c.l.b16 %v2768
    %v3212 = vunpack.c.h.b16 %v2768
    %v3213 = vunpack.c.l.b16 %v2769
    %v3214 = vunpack.c.h.b16 %v2769
    %v3215 = vunpack.c.l.b16 %v2770
    %v3216 = vunpack.c.h.b16 %v2770
    %v3217 = vunpack.c.l.b16 %v2771
    %v3218 = vunpack.c.h.b16 %v2771
    %v3219 = vunpack.c.l.b16 %v2772
    %v3220 = vunpack.c.h.b16 %v2772
    %v3221 = vunpack.c.l.b16 %v2773
    %v3222 = vunpack.c.h.b16 %v2773
    %v3223 = vunpack.c.l.b16 %v2774
    %v3224 = vunpack.c.h.b16 %v2774
    %v3225 = vunpack.c.l.b16 %v2775
    %v3226 = vunpack.c.h.b16 %v2775
    %v3227 = vunpack.c.l.b16 %v2776
    %v3228 = vunpack.c.h.b16 %v2776
    %v3229 = vunpack.c.l.b16 %v2777
    %v3230 = vunpack.c.h.b16 %v2777
    %v3231 = vunpack.c.l.b16 %v2778
    %v3232 = vunpack.c.h.b16 %v2778
    %v3233 = vunpack.c.l.b16 %v2779
    %v3234 = vunpack.c.h.b16 %v2779
    %v3235 = vunpack.c.l.b16 %v2780
    %v3236 = vunpack.c.h.b16 %v2780
    %v3237 = vunpack.c.l.b16 %v2781
    %v3238 = vunpack.c.h.b16 %v2781
    %v3239 = vunpack.c.l.b16 %v2782
    %v3240 = vunpack.c.h.b16 %v2782
    %v3241 = vunpack.c.l.b16 %v2783
    %v3242 = vunpack.c.h.b16 %v2783
    %v3243 = vunpack.c.l.b16 %v2784
    %v3244 = vunpack.c.h.b16 %v2784
    %v3245 = vunpack.c.l.b16 %v2785
    %v3246 = vunpack.c.h.b16 %v2785
    %v3247 = vunpack.c.l.b16 %v2786
    %v3248 = vunpack.c.h.b16 %v2786
    %v3249 = vunpack.c.l.b16 %v2787
    %v3250 = vunpack.c.h.b16 %v2787
    %v3251 = vunpack.c.l.b16 %v2788
    %v3252 = vunpack.c.h.b16 %v2788
    %v3253 = vunpack.c.l.b16 %v2789
    %v3254 = vunpack.c.h.b16 %v2789
    %v3255 = vunpack.c.l.b16 %v2790
    %v3256 = vunpack.c.h.b16 %v2790
    %v3257 = vunpack.c.l.b16 %v2791
    %v3258 = vunpack.c.h.b16 %v2791
    %v3259 = vunpack.c.l.b16 %v2792
    %v3260 = vunpack.c.h.b16 %v2792
    %v3261 = vunpack.c.l.b16 %v2793
    %v3262 = vunpack.c.h.b16 %v2793
    %v3263 = vunpack.c.l.b16 %v2794
    %v3264 = vunpack.c.h.b16 %v2794
    %v3265 = vunpack.c.l.b16 %v2795
    %v3266 = vunpack.c.h.b16 %v2795
    %v3267 = vunpack.c.l.b16 %v2796
    %v3268 = vunpack.c.h.b16 %v2796
    %v3269 = vunpack.c.l.b16 %v2797
    %v3270 = vunpack.c.h.b16 %v2797
    %v3271 = vunpack.c.l.b16 %v2798
    %v3272 = vunpack.c.h.b16 %v2798
    %v3273 = vunpack.c.l.b16 %v2799
    %v3274 = vunpack.c.h.b16 %v2799
    %v3275 = vunpack.c.l.b16 %v2800
    %v3276 = vunpack.c.h.b16 %v2800
    %v3277 = vunpack.c.l.b16 %v2801
    %v3278 = vunpack.c.h.b16 %v2801
    %v3279 = vunpack.c.l.b16 %v2802
    %v3280 = vunpack.c.h.b16 %v2802
    %v3281 = vunpack.c.l.b16 %v2803
    %v3282 = vunpack.c.h.b16 %v2803
    %v3283 = vunpack.c.l.b16 %v2804
    %v3284 = vunpack.c.h.b16 %v2804
    %v3285 = vunpack.c.l.b16 %v2805
    %v3286 = vunpack.c.h.b16 %v2805
    %v3287 = vunpack.c.l.b16 %v2806
    %v3288 = vunpack.c.h.b16 %v2806
    %v3289 = vunpack.c.l.b16 %v2807
    %v3290 = vunpack.c.h.b16 %v2807
    %v3291 = vunpack.c.l.b16 %v2808
    %v3292 = vunpack.c.h.b16 %v2808
    %v3293 = vunpack.c.l.b16 %v2809
    %v3294 = vunpack.c.h.b16 %v2809
    %v3295 = vunpack.c.l.b16 %v2810
    %v3296 = vunpack.c.h.b16 %v2810
    %v3297 = vunpack.c.l.b16 %v2811
    %v3298 = vunpack.c.h.b16 %v2811
    %v3299 = vunpack.c.l.b16 %v2812
    %v3300 = vunpack.c.h.b16 %v2812
    %v3301 = vunpack.c.l.b16 %v2813
    %v3302 = vunpack.c.h.b16 %v2813
    %v3303 = vunpack.c.l.b16 %v2814
    %v3304 = vunpack.c.h.b16 %v2814
    %v3305 = vunpack.c.l.b16 %v2815
    %v3306 = vunpack.c.h.b16 %v2815
    %v3307 = vunpack.c.l.b16 %v2816
    %v3308 = vunpack.c.h.b16 %v2816
    %v3309 = vunpack.c.l.b16 %v2817
    %v3310 = vunpack.c.h.b16 %v2817
    %v3311 = vunpack.c.l.b16 %v2818
    %v3312 = vunpack.c.h.b16 %v2818
    %v3313 = vunpack.c.l.b16 %v2819
    %v3314 = vunpack.c.h.b16 %v2819
    %v3315 = vunpack.c.l.b16 %v2820
    %v3316 = vunpack.c.h.b16 %v2820
    %v3317 = vunpack.c.l.b16 %v2821
    %v3318 = vunpack.c.h.b16 %v2821
    %v3319 = vunpack.c.l.b16 %v2822
    %v3320 = vunpack.c.h.b16 %v2822
    %v3321 = vunpack.c.l.b16 %v2823
    %v3322 = vunpack.c.h.b16 %v2823
    %v3323 = vunpack.c.l.b16 %v2824
    %v3324 = vunpack.c.h.b16 %v2824
    %v3325 = vunpack.c.l.b16 %v2825
    %v3326 = vunpack.c.h.b16 %v2825
    %v3327 = vunpack.c.l.b16 %v2826
    %v3328 = vunpack.c.h.b16 %v2826
    %v3329 = vunpack.c.l.b16 %v2827
    %v3330 = vunpack.c.h.b16 %v2827
    %v3331 = vunpack.c.l.b16 %v2828
    %v3332 = vunpack.c.h.b16 %v2828
    %v3333 = vpack.c.b16 %v3003, %v2997
    %v3334 = vpack.c.b16 %v3004, %v2998
    %v3335 = vpack.c.b16 %v3005, %v2999
    %v3336 = vpack.c.b16 %v3006, %v3000
    %v3337 = vpack.c.b16 %v3007, %v3001
    %v3338 = vpack.c.b16 %v3008, %v3002
    %v3339 = vpack.c.b16 %v3015, %v3009
    %v3340 = vpack.c.b16 %v3016, %v3010
    %v3341 = vpack.c.b16 %v3017, %v3011
    %v3342 = vpack.c.b16 %v3018, %v3012
    %v3343 = vpack.c.b16 %v3019, %v3013
    %v3344 = vpack.c.b16 %v3020, %v3014
    %v3345 = vpack.c.b16 %v3027, %v3021
    %v3346 = vpack.c.b16 %v3028, %v3022
    %v3347 = vpack.c.b16 %v3029, %v3023
    %v3348 = vpack.c.b16 %v3030, %v3024
    %v3349 = vpack.c.b16 %v3031, %v3025
    %v3350 = vpack.c.b16 %v3032, %v3026
    %v3351 = vpack.c.b16 %v3039, %v3033
    %v3352 = vpack.c.b16 %v3040, %v3034
    %v3353 = vpack.c.b16 %v3041, %v3035
    %v3354 = vpack.c.b16 %v3042, %v3036
    %v3355 = vpack.c.b16 %v3043, %v3037
    %v3356 = vpack.c.b16 %v3044, %v3038
    %v3357 = vpack.c.b16 %v3051, %v3045
    %v3358 = vpack.c.b16 %v3052, %v3046
    %v3359 = vpack.c.b16 %v3053, %v3047
    %v3360 = vpack.c.b16 %v3054, %v3048
    %v3361 = vpack.c.b16 %v3055, %v3049
    %v3362 = vpack.c.b16 %v3056, %v3050
    %v3363 = vpack.c.b16 %v3063, %v3057
    %v3364 = vpack.c.b16 %v3064, %v3058
    %v3365 = vpack.c.b16 %v3065, %v3059
    %v3366 = vpack.c.b16 %v3066, %v3060
    %v3367 = vpack.c.b16 %v3067, %v3061
    %v3368 = vpack.c.b16 %v3068, %v3062
    %v3369 = vpack.c.b16 %v3075, %v3069
    %v3370 = vpack.c.b16 %v3076, %v3070
    %v3371 = vpack.c.b16 %v3077, %v3071
    %v3372 = vpack.c.b16 %v3078, %v3072
    %v3373 = vpack.c.b16 %v3079, %v3073
    %v3374 = vpack.c.b16 %v3080, %v3074
    %v3375 = vpack.c.b16 %v3087, %v3081
    %v3376 = vpack.c.b16 %v3088, %v3082
    %v3377 = vpack.c.b16 %v3089, %v3083
    %v3378 = vpack.c.b16 %v3090, %v3084
    %v3379 = vpack.c.b16 %v3091, %v3085
    %v3380 = vpack.c.b16 %v3092, %v3086
    %v3381 = vpack.c.b16 %v3099, %v3093
    %v3382 = vpack.c.b16 %v3100, %v3094
    %v3383 = vpack.c.b16 %v3101, %v3095
    %v3384 = vpack.c.b16 %v3102, %v3096
    %v3385 = vpack.c.b16 %v3103, %v3097
    %v3386 = vpack.c.b16 %v3104, %v3098
    %v3387 = vpack.c.b16 %v3111, %v3105
    %v3388 = vpack.c.b16 %v3112, %v3106
    %v3389 = vpack.c.b16 %v3113, %v3107
    %v3390 = vpack.c.b16 %v3114, %v3108
    %v3391 = vpack.c.b16 %v3115, %v3109
    %v3392 = vpack.c.b16 %v3116, %v3110
    %v3393 = vpack.c.b16 %v3123, %v3117
    %v3394 = vpack.c.b16 %v3124, %v3118
    %v3395 = vpack.c.b16 %v3125, %v3119
    %v3396 = vpack.c.b16 %v3126, %v3120
    %v3397 = vpack.c.b16 %v3127, %v3121
    %v3398 = vpack.c.b16 %v3128, %v3122
    %v3399 = vpack.c.b16 %v3135, %v3129
    %v3400 = vpack.c.b16 %v3136, %v3130
    %v3401 = vpack.c.b16 %v3137, %v3131
    %v3402 = vpack.c.b16 %v3138, %v3132
    %v3403 = vpack.c.b16 %v3139, %v3133
    %v3404 = vpack.c.b16 %v3140, %v3134
    %v3405 = vpack.c.b16 %v3147, %v3141
    %v3406 = vpack.c.b16 %v3148, %v3142
    %v3407 = vpack.c.b16 %v3149, %v3143
    %v3408 = vpack.c.b16 %v3150, %v3144
    %v3409 = vpack.c.b16 %v3151, %v3145
    %v3410 = vpack.c.b16 %v3152, %v3146
    %v3411 = vpack.c.b16 %v3159, %v3153
    %v3412 = vpack.c.b16 %v3160, %v3154
    %v3413 = vpack.c.b16 %v3161, %v3155
    %v3414 = vpack.c.b16 %v3162, %v3156
    %v3415 = vpack.c.b16 %v3163, %v3157
    %v3416 = vpack.c.b16 %v3164, %v3158
    %v3417 = vpack.c.b16 %v3171, %v3165
    %v3418 = vpack.c.b16 %v3172, %v3166
    %v3419 = vpack.c.b16 %v3173, %v3167
    %v3420 = vpack.c.b16 %v3174, %v3168
    %v3421 = vpack.c.b16 %v3175, %v3169
    %v3422 = vpack.c.b16 %v3176, %v3170
    %v3423 = vpack.c.b16 %v3183, %v3177
    %v3424 = vpack.c.b16 %v3184, %v3178
    %v3425 = vpack.c.b16 %v3185, %v3179
    %v3426 = vpack.c.b16 %v3186, %v3180
    %v3427 = vpack.c.b16 %v3187, %v3181
    %v3428 = vpack.c.b16 %v3188, %v3182
    %v3429 = vpack.c.b16 %v3195, %v3189
    %v3430 = vpack.c.b16 %v3196, %v3190
    %v3431 = vpack.c.b16 %v3197, %v3191
    %v3432 = vpack.c.b16 %v3198, %v3192
    %v3433 = vpack.c.b16 %v3199, %v3193
    %v3434 = vpack.c.b16 %v3200, %v3194
    %v3435 = vpack.c.b16 %v3207, %v3201
    %v3436 = vpack.c.b16 %v3208, %v3202
    %v3437 = vpack.c.b16 %v3209, %v3203
    %v3438 = vpack.c.b16 %v3210, %v3204
    %v3439 = vpack.c.b16 %v3211, %v3205
    %v3440 = vpack.c.b16 %v3212, %v3206
    %v3441 = vpack.c.b16 %v3219, %v3213
    %v3442 = vpack.c.b16 %v3220, %v3214
    %v3443 = vpack.c.b16 %v3221, %v3215
    %v3444 = vpack.c.b16 %v3222, %v3216
    %v3445 = vpack.c.b16 %v3223, %v3217
    %v3446 = vpack.c.b16 %v3224, %v3218
    %v3447 = vpack.c.b16 %v3231, %v3225
    %v3448 = vpack.c.b16 %v3232, %v3226
    %v3449 = vpack.c.b16 %v3233, %v3227
    %v3450 = vpack.c.b16 %v3234, %v3228
    %v3451 = vpack.c.b16 %v3235, %v3229
    %v3452 = vpack.c.b16 %v3236, %v3230
    %v3453 = vpack.c.b16 %v3243, %v3237
    %v3454 = vpack.c.b16 %v3244, %v3238
    %v3455 = vpack.c.b16 %v3245, %v3239
    %v3456 = vpack.c.b16 %v3246, %v3240
    %v3457 = vpack.c.b16 %v3247, %v3241
    %v3458 = vpack.c.b16 %v3248, %v3242
    %v3459 = vpack.c.b16 %v3255, %v3249
    %v3460 = vpack.c.b16 %v3256, %v3250
    %v3461 = vpack.c.b16 %v3257, %v3251
    %v3462 = vpack.c.b16 %v3258, %v3252
    %v3463 = vpack.c.b16 %v3259, %v3253
    %v3464 = vpack.c.b16 %v3260, %v3254
    %v3465 = vpack.c.b16 %v3267, %v3261
    %v3466 = vpack.c.b16 %v3268, %v3262
    %v3467 = vpack.c.b16 %v3269, %v3263
    %v3468 = vpack.c.b16 %v3270, %v3264
    %v3469 = vpack.c.b16 %v3271, %v3265
    %v3470 = vpack.c.b16 %v3272, %v3266
    %v3471 = vpack.c.b16 %v3279, %v3273
    %v3472 = vpack.c.b16 %v3280, %v3274
    %v3473 = vpack.c.b16 %v3281, %v3275
    %v3474 = vpack.c.b16 %v3282, %v3276
    %v3475 = vpack.c.b16 %v3283, %v3277
    %v3476 = vpack.c.b16 %v3284, %v3278
    %v3477 = vpack.c.b16 %v3291, %v3285
    %v3478 = vpack.c.b16 %v3292, %v3286
    %v3479 = vpack.c.b16 %v3293, %v3287
    %v3480 = vpack.c.b16 %v3294, %v3288
    %v3481 = vpack.c.b16 %v3295, %v3289
    %v3482 = vpack.c.b16 %v3296, %v3290
    %v3483 = vpack.c.b16 %v3303, %v3297
    %v3484 = vpack.c.b16 %v3304, %v3298
    %v3485 = vpack.c.b16 %v3305, %v3299
    %v3486 = vpack.c.b16 %v3306, %v3300
    %v3487 = vpack.c.b16 %v3307, %v3301
    %v3488 = vpack.c.b16 %v3308, %v3302
    %v3489 = vpack.c.b16 %v3315, %v3309
    %v3490 = vpack.c.b16 %v3316, %v3310
    %v3491 = vpack.c.b16 %v3317, %v3311
    %v3492 = vpack.c.b16 %v3318, %v3312
    %v3493 = vpack.c.b16 %v3319, %v3313
    %v3494 = vpack.c.b16 %v3320, %v3314
    %v3495 = vpack.c.b16 %v3327, %v3321
    %v3496 = vpack.c.b16 %v3328, %v3322
    %v3497 = vpack.c.b16 %v3329, %v3323
    %v3498 = vpack.c.b16 %v3330, %v3324
    %v3499 = vpack.c.b16 %v3331, %v3325
    %v3500 = vpack.c.b16 %v3332, %v3326
    %v3670 = vsel %vm1528, %v2487, 0
    %v3673 = vsel %vm1528, %v2491, 0
    %3675 = vmatpush.bf16.msra.mxu0 %v3375
    %3676 = vmatpush.bf16.msra.mxu0 %v3369
    %3677 = vmatpush.bf16.msra.mxu0 %v3363
    %3678 = vmatpush.bf16.msra.mxu0 %v3357
    %3679 = vmatpush.bf16.msra.mxu0 %v3351
    %3680 = vmatpush.bf16.msra.mxu0 %v3345
    %3681 = vmatpush.bf16.msra.mxu0 %v3339
    %3682 = vmatpush.bf16.msra.mxu0 %v3333
    %3683 = vmatmul.bf16.gmra.mxu0 %v2484
    %v3684 = vpop.f32.mrf.mxu0
    %v3685 = vadd.f32 0.0, %v3684
    %v3686 = vpop.f32.mrf.mxu0
    %v3687 = vadd.f32 0.0, %v3686
    %3688 = vmatmul.bf16.gmra.mxu0 %v2488
    %v3689 = vpop.f32.mrf.mxu0
    %v3690 = vadd.f32 0.0, %v3689
    %v3691 = vpop.f32.mrf.mxu0
    %v3692 = vadd.f32 0.0, %v3691
    %3693 = vdwg.mxu0
    %3694 = vmatpush.bf16.msra.mxu0 %v3423
    %3695 = vmatpush.bf16.msra.mxu0 %v3417
    %3696 = vmatpush.bf16.msra.mxu0 %v3411
    %3697 = vmatpush.bf16.msra.mxu0 %v3405
    %3698 = vmatpush.bf16.msra.mxu0 %v3399
    %3699 = vmatpush.bf16.msra.mxu0 %v3393
    %3700 = vmatpush.bf16.msra.mxu0 %v3387
    %3701 = vmatpush.bf16.msra.mxu0 %v3381
    %3702 = vmatmul.bf16.gmra.mxu0 %v2485
    %v3703 = vpop.f32.mrf.mxu0
    %v3704 = vadd.f32 %v3685, %v3703
    %v3705 = vpop.f32.mrf.mxu0
    %v3706 = vadd.f32 %v3687, %v3705
    %3707 = vmatmul.bf16.gmra.mxu0 %v2489
    %v3708 = vpop.f32.mrf.mxu0
    %v3709 = vadd.f32 %v3690, %v3708
    %v3710 = vpop.f32.mrf.mxu0
    %v3711 = vadd.f32 %v3692, %v3710
    %3712 = vdwg.mxu0
    %3713 = vmatpush.bf16.msra.mxu0 %v3471
    %3714 = vmatpush.bf16.msra.mxu0 %v3465
    %3715 = vmatpush.bf16.msra.mxu0 %v3459
    %3716 = vmatpush.bf16.msra.mxu0 %v3453
    %3717 = vmatpush.bf16.msra.mxu0 %v3447
    %3718 = vmatpush.bf16.msra.mxu0 %v3441
    %3719 = vmatpush.bf16.msra.mxu0 %v3435
    %3720 = vmatpush.bf16.msra.mxu0 %v3429
    %3721 = vmatmul.bf16.gmra.mxu0 %v2486
    %v3722 = vpop.f32.mrf.mxu0
    %v3723 = vadd.f32 %v3704, %v3722
    %v3724 = vpop.f32.mrf.mxu0
    %v3725 = vadd.f32 %v3706, %v3724
    %3726 = vmatmul.bf16.gmra.mxu0 %v2490
    %v3727 = vpop.f32.mrf.mxu0
    %v3728 = vadd.f32 %v3709, %v3727
    %v3729 = vpop.f32.mrf.mxu0
    %v3730 = vadd.f32 %v3711, %v3729
    %3731 = vdwg.mxu0
    %3732 = vmatpush.bf16.msra.mxu0 0
    %3733 = vmatpush.bf16.msra.mxu0 0
    %3734 = vmatpush.bf16.msra.mxu0 0
    %3735 = vmatpush.bf16.msra.mxu0 0
    %3736 = vmatpush.bf16.msra.mxu0 %v3495
    %3737 = vmatpush.bf16.msra.mxu0 %v3489
    %3738 = vmatpush.bf16.msra.mxu0 %v3483
    %3739 = vmatpush.bf16.msra.mxu0 %v3477
    %3740 = vmatmul.bf16.gmra.mxu0 %v3670
    %v3741 = vpop.f32.mrf.mxu0
    %v3742 = vadd.f32 %v3723, %v3741
    %v3743 = vpop.f32.mrf.mxu0
    %v3744 = vadd.f32 %v3725, %v3743
    %3745 = vmatmul.bf16.gmra.mxu0 %v3673
    %v3746 = vpop.f32.mrf.mxu0
    %v3747 = vadd.f32 %v3728, %v3746
    %v3748 = vpop.f32.mrf.mxu0
    %v3749 = vadd.f32 %v3730, %v3748
    %3750 = vdwg.mxu0
    %3751 = vmatpush.bf16.msra.mxu0 %v3376
    %3752 = vmatpush.bf16.msra.mxu0 %v3370
    %3753 = vmatpush.bf16.msra.mxu0 %v3364
    %3754 = vmatpush.bf16.msra.mxu0 %v3358
    %3755 = vmatpush.bf16.msra.mxu0 %v3352
    %3756 = vmatpush.bf16.msra.mxu0 %v3346
    %3757 = vmatpush.bf16.msra.mxu0 %v3340
    %3758 = vmatpush.bf16.msra.mxu0 %v3334
    %3759 = vmatmul.bf16.gmra.mxu0 %v2484
    %v3760 = vpop.f32.mrf.mxu0
    %v3761 = vadd.f32 0.0, %v3760
    %v3762 = vpop.f32.mrf.mxu0
    %v3763 = vadd.f32 0.0, %v3762
    %3764 = vmatmul.bf16.gmra.mxu0 %v2488
    %v3765 = vpop.f32.mrf.mxu0
    %v3766 = vadd.f32 0.0, %v3765
    %v3767 = vpop.f32.mrf.mxu0
    %v3768 = vadd.f32 0.0, %v3767
    %3769 = vdwg.mxu0
    %3770 = vmatpush.bf16.msra.mxu0 %v3424
    %3771 = vmatpush.bf16.msra.mxu0 %v3418
    %3772 = vmatpush.bf16.msra.mxu0 %v3412
    %3773 = vmatpush.bf16.msra.mxu0 %v3406
    %3774 = vmatpush.bf16.msra.mxu0 %v3400
    %3775 = vmatpush.bf16.msra.mxu0 %v3394
    %3776 = vmatpush.bf16.msra.mxu0 %v3388
    %3777 = vmatpush.bf16.msra.mxu0 %v3382
    %3778 = vmatmul.bf16.gmra.mxu0 %v2485
    %v3779 = vpop.f32.mrf.mxu0
    %v3780 = vadd.f32 %v3761, %v3779
    %v3781 = vpop.f32.mrf.mxu0
    %v3782 = vadd.f32 %v3763, %v3781
    %3783 = vmatmul.bf16.gmra.mxu0 %v2489
    %v3784 = vpop.f32.mrf.mxu0
    %v3785 = vadd.f32 %v3766, %v3784
    %v3786 = vpop.f32.mrf.mxu0
    %v3787 = vadd.f32 %v3768, %v3786
    %3788 = vdwg.mxu0
    %3789 = vmatpush.bf16.msra.mxu0 %v3472
    %3790 = vmatpush.bf16.msra.mxu0 %v3466
    %3791 = vmatpush.bf16.msra.mxu0 %v3460
    %3792 = vmatpush.bf16.msra.mxu0 %v3454
    %3793 = vmatpush.bf16.msra.mxu0 %v3448
    %3794 = vmatpush.bf16.msra.mxu0 %v3442
    %3795 = vmatpush.bf16.msra.mxu0 %v3436
    %3796 = vmatpush.bf16.msra.mxu0 %v3430
    %3797 = vmatmul.bf16.gmra.mxu0 %v2486
    %v3798 = vpop.f32.mrf.mxu0
    %v3799 = vadd.f32 %v3780, %v3798
    %v3800 = vpop.f32.mrf.mxu0
    %v3801 = vadd.f32 %v3782, %v3800
    %3802 = vmatmul.bf16.gmra.mxu0 %v2490
    %v3803 = vpop.f32.mrf.mxu0
    %v3804 = vadd.f32 %v3785, %v3803
    %v3805 = vpop.f32.mrf.mxu0
    %v3806 = vadd.f32 %v3787, %v3805
    %3807 = vdwg.mxu0
    %3808 = vmatpush.bf16.msra.mxu0 0
    %3809 = vmatpush.bf16.msra.mxu0 0
    %3810 = vmatpush.bf16.msra.mxu0 0
    %3811 = vmatpush.bf16.msra.mxu0 0
    %3812 = vmatpush.bf16.msra.mxu0 %v3496
    %3813 = vmatpush.bf16.msra.mxu0 %v3490
    %3814 = vmatpush.bf16.msra.mxu0 %v3484
    %3815 = vmatpush.bf16.msra.mxu0 %v3478
    %3816 = vmatmul.bf16.gmra.mxu0 %v3670
    %v3817 = vpop.f32.mrf.mxu0
    %v3818 = vadd.f32 %v3799, %v3817
    %v3819 = vpop.f32.mrf.mxu0
    %v3820 = vadd.f32 %v3801, %v3819
    %3821 = vmatmul.bf16.gmra.mxu0 %v3673
    %v3822 = vpop.f32.mrf.mxu0
    %v3823 = vadd.f32 %v3804, %v3822
    %v3824 = vpop.f32.mrf.mxu0
    %v3825 = vadd.f32 %v3806, %v3824
    %3826 = vdwg.mxu0
    %3827 = vmatpush.bf16.msra.mxu0 %v3377
    %3828 = vmatpush.bf16.msra.mxu0 %v3371
    %3829 = vmatpush.bf16.msra.mxu0 %v3365
    %3830 = vmatpush.bf16.msra.mxu0 %v3359
    %3831 = vmatpush.bf16.msra.mxu0 %v3353
    %3832 = vmatpush.bf16.msra.mxu0 %v3347
    %3833 = vmatpush.bf16.msra.mxu0 %v3341
    %3834 = vmatpush.bf16.msra.mxu0 %v3335
    %3835 = vmatmul.bf16.gmra.mxu0 %v2484
    %v3836 = vpop.f32.mrf.mxu0
    %v3837 = vadd.f32 0.0, %v3836
    %v3838 = vpop.f32.mrf.mxu0
    %v3839 = vadd.f32 0.0, %v3838
    %3840 = vmatmul.bf16.gmra.mxu0 %v2488
    %v3841 = vpop.f32.mrf.mxu0
    %v3842 = vadd.f32 0.0, %v3841
    %v3843 = vpop.f32.mrf.mxu0
    %v3844 = vadd.f32 0.0, %v3843
    %3845 = vdwg.mxu0
    %3846 = vmatpush.bf16.msra.mxu0 %v3425
    %3847 = vmatpush.bf16.msra.mxu0 %v3419
    %3848 = vmatpush.bf16.msra.mxu0 %v3413
    %3849 = vmatpush.bf16.msra.mxu0 %v3407
    %3850 = vmatpush.bf16.msra.mxu0 %v3401
    %3851 = vmatpush.bf16.msra.mxu0 %v3395
    %3852 = vmatpush.bf16.msra.mxu0 %v3389
    %3853 = vmatpush.bf16.msra.mxu0 %v3383
    %3854 = vmatmul.bf16.gmra.mxu0 %v2485
    %v3855 = vpop.f32.mrf.mxu0
    %v3856 = vadd.f32 %v3837, %v3855
    %v3857 = vpop.f32.mrf.mxu0
    %v3858 = vadd.f32 %v3839, %v3857
    %3859 = vmatmul.bf16.gmra.mxu0 %v2489
    %v3860 = vpop.f32.mrf.mxu0
    %v3861 = vadd.f32 %v3842, %v3860
    %v3862 = vpop.f32.mrf.mxu0
    %v3863 = vadd.f32 %v3844, %v3862
    %3864 = vdwg.mxu0
    %3865 = vmatpush.bf16.msra.mxu0 %v3473
    %3866 = vmatpush.bf16.msra.mxu0 %v3467
    %3867 = vmatpush.bf16.msra.mxu0 %v3461
    %3868 = vmatpush.bf16.msra.mxu0 %v3455
    %3869 = vmatpush.bf16.msra.mxu0 %v3449
    %3870 = vmatpush.bf16.msra.mxu0 %v3443
    %3871 = vmatpush.bf16.msra.mxu0 %v3437
    %3872 = vmatpush.bf16.msra.mxu0 %v3431
    %3873 = vmatmul.bf16.gmra.mxu0 %v2486
    %v3874 = vpop.f32.mrf.mxu0
    %v3875 = vadd.f32 %v3856, %v3874
    %v3876 = vpop.f32.mrf.mxu0
    %v3877 = vadd.f32 %v3858, %v3876
    %3878 = vmatmul.bf16.gmra.mxu0 %v2490
    %v3879 = vpop.f32.mrf.mxu0
    %v3880 = vadd.f32 %v3861, %v3879
    %v3881 = vpop.f32.mrf.mxu0
    %v3882 = vadd.f32 %v3863, %v3881
    %3883 = vdwg.mxu0
    %3884 = vmatpush.bf16.msra.mxu0 0
    %3885 = vmatpush.bf16.msra.mxu0 0
    %3886 = vmatpush.bf16.msra.mxu0 0
    %3887 = vmatpush.bf16.msra.mxu0 0
    %3888 = vmatpush.bf16.msra.mxu0 %v3497
    %3889 = vmatpush.bf16.msra.mxu0 %v3491
    %3890 = vmatpush.bf16.msra.mxu0 %v3485
    %3891 = vmatpush.bf16.msra.mxu0 %v3479
    %3892 = vmatmul.bf16.gmra.mxu0 %v3670
    %v3893 = vpop.f32.mrf.mxu0
    %v3894 = vadd.f32 %v3875, %v3893
    %v3895 = vpop.f32.mrf.mxu0
    %v3896 = vadd.f32 %v3877, %v3895
    %3897 = vmatmul.bf16.gmra.mxu0 %v3673
    %v3898 = vpop.f32.mrf.mxu0
    %v3899 = vadd.f32 %v3880, %v3898
    %v3900 = vpop.f32.mrf.mxu0
    %v3901 = vadd.f32 %v3882, %v3900
    %3902 = vdwg.mxu0
    %3903 = vmatpush.bf16.msra.mxu0 %v3378
    %3904 = vmatpush.bf16.msra.mxu0 %v3372
    %3905 = vmatpush.bf16.msra.mxu0 %v3366
    %3906 = vmatpush.bf16.msra.mxu0 %v3360
    %3907 = vmatpush.bf16.msra.mxu0 %v3354
    %3908 = vmatpush.bf16.msra.mxu0 %v3348
    %3909 = vmatpush.bf16.msra.mxu0 %v3342
    %3910 = vmatpush.bf16.msra.mxu0 %v3336
    %3911 = vmatmul.bf16.gmra.mxu0 %v2484
    %v3912 = vpop.f32.mrf.mxu0
    %v3913 = vadd.f32 0.0, %v3912
    %v3914 = vpop.f32.mrf.mxu0
    %v3915 = vadd.f32 0.0, %v3914
    %3916 = vmatmul.bf16.gmra.mxu0 %v2488
    %v3917 = vpop.f32.mrf.mxu0
    %v3918 = vadd.f32 0.0, %v3917
    %v3919 = vpop.f32.mrf.mxu0
    %v3920 = vadd.f32 0.0, %v3919
    %3921 = vdwg.mxu0
    %3922 = vmatpush.bf16.msra.mxu0 %v3426
    %3923 = vmatpush.bf16.msra.mxu0 %v3420
    %3924 = vmatpush.bf16.msra.mxu0 %v3414
    %3925 = vmatpush.bf16.msra.mxu0 %v3408
    %3926 = vmatpush.bf16.msra.mxu0 %v3402
    %3927 = vmatpush.bf16.msra.mxu0 %v3396
    %3928 = vmatpush.bf16.msra.mxu0 %v3390
    %3929 = vmatpush.bf16.msra.mxu0 %v3384
    %3930 = vmatmul.bf16.gmra.mxu0 %v2485
    %v3931 = vpop.f32.mrf.mxu0
    %v3932 = vadd.f32 %v3913, %v3931
    %v3933 = vpop.f32.mrf.mxu0
    %v3934 = vadd.f32 %v3915, %v3933
    %3935 = vmatmul.bf16.gmra.mxu0 %v2489
    %v3936 = vpop.f32.mrf.mxu0
    %v3937 = vadd.f32 %v3918, %v3936
    %v3938 = vpop.f32.mrf.mxu0
    %v3939 = vadd.f32 %v3920, %v3938
    %3940 = vdwg.mxu0
    %3941 = vmatpush.bf16.msra.mxu0 %v3474
    %3942 = vmatpush.bf16.msra.mxu0 %v3468
    %3943 = vmatpush.bf16.msra.mxu0 %v3462
    %3944 = vmatpush.bf16.msra.mxu0 %v3456
    %3945 = vmatpush.bf16.msra.mxu0 %v3450
    %3946 = vmatpush.bf16.msra.mxu0 %v3444
    %3947 = vmatpush.bf16.msra.mxu0 %v3438
    %3948 = vmatpush.bf16.msra.mxu0 %v3432
    %3949 = vmatmul.bf16.gmra.mxu0 %v2486
    %v3950 = vpop.f32.mrf.mxu0
    %v3951 = vadd.f32 %v3932, %v3950
    %v3952 = vpop.f32.mrf.mxu0
    %v3953 = vadd.f32 %v3934, %v3952
    %3954 = vmatmul.bf16.gmra.mxu0 %v2490
    %v3955 = vpop.f32.mrf.mxu0
    %v3956 = vadd.f32 %v3937, %v3955
    %v3957 = vpop.f32.mrf.mxu0
    %v3958 = vadd.f32 %v3939, %v3957
    %3959 = vdwg.mxu0
    %3960 = vmatpush.bf16.msra.mxu0 0
    %3961 = vmatpush.bf16.msra.mxu0 0
    %3962 = vmatpush.bf16.msra.mxu0 0
    %3963 = vmatpush.bf16.msra.mxu0 0
    %3964 = vmatpush.bf16.msra.mxu0 %v3498
    %3965 = vmatpush.bf16.msra.mxu0 %v3492
    %3966 = vmatpush.bf16.msra.mxu0 %v3486
    %3967 = vmatpush.bf16.msra.mxu0 %v3480
    %3968 = vmatmul.bf16.gmra.mxu0 %v3670
    %v3969 = vpop.f32.mrf.mxu0
    %v3970 = vadd.f32 %v3951, %v3969
    %v3971 = vpop.f32.mrf.mxu0
    %v3972 = vadd.f32 %v3953, %v3971
    %3973 = vmatmul.bf16.gmra.mxu0 %v3673
    %v3974 = vpop.f32.mrf.mxu0
    %v3975 = vadd.f32 %v3956, %v3974
    %v3976 = vpop.f32.mrf.mxu0
    %v3977 = vadd.f32 %v3958, %v3976
    %3978 = vdwg.mxu0
    %3979 = vmatpush.bf16.msra.mxu0 %v3379
    %3980 = vmatpush.bf16.msra.mxu0 %v3373
    %3981 = vmatpush.bf16.msra.mxu0 %v3367
    %3982 = vmatpush.bf16.msra.mxu0 %v3361
    %3983 = vmatpush.bf16.msra.mxu0 %v3355
    %3984 = vmatpush.bf16.msra.mxu0 %v3349
    %3985 = vmatpush.bf16.msra.mxu0 %v3343
    %3986 = vmatpush.bf16.msra.mxu0 %v3337
    %3987 = vmatmul.bf16.gmra.mxu0 %v2484
    %v3988 = vpop.f32.mrf.mxu0
    %v3989 = vadd.f32 0.0, %v3988
    %v3990 = vpop.f32.mrf.mxu0
    %v3991 = vadd.f32 0.0, %v3990
    %3992 = vmatmul.bf16.gmra.mxu0 %v2488
    %v3993 = vpop.f32.mrf.mxu0
    %v3994 = vadd.f32 0.0, %v3993
    %v3995 = vpop.f32.mrf.mxu0
    %v3996 = vadd.f32 0.0, %v3995
    %3997 = vdwg.mxu0
    %3998 = vmatpush.bf16.msra.mxu0 %v3427
    %3999 = vmatpush.bf16.msra.mxu0 %v3421
    %4000 = vmatpush.bf16.msra.mxu0 %v3415
    %4001 = vmatpush.bf16.msra.mxu0 %v3409
    %4002 = vmatpush.bf16.msra.mxu0 %v3403
    %4003 = vmatpush.bf16.msra.mxu0 %v3397
    %4004 = vmatpush.bf16.msra.mxu0 %v3391
    %4005 = vmatpush.bf16.msra.mxu0 %v3385
    %4006 = vmatmul.bf16.gmra.mxu0 %v2485
    %v4007 = vpop.f32.mrf.mxu0
    %v4008 = vadd.f32 %v3989, %v4007
    %v4009 = vpop.f32.mrf.mxu0
    %v4010 = vadd.f32 %v3991, %v4009
    %4011 = vmatmul.bf16.gmra.mxu0 %v2489
    %v4012 = vpop.f32.mrf.mxu0
    %v4013 = vadd.f32 %v3994, %v4012
    %v4014 = vpop.f32.mrf.mxu0
    %v4015 = vadd.f32 %v3996, %v4014
    %4016 = vdwg.mxu0
    %4017 = vmatpush.bf16.msra.mxu0 %v3475
    %4018 = vmatpush.bf16.msra.mxu0 %v3469
    %4019 = vmatpush.bf16.msra.mxu0 %v3463
    %4020 = vmatpush.bf16.msra.mxu0 %v3457
    %4021 = vmatpush.bf16.msra.mxu0 %v3451
    %4022 = vmatpush.bf16.msra.mxu0 %v3445
    %4023 = vmatpush.bf16.msra.mxu0 %v3439
    %4024 = vmatpush.bf16.msra.mxu0 %v3433
    %4025 = vmatmul.bf16.gmra.mxu0 %v2486
    %v4026 = vpop.f32.mrf.mxu0
    %v4027 = vadd.f32 %v4008, %v4026
    %v4028 = vpop.f32.mrf.mxu0
    %v4029 = vadd.f32 %v4010, %v4028
    %4030 = vmatmul.bf16.gmra.mxu0 %v2490
    %v4031 = vpop.f32.mrf.mxu0
    %v4032 = vadd.f32 %v4013, %v4031
    %v4033 = vpop.f32.mrf.mxu0
    %v4034 = vadd.f32 %v4015, %v4033
    %4035 = vdwg.mxu0
    %4036 = vmatpush.bf16.msra.mxu0 0
    %4037 = vmatpush.bf16.msra.mxu0 0
    %4038 = vmatpush.bf16.msra.mxu0 0
    %4039 = vmatpush.bf16.msra.mxu0 0
    %4040 = vmatpush.bf16.msra.mxu0 %v3499
    %4041 = vmatpush.bf16.msra.mxu0 %v3493
    %4042 = vmatpush.bf16.msra.mxu0 %v3487
    %4043 = vmatpush.bf16.msra.mxu0 %v3481
    %4044 = vmatmul.bf16.gmra.mxu0 %v3670
    %v4045 = vpop.f32.mrf.mxu0
    %v4046 = vadd.f32 %v4027, %v4045
    %v4047 = vpop.f32.mrf.mxu0
    %v4048 = vadd.f32 %v4029, %v4047
    %4049 = vmatmul.bf16.gmra.mxu0 %v3673
    %v4050 = vpop.f32.mrf.mxu0
    %v4051 = vadd.f32 %v4032, %v4050
    %v4052 = vpop.f32.mrf.mxu0
    %v4053 = vadd.f32 %v4034, %v4052
    %4054 = vdwg.mxu0
    %4055 = vmatpush.bf16.msra.mxu0 %v3380
    %4056 = vmatpush.bf16.msra.mxu0 %v3374
    %4057 = vmatpush.bf16.msra.mxu0 %v3368
    %4058 = vmatpush.bf16.msra.mxu0 %v3362
    %4059 = vmatpush.bf16.msra.mxu0 %v3356
    %4060 = vmatpush.bf16.msra.mxu0 %v3350
    %4061 = vmatpush.bf16.msra.mxu0 %v3344
    %4062 = vmatpush.bf16.msra.mxu0 %v3338
    %4063 = vmatmul.bf16.gmra.mxu0 %v2484
    %v4064 = vpop.f32.mrf.mxu0
    %v4065 = vadd.f32 0.0, %v4064
    %v4066 = vpop.f32.mrf.mxu0
    %v4067 = vadd.f32 0.0, %v4066
    %4068 = vmatmul.bf16.gmra.mxu0 %v2488
    %v4069 = vpop.f32.mrf.mxu0
    %v4070 = vadd.f32 0.0, %v4069
    %v4071 = vpop.f32.mrf.mxu0
    %v4072 = vadd.f32 0.0, %v4071
    %4073 = vdwg.mxu0
    %4074 = vmatpush.bf16.msra.mxu0 %v3428
    %4075 = vmatpush.bf16.msra.mxu0 %v3422
    %4076 = vmatpush.bf16.msra.mxu0 %v3416
    %4077 = vmatpush.bf16.msra.mxu0 %v3410
    %4078 = vmatpush.bf16.msra.mxu0 %v3404
    %4079 = vmatpush.bf16.msra.mxu0 %v3398
    %4080 = vmatpush.bf16.msra.mxu0 %v3392
    %4081 = vmatpush.bf16.msra.mxu0 %v3386
    %4082 = vmatmul.bf16.gmra.mxu0 %v2485
    %v4083 = vpop.f32.mrf.mxu0
    %v4084 = vadd.f32 %v4065, %v4083
    %v4085 = vpop.f32.mrf.mxu0
    %v4086 = vadd.f32 %v4067, %v4085
    %4087 = vmatmul.bf16.gmra.mxu0 %v2489
    %v4088 = vpop.f32.mrf.mxu0
    %v4089 = vadd.f32 %v4070, %v4088
    %v4090 = vpop.f32.mrf.mxu0
    %v4091 = vadd.f32 %v4072, %v4090
    %4092 = vdwg.mxu0
    %4093 = vmatpush.bf16.msra.mxu0 %v3476
    %4094 = vmatpush.bf16.msra.mxu0 %v3470
    %4095 = vmatpush.bf16.msra.mxu0 %v3464
    %4096 = vmatpush.bf16.msra.mxu0 %v3458
    %4097 = vmatpush.bf16.msra.mxu0 %v3452
    %4098 = vmatpush.bf16.msra.mxu0 %v3446
    %4099 = vmatpush.bf16.msra.mxu0 %v3440
    %4100 = vmatpush.bf16.msra.mxu0 %v3434
    %4101 = vmatmul.bf16.gmra.mxu0 %v2486
    %v4102 = vpop.f32.mrf.mxu0
    %v4103 = vadd.f32 %v4084, %v4102
    %v4104 = vpop.f32.mrf.mxu0
    %v4105 = vadd.f32 %v4086, %v4104
    %4106 = vmatmul.bf16.gmra.mxu0 %v2490
    %v4107 = vpop.f32.mrf.mxu0
    %v4108 = vadd.f32 %v4089, %v4107
    %v4109 = vpop.f32.mrf.mxu0
    %v4110 = vadd.f32 %v4091, %v4109
    %4111 = vdwg.mxu0
    %4112 = vmatpush.bf16.msra.mxu0 0
    %4113 = vmatpush.bf16.msra.mxu0 0
    %4114 = vmatpush.bf16.msra.mxu0 0
    %4115 = vmatpush.bf16.msra.mxu0 0
    %4116 = vmatpush.bf16.msra.mxu0 %v3500
    %4117 = vmatpush.bf16.msra.mxu0 %v3494
    %4118 = vmatpush.bf16.msra.mxu0 %v3488
    %4119 = vmatpush.bf16.msra.mxu0 %v3482
    %4120 = vmatmul.bf16.gmra.mxu0 %v3670
    %v4121 = vpop.f32.mrf.mxu0
    %v4122 = vadd.f32 %v4103, %v4121
    %v4123 = vpop.f32.mrf.mxu0
    %v4124 = vadd.f32 %v4105, %v4123
    %4125 = vmatmul.bf16.gmra.mxu0 %v3673
    %v4126 = vpop.f32.mrf.mxu0
    %v4127 = vadd.f32 %v4108, %v4126
    %v4128 = vpop.f32.mrf.mxu0
    %v4129 = vadd.f32 %v4110, %v4128
    %4130 = vdwg.mxu0
    %v4299 = vunpack.c.l.b16 %v2492
    %v4300 = vunpack.c.h.b16 %v2492
    %v4301 = vunpack.c.l.b16 %v2493
    %v4302 = vunpack.c.h.b16 %v2493
    %v4303 = vunpack.c.l.b16 %v2494
    %v4304 = vunpack.c.h.b16 %v2494
    %v4305 = vunpack.c.l.b16 %v2495
    %v4306 = vunpack.c.h.b16 %v2495
    %v4307 = vunpack.c.l.b16 %v2496
    %v4308 = vunpack.c.h.b16 %v2496
    %v4309 = vunpack.c.l.b16 %v2497
    %v4310 = vunpack.c.h.b16 %v2497
    %v4311 = vunpack.c.l.b16 %v2498
    %v4312 = vunpack.c.h.b16 %v2498
    %v4313 = vunpack.c.l.b16 %v2499
    %v4314 = vunpack.c.h.b16 %v2499
    %v4315 = vunpack.c.l.b16 %v2500
    %v4316 = vunpack.c.h.b16 %v2500
    %v4317 = vunpack.c.l.b16 %v2501
    %v4318 = vunpack.c.h.b16 %v2501
    %v4319 = vunpack.c.l.b16 %v2502
    %v4320 = vunpack.c.h.b16 %v2502
    %v4321 = vunpack.c.l.b16 %v2503
    %v4322 = vunpack.c.h.b16 %v2503
    %v4323 = vunpack.c.l.b16 %v2504
    %v4324 = vunpack.c.h.b16 %v2504
    %v4325 = vunpack.c.l.b16 %v2505
    %v4326 = vunpack.c.h.b16 %v2505
    %v4327 = vunpack.c.l.b16 %v2506
    %v4328 = vunpack.c.h.b16 %v2506
    %v4329 = vunpack.c.l.b16 %v2507
    %v4330 = vunpack.c.h.b16 %v2507
    %v4331 = vunpack.c.l.b16 %v2508
    %v4332 = vunpack.c.h.b16 %v2508
    %v4333 = vunpack.c.l.b16 %v2509
    %v4334 = vunpack.c.h.b16 %v2509
    %v4335 = vunpack.c.l.b16 %v2510
    %v4336 = vunpack.c.h.b16 %v2510
    %v4337 = vunpack.c.l.b16 %v2511
    %v4338 = vunpack.c.h.b16 %v2511
    %v4339 = vunpack.c.l.b16 %v2512
    %v4340 = vunpack.c.h.b16 %v2512
    %v4341 = vunpack.c.l.b16 %v2513
    %v4342 = vunpack.c.h.b16 %v2513
    %v4343 = vunpack.c.l.b16 %v2514
    %v4344 = vunpack.c.h.b16 %v2514
    %v4345 = vunpack.c.l.b16 %v2515
    %v4346 = vunpack.c.h.b16 %v2515
    %v4347 = vunpack.c.l.b16 %v2516
    %v4348 = vunpack.c.h.b16 %v2516
    %v4349 = vunpack.c.l.b16 %v2517
    %v4350 = vunpack.c.h.b16 %v2517
    %v4351 = vunpack.c.l.b16 %v2518
    %v4352 = vunpack.c.h.b16 %v2518
    %v4353 = vunpack.c.l.b16 %v2519
    %v4354 = vunpack.c.h.b16 %v2519
    %v4355 = vunpack.c.l.b16 %v2520
    %v4356 = vunpack.c.h.b16 %v2520
    %v4357 = vunpack.c.l.b16 %v2521
    %v4358 = vunpack.c.h.b16 %v2521
    %v4359 = vunpack.c.l.b16 %v2522
    %v4360 = vunpack.c.h.b16 %v2522
    %v4361 = vunpack.c.l.b16 %v2523
    %v4362 = vunpack.c.h.b16 %v2523
    %v4363 = vunpack.c.l.b16 %v2524
    %v4364 = vunpack.c.h.b16 %v2524
    %v4365 = vunpack.c.l.b16 %v2525
    %v4366 = vunpack.c.h.b16 %v2525
    %v4367 = vunpack.c.l.b16 %v2526
    %v4368 = vunpack.c.h.b16 %v2526
    %v4369 = vunpack.c.l.b16 %v2527
    %v4370 = vunpack.c.h.b16 %v2527
    %v4371 = vunpack.c.l.b16 %v2528
    %v4372 = vunpack.c.h.b16 %v2528
    %v4373 = vunpack.c.l.b16 %v2529
    %v4374 = vunpack.c.h.b16 %v2529
    %v4375 = vunpack.c.l.b16 %v2530
    %v4376 = vunpack.c.h.b16 %v2530
    %v4377 = vunpack.c.l.b16 %v2531
    %v4378 = vunpack.c.h.b16 %v2531
    %v4379 = vunpack.c.l.b16 %v2532
    %v4380 = vunpack.c.h.b16 %v2532
    %v4381 = vunpack.c.l.b16 %v2533
    %v4382 = vunpack.c.h.b16 %v2533
    %v4383 = vunpack.c.l.b16 %v2534
    %v4384 = vunpack.c.h.b16 %v2534
    %v4385 = vunpack.c.l.b16 %v2535
    %v4386 = vunpack.c.h.b16 %v2535
    %v4387 = vunpack.c.l.b16 %v2536
    %v4388 = vunpack.c.h.b16 %v2536
    %v4389 = vunpack.c.l.b16 %v2537
    %v4390 = vunpack.c.h.b16 %v2537
    %v4391 = vunpack.c.l.b16 %v2538
    %v4392 = vunpack.c.h.b16 %v2538
    %v4393 = vunpack.c.l.b16 %v2539
    %v4394 = vunpack.c.h.b16 %v2539
    %v4395 = vunpack.c.l.b16 %v2540
    %v4396 = vunpack.c.h.b16 %v2540
    %v4397 = vunpack.c.l.b16 %v2541
    %v4398 = vunpack.c.h.b16 %v2541
    %v4399 = vunpack.c.l.b16 %v2542
    %v4400 = vunpack.c.h.b16 %v2542
    %v4401 = vunpack.c.l.b16 %v2543
    %v4402 = vunpack.c.h.b16 %v2543
    %v4403 = vunpack.c.l.b16 %v2544
    %v4404 = vunpack.c.h.b16 %v2544
    %v4405 = vunpack.c.l.b16 %v2545
    %v4406 = vunpack.c.h.b16 %v2545
    %v4407 = vunpack.c.l.b16 %v2546
    %v4408 = vunpack.c.h.b16 %v2546
    %v4409 = vunpack.c.l.b16 %v2547
    %v4410 = vunpack.c.h.b16 %v2547
    %v4411 = vunpack.c.l.b16 %v2548
    %v4412 = vunpack.c.h.b16 %v2548
    %v4413 = vunpack.c.l.b16 %v2549
    %v4414 = vunpack.c.h.b16 %v2549
    %v4415 = vunpack.c.l.b16 %v2550
    %v4416 = vunpack.c.h.b16 %v2550
    %v4417 = vunpack.c.l.b16 %v2551
    %v4418 = vunpack.c.h.b16 %v2551
    %v4419 = vunpack.c.l.b16 %v2552
    %v4420 = vunpack.c.h.b16 %v2552
    %v4421 = vunpack.c.l.b16 %v2553
    %v4422 = vunpack.c.h.b16 %v2553
    %v4423 = vunpack.c.l.b16 %v2554
    %v4424 = vunpack.c.h.b16 %v2554
    %v4425 = vunpack.c.l.b16 %v2555
    %v4426 = vunpack.c.h.b16 %v2555
    %v4427 = vunpack.c.l.b16 %v2556
    %v4428 = vunpack.c.h.b16 %v2556
    %v4429 = vunpack.c.l.b16 %v2557
    %v4430 = vunpack.c.h.b16 %v2557
    %v4431 = vunpack.c.l.b16 %v2558
    %v4432 = vunpack.c.h.b16 %v2558
    %v4433 = vunpack.c.l.b16 %v2559
    %v4434 = vunpack.c.h.b16 %v2559
    %v4435 = vunpack.c.l.b16 %v2560
    %v4436 = vunpack.c.h.b16 %v2560
    %v4437 = vunpack.c.l.b16 %v2561
    %v4438 = vunpack.c.h.b16 %v2561
    %v4439 = vunpack.c.l.b16 %v2562
    %v4440 = vunpack.c.h.b16 %v2562
    %v4441 = vunpack.c.l.b16 %v2563
    %v4442 = vunpack.c.h.b16 %v2563
    %v4443 = vunpack.c.l.b16 %v2564
    %v4444 = vunpack.c.h.b16 %v2564
    %v4445 = vunpack.c.l.b16 %v2565
    %v4446 = vunpack.c.h.b16 %v2565
    %v4447 = vunpack.c.l.b16 %v2566
    %v4448 = vunpack.c.h.b16 %v2566
    %v4449 = vunpack.c.l.b16 %v2567
    %v4450 = vunpack.c.h.b16 %v2567
    %v4451 = vunpack.c.l.b16 %v2568
    %v4452 = vunpack.c.h.b16 %v2568
    %v4453 = vunpack.c.l.b16 %v2569
    %v4454 = vunpack.c.h.b16 %v2569
    %v4455 = vunpack.c.l.b16 %v2570
    %v4456 = vunpack.c.h.b16 %v2570
    %v4457 = vunpack.c.l.b16 %v2571
    %v4458 = vunpack.c.h.b16 %v2571
    %v4459 = vunpack.c.l.b16 %v2572
    %v4460 = vunpack.c.h.b16 %v2572
    %v4461 = vunpack.c.l.b16 %v2573
    %v4462 = vunpack.c.h.b16 %v2573
    %v4463 = vunpack.c.l.b16 %v2574
    %v4464 = vunpack.c.h.b16 %v2574
    %v4465 = vunpack.c.l.b16 %v2575
    %v4466 = vunpack.c.h.b16 %v2575
    %v4467 = vunpack.c.l.b16 %v2576
    %v4468 = vunpack.c.h.b16 %v2576
    %v4469 = vunpack.c.l.b16 %v2577
    %v4470 = vunpack.c.h.b16 %v2577
    %v4471 = vunpack.c.l.b16 %v2578
    %v4472 = vunpack.c.h.b16 %v2578
    %v4473 = vunpack.c.l.b16 %v2579
    %v4474 = vunpack.c.h.b16 %v2579
    %v4475 = vunpack.c.l.b16 %v2580
    %v4476 = vunpack.c.h.b16 %v2580
    %v4477 = vunpack.c.l.b16 %v2581
    %v4478 = vunpack.c.h.b16 %v2581
    %v4479 = vunpack.c.l.b16 %v2582
    %v4480 = vunpack.c.h.b16 %v2582
    %v4481 = vunpack.c.l.b16 %v2583
    %v4482 = vunpack.c.h.b16 %v2583
    %v4483 = vunpack.c.l.b16 %v2584
    %v4484 = vunpack.c.h.b16 %v2584
    %v4485 = vunpack.c.l.b16 %v2585
    %v4486 = vunpack.c.h.b16 %v2585
    %v4487 = vunpack.c.l.b16 %v2586
    %v4488 = vunpack.c.h.b16 %v2586
    %v4489 = vunpack.c.l.b16 %v2587
    %v4490 = vunpack.c.h.b16 %v2587
    %v4491 = vunpack.c.l.b16 %v2588
    %v4492 = vunpack.c.h.b16 %v2588
    %v4493 = vunpack.c.l.b16 %v2589
    %v4494 = vunpack.c.h.b16 %v2589
    %v4495 = vunpack.c.l.b16 %v2590
    %v4496 = vunpack.c.h.b16 %v2590
    %v4497 = vunpack.c.l.b16 %v2591
    %v4498 = vunpack.c.h.b16 %v2591
    %v4499 = vunpack.c.l.b16 %v2592
    %v4500 = vunpack.c.h.b16 %v2592
    %v4501 = vunpack.c.l.b16 %v2593
    %v4502 = vunpack.c.h.b16 %v2593
    %v4503 = vunpack.c.l.b16 %v2594
    %v4504 = vunpack.c.h.b16 %v2594
    %v4505 = vunpack.c.l.b16 %v2595
    %v4506 = vunpack.c.h.b16 %v2595
    %v4507 = vunpack.c.l.b16 %v2596
    %v4508 = vunpack.c.h.b16 %v2596
    %v4509 = vunpack.c.l.b16 %v2597
    %v4510 = vunpack.c.h.b16 %v2597
    %v4511 = vunpack.c.l.b16 %v2598
    %v4512 = vunpack.c.h.b16 %v2598
    %v4513 = vunpack.c.l.b16 %v2599
    %v4514 = vunpack.c.h.b16 %v2599
    %v4515 = vunpack.c.l.b16 %v2600
    %v4516 = vunpack.c.h.b16 %v2600
    %v4517 = vunpack.c.l.b16 %v2601
    %v4518 = vunpack.c.h.b16 %v2601
    %v4519 = vunpack.c.l.b16 %v2602
    %v4520 = vunpack.c.h.b16 %v2602
    %v4521 = vunpack.c.l.b16 %v2603
    %v4522 = vunpack.c.h.b16 %v2603
    %v4523 = vunpack.c.l.b16 %v2604
    %v4524 = vunpack.c.h.b16 %v2604
    %v4525 = vunpack.c.l.b16 %v2605
    %v4526 = vunpack.c.h.b16 %v2605
    %v4527 = vunpack.c.l.b16 %v2606
    %v4528 = vunpack.c.h.b16 %v2606
    %v4529 = vunpack.c.l.b16 %v2607
    %v4530 = vunpack.c.h.b16 %v2607
    %v4531 = vunpack.c.l.b16 %v2608
    %v4532 = vunpack.c.h.b16 %v2608
    %v4533 = vunpack.c.l.b16 %v2609
    %v4534 = vunpack.c.h.b16 %v2609
    %v4535 = vunpack.c.l.b16 %v2610
    %v4536 = vunpack.c.h.b16 %v2610
    %v4537 = vunpack.c.l.b16 %v2611
    %v4538 = vunpack.c.h.b16 %v2611
    %v4539 = vunpack.c.l.b16 %v2612
    %v4540 = vunpack.c.h.b16 %v2612
    %v4541 = vunpack.c.l.b16 %v2613
    %v4542 = vunpack.c.h.b16 %v2613
    %v4543 = vunpack.c.l.b16 %v2614
    %v4544 = vunpack.c.h.b16 %v2614
    %v4545 = vunpack.c.l.b16 %v2615
    %v4546 = vunpack.c.h.b16 %v2615
    %v4547 = vunpack.c.l.b16 %v2616
    %v4548 = vunpack.c.h.b16 %v2616
    %v4549 = vunpack.c.l.b16 %v2617
    %v4550 = vunpack.c.h.b16 %v2617
    %v4551 = vunpack.c.l.b16 %v2618
    %v4552 = vunpack.c.h.b16 %v2618
    %v4553 = vunpack.c.l.b16 %v2619
    %v4554 = vunpack.c.h.b16 %v2619
    %v4555 = vunpack.c.l.b16 %v2620
    %v4556 = vunpack.c.h.b16 %v2620
    %v4557 = vunpack.c.l.b16 %v2621
    %v4558 = vunpack.c.h.b16 %v2621
    %v4559 = vunpack.c.l.b16 %v2622
    %v4560 = vunpack.c.h.b16 %v2622
    %v4561 = vunpack.c.l.b16 %v2623
    %v4562 = vunpack.c.h.b16 %v2623
    %v4563 = vunpack.c.l.b16 %v2624
    %v4564 = vunpack.c.h.b16 %v2624
    %v4565 = vunpack.c.l.b16 %v2625
    %v4566 = vunpack.c.h.b16 %v2625
    %v4567 = vunpack.c.l.b16 %v2626
    %v4568 = vunpack.c.h.b16 %v2626
    %v4569 = vunpack.c.l.b16 %v2627
    %v4570 = vunpack.c.h.b16 %v2627
    %v4571 = vunpack.c.l.b16 %v2628
    %v4572 = vunpack.c.h.b16 %v2628
    %v4573 = vunpack.c.l.b16 %v2629
    %v4574 = vunpack.c.h.b16 %v2629
    %v4575 = vunpack.c.l.b16 %v2630
    %v4576 = vunpack.c.h.b16 %v2630
    %v4577 = vunpack.c.l.b16 %v2631
    %v4578 = vunpack.c.h.b16 %v2631
    %v4579 = vunpack.c.l.b16 %v2632
    %v4580 = vunpack.c.h.b16 %v2632
    %v4581 = vunpack.c.l.b16 %v2633
    %v4582 = vunpack.c.h.b16 %v2633
    %v4583 = vunpack.c.l.b16 %v2634
    %v4584 = vunpack.c.h.b16 %v2634
    %v4585 = vunpack.c.l.b16 %v2635
    %v4586 = vunpack.c.h.b16 %v2635
    %v4587 = vunpack.c.l.b16 %v2636
    %v4588 = vunpack.c.h.b16 %v2636
    %v4589 = vunpack.c.l.b16 %v2637
    %v4590 = vunpack.c.h.b16 %v2637
    %v4591 = vunpack.c.l.b16 %v2638
    %v4592 = vunpack.c.h.b16 %v2638
    %v4593 = vunpack.c.l.b16 %v2639
    %v4594 = vunpack.c.h.b16 %v2639
    %v4595 = vunpack.c.l.b16 %v2640
    %v4596 = vunpack.c.h.b16 %v2640
    %v4597 = vunpack.c.l.b16 %v2641
    %v4598 = vunpack.c.h.b16 %v2641
    %v4599 = vunpack.c.l.b16 %v2642
    %v4600 = vunpack.c.h.b16 %v2642
    %v4601 = vunpack.c.l.b16 %v2643
    %v4602 = vunpack.c.h.b16 %v2643
    %v4603 = vunpack.c.l.b16 %v2644
    %v4604 = vunpack.c.h.b16 %v2644
    %v4605 = vunpack.c.l.b16 %v2645
    %v4606 = vunpack.c.h.b16 %v2645
    %v4607 = vunpack.c.l.b16 %v2646
    %v4608 = vunpack.c.h.b16 %v2646
    %v4609 = vunpack.c.l.b16 %v2647
    %v4610 = vunpack.c.h.b16 %v2647
    %v4611 = vunpack.c.l.b16 %v2648
    %v4612 = vunpack.c.h.b16 %v2648
    %v4613 = vunpack.c.l.b16 %v2649
    %v4614 = vunpack.c.h.b16 %v2649
    %v4615 = vunpack.c.l.b16 %v2650
    %v4616 = vunpack.c.h.b16 %v2650
    %v4617 = vunpack.c.l.b16 %v2651
    %v4618 = vunpack.c.h.b16 %v2651
    %v4619 = vunpack.c.l.b16 %v2652
    %v4620 = vunpack.c.h.b16 %v2652
    %v4621 = vunpack.c.l.b16 %v2653
    %v4622 = vunpack.c.h.b16 %v2653
    %v4623 = vunpack.c.l.b16 %v2654
    %v4624 = vunpack.c.h.b16 %v2654
    %v4625 = vunpack.c.l.b16 %v2655
    %v4626 = vunpack.c.h.b16 %v2655
    %v4627 = vunpack.c.l.b16 %v2656
    %v4628 = vunpack.c.h.b16 %v2656
    %v4629 = vunpack.c.l.b16 %v2657
    %v4630 = vunpack.c.h.b16 %v2657
    %v4631 = vunpack.c.l.b16 %v2658
    %v4632 = vunpack.c.h.b16 %v2658
    %v4633 = vunpack.c.l.b16 %v2659
    %v4634 = vunpack.c.h.b16 %v2659
    %v4635 = vpack.c.b16 %v4305, %v4299
    %v4636 = vpack.c.b16 %v4306, %v4300
    %v4637 = vpack.c.b16 %v4307, %v4301
    %v4638 = vpack.c.b16 %v4308, %v4302
    %v4639 = vpack.c.b16 %v4309, %v4303
    %v4640 = vpack.c.b16 %v4310, %v4304
    %v4641 = vpack.c.b16 %v4317, %v4311
    %v4642 = vpack.c.b16 %v4318, %v4312
    %v4643 = vpack.c.b16 %v4319, %v4313
    %v4644 = vpack.c.b16 %v4320, %v4314
    %v4645 = vpack.c.b16 %v4321, %v4315
    %v4646 = vpack.c.b16 %v4322, %v4316
    %v4647 = vpack.c.b16 %v4329, %v4323
    %v4648 = vpack.c.b16 %v4330, %v4324
    %v4649 = vpack.c.b16 %v4331, %v4325
    %v4650 = vpack.c.b16 %v4332, %v4326
    %v4651 = vpack.c.b16 %v4333, %v4327
    %v4652 = vpack.c.b16 %v4334, %v4328
    %v4653 = vpack.c.b16 %v4341, %v4335
    %v4654 = vpack.c.b16 %v4342, %v4336
    %v4655 = vpack.c.b16 %v4343, %v4337
    %v4656 = vpack.c.b16 %v4344, %v4338
    %v4657 = vpack.c.b16 %v4345, %v4339
    %v4658 = vpack.c.b16 %v4346, %v4340
    %v4659 = vpack.c.b16 %v4353, %v4347
    %v4660 = vpack.c.b16 %v4354, %v4348
    %v4661 = vpack.c.b16 %v4355, %v4349
    %v4662 = vpack.c.b16 %v4356, %v4350
    %v4663 = vpack.c.b16 %v4357, %v4351
    %v4664 = vpack.c.b16 %v4358, %v4352
    %v4665 = vpack.c.b16 %v4365, %v4359
    %v4666 = vpack.c.b16 %v4366, %v4360
    %v4667 = vpack.c.b16 %v4367, %v4361
    %v4668 = vpack.c.b16 %v4368, %v4362
    %v4669 = vpack.c.b16 %v4369, %v4363
    %v4670 = vpack.c.b16 %v4370, %v4364
    %v4671 = vpack.c.b16 %v4377, %v4371
    %v4672 = vpack.c.b16 %v4378, %v4372
    %v4673 = vpack.c.b16 %v4379, %v4373
    %v4674 = vpack.c.b16 %v4380, %v4374
    %v4675 = vpack.c.b16 %v4381, %v4375
    %v4676 = vpack.c.b16 %v4382, %v4376
    %v4677 = vpack.c.b16 %v4389, %v4383
    %v4678 = vpack.c.b16 %v4390, %v4384
    %v4679 = vpack.c.b16 %v4391, %v4385
    %v4680 = vpack.c.b16 %v4392, %v4386
    %v4681 = vpack.c.b16 %v4393, %v4387
    %v4682 = vpack.c.b16 %v4394, %v4388
    %v4683 = vpack.c.b16 %v4401, %v4395
    %v4684 = vpack.c.b16 %v4402, %v4396
    %v4685 = vpack.c.b16 %v4403, %v4397
    %v4686 = vpack.c.b16 %v4404, %v4398
    %v4687 = vpack.c.b16 %v4405, %v4399
    %v4688 = vpack.c.b16 %v4406, %v4400
    %v4689 = vpack.c.b16 %v4413, %v4407
    %v4690 = vpack.c.b16 %v4414, %v4408
    %v4691 = vpack.c.b16 %v4415, %v4409
    %v4692 = vpack.c.b16 %v4416, %v4410
    %v4693 = vpack.c.b16 %v4417, %v4411
    %v4694 = vpack.c.b16 %v4418, %v4412
    %v4695 = vpack.c.b16 %v4425, %v4419
    %v4696 = vpack.c.b16 %v4426, %v4420
    %v4697 = vpack.c.b16 %v4427, %v4421
    %v4698 = vpack.c.b16 %v4428, %v4422
    %v4699 = vpack.c.b16 %v4429, %v4423
    %v4700 = vpack.c.b16 %v4430, %v4424
    %v4701 = vpack.c.b16 %v4437, %v4431
    %v4702 = vpack.c.b16 %v4438, %v4432
    %v4703 = vpack.c.b16 %v4439, %v4433
    %v4704 = vpack.c.b16 %v4440, %v4434
    %v4705 = vpack.c.b16 %v4441, %v4435
    %v4706 = vpack.c.b16 %v4442, %v4436
    %v4707 = vpack.c.b16 %v4449, %v4443
    %v4708 = vpack.c.b16 %v4450, %v4444
    %v4709 = vpack.c.b16 %v4451, %v4445
    %v4710 = vpack.c.b16 %v4452, %v4446
    %v4711 = vpack.c.b16 %v4453, %v4447
    %v4712 = vpack.c.b16 %v4454, %v4448
    %v4713 = vpack.c.b16 %v4461, %v4455
    %v4714 = vpack.c.b16 %v4462, %v4456
    %v4715 = vpack.c.b16 %v4463, %v4457
    %v4716 = vpack.c.b16 %v4464, %v4458
    %v4717 = vpack.c.b16 %v4465, %v4459
    %v4718 = vpack.c.b16 %v4466, %v4460
    %v4719 = vpack.c.b16 %v4473, %v4467
    %v4720 = vpack.c.b16 %v4474, %v4468
    %v4721 = vpack.c.b16 %v4475, %v4469
    %v4722 = vpack.c.b16 %v4476, %v4470
    %v4723 = vpack.c.b16 %v4477, %v4471
    %v4724 = vpack.c.b16 %v4478, %v4472
    %v4725 = vpack.c.b16 %v4485, %v4479
    %v4726 = vpack.c.b16 %v4486, %v4480
    %v4727 = vpack.c.b16 %v4487, %v4481
    %v4728 = vpack.c.b16 %v4488, %v4482
    %v4729 = vpack.c.b16 %v4489, %v4483
    %v4730 = vpack.c.b16 %v4490, %v4484
    %v4731 = vpack.c.b16 %v4497, %v4491
    %v4732 = vpack.c.b16 %v4498, %v4492
    %v4733 = vpack.c.b16 %v4499, %v4493
    %v4734 = vpack.c.b16 %v4500, %v4494
    %v4735 = vpack.c.b16 %v4501, %v4495
    %v4736 = vpack.c.b16 %v4502, %v4496
    %v4737 = vpack.c.b16 %v4509, %v4503
    %v4738 = vpack.c.b16 %v4510, %v4504
    %v4739 = vpack.c.b16 %v4511, %v4505
    %v4740 = vpack.c.b16 %v4512, %v4506
    %v4741 = vpack.c.b16 %v4513, %v4507
    %v4742 = vpack.c.b16 %v4514, %v4508
    %v4743 = vpack.c.b16 %v4521, %v4515
    %v4744 = vpack.c.b16 %v4522, %v4516
    %v4745 = vpack.c.b16 %v4523, %v4517
    %v4746 = vpack.c.b16 %v4524, %v4518
    %v4747 = vpack.c.b16 %v4525, %v4519
    %v4748 = vpack.c.b16 %v4526, %v4520
    %v4749 = vpack.c.b16 %v4533, %v4527
    %v4750 = vpack.c.b16 %v4534, %v4528
    %v4751 = vpack.c.b16 %v4535, %v4529
    %v4752 = vpack.c.b16 %v4536, %v4530
    %v4753 = vpack.c.b16 %v4537, %v4531
    %v4754 = vpack.c.b16 %v4538, %v4532
    %v4755 = vpack.c.b16 %v4545, %v4539
    %v4756 = vpack.c.b16 %v4546, %v4540
    %v4757 = vpack.c.b16 %v4547, %v4541
    %v4758 = vpack.c.b16 %v4548, %v4542
    %v4759 = vpack.c.b16 %v4549, %v4543
    %v4760 = vpack.c.b16 %v4550, %v4544
    %v4761 = vpack.c.b16 %v4557, %v4551
    %v4762 = vpack.c.b16 %v4558, %v4552
    %v4763 = vpack.c.b16 %v4559, %v4553
    %v4764 = vpack.c.b16 %v4560, %v4554
    %v4765 = vpack.c.b16 %v4561, %v4555
    %v4766 = vpack.c.b16 %v4562, %v4556
    %v4767 = vpack.c.b16 %v4569, %v4563
    %v4768 = vpack.c.b16 %v4570, %v4564
    %v4769 = vpack.c.b16 %v4571, %v4565
    %v4770 = vpack.c.b16 %v4572, %v4566
    %v4771 = vpack.c.b16 %v4573, %v4567
    %v4772 = vpack.c.b16 %v4574, %v4568
    %v4773 = vpack.c.b16 %v4581, %v4575
    %v4774 = vpack.c.b16 %v4582, %v4576
    %v4775 = vpack.c.b16 %v4583, %v4577
    %v4776 = vpack.c.b16 %v4584, %v4578
    %v4777 = vpack.c.b16 %v4585, %v4579
    %v4778 = vpack.c.b16 %v4586, %v4580
    %v4779 = vpack.c.b16 %v4593, %v4587
    %v4780 = vpack.c.b16 %v4594, %v4588
    %v4781 = vpack.c.b16 %v4595, %v4589
    %v4782 = vpack.c.b16 %v4596, %v4590
    %v4783 = vpack.c.b16 %v4597, %v4591
    %v4784 = vpack.c.b16 %v4598, %v4592
    %v4785 = vpack.c.b16 %v4605, %v4599
    %v4786 = vpack.c.b16 %v4606, %v4600
    %v4787 = vpack.c.b16 %v4607, %v4601
    %v4788 = vpack.c.b16 %v4608, %v4602
    %v4789 = vpack.c.b16 %v4609, %v4603
    %v4790 = vpack.c.b16 %v4610, %v4604
    %v4791 = vpack.c.b16 %v4617, %v4611
    %v4792 = vpack.c.b16 %v4618, %v4612
    %v4793 = vpack.c.b16 %v4619, %v4613
    %v4794 = vpack.c.b16 %v4620, %v4614
    %v4795 = vpack.c.b16 %v4621, %v4615
    %v4796 = vpack.c.b16 %v4622, %v4616
    %v4797 = vpack.c.b16 %v4629, %v4623
    %v4798 = vpack.c.b16 %v4630, %v4624
    %v4799 = vpack.c.b16 %v4631, %v4625
    %v4800 = vpack.c.b16 %v4632, %v4626
    %v4801 = vpack.c.b16 %v4633, %v4627
    %v4802 = vpack.c.b16 %v4634, %v4628
    %v4972 = vsel %vm1528, %v2479, 0
    %v4975 = vsel %vm1528, %v2483, 0
    %4977 = vmatpush.bf16.msra.mxu0 %v4677
    %4978 = vmatpush.bf16.msra.mxu0 %v4671
    %4979 = vmatpush.bf16.msra.mxu0 %v4665
    %4980 = vmatpush.bf16.msra.mxu0 %v4659
    %4981 = vmatpush.bf16.msra.mxu0 %v4653
    %4982 = vmatpush.bf16.msra.mxu0 %v4647
    %4983 = vmatpush.bf16.msra.mxu0 %v4641
    %4984 = vmatpush.bf16.msra.mxu0 %v4635
    %4985 = vmatmul.bf16.gmra.mxu0 %v2476
    %v4986 = vpop.f32.mrf.mxu0
    %v4987 = vadd.f32 %v3742, %v4986
    %v4988 = vpop.f32.mrf.mxu0
    %v4989 = vadd.f32 %v3744, %v4988
    %4990 = vmatmul.bf16.gmra.mxu0 %v2480
    %v4991 = vpop.f32.mrf.mxu0
    %v4992 = vadd.f32 %v3747, %v4991
    %v4993 = vpop.f32.mrf.mxu0
    %v4994 = vadd.f32 %v3749, %v4993
    %4995 = vdwg.mxu0
    %4996 = vmatpush.bf16.msra.mxu0 %v4725
    %4997 = vmatpush.bf16.msra.mxu0 %v4719
    %4998 = vmatpush.bf16.msra.mxu0 %v4713
    %4999 = vmatpush.bf16.msra.mxu0 %v4707
    %5000 = vmatpush.bf16.msra.mxu0 %v4701
    %5001 = vmatpush.bf16.msra.mxu0 %v4695
    %5002 = vmatpush.bf16.msra.mxu0 %v4689
    %5003 = vmatpush.bf16.msra.mxu0 %v4683
    %5004 = vmatmul.bf16.gmra.mxu0 %v2477
    %v5005 = vpop.f32.mrf.mxu0
    %v5006 = vadd.f32 %v4987, %v5005
    %v5007 = vpop.f32.mrf.mxu0
    %v5008 = vadd.f32 %v4989, %v5007
    %5009 = vmatmul.bf16.gmra.mxu0 %v2481
    %v5010 = vpop.f32.mrf.mxu0
    %v5011 = vadd.f32 %v4992, %v5010
    %v5012 = vpop.f32.mrf.mxu0
    %v5013 = vadd.f32 %v4994, %v5012
    %5014 = vdwg.mxu0
    %5015 = vmatpush.bf16.msra.mxu0 %v4773
    %5016 = vmatpush.bf16.msra.mxu0 %v4767
    %5017 = vmatpush.bf16.msra.mxu0 %v4761
    %5018 = vmatpush.bf16.msra.mxu0 %v4755
    %5019 = vmatpush.bf16.msra.mxu0 %v4749
    %5020 = vmatpush.bf16.msra.mxu0 %v4743
    %5021 = vmatpush.bf16.msra.mxu0 %v4737
    %5022 = vmatpush.bf16.msra.mxu0 %v4731
    %5023 = vmatmul.bf16.gmra.mxu0 %v2478
    %v5024 = vpop.f32.mrf.mxu0
    %v5025 = vadd.f32 %v5006, %v5024
    %v5026 = vpop.f32.mrf.mxu0
    %v5027 = vadd.f32 %v5008, %v5026
    %5028 = vmatmul.bf16.gmra.mxu0 %v2482
    %v5029 = vpop.f32.mrf.mxu0
    %v5030 = vadd.f32 %v5011, %v5029
    %v5031 = vpop.f32.mrf.mxu0
    %v5032 = vadd.f32 %v5013, %v5031
    %5033 = vdwg.mxu0
    %5034 = vmatpush.bf16.msra.mxu0 0
    %5035 = vmatpush.bf16.msra.mxu0 0
    %5036 = vmatpush.bf16.msra.mxu0 0
    %5037 = vmatpush.bf16.msra.mxu0 0
    %5038 = vmatpush.bf16.msra.mxu0 %v4797
    %5039 = vmatpush.bf16.msra.mxu0 %v4791
    %5040 = vmatpush.bf16.msra.mxu0 %v4785
    %5041 = vmatpush.bf16.msra.mxu0 %v4779
    %5042 = vmatmul.bf16.gmra.mxu0 %v4972
    %v5043 = vpop.f32.mrf.mxu0
    %v5044 = vadd.f32 %v5025, %v5043
    %v5045 = vpop.f32.mrf.mxu0
    %v5046 = vadd.f32 %v5027, %v5045
    %5047 = vmatmul.bf16.gmra.mxu0 %v4975
    %v5048 = vpop.f32.mrf.mxu0
    %v5049 = vadd.f32 %v5030, %v5048
    %v5050 = vpop.f32.mrf.mxu0
    %v5051 = vadd.f32 %v5032, %v5050
    %5052 = vdwg.mxu0
    %5053 = vmatpush.bf16.msra.mxu0 %v4678
    %5054 = vmatpush.bf16.msra.mxu0 %v4672
    %5055 = vmatpush.bf16.msra.mxu0 %v4666
    %5056 = vmatpush.bf16.msra.mxu0 %v4660
    %5057 = vmatpush.bf16.msra.mxu0 %v4654
    %5058 = vmatpush.bf16.msra.mxu0 %v4648
    %5059 = vmatpush.bf16.msra.mxu0 %v4642
    %5060 = vmatpush.bf16.msra.mxu0 %v4636
    %5061 = vmatmul.bf16.gmra.mxu0 %v2476
    %v5062 = vpop.f32.mrf.mxu0
    %v5063 = vadd.f32 %v3818, %v5062
    %v5064 = vpop.f32.mrf.mxu0
    %v5065 = vadd.f32 %v3820, %v5064
    %5066 = vmatmul.bf16.gmra.mxu0 %v2480
    %v5067 = vpop.f32.mrf.mxu0
    %v5068 = vadd.f32 %v3823, %v5067
    %v5069 = vpop.f32.mrf.mxu0
    %v5070 = vadd.f32 %v3825, %v5069
    %5071 = vdwg.mxu0
    %5072 = vmatpush.bf16.msra.mxu0 %v4726
    %5073 = vmatpush.bf16.msra.mxu0 %v4720
    %5074 = vmatpush.bf16.msra.mxu0 %v4714
    %5075 = vmatpush.bf16.msra.mxu0 %v4708
    %5076 = vmatpush.bf16.msra.mxu0 %v4702
    %5077 = vmatpush.bf16.msra.mxu0 %v4696
    %5078 = vmatpush.bf16.msra.mxu0 %v4690
    %5079 = vmatpush.bf16.msra.mxu0 %v4684
    %5080 = vmatmul.bf16.gmra.mxu0 %v2477
    %v5081 = vpop.f32.mrf.mxu0
    %v5082 = vadd.f32 %v5063, %v5081
    %v5083 = vpop.f32.mrf.mxu0
    %v5084 = vadd.f32 %v5065, %v5083
    %5085 = vmatmul.bf16.gmra.mxu0 %v2481
    %v5086 = vpop.f32.mrf.mxu0
    %v5087 = vadd.f32 %v5068, %v5086
    %v5088 = vpop.f32.mrf.mxu0
    %v5089 = vadd.f32 %v5070, %v5088
    %5090 = vdwg.mxu0
    %5091 = vmatpush.bf16.msra.mxu0 %v4774
    %5092 = vmatpush.bf16.msra.mxu0 %v4768
    %5093 = vmatpush.bf16.msra.mxu0 %v4762
    %5094 = vmatpush.bf16.msra.mxu0 %v4756
    %5095 = vmatpush.bf16.msra.mxu0 %v4750
    %5096 = vmatpush.bf16.msra.mxu0 %v4744
    %5097 = vmatpush.bf16.msra.mxu0 %v4738
    %5098 = vmatpush.bf16.msra.mxu0 %v4732
    %5099 = vmatmul.bf16.gmra.mxu0 %v2478
    %v5100 = vpop.f32.mrf.mxu0
    %v5101 = vadd.f32 %v5082, %v5100
    %v5102 = vpop.f32.mrf.mxu0
    %v5103 = vadd.f32 %v5084, %v5102
    %5104 = vmatmul.bf16.gmra.mxu0 %v2482
    %v5105 = vpop.f32.mrf.mxu0
    %v5106 = vadd.f32 %v5087, %v5105
    %v5107 = vpop.f32.mrf.mxu0
    %v5108 = vadd.f32 %v5089, %v5107
    %5109 = vdwg.mxu0
    %5110 = vmatpush.bf16.msra.mxu0 0
    %5111 = vmatpush.bf16.msra.mxu0 0
    %5112 = vmatpush.bf16.msra.mxu0 0
    %5113 = vmatpush.bf16.msra.mxu0 0
    %5114 = vmatpush.bf16.msra.mxu0 %v4798
    %5115 = vmatpush.bf16.msra.mxu0 %v4792
    %5116 = vmatpush.bf16.msra.mxu0 %v4786
    %5117 = vmatpush.bf16.msra.mxu0 %v4780
    %5118 = vmatmul.bf16.gmra.mxu0 %v4972
    %v5119 = vpop.f32.mrf.mxu0
    %v5120 = vadd.f32 %v5101, %v5119
    %v5121 = vpop.f32.mrf.mxu0
    %v5122 = vadd.f32 %v5103, %v5121
    %5123 = vmatmul.bf16.gmra.mxu0 %v4975
    %v5124 = vpop.f32.mrf.mxu0
    %v5125 = vadd.f32 %v5106, %v5124
    %v5126 = vpop.f32.mrf.mxu0
    %v5127 = vadd.f32 %v5108, %v5126
    %5128 = vdwg.mxu0
    %5129 = vmatpush.bf16.msra.mxu0 %v4679
    %5130 = vmatpush.bf16.msra.mxu0 %v4673
    %5131 = vmatpush.bf16.msra.mxu0 %v4667
    %5132 = vmatpush.bf16.msra.mxu0 %v4661
    %5133 = vmatpush.bf16.msra.mxu0 %v4655
    %5134 = vmatpush.bf16.msra.mxu0 %v4649
    %5135 = vmatpush.bf16.msra.mxu0 %v4643
    %5136 = vmatpush.bf16.msra.mxu0 %v4637
    %5137 = vmatmul.bf16.gmra.mxu0 %v2476
    %v5138 = vpop.f32.mrf.mxu0
    %v5139 = vadd.f32 %v3894, %v5138
    %v5140 = vpop.f32.mrf.mxu0
    %v5141 = vadd.f32 %v3896, %v5140
    %5142 = vmatmul.bf16.gmra.mxu0 %v2480
    %v5143 = vpop.f32.mrf.mxu0
    %v5144 = vadd.f32 %v3899, %v5143
    %v5145 = vpop.f32.mrf.mxu0
    %v5146 = vadd.f32 %v3901, %v5145
    %5147 = vdwg.mxu0
    %5148 = vmatpush.bf16.msra.mxu0 %v4727
    %5149 = vmatpush.bf16.msra.mxu0 %v4721
    %5150 = vmatpush.bf16.msra.mxu0 %v4715
    %5151 = vmatpush.bf16.msra.mxu0 %v4709
    %5152 = vmatpush.bf16.msra.mxu0 %v4703
    %5153 = vmatpush.bf16.msra.mxu0 %v4697
    %5154 = vmatpush.bf16.msra.mxu0 %v4691
    %5155 = vmatpush.bf16.msra.mxu0 %v4685
    %5156 = vmatmul.bf16.gmra.mxu0 %v2477
    %v5157 = vpop.f32.mrf.mxu0
    %v5158 = vadd.f32 %v5139, %v5157
    %v5159 = vpop.f32.mrf.mxu0
    %v5160 = vadd.f32 %v5141, %v5159
    %5161 = vmatmul.bf16.gmra.mxu0 %v2481
    %v5162 = vpop.f32.mrf.mxu0
    %v5163 = vadd.f32 %v5144, %v5162
    %v5164 = vpop.f32.mrf.mxu0
    %v5165 = vadd.f32 %v5146, %v5164
    %5166 = vdwg.mxu0
    %5167 = vmatpush.bf16.msra.mxu0 %v4775
    %5168 = vmatpush.bf16.msra.mxu0 %v4769
    %5169 = vmatpush.bf16.msra.mxu0 %v4763
    %5170 = vmatpush.bf16.msra.mxu0 %v4757
    %5171 = vmatpush.bf16.msra.mxu0 %v4751
    %5172 = vmatpush.bf16.msra.mxu0 %v4745
    %5173 = vmatpush.bf16.msra.mxu0 %v4739
    %5174 = vmatpush.bf16.msra.mxu0 %v4733
    %5175 = vmatmul.bf16.gmra.mxu0 %v2478
    %v5176 = vpop.f32.mrf.mxu0
    %v5177 = vadd.f32 %v5158, %v5176
    %v5178 = vpop.f32.mrf.mxu0
    %v5179 = vadd.f32 %v5160, %v5178
    %5180 = vmatmul.bf16.gmra.mxu0 %v2482
    %v5181 = vpop.f32.mrf.mxu0
    %v5182 = vadd.f32 %v5163, %v5181
    %v5183 = vpop.f32.mrf.mxu0
    %v5184 = vadd.f32 %v5165, %v5183
    %5185 = vdwg.mxu0
    %5186 = vmatpush.bf16.msra.mxu0 0
    %5187 = vmatpush.bf16.msra.mxu0 0
    %5188 = vmatpush.bf16.msra.mxu0 0
    %5189 = vmatpush.bf16.msra.mxu0 0
    %5190 = vmatpush.bf16.msra.mxu0 %v4799
    %5191 = vmatpush.bf16.msra.mxu0 %v4793
    %5192 = vmatpush.bf16.msra.mxu0 %v4787
    %5193 = vmatpush.bf16.msra.mxu0 %v4781
    %5194 = vmatmul.bf16.gmra.mxu0 %v4972
    %v5195 = vpop.f32.mrf.mxu0
    %v5196 = vadd.f32 %v5177, %v5195
    %v5197 = vpop.f32.mrf.mxu0
    %v5198 = vadd.f32 %v5179, %v5197
    %5199 = vmatmul.bf16.gmra.mxu0 %v4975
    %v5200 = vpop.f32.mrf.mxu0
    %v5201 = vadd.f32 %v5182, %v5200
    %v5202 = vpop.f32.mrf.mxu0
    %v5203 = vadd.f32 %v5184, %v5202
    %5204 = vdwg.mxu0
    %5205 = vmatpush.bf16.msra.mxu0 %v4680
    %5206 = vmatpush.bf16.msra.mxu0 %v4674
    %5207 = vmatpush.bf16.msra.mxu0 %v4668
    %5208 = vmatpush.bf16.msra.mxu0 %v4662
    %5209 = vmatpush.bf16.msra.mxu0 %v4656
    %5210 = vmatpush.bf16.msra.mxu0 %v4650
    %5211 = vmatpush.bf16.msra.mxu0 %v4644
    %5212 = vmatpush.bf16.msra.mxu0 %v4638
    %5213 = vmatmul.bf16.gmra.mxu0 %v2476
    %v5214 = vpop.f32.mrf.mxu0
    %v5215 = vadd.f32 %v3970, %v5214
    %v5216 = vpop.f32.mrf.mxu0
    %v5217 = vadd.f32 %v3972, %v5216
    %5218 = vmatmul.bf16.gmra.mxu0 %v2480
    %v5219 = vpop.f32.mrf.mxu0
    %v5220 = vadd.f32 %v3975, %v5219
    %v5221 = vpop.f32.mrf.mxu0
    %v5222 = vadd.f32 %v3977, %v5221
    %5223 = vdwg.mxu0
    %5224 = vmatpush.bf16.msra.mxu0 %v4728
    %5225 = vmatpush.bf16.msra.mxu0 %v4722
    %5226 = vmatpush.bf16.msra.mxu0 %v4716
    %5227 = vmatpush.bf16.msra.mxu0 %v4710
    %5228 = vmatpush.bf16.msra.mxu0 %v4704
    %5229 = vmatpush.bf16.msra.mxu0 %v4698
    %5230 = vmatpush.bf16.msra.mxu0 %v4692
    %5231 = vmatpush.bf16.msra.mxu0 %v4686
    %5232 = vmatmul.bf16.gmra.mxu0 %v2477
    %v5233 = vpop.f32.mrf.mxu0
    %v5234 = vadd.f32 %v5215, %v5233
    %v5235 = vpop.f32.mrf.mxu0
    %v5236 = vadd.f32 %v5217, %v5235
    %5237 = vmatmul.bf16.gmra.mxu0 %v2481
    %v5238 = vpop.f32.mrf.mxu0
    %v5239 = vadd.f32 %v5220, %v5238
    %v5240 = vpop.f32.mrf.mxu0
    %v5241 = vadd.f32 %v5222, %v5240
    %5242 = vdwg.mxu0
    %5243 = vmatpush.bf16.msra.mxu0 %v4776
    %5244 = vmatpush.bf16.msra.mxu0 %v4770
    %5245 = vmatpush.bf16.msra.mxu0 %v4764
    %5246 = vmatpush.bf16.msra.mxu0 %v4758
    %5247 = vmatpush.bf16.msra.mxu0 %v4752
    %5248 = vmatpush.bf16.msra.mxu0 %v4746
    %5249 = vmatpush.bf16.msra.mxu0 %v4740
    %5250 = vmatpush.bf16.msra.mxu0 %v4734
    %5251 = vmatmul.bf16.gmra.mxu0 %v2478
    %v5252 = vpop.f32.mrf.mxu0
    %v5253 = vadd.f32 %v5234, %v5252
    %v5254 = vpop.f32.mrf.mxu0
    %v5255 = vadd.f32 %v5236, %v5254
    %5256 = vmatmul.bf16.gmra.mxu0 %v2482
    %v5257 = vpop.f32.mrf.mxu0
    %v5258 = vadd.f32 %v5239, %v5257
    %v5259 = vpop.f32.mrf.mxu0
    %v5260 = vadd.f32 %v5241, %v5259
    %5261 = vdwg.mxu0
    %5262 = vmatpush.bf16.msra.mxu0 0
    %5263 = vmatpush.bf16.msra.mxu0 0
    %5264 = vmatpush.bf16.msra.mxu0 0
    %5265 = vmatpush.bf16.msra.mxu0 0
    %5266 = vmatpush.bf16.msra.mxu0 %v4800
    %5267 = vmatpush.bf16.msra.mxu0 %v4794
    %5268 = vmatpush.bf16.msra.mxu0 %v4788
    %5269 = vmatpush.bf16.msra.mxu0 %v4782
    %5270 = vmatmul.bf16.gmra.mxu0 %v4972
    %v5271 = vpop.f32.mrf.mxu0
    %v5272 = vadd.f32 %v5253, %v5271
    %v5273 = vpop.f32.mrf.mxu0
    %v5274 = vadd.f32 %v5255, %v5273
    %5275 = vmatmul.bf16.gmra.mxu0 %v4975
    %v5276 = vpop.f32.mrf.mxu0
    %v5277 = vadd.f32 %v5258, %v5276
    %v5278 = vpop.f32.mrf.mxu0
    %v5279 = vadd.f32 %v5260, %v5278
    %5280 = vdwg.mxu0
    %5281 = vmatpush.bf16.msra.mxu0 %v4681
    %5282 = vmatpush.bf16.msra.mxu0 %v4675
    %5283 = vmatpush.bf16.msra.mxu0 %v4669
    %5284 = vmatpush.bf16.msra.mxu0 %v4663
    %5285 = vmatpush.bf16.msra.mxu0 %v4657
    %5286 = vmatpush.bf16.msra.mxu0 %v4651
    %5287 = vmatpush.bf16.msra.mxu0 %v4645
    %5288 = vmatpush.bf16.msra.mxu0 %v4639
    %5289 = vmatmul.bf16.gmra.mxu0 %v2476
    %v5290 = vpop.f32.mrf.mxu0
    %v5291 = vadd.f32 %v4046, %v5290
    %v5292 = vpop.f32.mrf.mxu0
    %v5293 = vadd.f32 %v4048, %v5292
    %5294 = vmatmul.bf16.gmra.mxu0 %v2480
    %v5295 = vpop.f32.mrf.mxu0
    %v5296 = vadd.f32 %v4051, %v5295
    %v5297 = vpop.f32.mrf.mxu0
    %v5298 = vadd.f32 %v4053, %v5297
    %5299 = vdwg.mxu0
    %5300 = vmatpush.bf16.msra.mxu0 %v4729
    %5301 = vmatpush.bf16.msra.mxu0 %v4723
    %5302 = vmatpush.bf16.msra.mxu0 %v4717
    %5303 = vmatpush.bf16.msra.mxu0 %v4711
    %5304 = vmatpush.bf16.msra.mxu0 %v4705
    %5305 = vmatpush.bf16.msra.mxu0 %v4699
    %5306 = vmatpush.bf16.msra.mxu0 %v4693
    %5307 = vmatpush.bf16.msra.mxu0 %v4687
    %5308 = vmatmul.bf16.gmra.mxu0 %v2477
    %v5309 = vpop.f32.mrf.mxu0
    %v5310 = vadd.f32 %v5291, %v5309
    %v5311 = vpop.f32.mrf.mxu0
    %v5312 = vadd.f32 %v5293, %v5311
    %5313 = vmatmul.bf16.gmra.mxu0 %v2481
    %v5314 = vpop.f32.mrf.mxu0
    %v5315 = vadd.f32 %v5296, %v5314
    %v5316 = vpop.f32.mrf.mxu0
    %v5317 = vadd.f32 %v5298, %v5316
    %5318 = vdwg.mxu0
    %5319 = vmatpush.bf16.msra.mxu0 %v4777
    %5320 = vmatpush.bf16.msra.mxu0 %v4771
    %5321 = vmatpush.bf16.msra.mxu0 %v4765
    %5322 = vmatpush.bf16.msra.mxu0 %v4759
    %5323 = vmatpush.bf16.msra.mxu0 %v4753
    %5324 = vmatpush.bf16.msra.mxu0 %v4747
    %5325 = vmatpush.bf16.msra.mxu0 %v4741
    %5326 = vmatpush.bf16.msra.mxu0 %v4735
    %5327 = vmatmul.bf16.gmra.mxu0 %v2478
    %v5328 = vpop.f32.mrf.mxu0
    %v5329 = vadd.f32 %v5310, %v5328
    %v5330 = vpop.f32.mrf.mxu0
    %v5331 = vadd.f32 %v5312, %v5330
    %5332 = vmatmul.bf16.gmra.mxu0 %v2482
    %v5333 = vpop.f32.mrf.mxu0
    %v5334 = vadd.f32 %v5315, %v5333
    %v5335 = vpop.f32.mrf.mxu0
    %v5336 = vadd.f32 %v5317, %v5335
    %5337 = vdwg.mxu0
    %5338 = vmatpush.bf16.msra.mxu0 0
    %5339 = vmatpush.bf16.msra.mxu0 0
    %5340 = vmatpush.bf16.msra.mxu0 0
    %5341 = vmatpush.bf16.msra.mxu0 0
    %5342 = vmatpush.bf16.msra.mxu0 %v4801
    %5343 = vmatpush.bf16.msra.mxu0 %v4795
    %5344 = vmatpush.bf16.msra.mxu0 %v4789
    %5345 = vmatpush.bf16.msra.mxu0 %v4783
    %5346 = vmatmul.bf16.gmra.mxu0 %v4972
    %v5347 = vpop.f32.mrf.mxu0
    %v5348 = vadd.f32 %v5329, %v5347
    %v5349 = vpop.f32.mrf.mxu0
    %v5350 = vadd.f32 %v5331, %v5349
    %5351 = vmatmul.bf16.gmra.mxu0 %v4975
    %v5352 = vpop.f32.mrf.mxu0
    %v5353 = vadd.f32 %v5334, %v5352
    %v5354 = vpop.f32.mrf.mxu0
    %v5355 = vadd.f32 %v5336, %v5354
    %5356 = vdwg.mxu0
    %5357 = vmatpush.bf16.msra.mxu0 %v4682
    %5358 = vmatpush.bf16.msra.mxu0 %v4676
    %5359 = vmatpush.bf16.msra.mxu0 %v4670
    %5360 = vmatpush.bf16.msra.mxu0 %v4664
    %5361 = vmatpush.bf16.msra.mxu0 %v4658
    %5362 = vmatpush.bf16.msra.mxu0 %v4652
    %5363 = vmatpush.bf16.msra.mxu0 %v4646
    %5364 = vmatpush.bf16.msra.mxu0 %v4640
    %5365 = vmatmul.bf16.gmra.mxu0 %v2476
    %v5366 = vpop.f32.mrf.mxu0
    %v5367 = vadd.f32 %v4122, %v5366
    %v5368 = vpop.f32.mrf.mxu0
    %v5369 = vadd.f32 %v4124, %v5368
    %5370 = vmatmul.bf16.gmra.mxu0 %v2480
    %v5371 = vpop.f32.mrf.mxu0
    %v5372 = vadd.f32 %v4127, %v5371
    %v5373 = vpop.f32.mrf.mxu0
    %v5374 = vadd.f32 %v4129, %v5373
    %5375 = vdwg.mxu0
    %5376 = vmatpush.bf16.msra.mxu0 %v4730
    %5377 = vmatpush.bf16.msra.mxu0 %v4724
    %5378 = vmatpush.bf16.msra.mxu0 %v4718
    %5379 = vmatpush.bf16.msra.mxu0 %v4712
    %5380 = vmatpush.bf16.msra.mxu0 %v4706
    %5381 = vmatpush.bf16.msra.mxu0 %v4700
    %5382 = vmatpush.bf16.msra.mxu0 %v4694
    %5383 = vmatpush.bf16.msra.mxu0 %v4688
    %5384 = vmatmul.bf16.gmra.mxu0 %v2477
    %v5385 = vpop.f32.mrf.mxu0
    %v5386 = vadd.f32 %v5367, %v5385
    %v5387 = vpop.f32.mrf.mxu0
    %v5388 = vadd.f32 %v5369, %v5387
    %5389 = vmatmul.bf16.gmra.mxu0 %v2481
    %v5390 = vpop.f32.mrf.mxu0
    %v5391 = vadd.f32 %v5372, %v5390
    %v5392 = vpop.f32.mrf.mxu0
    %v5393 = vadd.f32 %v5374, %v5392
    %5394 = vdwg.mxu0
    %5395 = vmatpush.bf16.msra.mxu0 %v4778
    %5396 = vmatpush.bf16.msra.mxu0 %v4772
    %5397 = vmatpush.bf16.msra.mxu0 %v4766
    %5398 = vmatpush.bf16.msra.mxu0 %v4760
    %5399 = vmatpush.bf16.msra.mxu0 %v4754
    %5400 = vmatpush.bf16.msra.mxu0 %v4748
    %5401 = vmatpush.bf16.msra.mxu0 %v4742
    %5402 = vmatpush.bf16.msra.mxu0 %v4736
    %5403 = vmatmul.bf16.gmra.mxu0 %v2478
    %v5404 = vpop.f32.mrf.mxu0
    %v5405 = vadd.f32 %v5386, %v5404
    %v5406 = vpop.f32.mrf.mxu0
    %v5407 = vadd.f32 %v5388, %v5406
    %5408 = vmatmul.bf16.gmra.mxu0 %v2482
    %v5409 = vpop.f32.mrf.mxu0
    %v5410 = vadd.f32 %v5391, %v5409
    %v5411 = vpop.f32.mrf.mxu0
    %v5412 = vadd.f32 %v5393, %v5411
    %5413 = vdwg.mxu0
    %5414 = vmatpush.bf16.msra.mxu0 0
    %5415 = vmatpush.bf16.msra.mxu0 0
    %5416 = vmatpush.bf16.msra.mxu0 0
    %5417 = vmatpush.bf16.msra.mxu0 0
    %5418 = vmatpush.bf16.msra.mxu0 %v4802
    %5419 = vmatpush.bf16.msra.mxu0 %v4796
    %5420 = vmatpush.bf16.msra.mxu0 %v4790
    %5421 = vmatpush.bf16.msra.mxu0 %v4784
    %5422 = vmatmul.bf16.gmra.mxu0 %v4972
    %v5423 = vpop.f32.mrf.mxu0
    %v5424 = vadd.f32 %v5405, %v5423
    %v5425 = vpop.f32.mrf.mxu0
    %v5426 = vadd.f32 %v5407, %v5425
    %5427 = vmatmul.bf16.gmra.mxu0 %v4975
    %v5428 = vpop.f32.mrf.mxu0
    %v5429 = vadd.f32 %v5410, %v5428
    %v5430 = vpop.f32.mrf.mxu0
    %v5431 = vadd.f32 %v5412, %v5430
    %5432 = vdwg.mxu0
    %v5433 = vpack.c.bf16 %v5046, %v5044
    %v5434 = vpack.c.bf16 %v5122, %v5120
    %v5435 = vpack.c.bf16 %v5198, %v5196
    %v5436 = vpack.c.bf16 %v5051, %v5049
    %v5437 = vpack.c.bf16 %v5127, %v5125
    %v5438 = vpack.c.bf16 %v5203, %v5201
    %v5439 = vld [vmem:[#allocation18] sm:$0x7]
    %v5441 = vperm.slane %v5439, 0
    %v5442 = vperm.slane %v5439, 1
    %v5443 = vperm.slane %v5439, 2
    %v5447 = vmul.f32 %v5044, %v5441
    %v5448 = vmul.f32 %v5120, %v5442
    %v5449 = vmul.f32 %v5196, %v5443
    %v5450 = vmul.f32 %v5046, %v5441
    %v5451 = vmul.f32 %v5122, %v5442
    %v5452 = vmul.f32 %v5198, %v5443
    %v5453 = vmul.f32 %v5049, %v5441
    %v5454 = vmul.f32 %v5125, %v5442
    %v5455 = vmul.f32 %v5201, %v5443
    %v5456 = vmul.f32 %v5051, %v5441
    %v5457 = vmul.f32 %v5127, %v5442
    %v5458 = vmul.f32 %v5203, %v5443
    %v5459 = vadd.f32 %v5447, %v5448
    %v5460 = vadd.f32 %v5459, %v5449
    %5461 = vadd.xlane.f32.xlu0 %v5460
    %v5462 = vpop.xlane.xlu0 %5461
    %v5463 = vadd.f32 %v5450, %v5451
    %v5464 = vadd.f32 %v5463, %v5452
    %5465 = vadd.xlane.f32.xlu0 %v5464
    %v5466 = vpop.xlane.xlu0 %5465
    %v5467 = vadd.f32 %v5453, %v5454
    %v5468 = vadd.f32 %v5467, %v5455
    %5469 = vadd.xlane.f32.xlu0 %v5468
    %v5470 = vpop.xlane.xlu0 %5469
    %v5471 = vadd.f32 %v5456, %v5457
    %v5472 = vadd.f32 %v5471, %v5458
    %5473 = vadd.xlane.f32.xlu0 %v5472
    %v5474 = vpop.xlane.xlu0 %5473
    %v5475 = vld [vmem:[#allocation17] sm:$0x7]
    %v5477 = vperm.slane %v5475, 0
    %v5478 = vperm.slane %v5475, 1
    %v5479 = vperm.slane %v5475, 2
    %v5483 = vpack.c.bf16 %v5477, %v5477
    %v5484 = vpack.c.bf16 %v5478, %v5478
    %v5485 = vpack.c.bf16 %v5479, %v5479
    %5486 = vmatpush.bf16.xpose.msra.mxu0 0
    %5487 = vmatpush.bf16.xpose.msra.mxu0 0
    %5488 = vmatpush.bf16.xpose.msra.mxu0 0
    %5489 = vmatpush.bf16.xpose.msra.mxu0 0
    %5490 = vmatpush.bf16.xpose.msra.mxu0 0
    %5491 = vmatpush.bf16.xpose.msra.mxu0 0
    %5492 = vmatpush.bf16.xpose.msra.mxu0 %v5436
    %5493 = vmatpush.bf16.xpose.msra.mxu0 %v5433
    %5494 = vmatmul.bf16.gmra.mxu0 %v5483
    %v5495 = vpop.f32.mrf.mxu0
    %v5496 = vadd.f32 0.0, %v5495
    %v5497 = vpop.f32.mrf.mxu0
    %5498 = vdwg.mxu0
    %5499 = vmatpush.bf16.xpose.msra.mxu0 0
    %5500 = vmatpush.bf16.xpose.msra.mxu0 0
    %5501 = vmatpush.bf16.xpose.msra.mxu0 0
    %5502 = vmatpush.bf16.xpose.msra.mxu0 0
    %5503 = vmatpush.bf16.xpose.msra.mxu0 0
    %5504 = vmatpush.bf16.xpose.msra.mxu0 0
    %5505 = vmatpush.bf16.xpose.msra.mxu0 %v5437
    %5506 = vmatpush.bf16.xpose.msra.mxu0 %v5434
    %5507 = vmatmul.bf16.gmra.mxu0 %v5484
    %v5508 = vpop.f32.mrf.mxu0
    %v5509 = vadd.f32 %v5496, %v5508
    %v5510 = vpop.f32.mrf.mxu0
    %5511 = vdwg.mxu0
    %5512 = vmatpush.bf16.xpose.msra.mxu0 0
    %5513 = vmatpush.bf16.xpose.msra.mxu0 0
    %5514 = vmatpush.bf16.xpose.msra.mxu0 0
    %5515 = vmatpush.bf16.xpose.msra.mxu0 0
    %5516 = vmatpush.bf16.xpose.msra.mxu0 0
    %5517 = vmatpush.bf16.xpose.msra.mxu0 0
    %5518 = vmatpush.bf16.xpose.msra.mxu0 %v5438
    %5519 = vmatpush.bf16.xpose.msra.mxu0 %v5435
    %5520 = vmatmul.bf16.gmra.mxu0 %v5485
    %v5521 = vpop.f32.mrf.mxu0
    %v5522 = vadd.f32 %v5509, %v5521
    %v5523 = vpop.f32.mrf.mxu0
    %5524 = vdwg.mxu0
    %v5525 = vperm.slane %v5522, 0
    %v5526 = vadd.f32 %v5462, %v5525
    %v5527 = vadd.f32 %v5466, %v5525
    %v5528 = vadd.f32 %v5470, %v5525
    %v5529 = vadd.f32 %v5474, %v5525
    %vm5530 = vcmp.gt.f32.partialorder %v5526, 0.0
    %vm5531 = vcmp.gt.f32.partialorder %v5527, 0.0
    %vm5532 = vcmp.gt.f32.partialorder %v5528, 0.0
    %vm5533 = vcmp.gt.f32.partialorder %v5529, 0.0
    %v5534 = vmul.f32 %v5526, 0.2
    %v5535 = vmul.f32 %v5527, 0.2
    %v5536 = vmul.f32 %v5528, 0.2
    %v5537 = vmul.f32 %v5529, 0.2
    %v5538 = vsel %vm5530, %v5526, %v5534
    %v5539 = vsel %vm5531, %v5527, %v5535
    %v5540 = vsel %vm5532, %v5528, %v5536
    %v5541 = vsel %vm5533, %v5529, %v5537
    %v5542 = vadd.f32 %v5538, %v403
    %v5543 = vadd.f32 %v5539, %v404
    %v5544 = vadd.f32 %v5540, %v405
    %v5545 = vadd.f32 %v5541, %v406
    %v5546 = vsel %vm1647, %v5542, -inf
    %5547 = vmax.xlane.f32.xlu0 %v5546
    %v5548 = vpop.xlane.xlu0 %5547
    %v5549 = vsel %vm1647, %v5543, -inf
    %5550 = vmax.xlane.f32.xlu0 %v5549
    %v5551 = vpop.xlane.xlu0 %5550
    %v5552 = vsel %vm1647, %v5544, -inf
    %5553 = vmax.xlane.f32.xlu0 %v5552
    %v5554 = vpop.xlane.xlu0 %5553
    %v5555 = vsel %vm1647, %v5545, -inf
    %5556 = vmax.xlane.f32.xlu0 %v5555
    %v5557 = vpop.xlane.xlu0 %5556
    %v5558 = vsub.f32 %v5542, %v5548
    %v5559 = vsub.f32 %v5543, %v5551
    %v5560 = vsub.f32 %v5544, %v5554
    %v5561 = vsub.f32 %v5545, %v5557
    %v5562 = vmul.f32 %v5558, 1.442695
    %v5563 = vpow.pop %v5562
    %v5564 = vmul.f32 %v5559, 1.442695
    %v5565 = vpow.pop %v5564
    %v5566 = vmul.f32 %v5560, 1.442695
    %v5567 = vpow.pop %v5566
    %v5568 = vmul.f32 %v5561, 1.442695
    %v5569 = vpow.pop %v5568
    %v5570 = vsel %vm1647, %v5563, 0.0
    %5571 = vadd.xlane.f32.xlu0 %v5570
    %v5572 = vpop.xlane.xlu0 %5571
    %v5573 = vsel %vm1647, %v5565, 0.0
    %5574 = vadd.xlane.f32.xlu0 %v5573
    %v5575 = vpop.xlane.xlu0 %5574
    %v5576 = vsel %vm1647, %v5567, 0.0
    %5577 = vadd.xlane.f32.xlu0 %v5576
    %v5578 = vpop.xlane.xlu0 %5577
    %v5579 = vsel %vm1647, %v5569, 0.0
    %5580 = vadd.xlane.f32.xlu0 %v5579
    %v5581 = vpop.xlane.xlu0 %5580
    %v5582 = vrcp.pop %v5572
    %v5583 = vrcp.pop %v5575
    %v5584 = vrcp.pop %v5578
    %v5585 = vrcp.pop %v5581
    %v5586 = vmul.f32 %v5563, %v5582
    %v5587 = vmul.f32 %v5565, %v5583
    %v5588 = vmul.f32 %v5567, %v5584
    %v5589 = vmul.f32 %v5569, %v5585
    %v5590 = vpack.c.bf16 %v5587, %v5586
    %v5591 = vpack.c.bf16 %v5589, %v5588
    %v5592 = vld [vmem:[#allocation20] sm:$0x7]
    %v5594 = vperm.slane %v5592, 0
    %v5595 = vperm.slane %v5592, 1
    %v5596 = vperm.slane %v5592, 2
    %v5601 = vsel %vm1647, %v5590, 0
    %v5604 = vsel %vm1647, %v5591, 0
    %5606 = vmatpush.bf16.msra.mxu0 0
    %5607 = vmatpush.bf16.msra.mxu0 0
    %5608 = vmatpush.bf16.msra.mxu0 0
    %5609 = vmatpush.bf16.msra.mxu0 0
    %5610 = vmatpush.bf16.msra.mxu0 0
    %5611 = vmatpush.bf16.msra.mxu0 0
    %5612 = vmatpush.bf16.msra.mxu0 %v5436
    %5613 = vmatpush.bf16.msra.mxu0 %v5433
    %5614 = vmatmul.bf16.gmra.mxu0 %v5601
    %v5615 = vpop.f32.mrf.mxu0
    %v5616 = vadd.f32 %v5594, %v5615
    %v5617 = vpop.f32.mrf.mxu0
    %v5618 = vadd.f32 %v5594, %v5617
    %5619 = vmatmul.bf16.gmra.mxu0 %v5604
    %v5620 = vpop.f32.mrf.mxu0
    %v5621 = vadd.f32 %v5594, %v5620
    %v5622 = vpop.f32.mrf.mxu0
    %v5623 = vadd.f32 %v5594, %v5622
    %5624 = vdwg.mxu0
    %5625 = vmatpush.bf16.msra.mxu0 0
    %5626 = vmatpush.bf16.msra.mxu0 0
    %5627 = vmatpush.bf16.msra.mxu0 0
    %5628 = vmatpush.bf16.msra.mxu0 0
    %5629 = vmatpush.bf16.msra.mxu0 0
    %5630 = vmatpush.bf16.msra.mxu0 0
    %5631 = vmatpush.bf16.msra.mxu0 %v5437
    %5632 = vmatpush.bf16.msra.mxu0 %v5434
    %5633 = vmatmul.bf16.gmra.mxu0 %v5601
    %v5634 = vpop.f32.mrf.mxu0
    %v5635 = vadd.f32 %v5595, %v5634
    %v5636 = vpop.f32.mrf.mxu0
    %v5637 = vadd.f32 %v5595, %v5636
    %5638 = vmatmul.bf16.gmra.mxu0 %v5604
    %v5639 = vpop.f32.mrf.mxu0
    %v5640 = vadd.f32 %v5595, %v5639
    %v5641 = vpop.f32.mrf.mxu0
    %v5642 = vadd.f32 %v5595, %v5641
    %5643 = vdwg.mxu0
    %5644 = vmatpush.bf16.msra.mxu0 0
    %5645 = vmatpush.bf16.msra.mxu0 0
    %5646 = vmatpush.bf16.msra.mxu0 0
    %5647 = vmatpush.bf16.msra.mxu0 0
    %5648 = vmatpush.bf16.msra.mxu0 0
    %5649 = vmatpush.bf16.msra.mxu0 0
    %5650 = vmatpush.bf16.msra.mxu0 %v5438
    %5651 = vmatpush.bf16.msra.mxu0 %v5435
    %5652 = vmatmul.bf16.gmra.mxu0 %v5601
    %v5653 = vpop.f32.mrf.mxu0
    %v5654 = vadd.f32 %v5596, %v5653
    %v5655 = vpop.f32.mrf.mxu0
    %v5656 = vadd.f32 %v5596, %v5655
    %5657 = vmatmul.bf16.gmra.mxu0 %v5604
    %v5658 = vpop.f32.mrf.mxu0
    %v5659 = vadd.f32 %v5596, %v5658
    %v5660 = vpop.f32.mrf.mxu0
    %v5661 = vadd.f32 %v5596, %v5660
    %5662 = vdwg.mxu0
    %v5663 = vpack.c.bf16 %v5274, %v5272
    %v5664 = vpack.c.bf16 %v5350, %v5348
    %v5665 = vpack.c.bf16 %v5426, %v5424
    %v5666 = vpack.c.bf16 %v5279, %v5277
    %v5667 = vpack.c.bf16 %v5355, %v5353
    %v5668 = vpack.c.bf16 %v5431, %v5429
    %s5669 = scalar_lea.vmem [#allocation18], 3
    %v5670 = vld [vmem:[%s5669] sm:$0x7]
    %v5672 = vperm.slane %v5670, 0
    %v5673 = vperm.slane %v5670, 1
    %v5674 = vperm.slane %v5670, 2
    %v5678 = vmul.f32 %v5272, %v5672
    %v5679 = vmul.f32 %v5348, %v5673
    %v5680 = vmul.f32 %v5424, %v5674
    %v5681 = vmul.f32 %v5274, %v5672
    %v5682 = vmul.f32 %v5350, %v5673
    %v5683 = vmul.f32 %v5426, %v5674
    %v5684 = vmul.f32 %v5277, %v5672
    %v5685 = vmul.f32 %v5353, %v5673
    %v5686 = vmul.f32 %v5429, %v5674
    %v5687 = vmul.f32 %v5279, %v5672
    %v5688 = vmul.f32 %v5355, %v5673
    %v5689 = vmul.f32 %v5431, %v5674
    %v5690 = vadd.f32 %v5678, %v5679
    %v5691 = vadd.f32 %v5690, %v5680
    %5692 = vadd.xlane.f32.xlu0 %v5691
    %v5693 = vpop.xlane.xlu0 %5692
    %v5694 = vadd.f32 %v5681, %v5682
    %v5695 = vadd.f32 %v5694, %v5683
    %5696 = vadd.xlane.f32.xlu0 %v5695
    %v5697 = vpop.xlane.xlu0 %5696
    %v5698 = vadd.f32 %v5684, %v5685
    %v5699 = vadd.f32 %v5698, %v5686
    %5700 = vadd.xlane.f32.xlu0 %v5699
    %v5701 = vpop.xlane.xlu0 %5700
    %v5702 = vadd.f32 %v5687, %v5688
    %v5703 = vadd.f32 %v5702, %v5689
    %5704 = vadd.xlane.f32.xlu0 %v5703
    %v5705 = vpop.xlane.xlu0 %5704
    %s5706 = scalar_lea.vmem [#allocation17], 3
    %v5707 = vld [vmem:[%s5706] sm:$0x7]
    %v5709 = vperm.slane %v5707, 0
    %v5710 = vperm.slane %v5707, 1
    %v5711 = vperm.slane %v5707, 2
    %v5715 = vpack.c.bf16 %v5709, %v5709
    %v5716 = vpack.c.bf16 %v5710, %v5710
    %v5717 = vpack.c.bf16 %v5711, %v5711
    %5718 = vmatpush.bf16.xpose.msra.mxu0 0
    %5719 = vmatpush.bf16.xpose.msra.mxu0 0
    %5720 = vmatpush.bf16.xpose.msra.mxu0 0
    %5721 = vmatpush.bf16.xpose.msra.mxu0 0
    %5722 = vmatpush.bf16.xpose.msra.mxu0 0
    %5723 = vmatpush.bf16.xpose.msra.mxu0 0
    %5724 = vmatpush.bf16.xpose.msra.mxu0 %v5666
    %5725 = vmatpush.bf16.xpose.msra.mxu0 %v5663
    %5726 = vmatmul.bf16.gmra.mxu0 %v5715
    %v5727 = vpop.f32.mrf.mxu0
    %v5728 = vadd.f32 0.0, %v5727
    %v5729 = vpop.f32.mrf.mxu0
    %5730 = vdwg.mxu0
    %5731 = vmatpush.bf16.xpose.msra.mxu0 0
    %5732 = vmatpush.bf16.xpose.msra.mxu0 0
    %5733 = vmatpush.bf16.xpose.msra.mxu0 0
    %5734 = vmatpush.bf16.xpose.msra.mxu0 0
    %5735 = vmatpush.bf16.xpose.msra.mxu0 0
    %5736 = vmatpush.bf16.xpose.msra.mxu0 0
    %5737 = vmatpush.bf16.xpose.msra.mxu0 %v5667
    %5738 = vmatpush.bf16.xpose.msra.mxu0 %v5664
    %5739 = vmatmul.bf16.gmra.mxu0 %v5716
    %v5740 = vpop.f32.mrf.mxu0
    %v5741 = vadd.f32 %v5728, %v5740
    %v5742 = vpop.f32.mrf.mxu0
    %5743 = vdwg.mxu0
    %5744 = vmatpush.bf16.xpose.msra.mxu0 0
    %5745 = vmatpush.bf16.xpose.msra.mxu0 0
    %5746 = vmatpush.bf16.xpose.msra.mxu0 0
    %5747 = vmatpush.bf16.xpose.msra.mxu0 0
    %5748 = vmatpush.bf16.xpose.msra.mxu0 0
    %5749 = vmatpush.bf16.xpose.msra.mxu0 0
    %5750 = vmatpush.bf16.xpose.msra.mxu0 %v5668
    %5751 = vmatpush.bf16.xpose.msra.mxu0 %v5665
    %5752 = vmatmul.bf16.gmra.mxu0 %v5717
    %v5753 = vpop.f32.mrf.mxu0
    %v5754 = vadd.f32 %v5741, %v5753
    %v5755 = vpop.f32.mrf.mxu0
    %5756 = vdwg.mxu0
    %v5757 = vperm.slane %v5754, 0
    %v5758 = vadd.f32 %v5693, %v5757
    %v5759 = vadd.f32 %v5697, %v5757
    %v5760 = vadd.f32 %v5701, %v5757
    %v5761 = vadd.f32 %v5705, %v5757
    %vm5762 = vcmp.gt.f32.partialorder %v5758, 0.0
    %vm5763 = vcmp.gt.f32.partialorder %v5759, 0.0
    %vm5764 = vcmp.gt.f32.partialorder %v5760, 0.0
    %vm5765 = vcmp.gt.f32.partialorder %v5761, 0.0
    %v5766 = vmul.f32 %v5758, 0.2
    %v5767 = vmul.f32 %v5759, 0.2
    %v5768 = vmul.f32 %v5760, 0.2
    %v5769 = vmul.f32 %v5761, 0.2
    %v5770 = vsel %vm5762, %v5758, %v5766
    %v5771 = vsel %vm5763, %v5759, %v5767
    %v5772 = vsel %vm5764, %v5760, %v5768
    %v5773 = vsel %vm5765, %v5761, %v5769
    %v5774 = vadd.f32 %v5770, %v403
    %v5775 = vadd.f32 %v5771, %v404
    %v5776 = vadd.f32 %v5772, %v405
    %v5777 = vadd.f32 %v5773, %v406
    %v5778 = vsel %vm1647, %v5774, -inf
    %5779 = vmax.xlane.f32.xlu0 %v5778
    %v5780 = vpop.xlane.xlu0 %5779
    %v5781 = vsel %vm1647, %v5775, -inf
    %5782 = vmax.xlane.f32.xlu0 %v5781
    %v5783 = vpop.xlane.xlu0 %5782
    %v5784 = vsel %vm1647, %v5776, -inf
    %5785 = vmax.xlane.f32.xlu0 %v5784
    %v5786 = vpop.xlane.xlu0 %5785
    %v5787 = vsel %vm1647, %v5777, -inf
    %5788 = vmax.xlane.f32.xlu0 %v5787
    %v5789 = vpop.xlane.xlu0 %5788
    %v5790 = vsub.f32 %v5774, %v5780
    %v5791 = vsub.f32 %v5775, %v5783
    %v5792 = vsub.f32 %v5776, %v5786
    %v5793 = vsub.f32 %v5777, %v5789
    %v5794 = vmul.f32 %v5790, 1.442695
    %v5795 = vpow.pop %v5794
    %v5796 = vmul.f32 %v5791, 1.442695
    %v5797 = vpow.pop %v5796
    %v5798 = vmul.f32 %v5792, 1.442695
    %v5799 = vpow.pop %v5798
    %v5800 = vmul.f32 %v5793, 1.442695
    %v5801 = vpow.pop %v5800
    %v5802 = vsel %vm1647, %v5795, 0.0
    %5803 = vadd.xlane.f32.xlu0 %v5802
    %v5804 = vpop.xlane.xlu0 %5803
    %v5805 = vsel %vm1647, %v5797, 0.0
    %5806 = vadd.xlane.f32.xlu0 %v5805
    %v5807 = vpop.xlane.xlu0 %5806
    %v5808 = vsel %vm1647, %v5799, 0.0
    %5809 = vadd.xlane.f32.xlu0 %v5808
    %v5810 = vpop.xlane.xlu0 %5809
    %v5811 = vsel %vm1647, %v5801, 0.0
    %5812 = vadd.xlane.f32.xlu0 %v5811
    %v5813 = vpop.xlane.xlu0 %5812
    %v5814 = vrcp.pop %v5804
    %v5815 = vrcp.pop %v5807
    %v5816 = vrcp.pop %v5810
    %v5817 = vrcp.pop %v5813
    %v5818 = vmul.f32 %v5795, %v5814
    %v5819 = vmul.f32 %v5797, %v5815
    %v5820 = vmul.f32 %v5799, %v5816
    %v5821 = vmul.f32 %v5801, %v5817
    %v5822 = vpack.c.bf16 %v5819, %v5818
    %v5823 = vpack.c.bf16 %v5821, %v5820
    %s5824 = scalar_lea.vmem [#allocation20], 3
    %v5825 = vld [vmem:[%s5824] sm:$0x7]
    %v5827 = vperm.slane %v5825, 0
    %v5828 = vperm.slane %v5825, 1
    %v5829 = vperm.slane %v5825, 2
    %v5834 = vsel %vm1647, %v5822, 0
    %v5837 = vsel %vm1647, %v5823, 0
    %5839 = vmatpush.bf16.msra.mxu0 0
    %5840 = vmatpush.bf16.msra.mxu0 0
    %5841 = vmatpush.bf16.msra.mxu0 0
    %5842 = vmatpush.bf16.msra.mxu0 0
    %5843 = vmatpush.bf16.msra.mxu0 0
    %5844 = vmatpush.bf16.msra.mxu0 0
    %5845 = vmatpush.bf16.msra.mxu0 %v5666
    %5846 = vmatpush.bf16.msra.mxu0 %v5663
    %5847 = vmatmul.bf16.gmra.mxu0 %v5834
    %v5848 = vpop.f32.mrf.mxu0
    %v5849 = vadd.f32 %v5827, %v5848
    %v5850 = vpop.f32.mrf.mxu0
    %v5851 = vadd.f32 %v5827, %v5850
    %5852 = vmatmul.bf16.gmra.mxu0 %v5837
    %v5853 = vpop.f32.mrf.mxu0
    %v5854 = vadd.f32 %v5827, %v5853
    %v5855 = vpop.f32.mrf.mxu0
    %v5856 = vadd.f32 %v5827, %v5855
    %5857 = vdwg.mxu0
    %5858 = vmatpush.bf16.msra.mxu0 0
    %5859 = vmatpush.bf16.msra.mxu0 0
    %5860 = vmatpush.bf16.msra.mxu0 0
    %5861 = vmatpush.bf16.msra.mxu0 0
    %5862 = vmatpush.bf16.msra.mxu0 0
    %5863 = vmatpush.bf16.msra.mxu0 0
    %5864 = vmatpush.bf16.msra.mxu0 %v5667
    %5865 = vmatpush.bf16.msra.mxu0 %v5664
    %5866 = vmatmul.bf16.gmra.mxu0 %v5834
    %v5867 = vpop.f32.mrf.mxu0
    %v5868 = vadd.f32 %v5828, %v5867
    %v5869 = vpop.f32.mrf.mxu0
    %v5870 = vadd.f32 %v5828, %v5869
    %5871 = vmatmul.bf16.gmra.mxu0 %v5837
    %v5872 = vpop.f32.mrf.mxu0
    %v5873 = vadd.f32 %v5828, %v5872
    %v5874 = vpop.f32.mrf.mxu0
    %v5875 = vadd.f32 %v5828, %v5874
    %5876 = vdwg.mxu0
    %5877 = vmatpush.bf16.msra.mxu0 0
    %5878 = vmatpush.bf16.msra.mxu0 0
    %5879 = vmatpush.bf16.msra.mxu0 0
    %5880 = vmatpush.bf16.msra.mxu0 0
    %5881 = vmatpush.bf16.msra.mxu0 0
    %5882 = vmatpush.bf16.msra.mxu0 0
    %5883 = vmatpush.bf16.msra.mxu0 %v5668
    %5884 = vmatpush.bf16.msra.mxu0 %v5665
    %5885 = vmatmul.bf16.gmra.mxu0 %v5834
    %v5886 = vpop.f32.mrf.mxu0
    %v5887 = vadd.f32 %v5829, %v5886
    %v5888 = vpop.f32.mrf.mxu0
    %v5889 = vadd.f32 %v5829, %v5888
    %5890 = vmatmul.bf16.gmra.mxu0 %v5837
    %v5891 = vpop.f32.mrf.mxu0
    %v5892 = vadd.f32 %v5829, %v5891
    %v5893 = vpop.f32.mrf.mxu0
    %v5894 = vadd.f32 %v5829, %v5893
    %5895 = vdwg.mxu0
    %v5896 = vmax.f32 %v5616, 0.0
    %v5897 = vmax.f32 %v5635, 0.0
    %v5898 = vmax.f32 %v5654, 0.0
    %v5899 = vmax.f32 %v5618, 0.0
    %v5900 = vmax.f32 %v5637, 0.0
    %v5901 = vmax.f32 %v5656, 0.0
    %v5902 = vmax.f32 %v5621, 0.0
    %v5903 = vmax.f32 %v5640, 0.0
    %v5904 = vmax.f32 %v5659, 0.0
    %v5905 = vmax.f32 %v5623, 0.0
    %v5906 = vmax.f32 %v5642, 0.0
    %v5907 = vmax.f32 %v5661, 0.0
    %v5908 = vmax.f32 %v5849, 0.0
    %v5909 = vmax.f32 %v5868, 0.0
    %v5910 = vmax.f32 %v5887, 0.0
    %v5911 = vmax.f32 %v5851, 0.0
    %v5912 = vmax.f32 %v5870, 0.0
    %v5913 = vmax.f32 %v5889, 0.0
    %v5914 = vmax.f32 %v5854, 0.0
    %v5915 = vmax.f32 %v5873, 0.0
    %v5916 = vmax.f32 %v5892, 0.0
    %v5917 = vmax.f32 %v5856, 0.0
    %v5918 = vmax.f32 %v5875, 0.0
    %v5919 = vmax.f32 %v5894, 0.0
    %v5920 = vadd.f32 %v5896, %v5897
    %v5921 = vadd.f32 %v5920, %v5898
    %5922 = vadd.xlane.f32.xlu0 %v5921
    %v5923 = vpop.xlane.xlu0 %5922
    %v5924 = vadd.f32 %v5899, %v5900
    %v5925 = vadd.f32 %v5924, %v5901
    %5926 = vadd.xlane.f32.xlu0 %v5925
    %v5927 = vpop.xlane.xlu0 %5926
    %v5928 = vadd.f32 %v5902, %v5903
    %v5929 = vadd.f32 %v5928, %v5904
    %5930 = vadd.xlane.f32.xlu0 %v5929
    %v5931 = vpop.xlane.xlu0 %5930
    %v5932 = vadd.f32 %v5905, %v5906
    %v5933 = vadd.f32 %v5932, %v5907
    %5934 = vadd.xlane.f32.xlu0 %v5933
    %v5935 = vpop.xlane.xlu0 %5934
    %v5936 = vadd.f32 %v5908, %v5909
    %v5937 = vadd.f32 %v5936, %v5910
    %5938 = vadd.xlane.f32.xlu0 %v5937
    %v5939 = vpop.xlane.xlu0 %5938
    %v5940 = vadd.f32 %v5911, %v5912
    %v5941 = vadd.f32 %v5940, %v5913
    %5942 = vadd.xlane.f32.xlu0 %v5941
    %v5943 = vpop.xlane.xlu0 %5942
    %v5944 = vadd.f32 %v5914, %v5915
    %v5945 = vadd.f32 %v5944, %v5916
    %5946 = vadd.xlane.f32.xlu0 %v5945
    %v5947 = vpop.xlane.xlu0 %5946
    %v5948 = vadd.f32 %v5917, %v5918
    %v5949 = vadd.f32 %v5948, %v5919
    %5950 = vadd.xlane.f32.xlu0 %v5949
    %v5951 = vpop.xlane.xlu0 %5950
    %v5952 = vadd.f32 %v5923, %v5939
    %v5953 = vadd.f32 %v5927, %v5943
    %v5954 = vadd.f32 %v5931, %v5947
    %v5955 = vadd.f32 %v5935, %v5951
    %v5956 = vmul.f32 %v5952, 0.0013020834
    %v5957 = vmul.f32 %v5953, 0.0013020834
    %v5958 = vmul.f32 %v5954, 0.0013020834
    %v5959 = vmul.f32 %v5955, 0.0013020834
    %v5960 = vsub.f32 %v5896, %v5956
    %v5961 = vsub.f32 %v5897, %v5956
    %v5962 = vsub.f32 %v5898, %v5956
    %v5963 = vsub.f32 %v5899, %v5957
    %v5964 = vsub.f32 %v5900, %v5957
    %v5965 = vsub.f32 %v5901, %v5957
    %v5966 = vsub.f32 %v5902, %v5958
    %v5967 = vsub.f32 %v5903, %v5958
    %v5968 = vsub.f32 %v5904, %v5958
    %v5969 = vsub.f32 %v5905, %v5959
    %v5970 = vsub.f32 %v5906, %v5959
    %v5971 = vsub.f32 %v5907, %v5959
    %v5972 = vmul.f32 %v5960, %v5960
    %v5973 = vmul.f32 %v5961, %v5961
    %v5974 = vmul.f32 %v5962, %v5962
    %v5975 = vmul.f32 %v5963, %v5963
    %v5976 = vmul.f32 %v5964, %v5964
    %v5977 = vmul.f32 %v5965, %v5965
    %v5978 = vmul.f32 %v5966, %v5966
    %v5979 = vmul.f32 %v5967, %v5967
    %v5980 = vmul.f32 %v5968, %v5968
    %v5981 = vmul.f32 %v5969, %v5969
    %v5982 = vmul.f32 %v5970, %v5970
    %v5983 = vmul.f32 %v5971, %v5971
    %v5984 = vadd.f32 %v5972, %v5973
    %v5985 = vadd.f32 %v5984, %v5974
    %5986 = vadd.xlane.f32.xlu0 %v5985
    %v5987 = vpop.xlane.xlu0 %5986
    %v5988 = vadd.f32 %v5975, %v5976
    %v5989 = vadd.f32 %v5988, %v5977
    %5990 = vadd.xlane.f32.xlu0 %v5989
    %v5991 = vpop.xlane.xlu0 %5990
    %v5992 = vadd.f32 %v5978, %v5979
    %v5993 = vadd.f32 %v5992, %v5980
    %5994 = vadd.xlane.f32.xlu0 %v5993
    %v5995 = vpop.xlane.xlu0 %5994
    %v5996 = vadd.f32 %v5981, %v5982
    %v5997 = vadd.f32 %v5996, %v5983
    %5998 = vadd.xlane.f32.xlu0 %v5997
    %v5999 = vpop.xlane.xlu0 %5998
    %v6000 = vsub.f32 %v5908, %v5956
    %v6001 = vsub.f32 %v5909, %v5956
    %v6002 = vsub.f32 %v5910, %v5956
    %v6003 = vsub.f32 %v5911, %v5957
    %v6004 = vsub.f32 %v5912, %v5957
    %v6005 = vsub.f32 %v5913, %v5957
    %v6006 = vsub.f32 %v5914, %v5958
    %v6007 = vsub.f32 %v5915, %v5958
    %v6008 = vsub.f32 %v5916, %v5958
    %v6009 = vsub.f32 %v5917, %v5959
    %v6010 = vsub.f32 %v5918, %v5959
    %v6011 = vsub.f32 %v5919, %v5959
    %v6012 = vmul.f32 %v6000, %v6000
    %v6013 = vmul.f32 %v6001, %v6001
    %v6014 = vmul.f32 %v6002, %v6002
    %v6015 = vmul.f32 %v6003, %v6003
    %v6016 = vmul.f32 %v6004, %v6004
    %v6017 = vmul.f32 %v6005, %v6005
    %v6018 = vmul.f32 %v6006, %v6006
    %v6019 = vmul.f32 %v6007, %v6007
    %v6020 = vmul.f32 %v6008, %v6008
    %v6021 = vmul.f32 %v6009, %v6009
    %v6022 = vmul.f32 %v6010, %v6010
    %v6023 = vmul.f32 %v6011, %v6011
    %v6024 = vadd.f32 %v6012, %v6013
    %v6025 = vadd.f32 %v6024, %v6014
    %6026 = vadd.xlane.f32.xlu0 %v6025
    %v6027 = vpop.xlane.xlu0 %6026
    %v6028 = vadd.f32 %v6015, %v6016
    %v6029 = vadd.f32 %v6028, %v6017
    %6030 = vadd.xlane.f32.xlu0 %v6029
    %v6031 = vpop.xlane.xlu0 %6030
    %v6032 = vadd.f32 %v6018, %v6019
    %v6033 = vadd.f32 %v6032, %v6020
    %6034 = vadd.xlane.f32.xlu0 %v6033
    %v6035 = vpop.xlane.xlu0 %6034
    %v6036 = vadd.f32 %v6021, %v6022
    %v6037 = vadd.f32 %v6036, %v6023
    %6038 = vadd.xlane.f32.xlu0 %v6037
    %v6039 = vpop.xlane.xlu0 %6038
    %v6040 = vadd.f32 %v5987, %v6027
    %v6041 = vadd.f32 %v5991, %v6031
    %v6042 = vadd.f32 %v5995, %v6035
    %v6043 = vadd.f32 %v5999, %v6039
    %v6044 = vmul.f32 %v6040, 0.0013020834
    %v6045 = vmul.f32 %v6041, 0.0013020834
    %v6046 = vmul.f32 %v6042, 0.0013020834
    %v6047 = vmul.f32 %v6043, 0.0013020834
    %v6048 = vadd.f32 %v6044, 1e-05
    %v6049 = vadd.f32 %v6045, 1e-05
    %v6050 = vadd.f32 %v6046, 1e-05
    %v6051 = vadd.f32 %v6047, 1e-05
    %v6052 = vrsqrt.pop %v6048
    %v6053 = vmul.f32 %v6052, %v6048
    %v6054 = vmul.f32 %v6053, %v6052
    %v6055 = vmul.f32 0.5, %v6054
    %v6056 = vsub.f32 1.5, %v6055
    %v6057 = vmul.f32 %v6052, %v6056
    %vm6058 = vweird.f32 %v6048
    %vm6059 = vweird.f32 %v6052
    %vm6060 = vmor %vm6058, %vm6059
    %v6061 = vsel %vm6060, %v6052, %v6057
    %v6062 = vrsqrt.pop %v6049
    %v6063 = vmul.f32 %v6062, %v6049
    %v6064 = vmul.f32 %v6063, %v6062
    %v6065 = vmul.f32 0.5, %v6064
    %v6066 = vsub.f32 1.5, %v6065
    %v6067 = vmul.f32 %v6062, %v6066
    %vm6068 = vweird.f32 %v6049
    %vm6069 = vweird.f32 %v6062
    %vm6070 = vmor %vm6068, %vm6069
    %v6071 = vsel %vm6070, %v6062, %v6067
    %v6072 = vrsqrt.pop %v6050
    %v6073 = vmul.f32 %v6072, %v6050
    %v6074 = vmul.f32 %v6073, %v6072
    %v6075 = vmul.f32 0.5, %v6074
    %v6076 = vsub.f32 1.5, %v6075
    %v6077 = vmul.f32 %v6072, %v6076
    %vm6078 = vweird.f32 %v6050
    %vm6079 = vweird.f32 %v6072
    %vm6080 = vmor %vm6078, %vm6079
    %v6081 = vsel %vm6080, %v6072, %v6077
    %v6082 = vrsqrt.pop %v6051
    %v6083 = vmul.f32 %v6082, %v6051
    %v6084 = vmul.f32 %v6083, %v6082
    %v6085 = vmul.f32 0.5, %v6084
    %v6086 = vsub.f32 1.5, %v6085
    %v6087 = vmul.f32 %v6082, %v6086
    %vm6088 = vweird.f32 %v6051
    %vm6089 = vweird.f32 %v6082
    %vm6090 = vmor %vm6088, %vm6089
    %v6091 = vsel %vm6090, %v6082, %v6087
    %v6092 = vmul.f32 %v5960, %v6061
    %v6093 = vmul.f32 %v5961, %v6061
    %v6094 = vmul.f32 %v5962, %v6061
    %v6095 = vmul.f32 %v5963, %v6071
    %v6096 = vmul.f32 %v5964, %v6071
    %v6097 = vmul.f32 %v5965, %v6071
    %v6098 = vmul.f32 %v5966, %v6081
    %v6099 = vmul.f32 %v5967, %v6081
    %v6100 = vmul.f32 %v5968, %v6081
    %v6101 = vmul.f32 %v5969, %v6091
    %v6102 = vmul.f32 %v5970, %v6091
    %v6103 = vmul.f32 %v5971, %v6091
    %v6104 = vld [vmem:[#allocation21] sm:$0x7]
    %v6106 = vperm.slane %v6104, 0
    %v6107 = vperm.slane %v6104, 1
    %v6108 = vperm.slane %v6104, 2
    %v6112 = vmul.f32 %v6092, %v6106
    %v6113 = vmul.f32 %v6093, %v6107
    %v6114 = vmul.f32 %v6094, %v6108
    %v6115 = vmul.f32 %v6095, %v6106
    %v6116 = vmul.f32 %v6096, %v6107
    %v6117 = vmul.f32 %v6097, %v6108
    %v6118 = vmul.f32 %v6098, %v6106
    %v6119 = vmul.f32 %v6099, %v6107
    %v6120 = vmul.f32 %v6100, %v6108
    %v6121 = vmul.f32 %v6101, %v6106
    %v6122 = vmul.f32 %v6102, %v6107
    %v6123 = vmul.f32 %v6103, %v6108
    %v6124 = vld [vmem:[#allocation23] sm:$0x7]
    %v6126 = vperm.slane %v6124, 0
    %v6127 = vperm.slane %v6124, 1
    %v6128 = vperm.slane %v6124, 2
    %v6132 = vadd.f32 %v6112, %v6126
    %v6133 = vadd.f32 %v6113, %v6127
    %v6134 = vadd.f32 %v6114, %v6128
    %v6135 = vadd.f32 %v6115, %v6126
    %v6136 = vadd.f32 %v6116, %v6127
    %v6137 = vadd.f32 %v6117, %v6128
    %v6138 = vadd.f32 %v6118, %v6126
    %v6139 = vadd.f32 %v6119, %v6127
    %v6140 = vadd.f32 %v6120, %v6128
    %v6141 = vadd.f32 %v6121, %v6126
    %v6142 = vadd.f32 %v6122, %v6127
    %v6143 = vadd.f32 %v6123, %v6128
    %v6144 = vmul.f32 %v6000, %v6061
    %v6145 = vmul.f32 %v6001, %v6061
    %v6146 = vmul.f32 %v6002, %v6061
    %v6147 = vmul.f32 %v6003, %v6071
    %v6148 = vmul.f32 %v6004, %v6071
    %v6149 = vmul.f32 %v6005, %v6071
    %v6150 = vmul.f32 %v6006, %v6081
    %v6151 = vmul.f32 %v6007, %v6081
    %v6152 = vmul.f32 %v6008, %v6081
    %v6153 = vmul.f32 %v6009, %v6091
    %v6154 = vmul.f32 %v6010, %v6091
    %v6155 = vmul.f32 %v6011, %v6091
    %s6156 = scalar_lea.vmem [#allocation21], 3
    %v6157 = vld [vmem:[%s6156] sm:$0x7]
    %v6159 = vperm.slane %v6157, 0
    %v6160 = vperm.slane %v6157, 1
    %v6161 = vperm.slane %v6157, 2
    %v6165 = vmul.f32 %v6144, %v6159
    %v6166 = vmul.f32 %v6145, %v6160
    %v6167 = vmul.f32 %v6146, %v6161
    %v6168 = vmul.f32 %v6147, %v6159
    %v6169 = vmul.f32 %v6148, %v6160
    %v6170 = vmul.f32 %v6149, %v6161
    %v6171 = vmul.f32 %v6150, %v6159
    %v6172 = vmul.f32 %v6151, %v6160
    %v6173 = vmul.f32 %v6152, %v6161
    %v6174 = vmul.f32 %v6153, %v6159
    %v6175 = vmul.f32 %v6154, %v6160
    %v6176 = vmul.f32 %v6155, %v6161
    %s6177 = scalar_lea.vmem [#allocation23], 3
    %v6178 = vld [vmem:[%s6177] sm:$0x7]
    %v6180 = vperm.slane %v6178, 0
    %v6181 = vperm.slane %v6178, 1
    %v6182 = vperm.slane %v6178, 2
    %v6186 = vadd.f32 %v6165, %v6180
    %v6187 = vadd.f32 %v6166, %v6181
    %v6188 = vadd.f32 %v6167, %v6182
    %v6189 = vadd.f32 %v6168, %v6180
    %v6190 = vadd.f32 %v6169, %v6181
    %v6191 = vadd.f32 %v6170, %v6182
    %v6192 = vadd.f32 %v6171, %v6180
    %v6193 = vadd.f32 %v6172, %v6181
    %v6194 = vadd.f32 %v6173, %v6182
    %v6195 = vadd.f32 %v6174, %v6180
    %v6196 = vadd.f32 %v6175, %v6181
    %v6197 = vadd.f32 %v6176, %v6182
    %s6198 = smul.u32 4, 96
    %s6199 = smul.u32 %s6198, 4
    %s6200 = sshll.u32 %s6199, 4
    %6201 = dma.done %s375, %s6200
    %v6202 = vpack.c.bf16 %v6135, %v6132
    %v6203 = vpack.c.bf16 %v6136, %v6133
    %v6204 = vpack.c.bf16 %v6137, %v6134
    %v6205 = vpack.c.bf16 %v6189, %v6186
    %v6206 = vpack.c.bf16 %v6190, %v6187
    %v6207 = vpack.c.bf16 %v6191, %v6188
    %v6208 = vpack.c.bf16 %v6141, %v6138
    %v6209 = vpack.c.bf16 %v6142, %v6139
    %v6210 = vpack.c.bf16 %v6143, %v6140
    %v6211 = vpack.c.bf16 %v6195, %v6192
    %v6212 = vpack.c.bf16 %v6196, %v6193
    %v6213 = vpack.c.bf16 %v6197, %v6194
    %v6214 = vld [vmem:[#allocation3] sm:$0xff]
    %v6215 = vld [vmem:[#allocation3 + $0x8] sm:$0xff]
    %v6216 = vld [vmem:[#allocation3 + $0x10] sm:$0xff]
    %v6217 = vld [vmem:[#allocation3 + $0x18] sm:$0xff]
    %v6218 = vld [vmem:[#allocation3 + $0x20] sm:$0xff]
    %v6219 = vld [vmem:[#allocation3 + $0x28] sm:$0xff]
    %v6220 = vld [vmem:[#allocation3 + $0x30] sm:$0xff]
    %v6221 = vld [vmem:[#allocation3 + $0x38] sm:$0xff]
    %v6222 = vld [vmem:[#allocation3 + $0x40] sm:$0xff]
    %v6223 = vld [vmem:[#allocation3 + $0x48] sm:$0xff]
    %v6224 = vld [vmem:[#allocation3 + $0x50] sm:$0xff]
    %v6225 = vld [vmem:[#allocation3 + $0x58] sm:$0xff]
    %v6226 = vld [vmem:[#allocation3 + $0x60] sm:$0xff]
    %v6227 = vld [vmem:[#allocation3 + $0x68] sm:$0xff]
    %v6228 = vld [vmem:[#allocation3 + $0x70] sm:$0xff]
    %v6229 = vld [vmem:[#allocation3 + $0x78] sm:$0xff]
    %v6230 = vld [vmem:[#allocation3 + $0x80] sm:$0xff]
    %v6231 = vld [vmem:[#allocation3 + $0x88] sm:$0xff]
    %v6232 = vld [vmem:[#allocation3 + $0x90] sm:$0xff]
    %v6233 = vld [vmem:[#allocation3 + $0x98] sm:$0xff]
    %v6234 = vld [vmem:[#allocation3 + $0xa0] sm:$0xff]
    %v6235 = vld [vmem:[#allocation3 + $0xa8] sm:$0xff]
    %v6236 = vld [vmem:[#allocation3 + $0xb0] sm:$0xff]
    %v6237 = vld [vmem:[#allocation3 + $0xb8] sm:$0xff]
    %v6238 = vld [vmem:[#allocation3 + $0xc0] sm:$0xff]
    %v6239 = vld [vmem:[#allocation3 + $0xc8] sm:$0xff]
    %v6240 = vld [vmem:[#allocation3 + $0xd0] sm:$0xff]
    %v6241 = vld [vmem:[#allocation3 + $0xd8] sm:$0xff]
    %v6242 = vld [vmem:[#allocation3 + $0xe0] sm:$0xff]
    %v6243 = vld [vmem:[#allocation3 + $0xe8] sm:$0xff]
    %v6244 = vld [vmem:[#allocation3 + $0xf0] sm:$0xff]
    %v6245 = vld [vmem:[#allocation3 + $0xf8] sm:$0xff]
    %v6246 = vld [vmem:[#allocation3 + $0x100] sm:$0xff]
    %v6247 = vld [vmem:[#allocation3 + $0x108] sm:$0xff]
    %v6248 = vld [vmem:[#allocation3 + $0x110] sm:$0xff]
    %v6249 = vld [vmem:[#allocation3 + $0x118] sm:$0xff]
    %v6250 = vld [vmem:[#allocation3 + $0x120] sm:$0xff]
    %v6251 = vld [vmem:[#allocation3 + $0x128] sm:$0xff]
    %v6252 = vld [vmem:[#allocation3 + $0x130] sm:$0xff]
    %v6253 = vld [vmem:[#allocation3 + $0x138] sm:$0xff]
    %v6254 = vld [vmem:[#allocation3 + $0x140] sm:$0xff]
    %v6255 = vld [vmem:[#allocation3 + $0x148] sm:$0xff]
    %v6256 = vld [vmem:[#allocation3 + $0x150] sm:$0xff]
    %v6257 = vld [vmem:[#allocation3 + $0x158] sm:$0xff]
    %v6258 = vld [vmem:[#allocation3 + $0x160] sm:$0xff]
    %v6259 = vld [vmem:[#allocation3 + $0x168] sm:$0xff]
    %v6260 = vld [vmem:[#allocation3 + $0x170] sm:$0xff]
    %v6261 = vld [vmem:[#allocation3 + $0x178] sm:$0xff]
    %v6262 = vld [vmem:[#allocation3 + $0x180] sm:$0xff]
    %v6263 = vld [vmem:[#allocation3 + $0x188] sm:$0xff]
    %v6264 = vld [vmem:[#allocation3 + $0x190] sm:$0xff]
    %v6265 = vld [vmem:[#allocation3 + $0x198] sm:$0xff]
    %v6266 = vld [vmem:[#allocation3 + $0x1a0] sm:$0xff]
    %v6267 = vld [vmem:[#allocation3 + $0x1a8] sm:$0xff]
    %v6268 = vld [vmem:[#allocation3 + $0x1b0] sm:$0xff]
    %v6269 = vld [vmem:[#allocation3 + $0x1b8] sm:$0xff]
    %v6270 = vld [vmem:[#allocation3 + $0x1c0] sm:$0xff]
    %v6271 = vld [vmem:[#allocation3 + $0x1c8] sm:$0xff]
    %v6272 = vld [vmem:[#allocation3 + $0x1d0] sm:$0xff]
    %v6273 = vld [vmem:[#allocation3 + $0x1d8] sm:$0xff]
    %v6274 = vld [vmem:[#allocation3 + $0x1e0] sm:$0xff]
    %v6275 = vld [vmem:[#allocation3 + $0x1e8] sm:$0xff]
    %v6276 = vld [vmem:[#allocation3 + $0x1f0] sm:$0xff]
    %v6277 = vld [vmem:[#allocation3 + $0x1f8] sm:$0xff]
    %v6278 = vld [vmem:[#allocation3 + $0x200] sm:$0xff]
    %v6279 = vld [vmem:[#allocation3 + $0x208] sm:$0xff]
    %v6280 = vld [vmem:[#allocation3 + $0x210] sm:$0xff]
    %v6281 = vld [vmem:[#allocation3 + $0x218] sm:$0xff]
    %v6282 = vld [vmem:[#allocation3 + $0x220] sm:$0xff]
    %v6283 = vld [vmem:[#allocation3 + $0x228] sm:$0xff]
    %v6284 = vld [vmem:[#allocation3 + $0x230] sm:$0xff]
    %v6285 = vld [vmem:[#allocation3 + $0x238] sm:$0xff]
    %v6286 = vld [vmem:[#allocation3 + $0x240] sm:$0xff]
    %v6287 = vld [vmem:[#allocation3 + $0x248] sm:$0xff]
    %v6288 = vld [vmem:[#allocation3 + $0x250] sm:$0xff]
    %v6289 = vld [vmem:[#allocation3 + $0x258] sm:$0xff]
    %v6290 = vld [vmem:[#allocation3 + $0x260] sm:$0xff]
    %v6291 = vld [vmem:[#allocation3 + $0x268] sm:$0xff]
    %v6292 = vld [vmem:[#allocation3 + $0x270] sm:$0xff]
    %v6293 = vld [vmem:[#allocation3 + $0x278] sm:$0xff]
    %v6294 = vld [vmem:[#allocation3 + $0x280] sm:$0xff]
    %v6295 = vld [vmem:[#allocation3 + $0x288] sm:$0xff]
    %v6296 = vld [vmem:[#allocation3 + $0x290] sm:$0xff]
    %v6297 = vld [vmem:[#allocation3 + $0x298] sm:$0xff]
    %v6298 = vld [vmem:[#allocation3 + $0x2a0] sm:$0xff]
    %v6299 = vld [vmem:[#allocation3 + $0x2a8] sm:$0xff]
    %v6300 = vld [vmem:[#allocation3 + $0x2b0] sm:$0xff]
    %v6301 = vld [vmem:[#allocation3 + $0x2b8] sm:$0xff]
    %v6302 = vld [vmem:[#allocation3 + $0x2c0] sm:$0xff]
    %v6303 = vld [vmem:[#allocation3 + $0x2c8] sm:$0xff]
    %v6304 = vld [vmem:[#allocation3 + $0x2d0] sm:$0xff]
    %v6305 = vld [vmem:[#allocation3 + $0x2d8] sm:$0xff]
    %v6306 = vld [vmem:[#allocation3 + $0x2e0] sm:$0xff]
    %v6307 = vld [vmem:[#allocation3 + $0x2e8] sm:$0xff]
    %v6308 = vld [vmem:[#allocation3 + $0x2f0] sm:$0xff]
    %v6309 = vld [vmem:[#allocation3 + $0x2f8] sm:$0xff]
    %v6310 = vld [vmem:[#allocation3 + $0x300] sm:$0xff]
    %v6311 = vld [vmem:[#allocation3 + $0x308] sm:$0xff]
    %v6312 = vld [vmem:[#allocation3 + $0x310] sm:$0xff]
    %v6313 = vld [vmem:[#allocation3 + $0x318] sm:$0xff]
    %v6314 = vld [vmem:[#allocation3 + $0x320] sm:$0xff]
    %v6315 = vld [vmem:[#allocation3 + $0x328] sm:$0xff]
    %v6316 = vld [vmem:[#allocation3 + $0x330] sm:$0xff]
    %v6317 = vld [vmem:[#allocation3 + $0x338] sm:$0xff]
    %v6318 = vld [vmem:[#allocation3 + $0x340] sm:$0xff]
    %v6319 = vld [vmem:[#allocation3 + $0x348] sm:$0xff]
    %v6320 = vld [vmem:[#allocation3 + $0x350] sm:$0xff]
    %v6321 = vld [vmem:[#allocation3 + $0x358] sm:$0xff]
    %v6322 = vld [vmem:[#allocation3 + $0x360] sm:$0xff]
    %v6323 = vld [vmem:[#allocation3 + $0x368] sm:$0xff]
    %v6324 = vld [vmem:[#allocation3 + $0x370] sm:$0xff]
    %v6325 = vld [vmem:[#allocation3 + $0x378] sm:$0xff]
    %v6326 = vld [vmem:[#allocation3 + $0x380] sm:$0xff]
    %v6327 = vld [vmem:[#allocation3 + $0x388] sm:$0xff]
    %v6328 = vld [vmem:[#allocation3 + $0x390] sm:$0xff]
    %v6329 = vld [vmem:[#allocation3 + $0x398] sm:$0xff]
    %v6330 = vld [vmem:[#allocation3 + $0x3a0] sm:$0xff]
    %v6331 = vld [vmem:[#allocation3 + $0x3a8] sm:$0xff]
    %v6332 = vld [vmem:[#allocation3 + $0x3b0] sm:$0xff]
    %v6333 = vld [vmem:[#allocation3 + $0x3b8] sm:$0xff]
    %v6334 = vld [vmem:[#allocation3 + $0x3c0] sm:$0xff]
    %v6335 = vld [vmem:[#allocation3 + $0x3c8] sm:$0xff]
    %v6336 = vld [vmem:[#allocation3 + $0x3d0] sm:$0xff]
    %v6337 = vld [vmem:[#allocation3 + $0x3d8] sm:$0xff]
    %v6338 = vld [vmem:[#allocation3 + $0x3e0] sm:$0xff]
    %v6339 = vld [vmem:[#allocation3 + $0x3e8] sm:$0xff]
    %v6340 = vld [vmem:[#allocation3 + $0x3f0] sm:$0xff]
    %v6341 = vld [vmem:[#allocation3 + $0x3f8] sm:$0xff]
    %v6342 = vld [vmem:[#allocation3 + $0x400] sm:$0xff]
    %v6343 = vld [vmem:[#allocation3 + $0x408] sm:$0xff]
    %v6344 = vld [vmem:[#allocation3 + $0x410] sm:$0xff]
    %v6345 = vld [vmem:[#allocation3 + $0x418] sm:$0xff]
    %v6346 = vld [vmem:[#allocation3 + $0x420] sm:$0xff]
    %v6347 = vld [vmem:[#allocation3 + $0x428] sm:$0xff]
    %v6348 = vld [vmem:[#allocation3 + $0x430] sm:$0xff]
    %v6349 = vld [vmem:[#allocation3 + $0x438] sm:$0xff]
    %v6350 = vld [vmem:[#allocation3 + $0x440] sm:$0xff]
    %v6351 = vld [vmem:[#allocation3 + $0x448] sm:$0xff]
    %v6352 = vld [vmem:[#allocation3 + $0x450] sm:$0xff]
    %v6353 = vld [vmem:[#allocation3 + $0x458] sm:$0xff]
    %v6354 = vld [vmem:[#allocation3 + $0x460] sm:$0xff]
    %v6355 = vld [vmem:[#allocation3 + $0x468] sm:$0xff]
    %v6356 = vld [vmem:[#allocation3 + $0x470] sm:$0xff]
    %v6357 = vld [vmem:[#allocation3 + $0x478] sm:$0xff]
    %v6358 = vld [vmem:[#allocation3 + $0x480] sm:$0xff]
    %v6359 = vld [vmem:[#allocation3 + $0x488] sm:$0xff]
    %v6360 = vld [vmem:[#allocation3 + $0x490] sm:$0xff]
    %v6361 = vld [vmem:[#allocation3 + $0x498] sm:$0xff]
    %v6362 = vld [vmem:[#allocation3 + $0x4a0] sm:$0xff]
    %v6363 = vld [vmem:[#allocation3 + $0x4a8] sm:$0xff]
    %v6364 = vld [vmem:[#allocation3 + $0x4b0] sm:$0xff]
    %v6365 = vld [vmem:[#allocation3 + $0x4b8] sm:$0xff]
    %v6366 = vld [vmem:[#allocation3 + $0x4c0] sm:$0xff]
    %v6367 = vld [vmem:[#allocation3 + $0x4c8] sm:$0xff]
    %v6368 = vld [vmem:[#allocation3 + $0x4d0] sm:$0xff]
    %v6369 = vld [vmem:[#allocation3 + $0x4d8] sm:$0xff]
    %v6370 = vld [vmem:[#allocation3 + $0x4e0] sm:$0xff]
    %v6371 = vld [vmem:[#allocation3 + $0x4e8] sm:$0xff]
    %v6372 = vld [vmem:[#allocation3 + $0x4f0] sm:$0xff]
    %v6373 = vld [vmem:[#allocation3 + $0x4f8] sm:$0xff]
    %v6374 = vld [vmem:[#allocation3 + $0x500] sm:$0xff]
    %v6375 = vld [vmem:[#allocation3 + $0x508] sm:$0xff]
    %v6376 = vld [vmem:[#allocation3 + $0x510] sm:$0xff]
    %v6377 = vld [vmem:[#allocation3 + $0x518] sm:$0xff]
    %v6378 = vld [vmem:[#allocation3 + $0x520] sm:$0xff]
    %v6379 = vld [vmem:[#allocation3 + $0x528] sm:$0xff]
    %v6380 = vld [vmem:[#allocation3 + $0x530] sm:$0xff]
    %v6381 = vld [vmem:[#allocation3 + $0x538] sm:$0xff]
    %v6382 = vld [vmem:[#allocation3 + $0x540] sm:$0xff]
    %v6383 = vld [vmem:[#allocation3 + $0x548] sm:$0xff]
    %v6384 = vld [vmem:[#allocation3 + $0x550] sm:$0xff]
    %v6385 = vld [vmem:[#allocation3 + $0x558] sm:$0xff]
    %v6386 = vld [vmem:[#allocation3 + $0x560] sm:$0xff]
    %v6387 = vld [vmem:[#allocation3 + $0x568] sm:$0xff]
    %v6388 = vld [vmem:[#allocation3 + $0x570] sm:$0xff]
    %v6389 = vld [vmem:[#allocation3 + $0x578] sm:$0xff]
    %v6390 = vld [vmem:[#allocation3 + $0x580] sm:$0xff]
    %v6391 = vld [vmem:[#allocation3 + $0x588] sm:$0xff]
    %v6392 = vld [vmem:[#allocation3 + $0x590] sm:$0xff]
    %v6393 = vld [vmem:[#allocation3 + $0x598] sm:$0xff]
    %v6394 = vld [vmem:[#allocation3 + $0x5a0] sm:$0xff]
    %v6395 = vld [vmem:[#allocation3 + $0x5a8] sm:$0xff]
    %v6396 = vld [vmem:[#allocation3 + $0x5b0] sm:$0xff]
    %v6397 = vld [vmem:[#allocation3 + $0x5b8] sm:$0xff]
    %v6398 = vld [vmem:[#allocation3 + $0x5c0] sm:$0xff]
    %v6399 = vld [vmem:[#allocation3 + $0x5c8] sm:$0xff]
    %v6400 = vld [vmem:[#allocation3 + $0x5d0] sm:$0xff]
    %v6401 = vld [vmem:[#allocation3 + $0x5d8] sm:$0xff]
    %v6402 = vld [vmem:[#allocation3 + $0x5e0] sm:$0xff]
    %v6403 = vld [vmem:[#allocation3 + $0x5e8] sm:$0xff]
    %v6404 = vld [vmem:[#allocation3 + $0x5f0] sm:$0xff]
    %v6405 = vld [vmem:[#allocation3 + $0x5f8] sm:$0xff]
    %v6598 = vunpack.c.l.b16 %v6214
    %v6599 = vunpack.c.h.b16 %v6214
    %v6600 = vunpack.c.l.b16 %v6215
    %v6601 = vunpack.c.h.b16 %v6215
    %v6602 = vunpack.c.l.b16 %v6216
    %v6603 = vunpack.c.h.b16 %v6216
    %v6604 = vunpack.c.l.b16 %v6217
    %v6605 = vunpack.c.h.b16 %v6217
    %v6606 = vunpack.c.l.b16 %v6218
    %v6607 = vunpack.c.h.b16 %v6218
    %v6608 = vunpack.c.l.b16 %v6219
    %v6609 = vunpack.c.h.b16 %v6219
    %v6610 = vunpack.c.l.b16 %v6220
    %v6611 = vunpack.c.h.b16 %v6220
    %v6612 = vunpack.c.l.b16 %v6221
    %v6613 = vunpack.c.h.b16 %v6221
    %v6614 = vunpack.c.l.b16 %v6222
    %v6615 = vunpack.c.h.b16 %v6222
    %v6616 = vunpack.c.l.b16 %v6223
    %v6617 = vunpack.c.h.b16 %v6223
    %v6618 = vunpack.c.l.b16 %v6224
    %v6619 = vunpack.c.h.b16 %v6224
    %v6620 = vunpack.c.l.b16 %v6225
    %v6621 = vunpack.c.h.b16 %v6225
    %v6622 = vunpack.c.l.b16 %v6226
    %v6623 = vunpack.c.h.b16 %v6226
    %v6624 = vunpack.c.l.b16 %v6227
    %v6625 = vunpack.c.h.b16 %v6227
    %v6626 = vunpack.c.l.b16 %v6228
    %v6627 = vunpack.c.h.b16 %v6228
    %v6628 = vunpack.c.l.b16 %v6229
    %v6629 = vunpack.c.h.b16 %v6229
    %v6630 = vunpack.c.l.b16 %v6230
    %v6631 = vunpack.c.h.b16 %v6230
    %v6632 = vunpack.c.l.b16 %v6231
    %v6633 = vunpack.c.h.b16 %v6231
    %v6634 = vunpack.c.l.b16 %v6232
    %v6635 = vunpack.c.h.b16 %v6232
    %v6636 = vunpack.c.l.b16 %v6233
    %v6637 = vunpack.c.h.b16 %v6233
    %v6638 = vunpack.c.l.b16 %v6234
    %v6639 = vunpack.c.h.b16 %v6234
    %v6640 = vunpack.c.l.b16 %v6235
    %v6641 = vunpack.c.h.b16 %v6235
    %v6642 = vunpack.c.l.b16 %v6236
    %v6643 = vunpack.c.h.b16 %v6236
    %v6644 = vunpack.c.l.b16 %v6237
    %v6645 = vunpack.c.h.b16 %v6237
    %v6646 = vunpack.c.l.b16 %v6238
    %v6647 = vunpack.c.h.b16 %v6238
    %v6648 = vunpack.c.l.b16 %v6239
    %v6649 = vunpack.c.h.b16 %v6239
    %v6650 = vunpack.c.l.b16 %v6240
    %v6651 = vunpack.c.h.b16 %v6240
    %v6652 = vunpack.c.l.b16 %v6241
    %v6653 = vunpack.c.h.b16 %v6241
    %v6654 = vunpack.c.l.b16 %v6242
    %v6655 = vunpack.c.h.b16 %v6242
    %v6656 = vunpack.c.l.b16 %v6243
    %v6657 = vunpack.c.h.b16 %v6243
    %v6658 = vunpack.c.l.b16 %v6244
    %v6659 = vunpack.c.h.b16 %v6244
    %v6660 = vunpack.c.l.b16 %v6245
    %v6661 = vunpack.c.h.b16 %v6245
    %v6662 = vunpack.c.l.b16 %v6246
    %v6663 = vunpack.c.h.b16 %v6246
    %v6664 = vunpack.c.l.b16 %v6247
    %v6665 = vunpack.c.h.b16 %v6247
    %v6666 = vunpack.c.l.b16 %v6248
    %v6667 = vunpack.c.h.b16 %v6248
    %v6668 = vunpack.c.l.b16 %v6249
    %v6669 = vunpack.c.h.b16 %v6249
    %v6670 = vunpack.c.l.b16 %v6250
    %v6671 = vunpack.c.h.b16 %v6250
    %v6672 = vunpack.c.l.b16 %v6251
    %v6673 = vunpack.c.h.b16 %v6251
    %v6674 = vunpack.c.l.b16 %v6252
    %v6675 = vunpack.c.h.b16 %v6252
    %v6676 = vunpack.c.l.b16 %v6253
    %v6677 = vunpack.c.h.b16 %v6253
    %v6678 = vunpack.c.l.b16 %v6254
    %v6679 = vunpack.c.h.b16 %v6254
    %v6680 = vunpack.c.l.b16 %v6255
    %v6681 = vunpack.c.h.b16 %v6255
    %v6682 = vunpack.c.l.b16 %v6256
    %v6683 = vunpack.c.h.b16 %v6256
    %v6684 = vunpack.c.l.b16 %v6257
    %v6685 = vunpack.c.h.b16 %v6257
    %v6686 = vunpack.c.l.b16 %v6258
    %v6687 = vunpack.c.h.b16 %v6258
    %v6688 = vunpack.c.l.b16 %v6259
    %v6689 = vunpack.c.h.b16 %v6259
    %v6690 = vunpack.c.l.b16 %v6260
    %v6691 = vunpack.c.h.b16 %v6260
    %v6692 = vunpack.c.l.b16 %v6261
    %v6693 = vunpack.c.h.b16 %v6261
    %v6694 = vunpack.c.l.b16 %v6262
    %v6695 = vunpack.c.h.b16 %v6262
    %v6696 = vunpack.c.l.b16 %v6263
    %v6697 = vunpack.c.h.b16 %v6263
    %v6698 = vunpack.c.l.b16 %v6264
    %v6699 = vunpack.c.h.b16 %v6264
    %v6700 = vunpack.c.l.b16 %v6265
    %v6701 = vunpack.c.h.b16 %v6265
    %v6702 = vunpack.c.l.b16 %v6266
    %v6703 = vunpack.c.h.b16 %v6266
    %v6704 = vunpack.c.l.b16 %v6267
    %v6705 = vunpack.c.h.b16 %v6267
    %v6706 = vunpack.c.l.b16 %v6268
    %v6707 = vunpack.c.h.b16 %v6268
    %v6708 = vunpack.c.l.b16 %v6269
    %v6709 = vunpack.c.h.b16 %v6269
    %v6710 = vunpack.c.l.b16 %v6270
    %v6711 = vunpack.c.h.b16 %v6270
    %v6712 = vunpack.c.l.b16 %v6271
    %v6713 = vunpack.c.h.b16 %v6271
    %v6714 = vunpack.c.l.b16 %v6272
    %v6715 = vunpack.c.h.b16 %v6272
    %v6716 = vunpack.c.l.b16 %v6273
    %v6717 = vunpack.c.h.b16 %v6273
    %v6718 = vunpack.c.l.b16 %v6274
    %v6719 = vunpack.c.h.b16 %v6274
    %v6720 = vunpack.c.l.b16 %v6275
    %v6721 = vunpack.c.h.b16 %v6275
    %v6722 = vunpack.c.l.b16 %v6276
    %v6723 = vunpack.c.h.b16 %v6276
    %v6724 = vunpack.c.l.b16 %v6277
    %v6725 = vunpack.c.h.b16 %v6277
    %v6726 = vunpack.c.l.b16 %v6278
    %v6727 = vunpack.c.h.b16 %v6278
    %v6728 = vunpack.c.l.b16 %v6279
    %v6729 = vunpack.c.h.b16 %v6279
    %v6730 = vunpack.c.l.b16 %v6280
    %v6731 = vunpack.c.h.b16 %v6280
    %v6732 = vunpack.c.l.b16 %v6281
    %v6733 = vunpack.c.h.b16 %v6281
    %v6734 = vunpack.c.l.b16 %v6282
    %v6735 = vunpack.c.h.b16 %v6282
    %v6736 = vunpack.c.l.b16 %v6283
    %v6737 = vunpack.c.h.b16 %v6283
    %v6738 = vunpack.c.l.b16 %v6284
    %v6739 = vunpack.c.h.b16 %v6284
    %v6740 = vunpack.c.l.b16 %v6285
    %v6741 = vunpack.c.h.b16 %v6285
    %v6742 = vunpack.c.l.b16 %v6286
    %v6743 = vunpack.c.h.b16 %v6286
    %v6744 = vunpack.c.l.b16 %v6287
    %v6745 = vunpack.c.h.b16 %v6287
    %v6746 = vunpack.c.l.b16 %v6288
    %v6747 = vunpack.c.h.b16 %v6288
    %v6748 = vunpack.c.l.b16 %v6289
    %v6749 = vunpack.c.h.b16 %v6289
    %v6750 = vunpack.c.l.b16 %v6290
    %v6751 = vunpack.c.h.b16 %v6290
    %v6752 = vunpack.c.l.b16 %v6291
    %v6753 = vunpack.c.h.b16 %v6291
    %v6754 = vunpack.c.l.b16 %v6292
    %v6755 = vunpack.c.h.b16 %v6292
    %v6756 = vunpack.c.l.b16 %v6293
    %v6757 = vunpack.c.h.b16 %v6293
    %v6758 = vunpack.c.l.b16 %v6294
    %v6759 = vunpack.c.h.b16 %v6294
    %v6760 = vunpack.c.l.b16 %v6295
    %v6761 = vunpack.c.h.b16 %v6295
    %v6762 = vunpack.c.l.b16 %v6296
    %v6763 = vunpack.c.h.b16 %v6296
    %v6764 = vunpack.c.l.b16 %v6297
    %v6765 = vunpack.c.h.b16 %v6297
    %v6766 = vunpack.c.l.b16 %v6298
    %v6767 = vunpack.c.h.b16 %v6298
    %v6768 = vunpack.c.l.b16 %v6299
    %v6769 = vunpack.c.h.b16 %v6299
    %v6770 = vunpack.c.l.b16 %v6300
    %v6771 = vunpack.c.h.b16 %v6300
    %v6772 = vunpack.c.l.b16 %v6301
    %v6773 = vunpack.c.h.b16 %v6301
    %v6774 = vunpack.c.l.b16 %v6302
    %v6775 = vunpack.c.h.b16 %v6302
    %v6776 = vunpack.c.l.b16 %v6303
    %v6777 = vunpack.c.h.b16 %v6303
    %v6778 = vunpack.c.l.b16 %v6304
    %v6779 = vunpack.c.h.b16 %v6304
    %v6780 = vunpack.c.l.b16 %v6305
    %v6781 = vunpack.c.h.b16 %v6305
    %v6782 = vunpack.c.l.b16 %v6306
    %v6783 = vunpack.c.h.b16 %v6306
    %v6784 = vunpack.c.l.b16 %v6307
    %v6785 = vunpack.c.h.b16 %v6307
    %v6786 = vunpack.c.l.b16 %v6308
    %v6787 = vunpack.c.h.b16 %v6308
    %v6788 = vunpack.c.l.b16 %v6309
    %v6789 = vunpack.c.h.b16 %v6309
    %v6790 = vunpack.c.l.b16 %v6310
    %v6791 = vunpack.c.h.b16 %v6310
    %v6792 = vunpack.c.l.b16 %v6311
    %v6793 = vunpack.c.h.b16 %v6311
    %v6794 = vunpack.c.l.b16 %v6312
    %v6795 = vunpack.c.h.b16 %v6312
    %v6796 = vunpack.c.l.b16 %v6313
    %v6797 = vunpack.c.h.b16 %v6313
    %v6798 = vunpack.c.l.b16 %v6314
    %v6799 = vunpack.c.h.b16 %v6314
    %v6800 = vunpack.c.l.b16 %v6315
    %v6801 = vunpack.c.h.b16 %v6315
    %v6802 = vunpack.c.l.b16 %v6316
    %v6803 = vunpack.c.h.b16 %v6316
    %v6804 = vunpack.c.l.b16 %v6317
    %v6805 = vunpack.c.h.b16 %v6317
    %v6806 = vunpack.c.l.b16 %v6318
    %v6807 = vunpack.c.h.b16 %v6318
    %v6808 = vunpack.c.l.b16 %v6319
    %v6809 = vunpack.c.h.b16 %v6319
    %v6810 = vunpack.c.l.b16 %v6320
    %v6811 = vunpack.c.h.b16 %v6320
    %v6812 = vunpack.c.l.b16 %v6321
    %v6813 = vunpack.c.h.b16 %v6321
    %v6814 = vunpack.c.l.b16 %v6322
    %v6815 = vunpack.c.h.b16 %v6322
    %v6816 = vunpack.c.l.b16 %v6323
    %v6817 = vunpack.c.h.b16 %v6323
    %v6818 = vunpack.c.l.b16 %v6324
    %v6819 = vunpack.c.h.b16 %v6324
    %v6820 = vunpack.c.l.b16 %v6325
    %v6821 = vunpack.c.h.b16 %v6325
    %v6822 = vunpack.c.l.b16 %v6326
    %v6823 = vunpack.c.h.b16 %v6326
    %v6824 = vunpack.c.l.b16 %v6327
    %v6825 = vunpack.c.h.b16 %v6327
    %v6826 = vunpack.c.l.b16 %v6328
    %v6827 = vunpack.c.h.b16 %v6328
    %v6828 = vunpack.c.l.b16 %v6329
    %v6829 = vunpack.c.h.b16 %v6329
    %v6830 = vunpack.c.l.b16 %v6330
    %v6831 = vunpack.c.h.b16 %v6330
    %v6832 = vunpack.c.l.b16 %v6331
    %v6833 = vunpack.c.h.b16 %v6331
    %v6834 = vunpack.c.l.b16 %v6332
    %v6835 = vunpack.c.h.b16 %v6332
    %v6836 = vunpack.c.l.b16 %v6333
    %v6837 = vunpack.c.h.b16 %v6333
    %v6838 = vunpack.c.l.b16 %v6334
    %v6839 = vunpack.c.h.b16 %v6334
    %v6840 = vunpack.c.l.b16 %v6335
    %v6841 = vunpack.c.h.b16 %v6335
    %v6842 = vunpack.c.l.b16 %v6336
    %v6843 = vunpack.c.h.b16 %v6336
    %v6844 = vunpack.c.l.b16 %v6337
    %v6845 = vunpack.c.h.b16 %v6337
    %v6846 = vunpack.c.l.b16 %v6338
    %v6847 = vunpack.c.h.b16 %v6338
    %v6848 = vunpack.c.l.b16 %v6339
    %v6849 = vunpack.c.h.b16 %v6339
    %v6850 = vunpack.c.l.b16 %v6340
    %v6851 = vunpack.c.h.b16 %v6340
    %v6852 = vunpack.c.l.b16 %v6341
    %v6853 = vunpack.c.h.b16 %v6341
    %v6854 = vunpack.c.l.b16 %v6342
    %v6855 = vunpack.c.h.b16 %v6342
    %v6856 = vunpack.c.l.b16 %v6343
    %v6857 = vunpack.c.h.b16 %v6343
    %v6858 = vunpack.c.l.b16 %v6344
    %v6859 = vunpack.c.h.b16 %v6344
    %v6860 = vunpack.c.l.b16 %v6345
    %v6861 = vunpack.c.h.b16 %v6345
    %v6862 = vunpack.c.l.b16 %v6346
    %v6863 = vunpack.c.h.b16 %v6346
    %v6864 = vunpack.c.l.b16 %v6347
    %v6865 = vunpack.c.h.b16 %v6347
    %v6866 = vunpack.c.l.b16 %v6348
    %v6867 = vunpack.c.h.b16 %v6348
    %v6868 = vunpack.c.l.b16 %v6349
    %v6869 = vunpack.c.h.b16 %v6349
    %v6870 = vunpack.c.l.b16 %v6350
    %v6871 = vunpack.c.h.b16 %v6350
    %v6872 = vunpack.c.l.b16 %v6351
    %v6873 = vunpack.c.h.b16 %v6351
    %v6874 = vunpack.c.l.b16 %v6352
    %v6875 = vunpack.c.h.b16 %v6352
    %v6876 = vunpack.c.l.b16 %v6353
    %v6877 = vunpack.c.h.b16 %v6353
    %v6878 = vunpack.c.l.b16 %v6354
    %v6879 = vunpack.c.h.b16 %v6354
    %v6880 = vunpack.c.l.b16 %v6355
    %v6881 = vunpack.c.h.b16 %v6355
    %v6882 = vunpack.c.l.b16 %v6356
    %v6883 = vunpack.c.h.b16 %v6356
    %v6884 = vunpack.c.l.b16 %v6357
    %v6885 = vunpack.c.h.b16 %v6357
    %v6886 = vunpack.c.l.b16 %v6358
    %v6887 = vunpack.c.h.b16 %v6358
    %v6888 = vunpack.c.l.b16 %v6359
    %v6889 = vunpack.c.h.b16 %v6359
    %v6890 = vunpack.c.l.b16 %v6360
    %v6891 = vunpack.c.h.b16 %v6360
    %v6892 = vunpack.c.l.b16 %v6361
    %v6893 = vunpack.c.h.b16 %v6361
    %v6894 = vunpack.c.l.b16 %v6362
    %v6895 = vunpack.c.h.b16 %v6362
    %v6896 = vunpack.c.l.b16 %v6363
    %v6897 = vunpack.c.h.b16 %v6363
    %v6898 = vunpack.c.l.b16 %v6364
    %v6899 = vunpack.c.h.b16 %v6364
    %v6900 = vunpack.c.l.b16 %v6365
    %v6901 = vunpack.c.h.b16 %v6365
    %v6902 = vunpack.c.l.b16 %v6366
    %v6903 = vunpack.c.h.b16 %v6366
    %v6904 = vunpack.c.l.b16 %v6367
    %v6905 = vunpack.c.h.b16 %v6367
    %v6906 = vunpack.c.l.b16 %v6368
    %v6907 = vunpack.c.h.b16 %v6368
    %v6908 = vunpack.c.l.b16 %v6369
    %v6909 = vunpack.c.h.b16 %v6369
    %v6910 = vunpack.c.l.b16 %v6370
    %v6911 = vunpack.c.h.b16 %v6370
    %v6912 = vunpack.c.l.b16 %v6371
    %v6913 = vunpack.c.h.b16 %v6371
    %v6914 = vunpack.c.l.b16 %v6372
    %v6915 = vunpack.c.h.b16 %v6372
    %v6916 = vunpack.c.l.b16 %v6373
    %v6917 = vunpack.c.h.b16 %v6373
    %v6918 = vunpack.c.l.b16 %v6374
    %v6919 = vunpack.c.h.b16 %v6374
    %v6920 = vunpack.c.l.b16 %v6375
    %v6921 = vunpack.c.h.b16 %v6375
    %v6922 = vunpack.c.l.b16 %v6376
    %v6923 = vunpack.c.h.b16 %v6376
    %v6924 = vunpack.c.l.b16 %v6377
    %v6925 = vunpack.c.h.b16 %v6377
    %v6926 = vunpack.c.l.b16 %v6378
    %v6927 = vunpack.c.h.b16 %v6378
    %v6928 = vunpack.c.l.b16 %v6379
    %v6929 = vunpack.c.h.b16 %v6379
    %v6930 = vunpack.c.l.b16 %v6380
    %v6931 = vunpack.c.h.b16 %v6380
    %v6932 = vunpack.c.l.b16 %v6381
    %v6933 = vunpack.c.h.b16 %v6381
    %v6934 = vunpack.c.l.b16 %v6382
    %v6935 = vunpack.c.h.b16 %v6382
    %v6936 = vunpack.c.l.b16 %v6383
    %v6937 = vunpack.c.h.b16 %v6383
    %v6938 = vunpack.c.l.b16 %v6384
    %v6939 = vunpack.c.h.b16 %v6384
    %v6940 = vunpack.c.l.b16 %v6385
    %v6941 = vunpack.c.h.b16 %v6385
    %v6942 = vunpack.c.l.b16 %v6386
    %v6943 = vunpack.c.h.b16 %v6386
    %v6944 = vunpack.c.l.b16 %v6387
    %v6945 = vunpack.c.h.b16 %v6387
    %v6946 = vunpack.c.l.b16 %v6388
    %v6947 = vunpack.c.h.b16 %v6388
    %v6948 = vunpack.c.l.b16 %v6389
    %v6949 = vunpack.c.h.b16 %v6389
    %v6950 = vunpack.c.l.b16 %v6390
    %v6951 = vunpack.c.h.b16 %v6390
    %v6952 = vunpack.c.l.b16 %v6391
    %v6953 = vunpack.c.h.b16 %v6391
    %v6954 = vunpack.c.l.b16 %v6392
    %v6955 = vunpack.c.h.b16 %v6392
    %v6956 = vunpack.c.l.b16 %v6393
    %v6957 = vunpack.c.h.b16 %v6393
    %v6958 = vunpack.c.l.b16 %v6394
    %v6959 = vunpack.c.h.b16 %v6394
    %v6960 = vunpack.c.l.b16 %v6395
    %v6961 = vunpack.c.h.b16 %v6395
    %v6962 = vunpack.c.l.b16 %v6396
    %v6963 = vunpack.c.h.b16 %v6396
    %v6964 = vunpack.c.l.b16 %v6397
    %v6965 = vunpack.c.h.b16 %v6397
    %v6966 = vunpack.c.l.b16 %v6398
    %v6967 = vunpack.c.h.b16 %v6398
    %v6968 = vunpack.c.l.b16 %v6399
    %v6969 = vunpack.c.h.b16 %v6399
    %v6970 = vunpack.c.l.b16 %v6400
    %v6971 = vunpack.c.h.b16 %v6400
    %v6972 = vunpack.c.l.b16 %v6401
    %v6973 = vunpack.c.h.b16 %v6401
    %v6974 = vunpack.c.l.b16 %v6402
    %v6975 = vunpack.c.h.b16 %v6402
    %v6976 = vunpack.c.l.b16 %v6403
    %v6977 = vunpack.c.h.b16 %v6403
    %v6978 = vunpack.c.l.b16 %v6404
    %v6979 = vunpack.c.h.b16 %v6404
    %v6980 = vunpack.c.l.b16 %v6405
    %v6981 = vunpack.c.h.b16 %v6405
    %v6982 = vpack.c.b16 %v6602, %v6598
    %v6983 = vpack.c.b16 %v6603, %v6599
    %v6984 = vpack.c.b16 %v6604, %v6600
    %v6985 = vpack.c.b16 %v6605, %v6601
    %v6986 = vpack.c.b16 %v6610, %v6606
    %v6987 = vpack.c.b16 %v6611, %v6607
    %v6988 = vpack.c.b16 %v6612, %v6608
    %v6989 = vpack.c.b16 %v6613, %v6609
    %v6990 = vpack.c.b16 %v6618, %v6614
    %v6991 = vpack.c.b16 %v6619, %v6615
    %v6992 = vpack.c.b16 %v6620, %v6616
    %v6993 = vpack.c.b16 %v6621, %v6617
    %v6994 = vpack.c.b16 %v6626, %v6622
    %v6995 = vpack.c.b16 %v6627, %v6623
    %v6996 = vpack.c.b16 %v6628, %v6624
    %v6997 = vpack.c.b16 %v6629, %v6625
    %v6998 = vpack.c.b16 %v6634, %v6630
    %v6999 = vpack.c.b16 %v6635, %v6631
    %v7000 = vpack.c.b16 %v6636, %v6632
    %v7001 = vpack.c.b16 %v6637, %v6633
    %v7002 = vpack.c.b16 %v6642, %v6638
    %v7003 = vpack.c.b16 %v6643, %v6639
    %v7004 = vpack.c.b16 %v6644, %v6640
    %v7005 = vpack.c.b16 %v6645, %v6641
    %v7006 = vpack.c.b16 %v6650, %v6646
    %v7007 = vpack.c.b16 %v6651, %v6647
    %v7008 = vpack.c.b16 %v6652, %v6648
    %v7009 = vpack.c.b16 %v6653, %v6649
    %v7010 = vpack.c.b16 %v6658, %v6654
    %v7011 = vpack.c.b16 %v6659, %v6655
    %v7012 = vpack.c.b16 %v6660, %v6656
    %v7013 = vpack.c.b16 %v6661, %v6657
    %v7014 = vpack.c.b16 %v6666, %v6662
    %v7015 = vpack.c.b16 %v6667, %v6663
    %v7016 = vpack.c.b16 %v6668, %v6664
    %v7017 = vpack.c.b16 %v6669, %v6665
    %v7018 = vpack.c.b16 %v6674, %v6670
    %v7019 = vpack.c.b16 %v6675, %v6671
    %v7020 = vpack.c.b16 %v6676, %v6672
    %v7021 = vpack.c.b16 %v6677, %v6673
    %v7022 = vpack.c.b16 %v6682, %v6678
    %v7023 = vpack.c.b16 %v6683, %v6679
    %v7024 = vpack.c.b16 %v6684, %v6680
    %v7025 = vpack.c.b16 %v6685, %v6681
    %v7026 = vpack.c.b16 %v6690, %v6686
    %v7027 = vpack.c.b16 %v6691, %v6687
    %v7028 = vpack.c.b16 %v6692, %v6688
    %v7029 = vpack.c.b16 %v6693, %v6689
    %v7030 = vpack.c.b16 %v6698, %v6694
    %v7031 = vpack.c.b16 %v6699, %v6695
    %v7032 = vpack.c.b16 %v6700, %v6696
    %v7033 = vpack.c.b16 %v6701, %v6697
    %v7034 = vpack.c.b16 %v6706, %v6702
    %v7035 = vpack.c.b16 %v6707, %v6703
    %v7036 = vpack.c.b16 %v6708, %v6704
    %v7037 = vpack.c.b16 %v6709, %v6705
    %v7038 = vpack.c.b16 %v6714, %v6710
    %v7039 = vpack.c.b16 %v6715, %v6711
    %v7040 = vpack.c.b16 %v6716, %v6712
    %v7041 = vpack.c.b16 %v6717, %v6713
    %v7042 = vpack.c.b16 %v6722, %v6718
    %v7043 = vpack.c.b16 %v6723, %v6719
    %v7044 = vpack.c.b16 %v6724, %v6720
    %v7045 = vpack.c.b16 %v6725, %v6721
    %v7046 = vpack.c.b16 %v6730, %v6726
    %v7047 = vpack.c.b16 %v6731, %v6727
    %v7048 = vpack.c.b16 %v6732, %v6728
    %v7049 = vpack.c.b16 %v6733, %v6729
    %v7050 = vpack.c.b16 %v6738, %v6734
    %v7051 = vpack.c.b16 %v6739, %v6735
    %v7052 = vpack.c.b16 %v6740, %v6736
    %v7053 = vpack.c.b16 %v6741, %v6737
    %v7054 = vpack.c.b16 %v6746, %v6742
    %v7055 = vpack.c.b16 %v6747, %v6743
    %v7056 = vpack.c.b16 %v6748, %v6744
    %v7057 = vpack.c.b16 %v6749, %v6745
    %v7058 = vpack.c.b16 %v6754, %v6750
    %v7059 = vpack.c.b16 %v6755, %v6751
    %v7060 = vpack.c.b16 %v6756, %v6752
    %v7061 = vpack.c.b16 %v6757, %v6753
    %v7062 = vpack.c.b16 %v6762, %v6758
    %v7063 = vpack.c.b16 %v6763, %v6759
    %v7064 = vpack.c.b16 %v6764, %v6760
    %v7065 = vpack.c.b16 %v6765, %v6761
    %v7066 = vpack.c.b16 %v6770, %v6766
    %v7067 = vpack.c.b16 %v6771, %v6767
    %v7068 = vpack.c.b16 %v6772, %v6768
    %v7069 = vpack.c.b16 %v6773, %v6769
    %v7070 = vpack.c.b16 %v6778, %v6774
    %v7071 = vpack.c.b16 %v6779, %v6775
    %v7072 = vpack.c.b16 %v6780, %v6776
    %v7073 = vpack.c.b16 %v6781, %v6777
    %v7074 = vpack.c.b16 %v6786, %v6782
    %v7075 = vpack.c.b16 %v6787, %v6783
    %v7076 = vpack.c.b16 %v6788, %v6784
    %v7077 = vpack.c.b16 %v6789, %v6785
    %v7078 = vpack.c.b16 %v6794, %v6790
    %v7079 = vpack.c.b16 %v6795, %v6791
    %v7080 = vpack.c.b16 %v6796, %v6792
    %v7081 = vpack.c.b16 %v6797, %v6793
    %v7082 = vpack.c.b16 %v6802, %v6798
    %v7083 = vpack.c.b16 %v6803, %v6799
    %v7084 = vpack.c.b16 %v6804, %v6800
    %v7085 = vpack.c.b16 %v6805, %v6801
    %v7086 = vpack.c.b16 %v6810, %v6806
    %v7087 = vpack.c.b16 %v6811, %v6807
    %v7088 = vpack.c.b16 %v6812, %v6808
    %v7089 = vpack.c.b16 %v6813, %v6809
    %v7090 = vpack.c.b16 %v6818, %v6814
    %v7091 = vpack.c.b16 %v6819, %v6815
    %v7092 = vpack.c.b16 %v6820, %v6816
    %v7093 = vpack.c.b16 %v6821, %v6817
    %v7094 = vpack.c.b16 %v6826, %v6822
    %v7095 = vpack.c.b16 %v6827, %v6823
    %v7096 = vpack.c.b16 %v6828, %v6824
    %v7097 = vpack.c.b16 %v6829, %v6825
    %v7098 = vpack.c.b16 %v6834, %v6830
    %v7099 = vpack.c.b16 %v6835, %v6831
    %v7100 = vpack.c.b16 %v6836, %v6832
    %v7101 = vpack.c.b16 %v6837, %v6833
    %v7102 = vpack.c.b16 %v6842, %v6838
    %v7103 = vpack.c.b16 %v6843, %v6839
    %v7104 = vpack.c.b16 %v6844, %v6840
    %v7105 = vpack.c.b16 %v6845, %v6841
    %v7106 = vpack.c.b16 %v6850, %v6846
    %v7107 = vpack.c.b16 %v6851, %v6847
    %v7108 = vpack.c.b16 %v6852, %v6848
    %v7109 = vpack.c.b16 %v6853, %v6849
    %v7110 = vpack.c.b16 %v6858, %v6854
    %v7111 = vpack.c.b16 %v6859, %v6855
    %v7112 = vpack.c.b16 %v6860, %v6856
    %v7113 = vpack.c.b16 %v6861, %v6857
    %v7114 = vpack.c.b16 %v6866, %v6862
    %v7115 = vpack.c.b16 %v6867, %v6863
    %v7116 = vpack.c.b16 %v6868, %v6864
    %v7117 = vpack.c.b16 %v6869, %v6865
    %v7118 = vpack.c.b16 %v6874, %v6870
    %v7119 = vpack.c.b16 %v6875, %v6871
    %v7120 = vpack.c.b16 %v6876, %v6872
    %v7121 = vpack.c.b16 %v6877, %v6873
    %v7122 = vpack.c.b16 %v6882, %v6878
    %v7123 = vpack.c.b16 %v6883, %v6879
    %v7124 = vpack.c.b16 %v6884, %v6880
    %v7125 = vpack.c.b16 %v6885, %v6881
    %v7126 = vpack.c.b16 %v6890, %v6886
    %v7127 = vpack.c.b16 %v6891, %v6887
    %v7128 = vpack.c.b16 %v6892, %v6888
    %v7129 = vpack.c.b16 %v6893, %v6889
    %v7130 = vpack.c.b16 %v6898, %v6894
    %v7131 = vpack.c.b16 %v6899, %v6895
    %v7132 = vpack.c.b16 %v6900, %v6896
    %v7133 = vpack.c.b16 %v6901, %v6897
    %v7134 = vpack.c.b16 %v6906, %v6902
    %v7135 = vpack.c.b16 %v6907, %v6903
    %v7136 = vpack.c.b16 %v6908, %v6904
    %v7137 = vpack.c.b16 %v6909, %v6905
    %v7138 = vpack.c.b16 %v6914, %v6910
    %v7139 = vpack.c.b16 %v6915, %v6911
    %v7140 = vpack.c.b16 %v6916, %v6912
    %v7141 = vpack.c.b16 %v6917, %v6913
    %v7142 = vpack.c.b16 %v6922, %v6918
    %v7143 = vpack.c.b16 %v6923, %v6919
    %v7144 = vpack.c.b16 %v6924, %v6920
    %v7145 = vpack.c.b16 %v6925, %v6921
    %v7146 = vpack.c.b16 %v6930, %v6926
    %v7147 = vpack.c.b16 %v6931, %v6927
    %v7148 = vpack.c.b16 %v6932, %v6928
    %v7149 = vpack.c.b16 %v6933, %v6929
    %v7150 = vpack.c.b16 %v6938, %v6934
    %v7151 = vpack.c.b16 %v6939, %v6935
    %v7152 = vpack.c.b16 %v6940, %v6936
    %v7153 = vpack.c.b16 %v6941, %v6937
    %v7154 = vpack.c.b16 %v6946, %v6942
    %v7155 = vpack.c.b16 %v6947, %v6943
    %v7156 = vpack.c.b16 %v6948, %v6944
    %v7157 = vpack.c.b16 %v6949, %v6945
    %v7158 = vpack.c.b16 %v6954, %v6950
    %v7159 = vpack.c.b16 %v6955, %v6951
    %v7160 = vpack.c.b16 %v6956, %v6952
    %v7161 = vpack.c.b16 %v6957, %v6953
    %v7162 = vpack.c.b16 %v6962, %v6958
    %v7163 = vpack.c.b16 %v6963, %v6959
    %v7164 = vpack.c.b16 %v6964, %v6960
    %v7165 = vpack.c.b16 %v6965, %v6961
    %v7166 = vpack.c.b16 %v6970, %v6966
    %v7167 = vpack.c.b16 %v6971, %v6967
    %v7168 = vpack.c.b16 %v6972, %v6968
    %v7169 = vpack.c.b16 %v6973, %v6969
    %v7170 = vpack.c.b16 %v6978, %v6974
    %v7171 = vpack.c.b16 %v6979, %v6975
    %v7172 = vpack.c.b16 %v6980, %v6976
    %v7173 = vpack.c.b16 %v6981, %v6977
    %7366 = vmatpush.bf16.msra.mxu0 %v7010
    %7367 = vmatpush.bf16.msra.mxu0 %v7006
    %7368 = vmatpush.bf16.msra.mxu0 %v7002
    %7369 = vmatpush.bf16.msra.mxu0 %v6998
    %7370 = vmatpush.bf16.msra.mxu0 %v6994
    %7371 = vmatpush.bf16.msra.mxu0 %v6990
    %7372 = vmatpush.bf16.msra.mxu0 %v6986
    %7373 = vmatpush.bf16.msra.mxu0 %v6982
    %7374 = vmatmul.bf16.gmra.mxu0 %v6202
    %v7375 = vpop.f32.mrf.mxu0
    %v7376 = vadd.f32 0.0, %v7375
    %v7377 = vpop.f32.mrf.mxu0
    %v7378 = vadd.f32 0.0, %v7377
    %7379 = vmatmul.bf16.gmra.mxu0 %v6208
    %v7380 = vpop.f32.mrf.mxu0
    %v7381 = vadd.f32 0.0, %v7380
    %v7382 = vpop.f32.mrf.mxu0
    %v7383 = vadd.f32 0.0, %v7382
    %7384 = vdwg.mxu0
    %7385 = vmatpush.bf16.msra.mxu0 %v7042
    %7386 = vmatpush.bf16.msra.mxu0 %v7038
    %7387 = vmatpush.bf16.msra.mxu0 %v7034
    %7388 = vmatpush.bf16.msra.mxu0 %v7030
    %7389 = vmatpush.bf16.msra.mxu0 %v7026
    %7390 = vmatpush.bf16.msra.mxu0 %v7022
    %7391 = vmatpush.bf16.msra.mxu0 %v7018
    %7392 = vmatpush.bf16.msra.mxu0 %v7014
    %7393 = vmatmul.bf16.gmra.mxu0 %v6203
    %v7394 = vpop.f32.mrf.mxu0
    %v7395 = vadd.f32 %v7376, %v7394
    %v7396 = vpop.f32.mrf.mxu0
    %v7397 = vadd.f32 %v7378, %v7396
    %7398 = vmatmul.bf16.gmra.mxu0 %v6209
    %v7399 = vpop.f32.mrf.mxu0
    %v7400 = vadd.f32 %v7381, %v7399
    %v7401 = vpop.f32.mrf.mxu0
    %v7402 = vadd.f32 %v7383, %v7401
    %7403 = vdwg.mxu0
    %7404 = vmatpush.bf16.msra.mxu0 %v7074
    %7405 = vmatpush.bf16.msra.mxu0 %v7070
    %7406 = vmatpush.bf16.msra.mxu0 %v7066
    %7407 = vmatpush.bf16.msra.mxu0 %v7062
    %7408 = vmatpush.bf16.msra.mxu0 %v7058
    %7409 = vmatpush.bf16.msra.mxu0 %v7054
    %7410 = vmatpush.bf16.msra.mxu0 %v7050
    %7411 = vmatpush.bf16.msra.mxu0 %v7046
    %7412 = vmatmul.bf16.gmra.mxu0 %v6204
    %v7413 = vpop.f32.mrf.mxu0
    %v7414 = vadd.f32 %v7395, %v7413
    %v7415 = vpop.f32.mrf.mxu0
    %v7416 = vadd.f32 %v7397, %v7415
    %7417 = vmatmul.bf16.gmra.mxu0 %v6210
    %v7418 = vpop.f32.mrf.mxu0
    %v7419 = vadd.f32 %v7400, %v7418
    %v7420 = vpop.f32.mrf.mxu0
    %v7421 = vadd.f32 %v7402, %v7420
    %7422 = vdwg.mxu0
    %7423 = vmatpush.bf16.msra.mxu0 %v7106
    %7424 = vmatpush.bf16.msra.mxu0 %v7102
    %7425 = vmatpush.bf16.msra.mxu0 %v7098
    %7426 = vmatpush.bf16.msra.mxu0 %v7094
    %7427 = vmatpush.bf16.msra.mxu0 %v7090
    %7428 = vmatpush.bf16.msra.mxu0 %v7086
    %7429 = vmatpush.bf16.msra.mxu0 %v7082
    %7430 = vmatpush.bf16.msra.mxu0 %v7078
    %7431 = vmatmul.bf16.gmra.mxu0 %v6205
    %v7432 = vpop.f32.mrf.mxu0
    %v7433 = vadd.f32 %v7414, %v7432
    %v7434 = vpop.f32.mrf.mxu0
    %v7435 = vadd.f32 %v7416, %v7434
    %7436 = vmatmul.bf16.gmra.mxu0 %v6211
    %v7437 = vpop.f32.mrf.mxu0
    %v7438 = vadd.f32 %v7419, %v7437
    %v7439 = vpop.f32.mrf.mxu0
    %v7440 = vadd.f32 %v7421, %v7439
    %7441 = vdwg.mxu0
    %7442 = vmatpush.bf16.msra.mxu0 %v7138
    %7443 = vmatpush.bf16.msra.mxu0 %v7134
    %7444 = vmatpush.bf16.msra.mxu0 %v7130
    %7445 = vmatpush.bf16.msra.mxu0 %v7126
    %7446 = vmatpush.bf16.msra.mxu0 %v7122
    %7447 = vmatpush.bf16.msra.mxu0 %v7118
    %7448 = vmatpush.bf16.msra.mxu0 %v7114
    %7449 = vmatpush.bf16.msra.mxu0 %v7110
    %7450 = vmatmul.bf16.gmra.mxu0 %v6206
    %v7451 = vpop.f32.mrf.mxu0
    %v7452 = vadd.f32 %v7433, %v7451
    %v7453 = vpop.f32.mrf.mxu0
    %v7454 = vadd.f32 %v7435, %v7453
    %7455 = vmatmul.bf16.gmra.mxu0 %v6212
    %v7456 = vpop.f32.mrf.mxu0
    %v7457 = vadd.f32 %v7438, %v7456
    %v7458 = vpop.f32.mrf.mxu0
    %v7459 = vadd.f32 %v7440, %v7458
    %7460 = vdwg.mxu0
    %7461 = vmatpush.bf16.msra.mxu0 %v7170
    %7462 = vmatpush.bf16.msra.mxu0 %v7166
    %7463 = vmatpush.bf16.msra.mxu0 %v7162
    %7464 = vmatpush.bf16.msra.mxu0 %v7158
    %7465 = vmatpush.bf16.msra.mxu0 %v7154
    %7466 = vmatpush.bf16.msra.mxu0 %v7150
    %7467 = vmatpush.bf16.msra.mxu0 %v7146
    %7468 = vmatpush.bf16.msra.mxu0 %v7142
    %7469 = vmatmul.bf16.gmra.mxu0 %v6207
    %v7470 = vpop.f32.mrf.mxu0
    %v7471 = vadd.f32 %v7452, %v7470
    %v7472 = vpop.f32.mrf.mxu0
    %v7473 = vadd.f32 %v7454, %v7472
    %7474 = vmatmul.bf16.gmra.mxu0 %v6213
    %v7475 = vpop.f32.mrf.mxu0
    %v7476 = vadd.f32 %v7457, %v7475
    %v7477 = vpop.f32.mrf.mxu0
    %v7478 = vadd.f32 %v7459, %v7477
    %7479 = vdwg.mxu0
    %7480 = vmatpush.bf16.msra.mxu0 %v7011
    %7481 = vmatpush.bf16.msra.mxu0 %v7007
    %7482 = vmatpush.bf16.msra.mxu0 %v7003
    %7483 = vmatpush.bf16.msra.mxu0 %v6999
    %7484 = vmatpush.bf16.msra.mxu0 %v6995
    %7485 = vmatpush.bf16.msra.mxu0 %v6991
    %7486 = vmatpush.bf16.msra.mxu0 %v6987
    %7487 = vmatpush.bf16.msra.mxu0 %v6983
    %7488 = vmatmul.bf16.gmra.mxu0 %v6202
    %v7489 = vpop.f32.mrf.mxu0
    %v7490 = vadd.f32 0.0, %v7489
    %v7491 = vpop.f32.mrf.mxu0
    %v7492 = vadd.f32 0.0, %v7491
    %7493 = vmatmul.bf16.gmra.mxu0 %v6208
    %v7494 = vpop.f32.mrf.mxu0
    %v7495 = vadd.f32 0.0, %v7494
    %v7496 = vpop.f32.mrf.mxu0
    %v7497 = vadd.f32 0.0, %v7496
    %7498 = vdwg.mxu0
    %7499 = vmatpush.bf16.msra.mxu0 %v7043
    %7500 = vmatpush.bf16.msra.mxu0 %v7039
    %7501 = vmatpush.bf16.msra.mxu0 %v7035
    %7502 = vmatpush.bf16.msra.mxu0 %v7031
    %7503 = vmatpush.bf16.msra.mxu0 %v7027
    %7504 = vmatpush.bf16.msra.mxu0 %v7023
    %7505 = vmatpush.bf16.msra.mxu0 %v7019
    %7506 = vmatpush.bf16.msra.mxu0 %v7015
    %7507 = vmatmul.bf16.gmra.mxu0 %v6203
    %v7508 = vpop.f32.mrf.mxu0
    %v7509 = vadd.f32 %v7490, %v7508
    %v7510 = vpop.f32.mrf.mxu0
    %v7511 = vadd.f32 %v7492, %v7510
    %7512 = vmatmul.bf16.gmra.mxu0 %v6209
    %v7513 = vpop.f32.mrf.mxu0
    %v7514 = vadd.f32 %v7495, %v7513
    %v7515 = vpop.f32.mrf.mxu0
    %v7516 = vadd.f32 %v7497, %v7515
    %7517 = vdwg.mxu0
    %7518 = vmatpush.bf16.msra.mxu0 %v7075
    %7519 = vmatpush.bf16.msra.mxu0 %v7071
    %7520 = vmatpush.bf16.msra.mxu0 %v7067
    %7521 = vmatpush.bf16.msra.mxu0 %v7063
    %7522 = vmatpush.bf16.msra.mxu0 %v7059
    %7523 = vmatpush.bf16.msra.mxu0 %v7055
    %7524 = vmatpush.bf16.msra.mxu0 %v7051
    %7525 = vmatpush.bf16.msra.mxu0 %v7047
    %7526 = vmatmul.bf16.gmra.mxu0 %v6204
    %v7527 = vpop.f32.mrf.mxu0
    %v7528 = vadd.f32 %v7509, %v7527
    %v7529 = vpop.f32.mrf.mxu0
    %v7530 = vadd.f32 %v7511, %v7529
    %7531 = vmatmul.bf16.gmra.mxu0 %v6210
    %v7532 = vpop.f32.mrf.mxu0
    %v7533 = vadd.f32 %v7514, %v7532
    %v7534 = vpop.f32.mrf.mxu0
    %v7535 = vadd.f32 %v7516, %v7534
    %7536 = vdwg.mxu0
    %7537 = vmatpush.bf16.msra.mxu0 %v7107
    %7538 = vmatpush.bf16.msra.mxu0 %v7103
    %7539 = vmatpush.bf16.msra.mxu0 %v7099
    %7540 = vmatpush.bf16.msra.mxu0 %v7095
    %7541 = vmatpush.bf16.msra.mxu0 %v7091
    %7542 = vmatpush.bf16.msra.mxu0 %v7087
    %7543 = vmatpush.bf16.msra.mxu0 %v7083
    %7544 = vmatpush.bf16.msra.mxu0 %v7079
    %7545 = vmatmul.bf16.gmra.mxu0 %v6205
    %v7546 = vpop.f32.mrf.mxu0
    %v7547 = vadd.f32 %v7528, %v7546
    %v7548 = vpop.f32.mrf.mxu0
    %v7549 = vadd.f32 %v7530, %v7548
    %7550 = vmatmul.bf16.gmra.mxu0 %v6211
    %v7551 = vpop.f32.mrf.mxu0
    %v7552 = vadd.f32 %v7533, %v7551
    %v7553 = vpop.f32.mrf.mxu0
    %v7554 = vadd.f32 %v7535, %v7553
    %7555 = vdwg.mxu0
    %7556 = vmatpush.bf16.msra.mxu0 %v7139
    %7557 = vmatpush.bf16.msra.mxu0 %v7135
    %7558 = vmatpush.bf16.msra.mxu0 %v7131
    %7559 = vmatpush.bf16.msra.mxu0 %v7127
    %7560 = vmatpush.bf16.msra.mxu0 %v7123
    %7561 = vmatpush.bf16.msra.mxu0 %v7119
    %7562 = vmatpush.bf16.msra.mxu0 %v7115
    %7563 = vmatpush.bf16.msra.mxu0 %v7111
    %7564 = vmatmul.bf16.gmra.mxu0 %v6206
    %v7565 = vpop.f32.mrf.mxu0
    %v7566 = vadd.f32 %v7547, %v7565
    %v7567 = vpop.f32.mrf.mxu0
    %v7568 = vadd.f32 %v7549, %v7567
    %7569 = vmatmul.bf16.gmra.mxu0 %v6212
    %v7570 = vpop.f32.mrf.mxu0
    %v7571 = vadd.f32 %v7552, %v7570
    %v7572 = vpop.f32.mrf.mxu0
    %v7573 = vadd.f32 %v7554, %v7572
    %7574 = vdwg.mxu0
    %7575 = vmatpush.bf16.msra.mxu0 %v7171
    %7576 = vmatpush.bf16.msra.mxu0 %v7167
    %7577 = vmatpush.bf16.msra.mxu0 %v7163
    %7578 = vmatpush.bf16.msra.mxu0 %v7159
    %7579 = vmatpush.bf16.msra.mxu0 %v7155
    %7580 = vmatpush.bf16.msra.mxu0 %v7151
    %7581 = vmatpush.bf16.msra.mxu0 %v7147
    %7582 = vmatpush.bf16.msra.mxu0 %v7143
    %7583 = vmatmul.bf16.gmra.mxu0 %v6207
    %v7584 = vpop.f32.mrf.mxu0
    %v7585 = vadd.f32 %v7566, %v7584
    %v7586 = vpop.f32.mrf.mxu0
    %v7587 = vadd.f32 %v7568, %v7586
    %7588 = vmatmul.bf16.gmra.mxu0 %v6213
    %v7589 = vpop.f32.mrf.mxu0
    %v7590 = vadd.f32 %v7571, %v7589
    %v7591 = vpop.f32.mrf.mxu0
    %v7592 = vadd.f32 %v7573, %v7591
    %7593 = vdwg.mxu0
    %7594 = vmatpush.bf16.msra.mxu0 %v7012
    %7595 = vmatpush.bf16.msra.mxu0 %v7008
    %7596 = vmatpush.bf16.msra.mxu0 %v7004
    %7597 = vmatpush.bf16.msra.mxu0 %v7000
    %7598 = vmatpush.bf16.msra.mxu0 %v6996
    %7599 = vmatpush.bf16.msra.mxu0 %v6992
    %7600 = vmatpush.bf16.msra.mxu0 %v6988
    %7601 = vmatpush.bf16.msra.mxu0 %v6984
    %7602 = vmatmul.bf16.gmra.mxu0 %v6202
    %v7603 = vpop.f32.mrf.mxu0
    %v7604 = vadd.f32 0.0, %v7603
    %v7605 = vpop.f32.mrf.mxu0
    %v7606 = vadd.f32 0.0, %v7605
    %7607 = vmatmul.bf16.gmra.mxu0 %v6208
    %v7608 = vpop.f32.mrf.mxu0
    %v7609 = vadd.f32 0.0, %v7608
    %v7610 = vpop.f32.mrf.mxu0
    %v7611 = vadd.f32 0.0, %v7610
    %7612 = vdwg.mxu0
    %7613 = vmatpush.bf16.msra.mxu0 %v7044
    %7614 = vmatpush.bf16.msra.mxu0 %v7040
    %7615 = vmatpush.bf16.msra.mxu0 %v7036
    %7616 = vmatpush.bf16.msra.mxu0 %v7032
    %7617 = vmatpush.bf16.msra.mxu0 %v7028
    %7618 = vmatpush.bf16.msra.mxu0 %v7024
    %7619 = vmatpush.bf16.msra.mxu0 %v7020
    %7620 = vmatpush.bf16.msra.mxu0 %v7016
    %7621 = vmatmul.bf16.gmra.mxu0 %v6203
    %v7622 = vpop.f32.mrf.mxu0
    %v7623 = vadd.f32 %v7604, %v7622
    %v7624 = vpop.f32.mrf.mxu0
    %v7625 = vadd.f32 %v7606, %v7624
    %7626 = vmatmul.bf16.gmra.mxu0 %v6209
    %v7627 = vpop.f32.mrf.mxu0
    %v7628 = vadd.f32 %v7609, %v7627
    %v7629 = vpop.f32.mrf.mxu0
    %v7630 = vadd.f32 %v7611, %v7629
    %7631 = vdwg.mxu0
    %7632 = vmatpush.bf16.msra.mxu0 %v7076
    %7633 = vmatpush.bf16.msra.mxu0 %v7072
    %7634 = vmatpush.bf16.msra.mxu0 %v7068
    %7635 = vmatpush.bf16.msra.mxu0 %v7064
    %7636 = vmatpush.bf16.msra.mxu0 %v7060
    %7637 = vmatpush.bf16.msra.mxu0 %v7056
    %7638 = vmatpush.bf16.msra.mxu0 %v7052
    %7639 = vmatpush.bf16.msra.mxu0 %v7048
    %7640 = vmatmul.bf16.gmra.mxu0 %v6204
    %v7641 = vpop.f32.mrf.mxu0
    %v7642 = vadd.f32 %v7623, %v7641
    %v7643 = vpop.f32.mrf.mxu0
    %v7644 = vadd.f32 %v7625, %v7643
    %7645 = vmatmul.bf16.gmra.mxu0 %v6210
    %v7646 = vpop.f32.mrf.mxu0
    %v7647 = vadd.f32 %v7628, %v7646
    %v7648 = vpop.f32.mrf.mxu0
    %v7649 = vadd.f32 %v7630, %v7648
    %7650 = vdwg.mxu0
    %7651 = vmatpush.bf16.msra.mxu0 %v7108
    %7652 = vmatpush.bf16.msra.mxu0 %v7104
    %7653 = vmatpush.bf16.msra.mxu0 %v7100
    %7654 = vmatpush.bf16.msra.mxu0 %v7096
    %7655 = vmatpush.bf16.msra.mxu0 %v7092
    %7656 = vmatpush.bf16.msra.mxu0 %v7088
    %7657 = vmatpush.bf16.msra.mxu0 %v7084
    %7658 = vmatpush.bf16.msra.mxu0 %v7080
    %7659 = vmatmul.bf16.gmra.mxu0 %v6205
    %v7660 = vpop.f32.mrf.mxu0
    %v7661 = vadd.f32 %v7642, %v7660
    %v7662 = vpop.f32.mrf.mxu0
    %v7663 = vadd.f32 %v7644, %v7662
    %7664 = vmatmul.bf16.gmra.mxu0 %v6211
    %v7665 = vpop.f32.mrf.mxu0
    %v7666 = vadd.f32 %v7647, %v7665
    %v7667 = vpop.f32.mrf.mxu0
    %v7668 = vadd.f32 %v7649, %v7667
    %7669 = vdwg.mxu0
    %7670 = vmatpush.bf16.msra.mxu0 %v7140
    %7671 = vmatpush.bf16.msra.mxu0 %v7136
    %7672 = vmatpush.bf16.msra.mxu0 %v7132
    %7673 = vmatpush.bf16.msra.mxu0 %v7128
    %7674 = vmatpush.bf16.msra.mxu0 %v7124
    %7675 = vmatpush.bf16.msra.mxu0 %v7120
    %7676 = vmatpush.bf16.msra.mxu0 %v7116
    %7677 = vmatpush.bf16.msra.mxu0 %v7112
    %7678 = vmatmul.bf16.gmra.mxu0 %v6206
    %v7679 = vpop.f32.mrf.mxu0
    %v7680 = vadd.f32 %v7661, %v7679
    %v7681 = vpop.f32.mrf.mxu0
    %v7682 = vadd.f32 %v7663, %v7681
    %7683 = vmatmul.bf16.gmra.mxu0 %v6212
    %v7684 = vpop.f32.mrf.mxu0
    %v7685 = vadd.f32 %v7666, %v7684
    %v7686 = vpop.f32.mrf.mxu0
    %v7687 = vadd.f32 %v7668, %v7686
    %7688 = vdwg.mxu0
    %7689 = vmatpush.bf16.msra.mxu0 %v7172
    %7690 = vmatpush.bf16.msra.mxu0 %v7168
    %7691 = vmatpush.bf16.msra.mxu0 %v7164
    %7692 = vmatpush.bf16.msra.mxu0 %v7160
    %7693 = vmatpush.bf16.msra.mxu0 %v7156
    %7694 = vmatpush.bf16.msra.mxu0 %v7152
    %7695 = vmatpush.bf16.msra.mxu0 %v7148
    %7696 = vmatpush.bf16.msra.mxu0 %v7144
    %7697 = vmatmul.bf16.gmra.mxu0 %v6207
    %v7698 = vpop.f32.mrf.mxu0
    %v7699 = vadd.f32 %v7680, %v7698
    %v7700 = vpop.f32.mrf.mxu0
    %v7701 = vadd.f32 %v7682, %v7700
    %7702 = vmatmul.bf16.gmra.mxu0 %v6213
    %v7703 = vpop.f32.mrf.mxu0
    %v7704 = vadd.f32 %v7685, %v7703
    %v7705 = vpop.f32.mrf.mxu0
    %v7706 = vadd.f32 %v7687, %v7705
    %7707 = vdwg.mxu0
    %7708 = vmatpush.bf16.msra.mxu0 %v7013
    %7709 = vmatpush.bf16.msra.mxu0 %v7009
    %7710 = vmatpush.bf16.msra.mxu0 %v7005
    %7711 = vmatpush.bf16.msra.mxu0 %v7001
    %7712 = vmatpush.bf16.msra.mxu0 %v6997
    %7713 = vmatpush.bf16.msra.mxu0 %v6993
    %7714 = vmatpush.bf16.msra.mxu0 %v6989
    %7715 = vmatpush.bf16.msra.mxu0 %v6985
    %7716 = vmatmul.bf16.gmra.mxu0 %v6202
    %v7717 = vpop.f32.mrf.mxu0
    %v7718 = vadd.f32 0.0, %v7717
    %v7719 = vpop.f32.mrf.mxu0
    %v7720 = vadd.f32 0.0, %v7719
    %7721 = vmatmul.bf16.gmra.mxu0 %v6208
    %v7722 = vpop.f32.mrf.mxu0
    %v7723 = vadd.f32 0.0, %v7722
    %v7724 = vpop.f32.mrf.mxu0
    %v7725 = vadd.f32 0.0, %v7724
    %7726 = vdwg.mxu0
    %7727 = vmatpush.bf16.msra.mxu0 %v7045
    %7728 = vmatpush.bf16.msra.mxu0 %v7041
    %7729 = vmatpush.bf16.msra.mxu0 %v7037
    %7730 = vmatpush.bf16.msra.mxu0 %v7033
    %7731 = vmatpush.bf16.msra.mxu0 %v7029
    %7732 = vmatpush.bf16.msra.mxu0 %v7025
    %7733 = vmatpush.bf16.msra.mxu0 %v7021
    %7734 = vmatpush.bf16.msra.mxu0 %v7017
    %7735 = vmatmul.bf16.gmra.mxu0 %v6203
    %v7736 = vpop.f32.mrf.mxu0
    %v7737 = vadd.f32 %v7718, %v7736
    %v7738 = vpop.f32.mrf.mxu0
    %v7739 = vadd.f32 %v7720, %v7738
    %7740 = vmatmul.bf16.gmra.mxu0 %v6209
    %v7741 = vpop.f32.mrf.mxu0
    %v7742 = vadd.f32 %v7723, %v7741
    %v7743 = vpop.f32.mrf.mxu0
    %v7744 = vadd.f32 %v7725, %v7743
    %7745 = vdwg.mxu0
    %7746 = vmatpush.bf16.msra.mxu0 %v7077
    %7747 = vmatpush.bf16.msra.mxu0 %v7073
    %7748 = vmatpush.bf16.msra.mxu0 %v7069
    %7749 = vmatpush.bf16.msra.mxu0 %v7065
    %7750 = vmatpush.bf16.msra.mxu0 %v7061
    %7751 = vmatpush.bf16.msra.mxu0 %v7057
    %7752 = vmatpush.bf16.msra.mxu0 %v7053
    %7753 = vmatpush.bf16.msra.mxu0 %v7049
    %7754 = vmatmul.bf16.gmra.mxu0 %v6204
    %v7755 = vpop.f32.mrf.mxu0
    %v7756 = vadd.f32 %v7737, %v7755
    %v7757 = vpop.f32.mrf.mxu0
    %v7758 = vadd.f32 %v7739, %v7757
    %7759 = vmatmul.bf16.gmra.mxu0 %v6210
    %v7760 = vpop.f32.mrf.mxu0
    %v7761 = vadd.f32 %v7742, %v7760
    %v7762 = vpop.f32.mrf.mxu0
    %v7763 = vadd.f32 %v7744, %v7762
    %7764 = vdwg.mxu0
    %7765 = vmatpush.bf16.msra.mxu0 %v7109
    %7766 = vmatpush.bf16.msra.mxu0 %v7105
    %7767 = vmatpush.bf16.msra.mxu0 %v7101
    %7768 = vmatpush.bf16.msra.mxu0 %v7097
    %7769 = vmatpush.bf16.msra.mxu0 %v7093
    %7770 = vmatpush.bf16.msra.mxu0 %v7089
    %7771 = vmatpush.bf16.msra.mxu0 %v7085
    %7772 = vmatpush.bf16.msra.mxu0 %v7081
    %7773 = vmatmul.bf16.gmra.mxu0 %v6205
    %v7774 = vpop.f32.mrf.mxu0
    %v7775 = vadd.f32 %v7756, %v7774
    %v7776 = vpop.f32.mrf.mxu0
    %v7777 = vadd.f32 %v7758, %v7776
    %7778 = vmatmul.bf16.gmra.mxu0 %v6211
    %v7779 = vpop.f32.mrf.mxu0
    %v7780 = vadd.f32 %v7761, %v7779
    %v7781 = vpop.f32.mrf.mxu0
    %v7782 = vadd.f32 %v7763, %v7781
    %7783 = vdwg.mxu0
    %7784 = vmatpush.bf16.msra.mxu0 %v7141
    %7785 = vmatpush.bf16.msra.mxu0 %v7137
    %7786 = vmatpush.bf16.msra.mxu0 %v7133
    %7787 = vmatpush.bf16.msra.mxu0 %v7129
    %7788 = vmatpush.bf16.msra.mxu0 %v7125
    %7789 = vmatpush.bf16.msra.mxu0 %v7121
    %7790 = vmatpush.bf16.msra.mxu0 %v7117
    %7791 = vmatpush.bf16.msra.mxu0 %v7113
    %7792 = vmatmul.bf16.gmra.mxu0 %v6206
    %v7793 = vpop.f32.mrf.mxu0
    %v7794 = vadd.f32 %v7775, %v7793
    %v7795 = vpop.f32.mrf.mxu0
    %v7796 = vadd.f32 %v7777, %v7795
    %7797 = vmatmul.bf16.gmra.mxu0 %v6212
    %v7798 = vpop.f32.mrf.mxu0
    %v7799 = vadd.f32 %v7780, %v7798
    %v7800 = vpop.f32.mrf.mxu0
    %v7801 = vadd.f32 %v7782, %v7800
    %7802 = vdwg.mxu0
    %7803 = vmatpush.bf16.msra.mxu0 %v7173
    %7804 = vmatpush.bf16.msra.mxu0 %v7169
    %7805 = vmatpush.bf16.msra.mxu0 %v7165
    %7806 = vmatpush.bf16.msra.mxu0 %v7161
    %7807 = vmatpush.bf16.msra.mxu0 %v7157
    %7808 = vmatpush.bf16.msra.mxu0 %v7153
    %7809 = vmatpush.bf16.msra.mxu0 %v7149
    %7810 = vmatpush.bf16.msra.mxu0 %v7145
    %7811 = vmatmul.bf16.gmra.mxu0 %v6207
    %v7812 = vpop.f32.mrf.mxu0
    %v7813 = vadd.f32 %v7794, %v7812
    %v7814 = vpop.f32.mrf.mxu0
    %v7815 = vadd.f32 %v7796, %v7814
    %7816 = vmatmul.bf16.gmra.mxu0 %v6213
    %v7817 = vpop.f32.mrf.mxu0
    %v7818 = vadd.f32 %v7799, %v7817
    %v7819 = vpop.f32.mrf.mxu0
    %v7820 = vadd.f32 %v7801, %v7819
    %7821 = vdwg.mxu0
    %v7822 = vpack.c.bf16 %v7473, %v7471
    %v7823 = vpack.c.bf16 %v7587, %v7585
    %v7824 = vpack.c.bf16 %v7478, %v7476
    %v7825 = vpack.c.bf16 %v7592, %v7590
    %v7826 = vld [vmem:[#allocation26] sm:$0x3]
    %v7828 = vperm.slane %v7826, 0
    %v7829 = vperm.slane %v7826, 1
    %v7832 = vmul.f32 %v7471, %v7828
    %v7833 = vmul.f32 %v7585, %v7829
    %v7834 = vmul.f32 %v7473, %v7828
    %v7835 = vmul.f32 %v7587, %v7829
    %v7836 = vmul.f32 %v7476, %v7828
    %v7837 = vmul.f32 %v7590, %v7829
    %v7838 = vmul.f32 %v7478, %v7828
    %v7839 = vmul.f32 %v7592, %v7829
    %v7840 = vadd.f32 %v7832, %v7833
    %7841 = vadd.xlane.f32.xlu0 %v7840
    %v7842 = vpop.xlane.xlu0 %7841
    %v7843 = vadd.f32 %v7834, %v7835
    %7844 = vadd.xlane.f32.xlu0 %v7843
    %v7845 = vpop.xlane.xlu0 %7844
    %v7846 = vadd.f32 %v7836, %v7837
    %7847 = vadd.xlane.f32.xlu0 %v7846
    %v7848 = vpop.xlane.xlu0 %7847
    %v7849 = vadd.f32 %v7838, %v7839
    %7850 = vadd.xlane.f32.xlu0 %v7849
    %v7851 = vpop.xlane.xlu0 %7850
    %v7852 = vld [vmem:[#allocation24] sm:$0x3]
    %v7854 = vperm.slane %v7852, 0
    %v7855 = vperm.slane %v7852, 1
    %v7858 = vpack.c.bf16 %v7854, %v7854
    %v7859 = vpack.c.bf16 %v7855, %v7855
    %7860 = vmatpush.bf16.xpose.msra.mxu0 0
    %7861 = vmatpush.bf16.xpose.msra.mxu0 0
    %7862 = vmatpush.bf16.xpose.msra.mxu0 0
    %7863 = vmatpush.bf16.xpose.msra.mxu0 0
    %7864 = vmatpush.bf16.xpose.msra.mxu0 0
    %7865 = vmatpush.bf16.xpose.msra.mxu0 0
    %7866 = vmatpush.bf16.xpose.msra.mxu0 %v7824
    %7867 = vmatpush.bf16.xpose.msra.mxu0 %v7822
    %7868 = vmatmul.bf16.gmra.mxu0 %v7858
    %v7869 = vpop.f32.mrf.mxu0
    %v7870 = vadd.f32 0.0, %v7869
    %v7871 = vpop.f32.mrf.mxu0
    %7872 = vdwg.mxu0
    %7873 = vmatpush.bf16.xpose.msra.mxu0 0
    %7874 = vmatpush.bf16.xpose.msra.mxu0 0
    %7875 = vmatpush.bf16.xpose.msra.mxu0 0
    %7876 = vmatpush.bf16.xpose.msra.mxu0 0
    %7877 = vmatpush.bf16.xpose.msra.mxu0 0
    %7878 = vmatpush.bf16.xpose.msra.mxu0 0
    %7879 = vmatpush.bf16.xpose.msra.mxu0 %v7825
    %7880 = vmatpush.bf16.xpose.msra.mxu0 %v7823
    %7881 = vmatmul.bf16.gmra.mxu0 %v7859
    %v7882 = vpop.f32.mrf.mxu0
    %v7883 = vadd.f32 %v7870, %v7882
    %v7884 = vpop.f32.mrf.mxu0
    %7885 = vdwg.mxu0
    %v7886 = vperm.slane %v7883, 0
    %v7887 = vadd.f32 %v7842, %v7886
    %v7888 = vadd.f32 %v7845, %v7886
    %v7889 = vadd.f32 %v7848, %v7886
    %v7890 = vadd.f32 %v7851, %v7886
    %vm7891 = vcmp.gt.f32.partialorder %v7887, 0.0
    %vm7892 = vcmp.gt.f32.partialorder %v7888, 0.0
    %vm7893 = vcmp.gt.f32.partialorder %v7889, 0.0
    %vm7894 = vcmp.gt.f32.partialorder %v7890, 0.0
    %v7895 = vmul.f32 %v7887, 0.2
    %v7896 = vmul.f32 %v7888, 0.2
    %v7897 = vmul.f32 %v7889, 0.2
    %v7898 = vmul.f32 %v7890, 0.2
    %v7899 = vsel %vm7891, %v7887, %v7895
    %v7900 = vsel %vm7892, %v7888, %v7896
    %v7901 = vsel %vm7893, %v7889, %v7897
    %v7902 = vsel %vm7894, %v7890, %v7898
    %v7903 = vadd.f32 %v7899, %v403
    %v7904 = vadd.f32 %v7900, %v404
    %v7905 = vadd.f32 %v7901, %v405
    %v7906 = vadd.f32 %v7902, %v406
    %v7907 = vsel %vm1647, %v7903, -inf
    %7908 = vmax.xlane.f32.xlu0 %v7907
    %v7909 = vpop.xlane.xlu0 %7908
    %v7910 = vsel %vm1647, %v7904, -inf
    %7911 = vmax.xlane.f32.xlu0 %v7910
    %v7912 = vpop.xlane.xlu0 %7911
    %v7913 = vsel %vm1647, %v7905, -inf
    %7914 = vmax.xlane.f32.xlu0 %v7913
    %v7915 = vpop.xlane.xlu0 %7914
    %v7916 = vsel %vm1647, %v7906, -inf
    %7917 = vmax.xlane.f32.xlu0 %v7916
    %v7918 = vpop.xlane.xlu0 %7917
    %v7919 = vsub.f32 %v7903, %v7909
    %v7920 = vsub.f32 %v7904, %v7912
    %v7921 = vsub.f32 %v7905, %v7915
    %v7922 = vsub.f32 %v7906, %v7918
    %v7923 = vmul.f32 %v7919, 1.442695
    %v7924 = vpow.pop %v7923
    %v7925 = vmul.f32 %v7920, 1.442695
    %v7926 = vpow.pop %v7925
    %v7927 = vmul.f32 %v7921, 1.442695
    %v7928 = vpow.pop %v7927
    %v7929 = vmul.f32 %v7922, 1.442695
    %v7930 = vpow.pop %v7929
    %v7931 = vsel %vm1647, %v7924, 0.0
    %7932 = vadd.xlane.f32.xlu0 %v7931
    %v7933 = vpop.xlane.xlu0 %7932
    %v7934 = vsel %vm1647, %v7926, 0.0
    %7935 = vadd.xlane.f32.xlu0 %v7934
    %v7936 = vpop.xlane.xlu0 %7935
    %v7937 = vsel %vm1647, %v7928, 0.0
    %7938 = vadd.xlane.f32.xlu0 %v7937
    %v7939 = vpop.xlane.xlu0 %7938
    %v7940 = vsel %vm1647, %v7930, 0.0
    %7941 = vadd.xlane.f32.xlu0 %v7940
    %v7942 = vpop.xlane.xlu0 %7941
    %v7943 = vrcp.pop %v7933
    %v7944 = vrcp.pop %v7936
    %v7945 = vrcp.pop %v7939
    %v7946 = vrcp.pop %v7942
    %v7947 = vmul.f32 %v7924, %v7943
    %v7948 = vmul.f32 %v7926, %v7944
    %v7949 = vmul.f32 %v7928, %v7945
    %v7950 = vmul.f32 %v7930, %v7946
    %v7951 = vpack.c.bf16 %v7948, %v7947
    %v7952 = vpack.c.bf16 %v7950, %v7949
    %v7953 = vld [vmem:[#allocation27] sm:$0x3]
    %v7955 = vperm.slane %v7953, 0
    %v7956 = vperm.slane %v7953, 1
    %v7960 = vsel %vm1647, %v7951, 0
    %v7963 = vsel %vm1647, %v7952, 0
    %7965 = vmatpush.bf16.msra.mxu0 0
    %7966 = vmatpush.bf16.msra.mxu0 0
    %7967 = vmatpush.bf16.msra.mxu0 0
    %7968 = vmatpush.bf16.msra.mxu0 0
    %7969 = vmatpush.bf16.msra.mxu0 0
    %7970 = vmatpush.bf16.msra.mxu0 0
    %7971 = vmatpush.bf16.msra.mxu0 %v7824
    %7972 = vmatpush.bf16.msra.mxu0 %v7822
    %7973 = vmatmul.bf16.gmra.mxu0 %v7960
    %v7974 = vpop.f32.mrf.mxu0
    %v7975 = vadd.f32 %v7955, %v7974
    %v7976 = vpop.f32.mrf.mxu0
    %v7977 = vadd.f32 %v7955, %v7976
    %7978 = vmatmul.bf16.gmra.mxu0 %v7963
    %v7979 = vpop.f32.mrf.mxu0
    %v7980 = vadd.f32 %v7955, %v7979
    %v7981 = vpop.f32.mrf.mxu0
    %v7982 = vadd.f32 %v7955, %v7981
    %7983 = vdwg.mxu0
    %7984 = vmatpush.bf16.msra.mxu0 0
    %7985 = vmatpush.bf16.msra.mxu0 0
    %7986 = vmatpush.bf16.msra.mxu0 0
    %7987 = vmatpush.bf16.msra.mxu0 0
    %7988 = vmatpush.bf16.msra.mxu0 0
    %7989 = vmatpush.bf16.msra.mxu0 0
    %7990 = vmatpush.bf16.msra.mxu0 %v7825
    %7991 = vmatpush.bf16.msra.mxu0 %v7823
    %7992 = vmatmul.bf16.gmra.mxu0 %v7960
    %v7993 = vpop.f32.mrf.mxu0
    %v7994 = vadd.f32 %v7956, %v7993
    %v7995 = vpop.f32.mrf.mxu0
    %v7996 = vadd.f32 %v7956, %v7995
    %7997 = vmatmul.bf16.gmra.mxu0 %v7963
    %v7998 = vpop.f32.mrf.mxu0
    %v7999 = vadd.f32 %v7956, %v7998
    %v8000 = vpop.f32.mrf.mxu0
    %v8001 = vadd.f32 %v7956, %v8000
    %8002 = vdwg.mxu0
    %v8003 = vpack.c.bf16 %v7701, %v7699
    %v8004 = vpack.c.bf16 %v7815, %v7813
    %v8005 = vpack.c.bf16 %v7706, %v7704
    %v8006 = vpack.c.bf16 %v7820, %v7818
    %s8007 = scalar_lea.vmem [#allocation26], 2
    %v8008 = vld [vmem:[%s8007] sm:$0x3]
    %v8010 = vperm.slane %v8008, 0
    %v8011 = vperm.slane %v8008, 1
    %v8014 = vmul.f32 %v7699, %v8010
    %v8015 = vmul.f32 %v7813, %v8011
    %v8016 = vmul.f32 %v7701, %v8010
    %v8017 = vmul.f32 %v7815, %v8011
    %v8018 = vmul.f32 %v7704, %v8010
    %v8019 = vmul.f32 %v7818, %v8011
    %v8020 = vmul.f32 %v7706, %v8010
    %v8021 = vmul.f32 %v7820, %v8011
    %v8022 = vadd.f32 %v8014, %v8015
    %8023 = vadd.xlane.f32.xlu0 %v8022
    %v8024 = vpop.xlane.xlu0 %8023
    %v8025 = vadd.f32 %v8016, %v8017
    %8026 = vadd.xlane.f32.xlu0 %v8025
    %v8027 = vpop.xlane.xlu0 %8026
    %v8028 = vadd.f32 %v8018, %v8019
    %8029 = vadd.xlane.f32.xlu0 %v8028
    %v8030 = vpop.xlane.xlu0 %8029
    %v8031 = vadd.f32 %v8020, %v8021
    %8032 = vadd.xlane.f32.xlu0 %v8031
    %v8033 = vpop.xlane.xlu0 %8032
    %s8034 = scalar_lea.vmem [#allocation24], 2
    %v8035 = vld [vmem:[%s8034] sm:$0x3]
    %v8037 = vperm.slane %v8035, 0
    %v8038 = vperm.slane %v8035, 1
    %v8041 = vpack.c.bf16 %v8037, %v8037
    %v8042 = vpack.c.bf16 %v8038, %v8038
    %8043 = vmatpush.bf16.xpose.msra.mxu0 0
    %8044 = vmatpush.bf16.xpose.msra.mxu0 0
    %8045 = vmatpush.bf16.xpose.msra.mxu0 0
    %8046 = vmatpush.bf16.xpose.msra.mxu0 0
    %8047 = vmatpush.bf16.xpose.msra.mxu0 0
    %8048 = vmatpush.bf16.xpose.msra.mxu0 0
    %8049 = vmatpush.bf16.xpose.msra.mxu0 %v8005
    %8050 = vmatpush.bf16.xpose.msra.mxu0 %v8003
    %8051 = vmatmul.bf16.gmra.mxu0 %v8041
    %v8052 = vpop.f32.mrf.mxu0
    %v8053 = vadd.f32 0.0, %v8052
    %v8054 = vpop.f32.mrf.mxu0
    %8055 = vdwg.mxu0
    %8056 = vmatpush.bf16.xpose.msra.mxu0 0
    %8057 = vmatpush.bf16.xpose.msra.mxu0 0
    %8058 = vmatpush.bf16.xpose.msra.mxu0 0
    %8059 = vmatpush.bf16.xpose.msra.mxu0 0
    %8060 = vmatpush.bf16.xpose.msra.mxu0 0
    %8061 = vmatpush.bf16.xpose.msra.mxu0 0
    %8062 = vmatpush.bf16.xpose.msra.mxu0 %v8006
    %8063 = vmatpush.bf16.xpose.msra.mxu0 %v8004
    %8064 = vmatmul.bf16.gmra.mxu0 %v8042
    %v8065 = vpop.f32.mrf.mxu0
    %v8066 = vadd.f32 %v8053, %v8065
    %v8067 = vpop.f32.mrf.mxu0
    %8068 = vdwg.mxu0
    %v8069 = vperm.slane %v8066, 0
    %v8070 = vadd.f32 %v8024, %v8069
    %v8071 = vadd.f32 %v8027, %v8069
    %v8072 = vadd.f32 %v8030, %v8069
    %v8073 = vadd.f32 %v8033, %v8069
    %vm8074 = vcmp.gt.f32.partialorder %v8070, 0.0
    %vm8075 = vcmp.gt.f32.partialorder %v8071, 0.0
    %vm8076 = vcmp.gt.f32.partialorder %v8072, 0.0
    %vm8077 = vcmp.gt.f32.partialorder %v8073, 0.0
    %v8078 = vmul.f32 %v8070, 0.2
    %v8079 = vmul.f32 %v8071, 0.2
    %v8080 = vmul.f32 %v8072, 0.2
    %v8081 = vmul.f32 %v8073, 0.2
    %v8082 = vsel %vm8074, %v8070, %v8078
    %v8083 = vsel %vm8075, %v8071, %v8079
    %v8084 = vsel %vm8076, %v8072, %v8080
    %v8085 = vsel %vm8077, %v8073, %v8081
    %v8086 = vadd.f32 %v8082, %v403
    %v8087 = vadd.f32 %v8083, %v404
    %v8088 = vadd.f32 %v8084, %v405
    %v8089 = vadd.f32 %v8085, %v406
    %v8090 = vsel %vm1647, %v8086, -inf
    %8091 = vmax.xlane.f32.xlu0 %v8090
    %v8092 = vpop.xlane.xlu0 %8091
    %v8093 = vsel %vm1647, %v8087, -inf
    %8094 = vmax.xlane.f32.xlu0 %v8093
    %v8095 = vpop.xlane.xlu0 %8094
    %v8096 = vsel %vm1647, %v8088, -inf
    %8097 = vmax.xlane.f32.xlu0 %v8096
    %v8098 = vpop.xlane.xlu0 %8097
    %v8099 = vsel %vm1647, %v8089, -inf
    %8100 = vmax.xlane.f32.xlu0 %v8099
    %v8101 = vpop.xlane.xlu0 %8100
    %v8102 = vsub.f32 %v8086, %v8092
    %v8103 = vsub.f32 %v8087, %v8095
    %v8104 = vsub.f32 %v8088, %v8098
    %v8105 = vsub.f32 %v8089, %v8101
    %v8106 = vmul.f32 %v8102, 1.442695
    %v8107 = vpow.pop %v8106
    %v8108 = vmul.f32 %v8103, 1.442695
    %v8109 = vpow.pop %v8108
    %v8110 = vmul.f32 %v8104, 1.442695
    %v8111 = vpow.pop %v8110
    %v8112 = vmul.f32 %v8105, 1.442695
    %v8113 = vpow.pop %v8112
    %v8114 = vsel %vm1647, %v8107, 0.0
    %8115 = vadd.xlane.f32.xlu0 %v8114
    %v8116 = vpop.xlane.xlu0 %8115
    %v8117 = vsel %vm1647, %v8109, 0.0
    %8118 = vadd.xlane.f32.xlu0 %v8117
    %v8119 = vpop.xlane.xlu0 %8118
    %v8120 = vsel %vm1647, %v8111, 0.0
    %8121 = vadd.xlane.f32.xlu0 %v8120
    %v8122 = vpop.xlane.xlu0 %8121
    %v8123 = vsel %vm1647, %v8113, 0.0
    %8124 = vadd.xlane.f32.xlu0 %v8123
    %v8125 = vpop.xlane.xlu0 %8124
    %v8126 = vrcp.pop %v8116
    %v8127 = vrcp.pop %v8119
    %v8128 = vrcp.pop %v8122
    %v8129 = vrcp.pop %v8125
    %v8130 = vmul.f32 %v8107, %v8126
    %v8131 = vmul.f32 %v8109, %v8127
    %v8132 = vmul.f32 %v8111, %v8128
    %v8133 = vmul.f32 %v8113, %v8129
    %v8134 = vpack.c.bf16 %v8131, %v8130
    %v8135 = vpack.c.bf16 %v8133, %v8132
    %s8136 = scalar_lea.vmem [#allocation27], 2
    %v8137 = vld [vmem:[%s8136] sm:$0x3]
    %v8139 = vperm.slane %v8137, 0
    %v8140 = vperm.slane %v8137, 1
    %v8144 = vsel %vm1647, %v8134, 0
    %v8147 = vsel %vm1647, %v8135, 0
    %8149 = vmatpush.bf16.msra.mxu0 0
    %8150 = vmatpush.bf16.msra.mxu0 0
    %8151 = vmatpush.bf16.msra.mxu0 0
    %8152 = vmatpush.bf16.msra.mxu0 0
    %8153 = vmatpush.bf16.msra.mxu0 0
    %8154 = vmatpush.bf16.msra.mxu0 0
    %8155 = vmatpush.bf16.msra.mxu0 %v8005
    %8156 = vmatpush.bf16.msra.mxu0 %v8003
    %8157 = vmatmul.bf16.gmra.mxu0 %v8144
    %v8158 = vpop.f32.mrf.mxu0
    %v8159 = vadd.f32 %v8139, %v8158
    %v8160 = vpop.f32.mrf.mxu0
    %v8161 = vadd.f32 %v8139, %v8160
    %8162 = vmatmul.bf16.gmra.mxu0 %v8147
    %v8163 = vpop.f32.mrf.mxu0
    %v8164 = vadd.f32 %v8139, %v8163
    %v8165 = vpop.f32.mrf.mxu0
    %v8166 = vadd.f32 %v8139, %v8165
    %8167 = vdwg.mxu0
    %8168 = vmatpush.bf16.msra.mxu0 0
    %8169 = vmatpush.bf16.msra.mxu0 0
    %8170 = vmatpush.bf16.msra.mxu0 0
    %8171 = vmatpush.bf16.msra.mxu0 0
    %8172 = vmatpush.bf16.msra.mxu0 0
    %8173 = vmatpush.bf16.msra.mxu0 0
    %8174 = vmatpush.bf16.msra.mxu0 %v8006
    %8175 = vmatpush.bf16.msra.mxu0 %v8004
    %8176 = vmatmul.bf16.gmra.mxu0 %v8144
    %v8177 = vpop.f32.mrf.mxu0
    %v8178 = vadd.f32 %v8140, %v8177
    %v8179 = vpop.f32.mrf.mxu0
    %v8180 = vadd.f32 %v8140, %v8179
    %8181 = vmatmul.bf16.gmra.mxu0 %v8147
    %v8182 = vpop.f32.mrf.mxu0
    %v8183 = vadd.f32 %v8140, %v8182
    %v8184 = vpop.f32.mrf.mxu0
    %v8185 = vadd.f32 %v8140, %v8184
    %8186 = vdwg.mxu0
    %v8187 = vmax.f32 %v7975, 0.0
    %v8188 = vmax.f32 %v7994, 0.0
    %v8189 = vmax.f32 %v7977, 0.0
    %v8190 = vmax.f32 %v7996, 0.0
    %v8191 = vmax.f32 %v7980, 0.0
    %v8192 = vmax.f32 %v7999, 0.0
    %v8193 = vmax.f32 %v7982, 0.0
    %v8194 = vmax.f32 %v8001, 0.0
    %v8195 = vmax.f32 %v8159, 0.0
    %v8196 = vmax.f32 %v8178, 0.0
    %v8197 = vmax.f32 %v8161, 0.0
    %v8198 = vmax.f32 %v8180, 0.0
    %v8199 = vmax.f32 %v8164, 0.0
    %v8200 = vmax.f32 %v8183, 0.0
    %v8201 = vmax.f32 %v8166, 0.0
    %v8202 = vmax.f32 %v8185, 0.0
    %v8203 = vadd.f32 %v8187, %v8188
    %8204 = vadd.xlane.f32.xlu0 %v8203
    %v8205 = vpop.xlane.xlu0 %8204
    %v8206 = vadd.f32 %v8189, %v8190
    %8207 = vadd.xlane.f32.xlu0 %v8206
    %v8208 = vpop.xlane.xlu0 %8207
    %v8209 = vadd.f32 %v8191, %v8192
    %8210 = vadd.xlane.f32.xlu0 %v8209
    %v8211 = vpop.xlane.xlu0 %8210
    %v8212 = vadd.f32 %v8193, %v8194
    %8213 = vadd.xlane.f32.xlu0 %v8212
    %v8214 = vpop.xlane.xlu0 %8213
    %v8215 = vadd.f32 %v8195, %v8196
    %8216 = vadd.xlane.f32.xlu0 %v8215
    %v8217 = vpop.xlane.xlu0 %8216
    %v8218 = vadd.f32 %v8197, %v8198
    %8219 = vadd.xlane.f32.xlu0 %v8218
    %v8220 = vpop.xlane.xlu0 %8219
    %v8221 = vadd.f32 %v8199, %v8200
    %8222 = vadd.xlane.f32.xlu0 %v8221
    %v8223 = vpop.xlane.xlu0 %8222
    %v8224 = vadd.f32 %v8201, %v8202
    %8225 = vadd.xlane.f32.xlu0 %v8224
    %v8226 = vpop.xlane.xlu0 %8225
    %v8227 = vadd.f32 %v8205, %v8217
    %v8228 = vadd.f32 %v8208, %v8220
    %v8229 = vadd.f32 %v8211, %v8223
    %v8230 = vadd.f32 %v8214, %v8226
    %v8231 = vmul.f32 %v8227, 0.001953125
    %v8232 = vmul.f32 %v8228, 0.001953125
    %v8233 = vmul.f32 %v8229, 0.001953125
    %v8234 = vmul.f32 %v8230, 0.001953125
    %v8235 = vsub.f32 %v8187, %v8231
    %v8236 = vsub.f32 %v8188, %v8231
    %v8237 = vsub.f32 %v8189, %v8232
    %v8238 = vsub.f32 %v8190, %v8232
    %v8239 = vsub.f32 %v8191, %v8233
    %v8240 = vsub.f32 %v8192, %v8233
    %v8241 = vsub.f32 %v8193, %v8234
    %v8242 = vsub.f32 %v8194, %v8234
    %v8243 = vmul.f32 %v8235, %v8235
    %v8244 = vmul.f32 %v8236, %v8236
    %v8245 = vmul.f32 %v8237, %v8237
    %v8246 = vmul.f32 %v8238, %v8238
    %v8247 = vmul.f32 %v8239, %v8239
    %v8248 = vmul.f32 %v8240, %v8240
    %v8249 = vmul.f32 %v8241, %v8241
    %v8250 = vmul.f32 %v8242, %v8242
    %v8251 = vadd.f32 %v8243, %v8244
    %8252 = vadd.xlane.f32.xlu0 %v8251
    %v8253 = vpop.xlane.xlu0 %8252
    %v8254 = vadd.f32 %v8245, %v8246
    %8255 = vadd.xlane.f32.xlu0 %v8254
    %v8256 = vpop.xlane.xlu0 %8255
    %v8257 = vadd.f32 %v8247, %v8248
    %8258 = vadd.xlane.f32.xlu0 %v8257
    %v8259 = vpop.xlane.xlu0 %8258
    %v8260 = vadd.f32 %v8249, %v8250
    %8261 = vadd.xlane.f32.xlu0 %v8260
    %v8262 = vpop.xlane.xlu0 %8261
    %v8263 = vsub.f32 %v8195, %v8231
    %v8264 = vsub.f32 %v8196, %v8231
    %v8265 = vsub.f32 %v8197, %v8232
    %v8266 = vsub.f32 %v8198, %v8232
    %v8267 = vsub.f32 %v8199, %v8233
    %v8268 = vsub.f32 %v8200, %v8233
    %v8269 = vsub.f32 %v8201, %v8234
    %v8270 = vsub.f32 %v8202, %v8234
    %v8271 = vmul.f32 %v8263, %v8263
    %v8272 = vmul.f32 %v8264, %v8264
    %v8273 = vmul.f32 %v8265, %v8265
    %v8274 = vmul.f32 %v8266, %v8266
    %v8275 = vmul.f32 %v8267, %v8267
    %v8276 = vmul.f32 %v8268, %v8268
    %v8277 = vmul.f32 %v8269, %v8269
    %v8278 = vmul.f32 %v8270, %v8270
    %v8279 = vadd.f32 %v8271, %v8272
    %8280 = vadd.xlane.f32.xlu0 %v8279
    %v8281 = vpop.xlane.xlu0 %8280
    %v8282 = vadd.f32 %v8273, %v8274
    %8283 = vadd.xlane.f32.xlu0 %v8282
    %v8284 = vpop.xlane.xlu0 %8283
    %v8285 = vadd.f32 %v8275, %v8276
    %8286 = vadd.xlane.f32.xlu0 %v8285
    %v8287 = vpop.xlane.xlu0 %8286
    %v8288 = vadd.f32 %v8277, %v8278
    %8289 = vadd.xlane.f32.xlu0 %v8288
    %v8290 = vpop.xlane.xlu0 %8289
    %v8291 = vadd.f32 %v8253, %v8281
    %v8292 = vadd.f32 %v8256, %v8284
    %v8293 = vadd.f32 %v8259, %v8287
    %v8294 = vadd.f32 %v8262, %v8290
    %v8295 = vmul.f32 %v8291, 0.001953125
    %v8296 = vmul.f32 %v8292, 0.001953125
    %v8297 = vmul.f32 %v8293, 0.001953125
    %v8298 = vmul.f32 %v8294, 0.001953125
    %v8299 = vadd.f32 %v8295, 1e-05
    %v8300 = vadd.f32 %v8296, 1e-05
    %v8301 = vadd.f32 %v8297, 1e-05
    %v8302 = vadd.f32 %v8298, 1e-05
    %v8303 = vrsqrt.pop %v8299
    %v8304 = vmul.f32 %v8303, %v8299
    %v8305 = vmul.f32 %v8304, %v8303
    %v8306 = vmul.f32 0.5, %v8305
    %v8307 = vsub.f32 1.5, %v8306
    %v8308 = vmul.f32 %v8303, %v8307
    %vm8309 = vweird.f32 %v8299
    %vm8310 = vweird.f32 %v8303
    %vm8311 = vmor %vm8309, %vm8310
    %v8312 = vsel %vm8311, %v8303, %v8308
    %v8313 = vrsqrt.pop %v8300
    %v8314 = vmul.f32 %v8313, %v8300
    %v8315 = vmul.f32 %v8314, %v8313
    %v8316 = vmul.f32 0.5, %v8315
    %v8317 = vsub.f32 1.5, %v8316
    %v8318 = vmul.f32 %v8313, %v8317
    %vm8319 = vweird.f32 %v8300
    %vm8320 = vweird.f32 %v8313
    %vm8321 = vmor %vm8319, %vm8320
    %v8322 = vsel %vm8321, %v8313, %v8318
    %v8323 = vrsqrt.pop %v8301
    %v8324 = vmul.f32 %v8323, %v8301
    %v8325 = vmul.f32 %v8324, %v8323
    %v8326 = vmul.f32 0.5, %v8325
    %v8327 = vsub.f32 1.5, %v8326
    %v8328 = vmul.f32 %v8323, %v8327
    %vm8329 = vweird.f32 %v8301
    %vm8330 = vweird.f32 %v8323
    %vm8331 = vmor %vm8329, %vm8330
    %v8332 = vsel %vm8331, %v8323, %v8328
    %v8333 = vrsqrt.pop %v8302
    %v8334 = vmul.f32 %v8333, %v8302
    %v8335 = vmul.f32 %v8334, %v8333
    %v8336 = vmul.f32 0.5, %v8335
    %v8337 = vsub.f32 1.5, %v8336
    %v8338 = vmul.f32 %v8333, %v8337
    %vm8339 = vweird.f32 %v8302
    %vm8340 = vweird.f32 %v8333
    %vm8341 = vmor %vm8339, %vm8340
    %v8342 = vsel %vm8341, %v8333, %v8338
    %v8343 = vmul.f32 %v8235, %v8312
    %v8344 = vmul.f32 %v8236, %v8312
    %v8345 = vmul.f32 %v8237, %v8322
    %v8346 = vmul.f32 %v8238, %v8322
    %v8347 = vmul.f32 %v8239, %v8332
    %v8348 = vmul.f32 %v8240, %v8332
    %v8349 = vmul.f32 %v8241, %v8342
    %v8350 = vmul.f32 %v8242, %v8342
    %v8351 = vld [vmem:[#allocation29] sm:$0x3]
    %v8353 = vperm.slane %v8351, 0
    %v8354 = vperm.slane %v8351, 1
    %v8357 = vmul.f32 %v8343, %v8353
    %v8358 = vmul.f32 %v8344, %v8354
    %v8359 = vmul.f32 %v8345, %v8353
    %v8360 = vmul.f32 %v8346, %v8354
    %v8361 = vmul.f32 %v8347, %v8353
    %v8362 = vmul.f32 %v8348, %v8354
    %v8363 = vmul.f32 %v8349, %v8353
    %v8364 = vmul.f32 %v8350, %v8354
    %v8365 = vld [vmem:[#allocation30] sm:$0x3]
    %v8367 = vperm.slane %v8365, 0
    %v8368 = vperm.slane %v8365, 1
    %v8371 = vadd.f32 %v8357, %v8367
    %v8372 = vadd.f32 %v8358, %v8368
    %v8373 = vadd.f32 %v8359, %v8367
    %v8374 = vadd.f32 %v8360, %v8368
    %v8375 = vadd.f32 %v8361, %v8367
    %v8376 = vadd.f32 %v8362, %v8368
    %v8377 = vadd.f32 %v8363, %v8367
    %v8378 = vadd.f32 %v8364, %v8368
    %v8379 = vmul.f32 %v8263, %v8312
    %v8380 = vmul.f32 %v8264, %v8312
    %v8381 = vmul.f32 %v8265, %v8322
    %v8382 = vmul.f32 %v8266, %v8322
    %v8383 = vmul.f32 %v8267, %v8332
    %v8384 = vmul.f32 %v8268, %v8332
    %v8385 = vmul.f32 %v8269, %v8342
    %v8386 = vmul.f32 %v8270, %v8342
    %s8387 = scalar_lea.vmem [#allocation29], 2
    %v8388 = vld [vmem:[%s8387] sm:$0x3]
    %v8390 = vperm.slane %v8388, 0
    %v8391 = vperm.slane %v8388, 1
    %v8394 = vmul.f32 %v8379, %v8390
    %v8395 = vmul.f32 %v8380, %v8391
    %v8396 = vmul.f32 %v8381, %v8390
    %v8397 = vmul.f32 %v8382, %v8391
    %v8398 = vmul.f32 %v8383, %v8390
    %v8399 = vmul.f32 %v8384, %v8391
    %v8400 = vmul.f32 %v8385, %v8390
    %v8401 = vmul.f32 %v8386, %v8391
    %s8402 = scalar_lea.vmem [#allocation30], 2
    %v8403 = vld [vmem:[%s8402] sm:$0x3]
    %v8405 = vperm.slane %v8403, 0
    %v8406 = vperm.slane %v8403, 1
    %v8409 = vadd.f32 %v8394, %v8405
    %v8410 = vadd.f32 %v8395, %v8406
    %v8411 = vadd.f32 %v8396, %v8405
    %v8412 = vadd.f32 %v8397, %v8406
    %v8413 = vadd.f32 %v8398, %v8405
    %v8414 = vadd.f32 %v8399, %v8406
    %v8415 = vadd.f32 %v8400, %v8405
    %v8416 = vadd.f32 %v8401, %v8406
    %s8417 = smul.u32 4, 64
    %s8418 = smul.u32 %s8417, 1
    %s8419 = sshll.u32 %s8418, 4
    %8420 = dma.done %s389, %s8419
    %v8421 = vpack.c.bf16 %v8373, %v8371
    %v8422 = vpack.c.bf16 %v8374, %v8372
    %v8423 = vpack.c.bf16 %v8411, %v8409
    %v8424 = vpack.c.bf16 %v8412, %v8410
    %v8425 = vpack.c.bf16 %v8377, %v8375
    %v8426 = vpack.c.bf16 %v8378, %v8376
    %v8427 = vpack.c.bf16 %v8415, %v8413
    %v8428 = vpack.c.bf16 %v8416, %v8414
    %v8429 = vld [vmem:[#allocation4] sm:$0xf]
    %v8430 = vld [vmem:[#allocation4 + $0x4] sm:$0xf]
    %v8431 = vld [vmem:[#allocation4 + $0x8] sm:$0xf]
    %v8432 = vld [vmem:[#allocation4 + $0xc] sm:$0xf]
    %v8433 = vld [vmem:[#allocation4 + $0x10] sm:$0xf]
    %v8434 = vld [vmem:[#allocation4 + $0x14] sm:$0xf]
    %v8435 = vld [vmem:[#allocation4 + $0x18] sm:$0xf]
    %v8436 = vld [vmem:[#allocation4 + $0x1c] sm:$0xf]
    %v8437 = vld [vmem:[#allocation4 + $0x20] sm:$0xf]
    %v8438 = vld [vmem:[#allocation4 + $0x24] sm:$0xf]
    %v8439 = vld [vmem:[#allocation4 + $0x28] sm:$0xf]
    %v8440 = vld [vmem:[#allocation4 + $0x2c] sm:$0xf]
    %v8441 = vld [vmem:[#allocation4 + $0x30] sm:$0xf]
    %v8442 = vld [vmem:[#allocation4 + $0x34] sm:$0xf]
    %v8443 = vld [vmem:[#allocation4 + $0x38] sm:$0xf]
    %v8444 = vld [vmem:[#allocation4 + $0x3c] sm:$0xf]
    %v8445 = vld [vmem:[#allocation4 + $0x40] sm:$0xf]
    %v8446 = vld [vmem:[#allocation4 + $0x44] sm:$0xf]
    %v8447 = vld [vmem:[#allocation4 + $0x48] sm:$0xf]
    %v8448 = vld [vmem:[#allocation4 + $0x4c] sm:$0xf]
    %v8449 = vld [vmem:[#allocation4 + $0x50] sm:$0xf]
    %v8450 = vld [vmem:[#allocation4 + $0x54] sm:$0xf]
    %v8451 = vld [vmem:[#allocation4 + $0x58] sm:$0xf]
    %v8452 = vld [vmem:[#allocation4 + $0x5c] sm:$0xf]
    %v8453 = vld [vmem:[#allocation4 + $0x60] sm:$0xf]
    %v8454 = vld [vmem:[#allocation4 + $0x64] sm:$0xf]
    %v8455 = vld [vmem:[#allocation4 + $0x68] sm:$0xf]
    %v8456 = vld [vmem:[#allocation4 + $0x6c] sm:$0xf]
    %v8457 = vld [vmem:[#allocation4 + $0x70] sm:$0xf]
    %v8458 = vld [vmem:[#allocation4 + $0x74] sm:$0xf]
    %v8459 = vld [vmem:[#allocation4 + $0x78] sm:$0xf]
    %v8460 = vld [vmem:[#allocation4 + $0x7c] sm:$0xf]
    %v8461 = vld [vmem:[#allocation4 + $0x80] sm:$0xf]
    %v8462 = vld [vmem:[#allocation4 + $0x84] sm:$0xf]
    %v8463 = vld [vmem:[#allocation4 + $0x88] sm:$0xf]
    %v8464 = vld [vmem:[#allocation4 + $0x8c] sm:$0xf]
    %v8465 = vld [vmem:[#allocation4 + $0x90] sm:$0xf]
    %v8466 = vld [vmem:[#allocation4 + $0x94] sm:$0xf]
    %v8467 = vld [vmem:[#allocation4 + $0x98] sm:$0xf]
    %v8468 = vld [vmem:[#allocation4 + $0x9c] sm:$0xf]
    %v8469 = vld [vmem:[#allocation4 + $0xa0] sm:$0xf]
    %v8470 = vld [vmem:[#allocation4 + $0xa4] sm:$0xf]
    %v8471 = vld [vmem:[#allocation4 + $0xa8] sm:$0xf]
    %v8472 = vld [vmem:[#allocation4 + $0xac] sm:$0xf]
    %v8473 = vld [vmem:[#allocation4 + $0xb0] sm:$0xf]
    %v8474 = vld [vmem:[#allocation4 + $0xb4] sm:$0xf]
    %v8475 = vld [vmem:[#allocation4 + $0xb8] sm:$0xf]
    %v8476 = vld [vmem:[#allocation4 + $0xbc] sm:$0xf]
    %v8477 = vld [vmem:[#allocation4 + $0xc0] sm:$0xf]
    %v8478 = vld [vmem:[#allocation4 + $0xc4] sm:$0xf]
    %v8479 = vld [vmem:[#allocation4 + $0xc8] sm:$0xf]
    %v8480 = vld [vmem:[#allocation4 + $0xcc] sm:$0xf]
    %v8481 = vld [vmem:[#allocation4 + $0xd0] sm:$0xf]
    %v8482 = vld [vmem:[#allocation4 + $0xd4] sm:$0xf]
    %v8483 = vld [vmem:[#allocation4 + $0xd8] sm:$0xf]
    %v8484 = vld [vmem:[#allocation4 + $0xdc] sm:$0xf]
    %v8485 = vld [vmem:[#allocation4 + $0xe0] sm:$0xf]
    %v8486 = vld [vmem:[#allocation4 + $0xe4] sm:$0xf]
    %v8487 = vld [vmem:[#allocation4 + $0xe8] sm:$0xf]
    %v8488 = vld [vmem:[#allocation4 + $0xec] sm:$0xf]
    %v8489 = vld [vmem:[#allocation4 + $0xf0] sm:$0xf]
    %v8490 = vld [vmem:[#allocation4 + $0xf4] sm:$0xf]
    %v8491 = vld [vmem:[#allocation4 + $0xf8] sm:$0xf]
    %v8492 = vld [vmem:[#allocation4 + $0xfc] sm:$0xf]
    %v8557 = vunpack.c.l.b16 %v8429
    %v8558 = vunpack.c.l.b16 %v8430
    %v8559 = vunpack.c.l.b16 %v8431
    %v8560 = vunpack.c.l.b16 %v8432
    %v8561 = vunpack.c.l.b16 %v8433
    %v8562 = vunpack.c.l.b16 %v8434
    %v8563 = vunpack.c.l.b16 %v8435
    %v8564 = vunpack.c.l.b16 %v8436
    %v8565 = vunpack.c.l.b16 %v8437
    %v8566 = vunpack.c.l.b16 %v8438
    %v8567 = vunpack.c.l.b16 %v8439
    %v8568 = vunpack.c.l.b16 %v8440
    %v8569 = vunpack.c.l.b16 %v8441
    %v8570 = vunpack.c.l.b16 %v8442
    %v8571 = vunpack.c.l.b16 %v8443
    %v8572 = vunpack.c.l.b16 %v8444
    %v8573 = vunpack.c.l.b16 %v8445
    %v8574 = vunpack.c.l.b16 %v8446
    %v8575 = vunpack.c.l.b16 %v8447
    %v8576 = vunpack.c.l.b16 %v8448
    %v8577 = vunpack.c.l.b16 %v8449
    %v8578 = vunpack.c.l.b16 %v8450
    %v8579 = vunpack.c.l.b16 %v8451
    %v8580 = vunpack.c.l.b16 %v8452
    %v8581 = vunpack.c.l.b16 %v8453
    %v8582 = vunpack.c.l.b16 %v8454
    %v8583 = vunpack.c.l.b16 %v8455
    %v8584 = vunpack.c.l.b16 %v8456
    %v8585 = vunpack.c.l.b16 %v8457
    %v8586 = vunpack.c.l.b16 %v8458
    %v8587 = vunpack.c.l.b16 %v8459
    %v8588 = vunpack.c.l.b16 %v8460
    %v8589 = vunpack.c.l.b16 %v8461
    %v8590 = vunpack.c.l.b16 %v8462
    %v8591 = vunpack.c.l.b16 %v8463
    %v8592 = vunpack.c.l.b16 %v8464
    %v8593 = vunpack.c.l.b16 %v8465
    %v8594 = vunpack.c.l.b16 %v8466
    %v8595 = vunpack.c.l.b16 %v8467
    %v8596 = vunpack.c.l.b16 %v8468
    %v8597 = vunpack.c.l.b16 %v8469
    %v8598 = vunpack.c.l.b16 %v8470
    %v8599 = vunpack.c.l.b16 %v8471
    %v8600 = vunpack.c.l.b16 %v8472
    %v8601 = vunpack.c.l.b16 %v8473
    %v8602 = vunpack.c.l.b16 %v8474
    %v8603 = vunpack.c.l.b16 %v8475
    %v8604 = vunpack.c.l.b16 %v8476
    %v8605 = vunpack.c.l.b16 %v8477
    %v8606 = vunpack.c.l.b16 %v8478
    %v8607 = vunpack.c.l.b16 %v8479
    %v8608 = vunpack.c.l.b16 %v8480
    %v8609 = vunpack.c.l.b16 %v8481
    %v8610 = vunpack.c.l.b16 %v8482
    %v8611 = vunpack.c.l.b16 %v8483
    %v8612 = vunpack.c.l.b16 %v8484
    %v8613 = vunpack.c.l.b16 %v8485
    %v8614 = vunpack.c.l.b16 %v8486
    %v8615 = vunpack.c.l.b16 %v8487
    %v8616 = vunpack.c.l.b16 %v8488
    %v8617 = vunpack.c.l.b16 %v8489
    %v8618 = vunpack.c.l.b16 %v8490
    %v8619 = vunpack.c.l.b16 %v8491
    %v8620 = vunpack.c.l.b16 %v8492
    %v8621 = vpack.c.b16 %v8558, %v8557
    %v8622 = vpack.c.b16 %v8560, %v8559
    %v8623 = vpack.c.b16 %v8562, %v8561
    %v8624 = vpack.c.b16 %v8564, %v8563
    %v8625 = vpack.c.b16 %v8566, %v8565
    %v8626 = vpack.c.b16 %v8568, %v8567
    %v8627 = vpack.c.b16 %v8570, %v8569
    %v8628 = vpack.c.b16 %v8572, %v8571
    %v8629 = vpack.c.b16 %v8574, %v8573
    %v8630 = vpack.c.b16 %v8576, %v8575
    %v8631 = vpack.c.b16 %v8578, %v8577
    %v8632 = vpack.c.b16 %v8580, %v8579
    %v8633 = vpack.c.b16 %v8582, %v8581
    %v8634 = vpack.c.b16 %v8584, %v8583
    %v8635 = vpack.c.b16 %v8586, %v8585
    %v8636 = vpack.c.b16 %v8588, %v8587
    %v8637 = vpack.c.b16 %v8590, %v8589
    %v8638 = vpack.c.b16 %v8592, %v8591
    %v8639 = vpack.c.b16 %v8594, %v8593
    %v8640 = vpack.c.b16 %v8596, %v8595
    %v8641 = vpack.c.b16 %v8598, %v8597
    %v8642 = vpack.c.b16 %v8600, %v8599
    %v8643 = vpack.c.b16 %v8602, %v8601
    %v8644 = vpack.c.b16 %v8604, %v8603
    %v8645 = vpack.c.b16 %v8606, %v8605
    %v8646 = vpack.c.b16 %v8608, %v8607
    %v8647 = vpack.c.b16 %v8610, %v8609
    %v8648 = vpack.c.b16 %v8612, %v8611
    %v8649 = vpack.c.b16 %v8614, %v8613
    %v8650 = vpack.c.b16 %v8616, %v8615
    %v8651 = vpack.c.b16 %v8618, %v8617
    %v8652 = vpack.c.b16 %v8620, %v8619
    %8685 = vmatpush.bf16.msra.mxu0 %v8628
    %8686 = vmatpush.bf16.msra.mxu0 %v8627
    %8687 = vmatpush.bf16.msra.mxu0 %v8626
    %8688 = vmatpush.bf16.msra.mxu0 %v8625
    %8689 = vmatpush.bf16.msra.mxu0 %v8624
    %8690 = vmatpush.bf16.msra.mxu0 %v8623
    %8691 = vmatpush.bf16.msra.mxu0 %v8622
    %8692 = vmatpush.bf16.msra.mxu0 %v8621
    %8693 = vmatmul.bf16.gmra.mxu0 %v8421
    %v8694 = vpop.f32.mrf.mxu0
    %v8695 = vadd.f32 0.0, %v8694
    %v8696 = vpop.f32.mrf.mxu0
    %v8697 = vadd.f32 0.0, %v8696
    %8698 = vmatmul.bf16.gmra.mxu0 %v8425
    %v8699 = vpop.f32.mrf.mxu0
    %v8700 = vadd.f32 0.0, %v8699
    %v8701 = vpop.f32.mrf.mxu0
    %v8702 = vadd.f32 0.0, %v8701
    %8703 = vdwg.mxu0
    %8704 = vmatpush.bf16.msra.mxu0 %v8636
    %8705 = vmatpush.bf16.msra.mxu0 %v8635
    %8706 = vmatpush.bf16.msra.mxu0 %v8634
    %8707 = vmatpush.bf16.msra.mxu0 %v8633
    %8708 = vmatpush.bf16.msra.mxu0 %v8632
    %8709 = vmatpush.bf16.msra.mxu0 %v8631
    %8710 = vmatpush.bf16.msra.mxu0 %v8630
    %8711 = vmatpush.bf16.msra.mxu0 %v8629
    %8712 = vmatmul.bf16.gmra.mxu0 %v8422
    %v8713 = vpop.f32.mrf.mxu0
    %v8714 = vadd.f32 %v8695, %v8713
    %v8715 = vpop.f32.mrf.mxu0
    %v8716 = vadd.f32 %v8697, %v8715
    %8717 = vmatmul.bf16.gmra.mxu0 %v8426
    %v8718 = vpop.f32.mrf.mxu0
    %v8719 = vadd.f32 %v8700, %v8718
    %v8720 = vpop.f32.mrf.mxu0
    %v8721 = vadd.f32 %v8702, %v8720
    %8722 = vdwg.mxu0
    %8723 = vmatpush.bf16.msra.mxu0 %v8644
    %8724 = vmatpush.bf16.msra.mxu0 %v8643
    %8725 = vmatpush.bf16.msra.mxu0 %v8642
    %8726 = vmatpush.bf16.msra.mxu0 %v8641
    %8727 = vmatpush.bf16.msra.mxu0 %v8640
    %8728 = vmatpush.bf16.msra.mxu0 %v8639
    %8729 = vmatpush.bf16.msra.mxu0 %v8638
    %8730 = vmatpush.bf16.msra.mxu0 %v8637
    %8731 = vmatmul.bf16.gmra.mxu0 %v8423
    %v8732 = vpop.f32.mrf.mxu0
    %v8733 = vadd.f32 %v8714, %v8732
    %v8734 = vpop.f32.mrf.mxu0
    %v8735 = vadd.f32 %v8716, %v8734
    %8736 = vmatmul.bf16.gmra.mxu0 %v8427
    %v8737 = vpop.f32.mrf.mxu0
    %v8738 = vadd.f32 %v8719, %v8737
    %v8739 = vpop.f32.mrf.mxu0
    %v8740 = vadd.f32 %v8721, %v8739
    %8741 = vdwg.mxu0
    %8742 = vmatpush.bf16.msra.mxu0 %v8652
    %8743 = vmatpush.bf16.msra.mxu0 %v8651
    %8744 = vmatpush.bf16.msra.mxu0 %v8650
    %8745 = vmatpush.bf16.msra.mxu0 %v8649
    %8746 = vmatpush.bf16.msra.mxu0 %v8648
    %8747 = vmatpush.bf16.msra.mxu0 %v8647
    %8748 = vmatpush.bf16.msra.mxu0 %v8646
    %8749 = vmatpush.bf16.msra.mxu0 %v8645
    %8750 = vmatmul.bf16.gmra.mxu0 %v8424
    %v8751 = vpop.f32.mrf.mxu0
    %v8752 = vadd.f32 %v8733, %v8751
    %v8753 = vpop.f32.mrf.mxu0
    %v8754 = vadd.f32 %v8735, %v8753
    %8755 = vmatmul.bf16.gmra.mxu0 %v8428
    %v8756 = vpop.f32.mrf.mxu0
    %v8757 = vadd.f32 %v8738, %v8756
    %v8758 = vpop.f32.mrf.mxu0
    %v8759 = vadd.f32 %v8740, %v8758
    %8760 = vdwg.mxu0
    %v8761 = vpack.c.bf16 %v8754, %v8752
    %v8762 = vpack.c.bf16 %v8759, %v8757
    %v8763 = vld [vmem:[#allocation33] sm:$0x1]
    %v8765 = vperm.slane %v8763, 0
    %v8767 = vmul.f32 %v8752, %v8765
    %v8768 = vmul.f32 %v8754, %v8765
    %v8769 = vmul.f32 %v8757, %v8765
    %v8770 = vmul.f32 %v8759, %v8765
    %8771 = vadd.xlane.f32.xlu0 %v8767
    %v8772 = vpop.xlane.xlu0 %8771
    %8773 = vadd.xlane.f32.xlu0 %v8768
    %v8774 = vpop.xlane.xlu0 %8773
    %8775 = vadd.xlane.f32.xlu0 %v8769
    %v8776 = vpop.xlane.xlu0 %8775
    %8777 = vadd.xlane.f32.xlu0 %v8770
    %v8778 = vpop.xlane.xlu0 %8777
    %v8779 = vld [vmem:[#allocation32] sm:$0x1]
    %v8780 = vpack.c.bf16 %v8779, %v8779
    %8781 = vmatpush.bf16.xpose.msra.mxu0 0
    %8782 = vmatpush.bf16.xpose.msra.mxu0 0
    %8783 = vmatpush.bf16.xpose.msra.mxu0 0
    %8784 = vmatpush.bf16.xpose.msra.mxu0 0
    %8785 = vmatpush.bf16.xpose.msra.mxu0 0
    %8786 = vmatpush.bf16.xpose.msra.mxu0 0
    %8787 = vmatpush.bf16.xpose.msra.mxu0 %v8762
    %8788 = vmatpush.bf16.xpose.msra.mxu0 %v8761
    %8789 = vmatmul.bf16.gmra.mxu0 %v8780
    %v8790 = vpop.f32.mrf.mxu0
    %v8791 = vadd.f32 0.0, %v8790
    %v8792 = vpop.f32.mrf.mxu0
    %8793 = vdwg.mxu0
    %v8794 = vperm.slane %v8791, 0
    %v8795 = vadd.f32 %v8772, %v8794
    %v8796 = vadd.f32 %v8774, %v8794
    %v8797 = vadd.f32 %v8776, %v8794
    %v8798 = vadd.f32 %v8778, %v8794
    %vm8799 = vcmp.gt.f32.partialorder %v8795, 0.0
    %vm8800 = vcmp.gt.f32.partialorder %v8796, 0.0
    %vm8801 = vcmp.gt.f32.partialorder %v8797, 0.0
    %vm8802 = vcmp.gt.f32.partialorder %v8798, 0.0
    %v8803 = vmul.f32 %v8795, 0.2
    %v8804 = vmul.f32 %v8796, 0.2
    %v8805 = vmul.f32 %v8797, 0.2
    %v8806 = vmul.f32 %v8798, 0.2
    %v8807 = vsel %vm8799, %v8795, %v8803
    %v8808 = vsel %vm8800, %v8796, %v8804
    %v8809 = vsel %vm8801, %v8797, %v8805
    %v8810 = vsel %vm8802, %v8798, %v8806
    %v8811 = vadd.f32 %v8807, %v403
    %v8812 = vadd.f32 %v8808, %v404
    %v8813 = vadd.f32 %v8809, %v405
    %v8814 = vadd.f32 %v8810, %v406
    %v8815 = vsel %vm1647, %v8811, -inf
    %8816 = vmax.xlane.f32.xlu0 %v8815
    %v8817 = vpop.xlane.xlu0 %8816
    %v8818 = vsel %vm1647, %v8812, -inf
    %8819 = vmax.xlane.f32.xlu0 %v8818
    %v8820 = vpop.xlane.xlu0 %8819
    %v8821 = vsel %vm1647, %v8813, -inf
    %8822 = vmax.xlane.f32.xlu0 %v8821
    %v8823 = vpop.xlane.xlu0 %8822
    %v8824 = vsel %vm1647, %v8814, -inf
    %8825 = vmax.xlane.f32.xlu0 %v8824
    %v8826 = vpop.xlane.xlu0 %8825
    %v8827 = vsub.f32 %v8811, %v8817
    %v8828 = vsub.f32 %v8812, %v8820
    %v8829 = vsub.f32 %v8813, %v8823
    %v8830 = vsub.f32 %v8814, %v8826
    %v8831 = vmul.f32 %v8827, 1.442695
    %v8832 = vpow.pop %v8831
    %v8833 = vmul.f32 %v8828, 1.442695
    %v8834 = vpow.pop %v8833
    %v8835 = vmul.f32 %v8829, 1.442695
    %v8836 = vpow.pop %v8835
    %v8837 = vmul.f32 %v8830, 1.442695
    %v8838 = vpow.pop %v8837
    %v8839 = vsel %vm1647, %v8832, 0.0
    %8840 = vadd.xlane.f32.xlu0 %v8839
    %v8841 = vpop.xlane.xlu0 %8840
    %v8842 = vsel %vm1647, %v8834, 0.0
    %8843 = vadd.xlane.f32.xlu0 %v8842
    %v8844 = vpop.xlane.xlu0 %8843
    %v8845 = vsel %vm1647, %v8836, 0.0
    %8846 = vadd.xlane.f32.xlu0 %v8845
    %v8847 = vpop.xlane.xlu0 %8846
    %v8848 = vsel %vm1647, %v8838, 0.0
    %8849 = vadd.xlane.f32.xlu0 %v8848
    %v8850 = vpop.xlane.xlu0 %8849
    %v8851 = vrcp.pop %v8841
    %v8852 = vrcp.pop %v8844
    %v8853 = vrcp.pop %v8847
    %v8854 = vrcp.pop %v8850
    %v8855 = vmul.f32 %v8832, %v8851
    %v8856 = vmul.f32 %v8834, %v8852
    %v8857 = vmul.f32 %v8836, %v8853
    %v8858 = vmul.f32 %v8838, %v8854
    %v8859 = vpack.c.bf16 %v8856, %v8855
    %v8860 = vpack.c.bf16 %v8858, %v8857
    %v8861 = vld [vmem:[#allocation35] sm:$0x1]
    %v8863 = vperm.slane %v8861, 0
    %v8866 = vsel %vm1647, %v8859, 0
    %v8869 = vsel %vm1647, %v8860, 0
    %8871 = vmatpush.bf16.msra.mxu0 0
    %8872 = vmatpush.bf16.msra.mxu0 0
    %8873 = vmatpush.bf16.msra.mxu0 0
    %8874 = vmatpush.bf16.msra.mxu0 0
    %8875 = vmatpush.bf16.msra.mxu0 0
    %8876 = vmatpush.bf16.msra.mxu0 0
    %8877 = vmatpush.bf16.msra.mxu0 %v8762
    %8878 = vmatpush.bf16.msra.mxu0 %v8761
    %8879 = vmatmul.bf16.gmra.mxu0 %v8866
    %v8880 = vpop.f32.mrf.mxu0
    %v8881 = vadd.f32 %v8863, %v8880
    %v8882 = vpop.f32.mrf.mxu0
    %v8883 = vadd.f32 %v8863, %v8882
    %8884 = vmatmul.bf16.gmra.mxu0 %v8869
    %v8885 = vpop.f32.mrf.mxu0
    %v8886 = vadd.f32 %v8863, %v8885
    %v8887 = vpop.f32.mrf.mxu0
    %v8888 = vadd.f32 %v8863, %v8887
    %8889 = vdwg.mxu0
    %8890 = vst [vmem:[#allocation36] sm:$0xff] %v8881
    %8891 = vst [vmem:[#allocation36 + $0x8] sm:$0xff] %v8883
    %8892 = vst [vmem:[#allocation36 + $0x10] sm:$0xff] %v8886
    %8893 = vst [vmem:[#allocation36 + $0x18] sm:$0xff] %v8888
    // Predicated region
    $region174: #{gatnet_forward.1} parent=1 // pred_check
      _
    $region175: #{gatnet_forward.1} parent=1 // pred_check_branch
      %8895 = sbr.rel (0) target = $region177
    $region176: #{gatnet_forward.1} parent=1 // pred_region
      %8897 = vsyncadd [#allocation8], 0
      %s8898 = sshll.u32 [#allocation36], 4
      %s8899 = int_to_ptr.vmem [resolvable:$true] %s8898
      %s8900 = sshll.u32 %s24, 4
      %s8901 = int_to_ptr.hbm [resolvable:$true] %s8900
      %8906 = dma.vmem_to_hbm [thread:$0]  %s8899, 512, %s8901, [#allocation8], 128, 128, 8
    $region177: #{gatnet_forward.1} parent=1 // pred_fallthru
      _
    // Predicated region
    $region178: #{gatnet_forward.1} parent=1 // pred_check
      _
    $region179: #{gatnet_forward.1} parent=1 // pred_check_branch
      %8908 = sbr.rel (0) target = $region181
    $region180: #{gatnet_forward.1} parent=1 // pred_region
      %8910 = dma.done [#allocation8], 512
    $region181: #{gatnet_forward.1} parent=1 // pred_fallthru
      _
    %8911 = vsyncpa [#allocation7], 1
    %8912 = vsyncpa [#allocation10], 1
    %8913 = vsyncpa [#allocation13], 1
    %8914 = vsyncpa [#allocation16], 1
    %8915 = vsyncpa [#allocation19], 1
    %8916 = vsyncpa [#allocation22], 1
    %8917 = vsyncpa [#allocation25], 1
    %8918 = vsyncpa [#allocation28], 1
    %8919 = vsyncpa [#allocation31], 1
    %8920 = vsyncpa [#allocation34], 1
    %8921 = vsyncpa [#allocation8], 1
  %8922 = vsyncmov [#allocation5]
  %s8923 = vpop.sfrf %8922
  %p8924 = scmp.eq.s32.totalorder %s8923, 0
  %p8925 = pneg %p8924
  %8927 = shalt.err (%p8925)
  %s8928 = scalar_lea.sflag [#allocation5], 1
  %8929 = vsyncmov %s8928
  %s8930 = vpop.sfrf %8929
  %p8931 = scmp.eq.s32.totalorder %s8930, 0
  %p8932 = pneg %p8931
  %8934 = shalt.err (%p8932)
  %s8935 = scalar_lea.sflag [#allocation5], 2
  %8936 = vsyncmov %s8935
  %s8937 = vpop.sfrf %8936
  %p8938 = scmp.eq.s32.totalorder %s8937, 0
  %p8939 = pneg %p8938
  %8941 = shalt.err (%p8939)

</llo_original>
